<compile_context>
chip_gen: v5e
topology: v5e:2x2
jax: 0.10.0
libtpu: 0.0.40
codegen_flags: <defaults>
</compile_context>

<pallas_src>
import functools

import jax
import jax.numpy as jnp
from jax.experimental import pallas as pl
from jax.experimental.pallas import tpu as pltpu


def _rggnn_kernel(x_ref, adj_ref, mask_ref,
                  w_emb_ref, b_emb_ref,
                  w_a_ref, b_a_ref,
                  w_x_ref, b_x_ref,
                  w_h1_ref, b_h1_ref,
                  w_out_ref, b_out_ref,
                  out_ref,
                  *, num_gnn_layers: int, alpha_weight: float,
                  G: int, N: int, H: int):
    mask = mask_ref[...]      # (G*N, 1)
    adj = adj_ref[...]        # (G, N, N)

    # emb_encode + mask (one flattened matmul over all G*N nodes)
    x = jnp.dot(x_ref[...], w_emb_ref[...],
                preferred_element_type=jnp.float32) + b_emb_ref[...]
    x = x * mask              # (G*N, H)

    w_a = w_a_ref[...]        # (H, 3H)  = [Wz0 | Wr0 | Wh0]
    b_a = b_a_ref[...]        # (1, 3H)
    w_x = w_x_ref[...]        # (H, 2H)  = [Wz1 | Wr1]
    b_x = b_x_ref[...]        # (1, 2H)
    w_h1 = w_h1_ref[...]      # (H, H)
    b_h1 = b_h1_ref[...]      # (1, H)

    for _ in range(num_gnn_layers):
        # a = adj @ x  (batched per graph)
        a = jnp.einsum("gij,gjh->gih", adj, x.reshape(G, N, H),
                       preferred_element_type=jnp.float32).reshape(G * N, H)
        # fused gate projections
        a3 = jnp.dot(a, w_a, preferred_element_type=jnp.float32) + b_a   # (G*N, 3H)
        x2 = jnp.dot(x, w_x, preferred_element_type=jnp.float32) + b_x   # (G*N, 2H)
        z = jax.nn.sigmoid(a3[:, 0:H] + x2[:, 0:H])
        r = jax.nn.sigmoid(a3[:, H:2 * H] + x2[:, H:2 * H])
        h = jax.nn.relu(a3[:, 2 * H:3 * H]
                        + jnp.dot(r * x, w_h1,
                                  preferred_element_type=jnp.float32) + b_h1)
        g = h * z + x * (1.0 - z)
        x = alpha_weight * x + g * mask

    # readout: [w_ln | w_att] fused into one matmul
    po = jnp.dot(x, w_out_ref[...],
                 preferred_element_type=jnp.float32) + b_out_ref[...]    # (G*N, H+1)
    xl = jax.nn.relu(po[:, 0:H])
    soft_att = jax.nn.sigmoid(po[:, H:H + 1])
    xo = (soft_att * xl * mask).reshape(G, N, H)

    # att_op == 'mul': sum over nodes * max over nodes (per graph)
    out_ref[...] = jnp.sum(xo, axis=1) * jnp.max(xo, axis=1)             # (G, H)


def rggnn_forward(inputs, adj, mask, params, *, num_gnn_layers=2,
                  alpha_weight=1.0, graphs_per_step=16):
    """inputs: (B, N, F) f32, adj: (B, N, N) f32, mask: (B, N, 1) f32 -> (B, H)."""
    B, N, F = inputs.shape
    H = params["w_emb"].shape[1]
    G = graphs_per_step
    assert G % 8 == 0, "graphs_per_step must be a multiple of 8 (sublane tiling)"

    num_steps = -(-B // G)          # cdiv
    B_pad = num_steps * G
    if B_pad != B:
        pad = B_pad - B
        inputs = jnp.pad(inputs, ((0, pad), (0, 0), (0, 0)))
        adj = jnp.pad(adj, ((0, pad), (0, 0), (0, 0)))
        mask = jnp.pad(mask, ((0, pad), (0, 0), (0, 0)))

    # Host-side flatten of the node axis -> lane/sublane-friendly 2-D blocks.
    x_flat = inputs.reshape(B_pad * N, F)
    m_flat = mask.reshape(B_pad * N, 1)

    # Consolidate 18 weight/bias tensors into 10 fused operands.
    w_emb, b_emb = params["w_emb"], params["b_emb"]
    w_a = jnp.concatenate([params["w_z0"], params["w_r0"], params["w_h0"]], axis=1)
    b_a = jnp.concatenate([params["b_z0"], params["b_r0"], params["b_h0"]], axis=1)
    w_x = jnp.concatenate([params["w_z1"], params["w_r1"]], axis=1)
    b_x = jnp.concatenate([params["b_z1"], params["b_r1"]], axis=1)
    w_h1, b_h1 = params["w_h1"], params["b_h1"]
    w_out = jnp.concatenate([params["w_ln"], params["w_att"]], axis=1)
    b_out = jnp.concatenate([params["b_ln"], params["b_att"]], axis=1)
    weights = [w_emb, b_emb, w_a, b_a, w_x, b_x, w_h1, b_h1, w_out, b_out]

    def const_spec(arr):
        return pl.BlockSpec(arr.shape, lambda b: (0, 0))

    in_specs = [
        pl.BlockSpec((G * N, F), lambda b: (b, 0)),     # node features (flattened)
        pl.BlockSpec((G, N, N), lambda b: (b, 0, 0)),   # adjacency (per graph)
        pl.BlockSpec((G * N, 1), lambda b: (b, 0)),     # mask (flattened)
    ] + [const_spec(w) for w in weights]

    kernel = functools.partial(_rggnn_kernel,
                               num_gnn_layers=num_gnn_layers,
                               alpha_weight=alpha_weight,
                               G=G, N=N, H=H)

    out = pl.pallas_call(
        kernel,
        out_shape=jax.ShapeDtypeStruct((B_pad, H), jnp.float32),
        grid_spec=pltpu.PrefetchScalarGridSpec(
            num_scalar_prefetch=0,
            grid=(num_steps,),
            in_specs=in_specs,
            out_specs=pl.BlockSpec((G, H), lambda b: (b, 0)),
        ),
        compiler_params=pltpu.CompilerParams(
            dimension_semantics=("parallel",)),
    )(x_flat, adj, m_flat, *weights)
    return out[:B]


def _rggnn_reference(inputs, adj, mask, params, *, num_gnn_layers, alpha_weight):
    """Pure-JAX reference matching the PyTorch forward (batched)."""
    def lin(v, w, b):
        return jnp.einsum("bnf,fh->bnh", v, w) + b

    x = lin(inputs, params["w_emb"], params["b_emb"]) * mask
    for _ in range(num_gnn_layers):
        a = jnp.einsum("bij,bjh->bih", adj, x)
        z = jax.nn.sigmoid(lin(a, params["w_z0"], params["b_z0"]) +
                           lin(x, params["w_z1"], params["b_z1"]))
        r = jax.nn.sigmoid(lin(a, params["w_r0"], params["b_r0"]) +
                           lin(x, params["w_r1"], params["b_r1"]))
        h = jax.nn.relu(lin(a, params["w_h0"], params["b_h0"]) +
                        lin(r * x, params["w_h1"], params["b_h1"]))
        g = h * z + x * (1.0 - z)
        x = alpha_weight * x + g * mask
    soft = jax.nn.sigmoid(jnp.einsum("bnh,ho->bno", x, params["w_att"]) + params["b_att"])
    xl = jax.nn.relu(lin(x, params["w_ln"], params["b_ln"]))
    xo = soft * xl * mask
    return jnp.sum(xo, axis=1) * jnp.max(xo, axis=1)


def _init_params(key, feature_dim, hidden):
    """Deterministic parameter init. Linear weights stored transposed: (in, out)."""
    ks = jax.random.split(key, 10)
    def w(k, i, o):
        return jax.random.normal(k, (i, o), jnp.float32) * 0.1
    def b(o):
        return jnp.zeros((1, o), jnp.float32)
    return {
        "w_emb": w(ks[0], feature_dim, hidden), "b_emb": b(hidden),
        "w_z0": w(ks[1], hidden, hidden), "b_z0": b(hidden),
        "w_z1": w(ks[2], hidden, hidden), "b_z1": b(hidden),
        "w_r0": w(ks[3], hidden, hidden), "b_r0": b(hidden),
        "w_r1": w(ks[4], hidden, hidden), "b_r1": b(hidden),
        "w_h0": w(ks[5], hidden, hidden), "b_h0": b(hidden),
        "w_h1": w(ks[6], hidden, hidden), "b_h1": b(hidden),
        "w_att": w(ks[7], hidden, 1), "b_att": jnp.zeros((1, 1), jnp.float32),
        "w_ln": w(ks[8], hidden, hidden), "b_ln": b(hidden),
    }


if __name__ == "__main__":
    key = jax.random.PRNGKey(0)
    B, N, F, H = 32, 16, 8, 32
    num_layers = 2
    alpha = 1.0

    k_x, k_a, k_m, k_p = jax.random.split(key, 4)
    inputs = jax.random.normal(k_x, (B, N, F), jnp.float32)
    adj = jax.random.uniform(k_a, (B, N, N), jnp.float32)
    # binary node mask, shape (B, N, 1)
    mask = (jax.random.uniform(k_m, (B, N, 1)) > 0.25).astype(jnp.float32)
    params = _init_params(k_p, F, H)

    out = rggnn_forward(inputs, adj, mask, params,
                        num_gnn_layers=num_layers, alpha_weight=alpha,
                        graphs_per_step=16)
    out = jax.block_until_ready(out)

    ref = _rggnn_reference(inputs, adj, mask, params,
                           num_gnn_layers=num_layers, alpha_weight=alpha)
    assert out.shape == (B, H)
    assert jnp.allclose(out, ref, atol=1e-4, rtol=1e-4), "mismatch vs reference"

    print("KERNEL_OK")
</pallas_src>

<mosaic_0001>
module attributes {stable_mosaic.version = 11 : i64} {
  func.func @_rggnn_kernel(%arg0: i32, %arg1: memref<256x8xf32, #tpu.memory_space<vmem>>, %arg2: memref<16x16x16xf32, #tpu.memory_space<vmem>>, %arg3: memref<256x1xf32, #tpu.memory_space<vmem>>, %arg4: memref<8x32xf32, #tpu.memory_space<vmem>>, %arg5: memref<1x32xf32, #tpu.memory_space<vmem>>, %arg6: memref<32x96xf32, #tpu.memory_space<vmem>>, %arg7: memref<1x96xf32, #tpu.memory_space<vmem>>, %arg8: memref<32x64xf32, #tpu.memory_space<vmem>>, %arg9: memref<1x64xf32, #tpu.memory_space<vmem>>, %arg10: memref<32x32xf32, #tpu.memory_space<vmem>>, %arg11: memref<1x32xf32, #tpu.memory_space<vmem>>, %arg12: memref<32x33xf32, #tpu.memory_space<vmem>>, %arg13: memref<1x33xf32, #tpu.memory_space<vmem>>, %arg14: memref<16x32xf32, #tpu.memory_space<vmem>>) attributes {dimension_semantics = [#tpu.dimension_semantics<parallel>], iteration_bounds = array<i64: 2>, scalar_prefetch = 0 : i64, scratch_operands = 0 : i64, tpu.core_type = #tpu.core_type<tc>, window_params = [{transform_indices = @transform_0, window_bounds = array<i64: 256, 8>}, {transform_indices = @transform_1, window_bounds = array<i64: 16, 16, 16>}, {transform_indices = @transform_2, window_bounds = array<i64: 256, 1>}, {pipeline_mode = #tpu.pipeline_mode<synchronous>, transform_indices = @transform_3, window_bounds = array<i64: 8, 32>}, {pipeline_mode = #tpu.pipeline_mode<synchronous>, transform_indices = @transform_4, window_bounds = array<i64: 1, 32>}, {pipeline_mode = #tpu.pipeline_mode<synchronous>, transform_indices = @transform_5, window_bounds = array<i64: 32, 96>}, {pipeline_mode = #tpu.pipeline_mode<synchronous>, transform_indices = @transform_6, window_bounds = array<i64: 1, 96>}, {pipeline_mode = #tpu.pipeline_mode<synchronous>, transform_indices = @transform_7, window_bounds = array<i64: 32, 64>}, {pipeline_mode = #tpu.pipeline_mode<synchronous>, transform_indices = @transform_8, window_bounds = array<i64: 1, 64>}, {pipeline_mode = #tpu.pipeline_mode<synchronous>, transform_indices = @transform_9, window_bounds = array<i64: 32, 32>}, {pipeline_mode = #tpu.pipeline_mode<synchronous>, transform_indices = @transform_10, window_bounds = array<i64: 1, 32>}, {pipeline_mode = #tpu.pipeline_mode<synchronous>, transform_indices = @transform_11, window_bounds = array<i64: 32, 33>}, {pipeline_mode = #tpu.pipeline_mode<synchronous>, transform_indices = @transform_12, window_bounds = array<i64: 1, 33>}, {transform_indices = @transform_13, window_bounds = array<i64: 16, 32>}]} {
    %c0 = arith.constant 0 : index
    %c0_0 = arith.constant 0 : index
    %0 = vector.load %arg3[%c0, %c0_0] : memref<256x1xf32, #tpu.memory_space<vmem>>, vector<256x1xf32>
    %c0_1 = arith.constant 0 : index
    %c0_2 = arith.constant 0 : index
    %c0_3 = arith.constant 0 : index
    %1 = vector.load %arg2[%c0_1, %c0_2, %c0_3] : memref<16x16x16xf32, #tpu.memory_space<vmem>>, vector<16x16x16xf32>
    %c0_4 = arith.constant 0 : index
    %c0_5 = arith.constant 0 : index
    %2 = vector.load %arg1[%c0_4, %c0_5] : memref<256x8xf32, #tpu.memory_space<vmem>>, vector<256x8xf32>
    %c0_6 = arith.constant 0 : index
    %c0_7 = arith.constant 0 : index
    %3 = vector.load %arg4[%c0_6, %c0_7] : memref<8x32xf32, #tpu.memory_space<vmem>>, vector<8x32xf32>
    %cst = arith.constant dense<0.000000e+00> : vector<256x32xf32>
    %4 = tpu.matmul %2, %3, %cst {dimension_numbers = #tpu.dot_dimension_numbers<[1], [0], [0], [1], [0, 0, 1, 1], [], []>} : vector<256x8xf32>, vector<8x32xf32>, vector<256x32xf32> -> vector<256x32xf32>
    %c0_8 = arith.constant 0 : index
    %c0_9 = arith.constant 0 : index
    %5 = vector.load %arg5[%c0_8, %c0_9] : memref<1x32xf32, #tpu.memory_space<vmem>>, vector<1x32xf32>
    %6 = vector.broadcast %5 : vector<1x32xf32> to vector<256x32xf32>
    %7 = arith.addf %4, %6 : vector<256x32xf32>
    %8 = vector.broadcast %0 : vector<256x1xf32> to vector<256x32xf32>
    %9 = arith.mulf %7, %8 : vector<256x32xf32>
    %c0_10 = arith.constant 0 : index
    %c0_11 = arith.constant 0 : index
    %10 = vector.load %arg6[%c0_10, %c0_11] : memref<32x96xf32, #tpu.memory_space<vmem>>, vector<32x96xf32>
    %c0_12 = arith.constant 0 : index
    %c0_13 = arith.constant 0 : index
    %11 = vector.load %arg7[%c0_12, %c0_13] : memref<1x96xf32, #tpu.memory_space<vmem>>, vector<1x96xf32>
    %c0_14 = arith.constant 0 : index
    %c0_15 = arith.constant 0 : index
    %12 = vector.load %arg8[%c0_14, %c0_15] : memref<32x64xf32, #tpu.memory_space<vmem>>, vector<32x64xf32>
    %c0_16 = arith.constant 0 : index
    %c0_17 = arith.constant 0 : index
    %13 = vector.load %arg9[%c0_16, %c0_17] : memref<1x64xf32, #tpu.memory_space<vmem>>, vector<1x64xf32>
    %c0_18 = arith.constant 0 : index
    %c0_19 = arith.constant 0 : index
    %14 = vector.load %arg10[%c0_18, %c0_19] : memref<32x32xf32, #tpu.memory_space<vmem>>, vector<32x32xf32>
    %c0_20 = arith.constant 0 : index
    %c0_21 = arith.constant 0 : index
    %15 = vector.load %arg11[%c0_20, %c0_21] : memref<1x32xf32, #tpu.memory_space<vmem>>, vector<1x32xf32>
    %16 = vector.shape_cast %9 : vector<256x32xf32> to vector<16x16x32xf32>
    "tpu.trace_start"() <{level = 10 : i32, message = "gij,gjh->gih"}> : () -> ()
    %cst_22 = arith.constant dense<0.000000e+00> : vector<16x16x32xf32>
    %17 = tpu.matmul %1, %16, %cst_22 {dimension_numbers = #tpu.dot_dimension_numbers<[2], [1], [1], [2], [0, 0, 0, 1, 1, 2], [0], [0]>} : vector<16x16x16xf32>, vector<16x16x32xf32>, vector<16x16x32xf32> -> vector<16x16x32xf32>
    "tpu.trace_stop"() : () -> ()
    %18 = vector.shape_cast %17 : vector<16x16x32xf32> to vector<256x32xf32>
    %cst_23 = arith.constant dense<0.000000e+00> : vector<256x96xf32>
    %19 = tpu.matmul %18, %10, %cst_23 {dimension_numbers = #tpu.dot_dimension_numbers<[1], [0], [0], [1], [0, 0, 1, 1], [], []>} : vector<256x32xf32>, vector<32x96xf32>, vector<256x96xf32> -> vector<256x96xf32>
    %20 = vector.broadcast %11 : vector<1x96xf32> to vector<256x96xf32>
    %21 = arith.addf %19, %20 : vector<256x96xf32>
    %cst_24 = arith.constant dense<0.000000e+00> : vector<256x64xf32>
    %22 = tpu.matmul %9, %12, %cst_24 {dimension_numbers = #tpu.dot_dimension_numbers<[1], [0], [0], [1], [0, 0, 1, 1], [], []>} : vector<256x32xf32>, vector<32x64xf32>, vector<256x64xf32> -> vector<256x64xf32>
    %23 = vector.broadcast %13 : vector<1x64xf32> to vector<256x64xf32>
    %24 = arith.addf %22, %23 : vector<256x64xf32>
    %25 = vector.extract_strided_slice %21 {offsets = [0, 0], sizes = [256, 32], strides = [1, 1]} : vector<256x96xf32> to vector<256x32xf32>
    %26 = vector.extract_strided_slice %24 {offsets = [0, 0], sizes = [256, 32], strides = [1, 1]} : vector<256x64xf32> to vector<256x32xf32>
    %27 = arith.addf %25, %26 : vector<256x32xf32>
    %28 = arith.negf %27 : vector<256x32xf32>
    %29 = math.exp %28 : vector<256x32xf32>
    %cst_25 = arith.constant 1.000000e+00 : f32
    %30 = vector.broadcast %cst_25 : f32 to vector<256x32xf32>
    %31 = arith.addf %30, %29 : vector<256x32xf32>
    %32 = arith.divf %30, %31 : vector<256x32xf32>
    %33 = vector.extract_strided_slice %21 {offsets = [0, 32], sizes = [256, 32], strides = [1, 1]} : vector<256x96xf32> to vector<256x32xf32>
    %34 = vector.extract_strided_slice %24 {offsets = [0, 32], sizes = [256, 32], strides = [1, 1]} : vector<256x64xf32> to vector<256x32xf32>
    %35 = arith.addf %33, %34 : vector<256x32xf32>
    %36 = arith.negf %35 : vector<256x32xf32>
    %37 = math.exp %36 : vector<256x32xf32>
    %cst_26 = arith.constant 1.000000e+00 : f32
    %38 = vector.broadcast %cst_26 : f32 to vector<256x32xf32>
    %39 = arith.addf %38, %37 : vector<256x32xf32>
    %40 = arith.divf %38, %39 : vector<256x32xf32>
    %41 = vector.extract_strided_slice %21 {offsets = [0, 64], sizes = [256, 32], strides = [1, 1]} : vector<256x96xf32> to vector<256x32xf32>
    %42 = arith.mulf %40, %9 : vector<256x32xf32>
    %cst_27 = arith.constant dense<0.000000e+00> : vector<256x32xf32>
    %43 = tpu.matmul %42, %14, %cst_27 {dimension_numbers = #tpu.dot_dimension_numbers<[1], [0], [0], [1], [0, 0, 1, 1], [], []>} : vector<256x32xf32>, vector<32x32xf32>, vector<256x32xf32> -> vector<256x32xf32>
    %44 = arith.addf %41, %43 : vector<256x32xf32>
    %45 = vector.broadcast %15 : vector<1x32xf32> to vector<256x32xf32>
    %46 = arith.addf %44, %45 : vector<256x32xf32>
    %cst_28 = arith.constant 0.000000e+00 : f32
    %47 = vector.broadcast %cst_28 : f32 to vector<256x32xf32>
    %48 = arith.maximumf %46, %47 : vector<256x32xf32>
    %49 = arith.mulf %48, %32 : vector<256x32xf32>
    %cst_29 = arith.constant 1.000000e+00 : f32
    %50 = vector.broadcast %cst_29 : f32 to vector<256x32xf32>
    %51 = arith.subf %50, %32 : vector<256x32xf32>
    %52 = arith.mulf %9, %51 : vector<256x32xf32>
    %53 = arith.addf %49, %52 : vector<256x32xf32>
    %cst_30 = arith.constant 1.000000e+00 : f32
    %54 = vector.broadcast %cst_30 : f32 to vector<256x32xf32>
    %55 = arith.mulf %54, %9 : vector<256x32xf32>
    %56 = vector.broadcast %0 : vector<256x1xf32> to vector<256x32xf32>
    %57 = arith.mulf %53, %56 : vector<256x32xf32>
    %58 = arith.addf %55, %57 : vector<256x32xf32>
    %59 = vector.shape_cast %58 : vector<256x32xf32> to vector<16x16x32xf32>
    "tpu.trace_start"() <{level = 10 : i32, message = "gij,gjh->gih"}> : () -> ()
    %cst_31 = arith.constant dense<0.000000e+00> : vector<16x16x32xf32>
    %60 = tpu.matmul %1, %59, %cst_31 {dimension_numbers = #tpu.dot_dimension_numbers<[2], [1], [1], [2], [0, 0, 0, 1, 1, 2], [0], [0]>} : vector<16x16x16xf32>, vector<16x16x32xf32>, vector<16x16x32xf32> -> vector<16x16x32xf32>
    "tpu.trace_stop"() : () -> ()
    %61 = vector.shape_cast %60 : vector<16x16x32xf32> to vector<256x32xf32>
    %cst_32 = arith.constant dense<0.000000e+00> : vector<256x96xf32>
    %62 = tpu.matmul %61, %10, %cst_32 {dimension_numbers = #tpu.dot_dimension_numbers<[1], [0], [0], [1], [0, 0, 1, 1], [], []>} : vector<256x32xf32>, vector<32x96xf32>, vector<256x96xf32> -> vector<256x96xf32>
    %63 = vector.broadcast %11 : vector<1x96xf32> to vector<256x96xf32>
    %64 = arith.addf %62, %63 : vector<256x96xf32>
    %cst_33 = arith.constant dense<0.000000e+00> : vector<256x64xf32>
    %65 = tpu.matmul %58, %12, %cst_33 {dimension_numbers = #tpu.dot_dimension_numbers<[1], [0], [0], [1], [0, 0, 1, 1], [], []>} : vector<256x32xf32>, vector<32x64xf32>, vector<256x64xf32> -> vector<256x64xf32>
    %66 = vector.broadcast %13 : vector<1x64xf32> to vector<256x64xf32>
    %67 = arith.addf %65, %66 : vector<256x64xf32>
    %68 = vector.extract_strided_slice %64 {offsets = [0, 0], sizes = [256, 32], strides = [1, 1]} : vector<256x96xf32> to vector<256x32xf32>
    %69 = vector.extract_strided_slice %67 {offsets = [0, 0], sizes = [256, 32], strides = [1, 1]} : vector<256x64xf32> to vector<256x32xf32>
    %70 = arith.addf %68, %69 : vector<256x32xf32>
    %71 = arith.negf %70 : vector<256x32xf32>
    %72 = math.exp %71 : vector<256x32xf32>
    %cst_34 = arith.constant 1.000000e+00 : f32
    %73 = vector.broadcast %cst_34 : f32 to vector<256x32xf32>
    %74 = arith.addf %73, %72 : vector<256x32xf32>
    %75 = arith.divf %73, %74 : vector<256x32xf32>
    %76 = vector.extract_strided_slice %64 {offsets = [0, 32], sizes = [256, 32], strides = [1, 1]} : vector<256x96xf32> to vector<256x32xf32>
    %77 = vector.extract_strided_slice %67 {offsets = [0, 32], sizes = [256, 32], strides = [1, 1]} : vector<256x64xf32> to vector<256x32xf32>
    %78 = arith.addf %76, %77 : vector<256x32xf32>
    %79 = arith.negf %78 : vector<256x32xf32>
    %80 = math.exp %79 : vector<256x32xf32>
    %cst_35 = arith.constant 1.000000e+00 : f32
    %81 = vector.broadcast %cst_35 : f32 to vector<256x32xf32>
    %82 = arith.addf %81, %80 : vector<256x32xf32>
    %83 = arith.divf %81, %82 : vector<256x32xf32>
    %84 = vector.extract_strided_slice %64 {offsets = [0, 64], sizes = [256, 32], strides = [1, 1]} : vector<256x96xf32> to vector<256x32xf32>
    %85 = arith.mulf %83, %58 : vector<256x32xf32>
    %cst_36 = arith.constant dense<0.000000e+00> : vector<256x32xf32>
    %86 = tpu.matmul %85, %14, %cst_36 {dimension_numbers = #tpu.dot_dimension_numbers<[1], [0], [0], [1], [0, 0, 1, 1], [], []>} : vector<256x32xf32>, vector<32x32xf32>, vector<256x32xf32> -> vector<256x32xf32>
    %87 = arith.addf %84, %86 : vector<256x32xf32>
    %88 = vector.broadcast %15 : vector<1x32xf32> to vector<256x32xf32>
    %89 = arith.addf %87, %88 : vector<256x32xf32>
    %cst_37 = arith.constant 0.000000e+00 : f32
    %90 = vector.broadcast %cst_37 : f32 to vector<256x32xf32>
    %91 = arith.maximumf %89, %90 : vector<256x32xf32>
    %92 = arith.mulf %91, %75 : vector<256x32xf32>
    %cst_38 = arith.constant 1.000000e+00 : f32
    %93 = vector.broadcast %cst_38 : f32 to vector<256x32xf32>
    %94 = arith.subf %93, %75 : vector<256x32xf32>
    %95 = arith.mulf %58, %94 : vector<256x32xf32>
    %96 = arith.addf %92, %95 : vector<256x32xf32>
    %cst_39 = arith.constant 1.000000e+00 : f32
    %97 = vector.broadcast %cst_39 : f32 to vector<256x32xf32>
    %98 = arith.mulf %97, %58 : vector<256x32xf32>
    %99 = vector.broadcast %0 : vector<256x1xf32> to vector<256x32xf32>
    %100 = arith.mulf %96, %99 : vector<256x32xf32>
    %101 = arith.addf %98, %100 : vector<256x32xf32>
    %c0_40 = arith.constant 0 : index
    %c0_41 = arith.constant 0 : index
    %102 = vector.load %arg12[%c0_40, %c0_41] : memref<32x33xf32, #tpu.memory_space<vmem>>, vector<32x33xf32>
    %cst_42 = arith.constant dense<0.000000e+00> : vector<256x33xf32>
    %103 = tpu.matmul %101, %102, %cst_42 {dimension_numbers = #tpu.dot_dimension_numbers<[1], [0], [0], [1], [0, 0, 1, 1], [], []>} : vector<256x32xf32>, vector<32x33xf32>, vector<256x33xf32> -> vector<256x33xf32>
    %c0_43 = arith.constant 0 : index
    %c0_44 = arith.constant 0 : index
    %104 = vector.load %arg13[%c0_43, %c0_44] : memref<1x33xf32, #tpu.memory_space<vmem>>, vector<1x33xf32>
    %105 = vector.broadcast %104 : vector<1x33xf32> to vector<256x33xf32>
    %106 = arith.addf %103, %105 : vector<256x33xf32>
    %107 = vector.extract_strided_slice %106 {offsets = [0, 0], sizes = [256, 32], strides = [1, 1]} : vector<256x33xf32> to vector<256x32xf32>
    %cst_45 = arith.constant 0.000000e+00 : f32
    %108 = vector.broadcast %cst_45 : f32 to vector<256x32xf32>
    %109 = arith.maximumf %107, %108 : vector<256x32xf32>
    %110 = vector.extract_strided_slice %106 {offsets = [0, 32], sizes = [256, 1], strides = [1, 1]} : vector<256x33xf32> to vector<256x1xf32>
    %111 = arith.negf %110 : vector<256x1xf32>
    %112 = math.exp %111 : vector<256x1xf32>
    %cst_46 = arith.constant 1.000000e+00 : f32
    %113 = vector.broadcast %cst_46 : f32 to vector<256x1xf32>
    %114 = arith.addf %113, %112 : vector<256x1xf32>
    %115 = arith.divf %113, %114 : vector<256x1xf32>
    %116 = vector.broadcast %115 : vector<256x1xf32> to vector<256x32xf32>
    %117 = arith.mulf %116, %109 : vector<256x32xf32>
    %118 = vector.broadcast %0 : vector<256x1xf32> to vector<256x32xf32>
    %119 = arith.mulf %117, %118 : vector<256x32xf32>
    %120 = vector.shape_cast %119 : vector<256x32xf32> to vector<16x16x32xf32>
    %cst_47 = arith.constant dense<0.000000e+00> : vector<16x32xf32>
    %121 = vector.multi_reduction <add>, %120, %cst_47 [1] : vector<16x16x32xf32> to vector<16x32xf32>
    %cst_48 = arith.constant dense<0xFF800000> : vector<16x32xf32>
    %122 = vector.multi_reduction <maximumf>, %120, %cst_48 [1] : vector<16x16x32xf32> to vector<16x32xf32>
    %123 = arith.mulf %121, %122 : vector<16x32xf32>
    %c0_49 = arith.constant 0 : index
    %c0_50 = arith.constant 0 : index
    %124 = vector.load %arg14[%c0_49, %c0_50] : memref<16x32xf32, #tpu.memory_space<vmem>>, vector<16x32xf32>
    tpu.vector_store %arg14[%c0_49, %c0_50], %123 {strides = array<i32>} : memref<16x32xf32, #tpu.memory_space<vmem>>, vector<16x32xf32>,
    return
  }
  func.func @transform_0(%arg0: i32) -> (i32, i32) {
    %c0_i32 = arith.constant 0 : i32
    %c0_i32_0 = arith.constant 0 : i32
    return %arg0, %c0_i32 : i32, i32
  }
  func.func @transform_1(%arg0: i32) -> (i32, i32, i32) {
    %c0_i32 = arith.constant 0 : i32
    %c0_i32_0 = arith.constant 0 : i32
    %c0_i32_1 = arith.constant 0 : i32
    return %arg0, %c0_i32, %c0_i32_0 : i32, i32, i32
  }
  func.func @transform_2(%arg0: i32) -> (i32, i32) {
    %c0_i32 = arith.constant 0 : i32
    %c0_i32_0 = arith.constant 0 : i32
    return %arg0, %c0_i32 : i32, i32
  }
  func.func @transform_3(%arg0: i32) -> (i32, i32) {
    %c0_i32 = arith.constant 0 : i32
    %c0_i32_0 = arith.constant 0 : i32
    %c0_i32_1 = arith.constant 0 : i32
    return %c0_i32, %c0_i32_0 : i32, i32
  }
  func.func @transform_4(%arg0: i32) -> (i32, i32) {
    %c0_i32 = arith.constant 0 : i32
    %c0_i32_0 = arith.constant 0 : i32
    %c0_i32_1 = arith.constant 0 : i32
    return %c0_i32, %c0_i32_0 : i32, i32
  }
  func.func @transform_5(%arg0: i32) -> (i32, i32) {
    %c0_i32 = arith.constant 0 : i32
    %c0_i32_0 = arith.constant 0 : i32
    %c0_i32_1 = arith.constant 0 : i32
    return %c0_i32, %c0_i32_0 : i32, i32
  }
  func.func @transform_6(%arg0: i32) -> (i32, i32) {
    %c0_i32 = arith.constant 0 : i32
    %c0_i32_0 = arith.constant 0 : i32
    %c0_i32_1 = arith.constant 0 : i32
    return %c0_i32, %c0_i32_0 : i32, i32
  }
  func.func @transform_7(%arg0: i32) -> (i32, i32) {
    %c0_i32 = arith.constant 0 : i32
    %c0_i32_0 = arith.constant 0 : i32
    %c0_i32_1 = arith.constant 0 : i32
    return %c0_i32, %c0_i32_0 : i32, i32
  }
  func.func @transform_8(%arg0: i32) -> (i32, i32) {
    %c0_i32 = arith.constant 0 : i32
    %c0_i32_0 = arith.constant 0 : i32
    %c0_i32_1 = arith.constant 0 : i32
    return %c0_i32, %c0_i32_0 : i32, i32
  }
  func.func @transform_9(%arg0: i32) -> (i32, i32) {
    %c0_i32 = arith.constant 0 : i32
    %c0_i32_0 = arith.constant 0 : i32
    %c0_i32_1 = arith.constant 0 : i32
    return %c0_i32, %c0_i32_0 : i32, i32
  }
  func.func @transform_10(%arg0: i32) -> (i32, i32) {
    %c0_i32 = arith.constant 0 : i32
    %c0_i32_0 = arith.constant 0 : i32
    %c0_i32_1 = arith.constant 0 : i32
    return %c0_i32, %c0_i32_0 : i32, i32
  }
  func.func @transform_11(%arg0: i32) -> (i32, i32) {
    %c0_i32 = arith.constant 0 : i32
    %c0_i32_0 = arith.constant 0 : i32
    %c0_i32_1 = arith.constant 0 : i32
    return %c0_i32, %c0_i32_0 : i32, i32
  }
  func.func @transform_12(%arg0: i32) -> (i32, i32) {
    %c0_i32 = arith.constant 0 : i32
    %c0_i32_0 = arith.constant 0 : i32
    %c0_i32_1 = arith.constant 0 : i32
    return %c0_i32, %c0_i32_0 : i32, i32
  }
  func.func @transform_13(%arg0: i32) -> (i32, i32) {
    %c0_i32 = arith.constant 0 : i32
    %c0_i32_0 = arith.constant 0 : i32
    return %arg0, %c0_i32 : i32, i32
  }
}

</mosaic_0001>

<llo_original>
// kernel: tpu_custom_call.1
$region0: #{tpu_custom_call.1}
  #allocation0 [shape = 'u32[]', space=smem, size = 0x4, offset = 0x4, fixed_abs, tag = 'smem constant byte address 0x4 - core index']
  #allocation1 [shape = 'u32[72,128]{1,0:T(1,128)}', space=vmem, size = 0x9000, scoped, tag = 'internal scratch']
  %s0 = inlined_call_operand.vmem [shape: f32[512,8], index: 0, kind: input, shape index: {}]
  %s1 = inlined_call_operand.vmem [shape: f32[32,16,16], index: 1, kind: input, shape index: {}]
  %s2 = inlined_call_operand.vmem [shape: f32[512,1], index: 2, kind: input, shape index: {}]
  %s3 = inlined_call_operand.vmem [shape: f32[8,32], index: 3, kind: input, shape index: {}]
  %s4 = inlined_call_operand.vmem [shape: f32[1,32], index: 4, kind: input, shape index: {}]
  %s5 = inlined_call_operand.vmem [shape: f32[32,96], index: 5, kind: input, shape index: {}]
  %s6 = inlined_call_operand.vmem [shape: f32[1,96], index: 6, kind: input, shape index: {}]
  %s7 = inlined_call_operand.vmem [shape: f32[32,64], index: 7, kind: input, shape index: {}]
  %s8 = inlined_call_operand.vmem [shape: f32[1,64], index: 8, kind: input, shape index: {}]
  %s9 = inlined_call_operand.vmem [shape: f32[32,32], index: 9, kind: input, shape index: {}]
  %s10 = inlined_call_operand.vmem [shape: f32[1,32], index: 10, kind: input, shape index: {}]
  %s11 = inlined_call_operand.vmem [shape: f32[32,33], index: 11, kind: input, shape index: {}]
  %s12 = inlined_call_operand.vmem [shape: f32[1,33], index: 12, kind: input, shape index: {}]
  %s13 = inlined_call_operand.hbm [shape: f32[32,32], index: 13, kind: output, shape index: {}]
  %s14 = sld [smem:[#allocation0]]
  $region85: #{tpu_custom_call.1} parent=0
    _
  %s16 = ssub.s32 1, %s14
  %s17 = scalar_select 0, %s16, %s14
  $region1: #{tpu_custom_call.1} parent=0
    #allocation2 [shape = 'u8[16384]{0}', space=vmem, size = 0x4000, scoped, tag = 'output window, operand 0']
    #allocation3 [shape = 's32[2]{0}', space=sflag, size = 0x8, scoped, tag = 'scoped memory for tpu_custom_call.1']
    %18 = vsyncpa [#allocation3], 0
    %s19 = scalar_lea.sflag [#allocation3], 1
    %20 = vsyncpa %s19, 0
    loop: start=0, step=1, limit=4
    $region2: #{tpu_custom_call.1} parent=1 // loop_pre_header
      _
    $region3: #{tpu_custom_call.1} parent=1 // loop_header
      %s22 = sphi 0, %s26
      %p23 = scmp.ge.s32.totalorder %s22, 4
      %s32 = sphi 0, %s34
      %s35 = sphi 0, %s32
      %s36 = sphi 0, %s35
      %s52 = sphi 0, %s36
      %s58 = sphi 0, %s60
      %s61 = sphi 0, %s58
      %s62 = sphi 0, %s61
      %s78 = sphi 0, %s62
      %s84 = sphi 0, %s86
      %s87 = sphi 0, %s84
      %s88 = sphi 0, %s87
      %s104 = sphi 0, %s88
      %s108 = sphi 0, %s108
      %s110 = sphi 0, %s108
      %s111 = sphi 0, %s110
      %s125 = sphi 0, %s111
      %s129 = sphi 0, %s129
      %s131 = sphi 0, %s129
      %s132 = sphi 0, %s131
      %s146 = sphi 0, %s132
      %s150 = sphi 0, %s150
      %s152 = sphi 0, %s150
      %s153 = sphi 0, %s152
      %s167 = sphi 0, %s153
      %s171 = sphi 0, %s171
      %s173 = sphi 0, %s171
      %s174 = sphi 0, %s173
      %s188 = sphi 0, %s174
      %s192 = sphi 0, %s192
      %s194 = sphi 0, %s192
      %s195 = sphi 0, %s194
      %s209 = sphi 0, %s195
      %s213 = sphi 0, %s213
      %s215 = sphi 0, %s213
      %s216 = sphi 0, %s215
      %s230 = sphi 0, %s216
      %s234 = sphi 0, %s234
      %s236 = sphi 0, %s234
      %s237 = sphi 0, %s236
      %s251 = sphi 0, %s237
      %s255 = sphi 0, %s255
      %s257 = sphi 0, %s255
      %s258 = sphi 0, %s257
      %s272 = sphi 0, %s258
      %s276 = sphi 0, %s276
      %s278 = sphi 0, %s276
      %s279 = sphi 0, %s278
      %s293 = sphi 0, %s279
      %s297 = sphi 0, %s297
      %s299 = sphi 0, %s297
      %s300 = sphi 0, %s299
      %s314 = sphi 0, %s300
      %s320 = sphi 0, %s322
      %s323 = sphi 0, %s320
      %s324 = sphi 0, %s323
      %s340 = sphi 0, %s324
    $region4: #{tpu_custom_call.1} parent=1 // loop_header_branch
      %25 = sbr.rel (%p23) target = $region8
    $region5: #{tpu_custom_call.1} parent=1 // loop_body
      %s27 = ssub.s32 %s22, 1
      %s28 = ssub.s32 %s22, 2
      %s29 = sadd.s32 %s22, 1
      %s30 = ssub.s32 %s22, %s29
      %p31 = scmp.eq.s32.totalorder %s30, 0
      %s33 = sadd.s32 %s32, 1
      %s34 = scalar_select %p31, %s32, %s33
      %p37 = pneg %p31
      %p38 = scmp.eq.s32.totalorder %s22, 1
      %p39 = por %p37, %p38
      %p40 = scmp.ne.s32.totalorder %s32, %s35
      %p41 = scmp.eq.s32.totalorder %s22, 0
      %p42 = por %p40, %p41
      %p43 = scmp.ne.s32.totalorder %s32, %s35
      %p44 = scmp.eq.s32.totalorder %s27, 1
      %p45 = por %p43, %p44
      %p46 = scmp.ne.s32.totalorder %s35, %s36
      %p47 = scmp.eq.s32.totalorder %s27, 0
      %p48 = por %p46, %p47
      %p49 = scmp.ne.s32.totalorder %s35, %s36
      %p50 = scmp.eq.s32.totalorder %s28, 1
      %p51 = por %p49, %p50
      %p53 = scmp.ne.s32.totalorder %s36, %s52
      %p54 = scmp.eq.s32.totalorder %s28, 0
      %p55 = por %p53, %p54
      %s56 = ssub.s32 %s22, %s29
      %p57 = scmp.eq.s32.totalorder %s56, 0
      %s59 = sadd.s32 %s58, 1
      %s60 = scalar_select %p57, %s58, %s59
      %p63 = pneg %p57
      %p64 = scmp.eq.s32.totalorder %s22, 1
      %p65 = por %p63, %p64
      %p66 = scmp.ne.s32.totalorder %s58, %s61
      %p67 = scmp.eq.s32.totalorder %s22, 0
      %p68 = por %p66, %p67
      %p69 = scmp.ne.s32.totalorder %s58, %s61
      %p70 = scmp.eq.s32.totalorder %s27, 1
      %p71 = por %p69, %p70
      %p72 = scmp.ne.s32.totalorder %s61, %s62
      %p73 = scmp.eq.s32.totalorder %s27, 0
      %p74 = por %p72, %p73
      %p75 = scmp.ne.s32.totalorder %s61, %s62
      %p76 = scmp.eq.s32.totalorder %s28, 1
      %p77 = por %p75, %p76
      %p79 = scmp.ne.s32.totalorder %s62, %s78
      %p80 = scmp.eq.s32.totalorder %s28, 0
      %p81 = por %p79, %p80
      %s82 = ssub.s32 %s22, %s29
      %p83 = scmp.eq.s32.totalorder %s82, 0
      %s85 = sadd.s32 %s84, 1
      %s86 = scalar_select %p83, %s84, %s85
      %p89 = pneg %p83
      %p90 = scmp.eq.s32.totalorder %s22, 1
      %p91 = por %p89, %p90
      %p92 = scmp.ne.s32.totalorder %s84, %s87
      %p93 = scmp.eq.s32.totalorder %s22, 0
      %p94 = por %p92, %p93
      %p95 = scmp.ne.s32.totalorder %s84, %s87
      %p96 = scmp.eq.s32.totalorder %s27, 1
      %p97 = por %p95, %p96
      %p98 = scmp.ne.s32.totalorder %s87, %s88
      %p99 = scmp.eq.s32.totalorder %s27, 0
      %p100 = por %p98, %p99
      %p101 = scmp.ne.s32.totalorder %s87, %s88
      %p102 = scmp.eq.s32.totalorder %s28, 1
      %p103 = por %p101, %p102
      %p105 = scmp.ne.s32.totalorder %s88, %s104
      %p106 = scmp.eq.s32.totalorder %s28, 0
      %p107 = por %p105, %p106
      %s109 = sadd.s32 %s108, 1
      %p112 = scmp.eq.s32.totalorder %s22, 1
      %p113 = scmp.ne.s32.totalorder %s108, %s110
      %p114 = scmp.eq.s32.totalorder %s22, 0
      %p115 = por %p113, %p114
      %p116 = scmp.ne.s32.totalorder %s108, %s110
      %p117 = scmp.eq.s32.totalorder %s27, 1
      %p118 = por %p116, %p117
      %p119 = scmp.ne.s32.totalorder %s110, %s111
      %p120 = scmp.eq.s32.totalorder %s27, 0
      %p121 = por %p119, %p120
      %p122 = scmp.ne.s32.totalorder %s110, %s111
      %p123 = scmp.eq.s32.totalorder %s28, 1
      %p124 = por %p122, %p123
      %p126 = scmp.ne.s32.totalorder %s111, %s125
      %p127 = scmp.eq.s32.totalorder %s28, 0
      %p128 = por %p126, %p127
      %s130 = sadd.s32 %s129, 1
      %p133 = scmp.eq.s32.totalorder %s22, 1
      %p134 = scmp.ne.s32.totalorder %s129, %s131
      %p135 = scmp.eq.s32.totalorder %s22, 0
      %p136 = por %p134, %p135
      %p137 = scmp.ne.s32.totalorder %s129, %s131
      %p138 = scmp.eq.s32.totalorder %s27, 1
      %p139 = por %p137, %p138
      %p140 = scmp.ne.s32.totalorder %s131, %s132
      %p141 = scmp.eq.s32.totalorder %s27, 0
      %p142 = por %p140, %p141
      %p143 = scmp.ne.s32.totalorder %s131, %s132
      %p144 = scmp.eq.s32.totalorder %s28, 1
      %p145 = por %p143, %p144
      %p147 = scmp.ne.s32.totalorder %s132, %s146
      %p148 = scmp.eq.s32.totalorder %s28, 0
      %p149 = por %p147, %p148
      %s151 = sadd.s32 %s150, 1
      %p154 = scmp.eq.s32.totalorder %s22, 1
      %p155 = scmp.ne.s32.totalorder %s150, %s152
      %p156 = scmp.eq.s32.totalorder %s22, 0
      %p157 = por %p155, %p156
      %p158 = scmp.ne.s32.totalorder %s150, %s152
      %p159 = scmp.eq.s32.totalorder %s27, 1
      %p160 = por %p158, %p159
      %p161 = scmp.ne.s32.totalorder %s152, %s153
      %p162 = scmp.eq.s32.totalorder %s27, 0
      %p163 = por %p161, %p162
      %p164 = scmp.ne.s32.totalorder %s152, %s153
      %p165 = scmp.eq.s32.totalorder %s28, 1
      %p166 = por %p164, %p165
      %p168 = scmp.ne.s32.totalorder %s153, %s167
      %p169 = scmp.eq.s32.totalorder %s28, 0
      %p170 = por %p168, %p169
      %s172 = sadd.s32 %s171, 1
      %p175 = scmp.eq.s32.totalorder %s22, 1
      %p176 = scmp.ne.s32.totalorder %s171, %s173
      %p177 = scmp.eq.s32.totalorder %s22, 0
      %p178 = por %p176, %p177
      %p179 = scmp.ne.s32.totalorder %s171, %s173
      %p180 = scmp.eq.s32.totalorder %s27, 1
      %p181 = por %p179, %p180
      %p182 = scmp.ne.s32.totalorder %s173, %s174
      %p183 = scmp.eq.s32.totalorder %s27, 0
      %p184 = por %p182, %p183
      %p185 = scmp.ne.s32.totalorder %s173, %s174
      %p186 = scmp.eq.s32.totalorder %s28, 1
      %p187 = por %p185, %p186
      %p189 = scmp.ne.s32.totalorder %s174, %s188
      %p190 = scmp.eq.s32.totalorder %s28, 0
      %p191 = por %p189, %p190
      %s193 = sadd.s32 %s192, 1
      %p196 = scmp.eq.s32.totalorder %s22, 1
      %p197 = scmp.ne.s32.totalorder %s192, %s194
      %p198 = scmp.eq.s32.totalorder %s22, 0
      %p199 = por %p197, %p198
      %p200 = scmp.ne.s32.totalorder %s192, %s194
      %p201 = scmp.eq.s32.totalorder %s27, 1
      %p202 = por %p200, %p201
      %p203 = scmp.ne.s32.totalorder %s194, %s195
      %p204 = scmp.eq.s32.totalorder %s27, 0
      %p205 = por %p203, %p204
      %p206 = scmp.ne.s32.totalorder %s194, %s195
      %p207 = scmp.eq.s32.totalorder %s28, 1
      %p208 = por %p206, %p207
      %p210 = scmp.ne.s32.totalorder %s195, %s209
      %p211 = scmp.eq.s32.totalorder %s28, 0
      %p212 = por %p210, %p211
      %s214 = sadd.s32 %s213, 1
      %p217 = scmp.eq.s32.totalorder %s22, 1
      %p218 = scmp.ne.s32.totalorder %s213, %s215
      %p219 = scmp.eq.s32.totalorder %s22, 0
      %p220 = por %p218, %p219
      %p221 = scmp.ne.s32.totalorder %s213, %s215
      %p222 = scmp.eq.s32.totalorder %s27, 1
      %p223 = por %p221, %p222
      %p224 = scmp.ne.s32.totalorder %s215, %s216
      %p225 = scmp.eq.s32.totalorder %s27, 0
      %p226 = por %p224, %p225
      %p227 = scmp.ne.s32.totalorder %s215, %s216
      %p228 = scmp.eq.s32.totalorder %s28, 1
      %p229 = por %p227, %p228
      %p231 = scmp.ne.s32.totalorder %s216, %s230
      %p232 = scmp.eq.s32.totalorder %s28, 0
      %p233 = por %p231, %p232
      %s235 = sadd.s32 %s234, 1
      %p238 = scmp.eq.s32.totalorder %s22, 1
      %p239 = scmp.ne.s32.totalorder %s234, %s236
      %p240 = scmp.eq.s32.totalorder %s22, 0
      %p241 = por %p239, %p240
      %p242 = scmp.ne.s32.totalorder %s234, %s236
      %p243 = scmp.eq.s32.totalorder %s27, 1
      %p244 = por %p242, %p243
      %p245 = scmp.ne.s32.totalorder %s236, %s237
      %p246 = scmp.eq.s32.totalorder %s27, 0
      %p247 = por %p245, %p246
      %p248 = scmp.ne.s32.totalorder %s236, %s237
      %p249 = scmp.eq.s32.totalorder %s28, 1
      %p250 = por %p248, %p249
      %p252 = scmp.ne.s32.totalorder %s237, %s251
      %p253 = scmp.eq.s32.totalorder %s28, 0
      %p254 = por %p252, %p253
      %s256 = sadd.s32 %s255, 1
      %p259 = scmp.eq.s32.totalorder %s22, 1
      %p260 = scmp.ne.s32.totalorder %s255, %s257
      %p261 = scmp.eq.s32.totalorder %s22, 0
      %p262 = por %p260, %p261
      %p263 = scmp.ne.s32.totalorder %s255, %s257
      %p264 = scmp.eq.s32.totalorder %s27, 1
      %p265 = por %p263, %p264
      %p266 = scmp.ne.s32.totalorder %s257, %s258
      %p267 = scmp.eq.s32.totalorder %s27, 0
      %p268 = por %p266, %p267
      %p269 = scmp.ne.s32.totalorder %s257, %s258
      %p270 = scmp.eq.s32.totalorder %s28, 1
      %p271 = por %p269, %p270
      %p273 = scmp.ne.s32.totalorder %s258, %s272
      %p274 = scmp.eq.s32.totalorder %s28, 0
      %p275 = por %p273, %p274
      %s277 = sadd.s32 %s276, 1
      %p280 = scmp.eq.s32.totalorder %s22, 1
      %p281 = scmp.ne.s32.totalorder %s276, %s278
      %p282 = scmp.eq.s32.totalorder %s22, 0
      %p283 = por %p281, %p282
      %p284 = scmp.ne.s32.totalorder %s276, %s278
      %p285 = scmp.eq.s32.totalorder %s27, 1
      %p286 = por %p284, %p285
      %p287 = scmp.ne.s32.totalorder %s278, %s279
      %p288 = scmp.eq.s32.totalorder %s27, 0
      %p289 = por %p287, %p288
      %p290 = scmp.ne.s32.totalorder %s278, %s279
      %p291 = scmp.eq.s32.totalorder %s28, 1
      %p292 = por %p290, %p291
      %p294 = scmp.ne.s32.totalorder %s279, %s293
      %p295 = scmp.eq.s32.totalorder %s28, 0
      %p296 = por %p294, %p295
      %s298 = sadd.s32 %s297, 1
      %p301 = scmp.eq.s32.totalorder %s22, 1
      %p302 = scmp.ne.s32.totalorder %s297, %s299
      %p303 = scmp.eq.s32.totalorder %s22, 0
      %p304 = por %p302, %p303
      %p305 = scmp.ne.s32.totalorder %s297, %s299
      %p306 = scmp.eq.s32.totalorder %s27, 1
      %p307 = por %p305, %p306
      %p308 = scmp.ne.s32.totalorder %s299, %s300
      %p309 = scmp.eq.s32.totalorder %s27, 0
      %p310 = por %p308, %p309
      %p311 = scmp.ne.s32.totalorder %s299, %s300
      %p312 = scmp.eq.s32.totalorder %s28, 1
      %p313 = por %p311, %p312
      %p315 = scmp.ne.s32.totalorder %s300, %s314
      %p316 = scmp.eq.s32.totalorder %s28, 0
      %p317 = por %p315, %p316
      %s318 = ssub.s32 %s22, %s29
      %p319 = scmp.eq.s32.totalorder %s318, 0
      %s321 = sadd.s32 %s320, 1
      %s322 = scalar_select %p319, %s320, %s321
      %p325 = pneg %p319
      %p326 = scmp.eq.s32.totalorder %s22, 1
      %p327 = por %p325, %p326
      %p328 = scmp.ne.s32.totalorder %s320, %s323
      %p329 = scmp.eq.s32.totalorder %s22, 0
      %p330 = por %p328, %p329
      %p331 = scmp.ne.s32.totalorder %s320, %s323
      %p332 = scmp.eq.s32.totalorder %s27, 1
      %p333 = por %p331, %p332
      %p334 = scmp.ne.s32.totalorder %s323, %s324
      %p335 = scmp.eq.s32.totalorder %s27, 0
      %p336 = por %p334, %p335
      %p337 = scmp.ne.s32.totalorder %s323, %s324
      %p338 = scmp.eq.s32.totalorder %s28, 1
      %p339 = por %p337, %p338
      %p341 = scmp.ne.s32.totalorder %s324, %s340
      %p342 = scmp.eq.s32.totalorder %s28, 0
      %p343 = por %p341, %p342
      %p344 = scmp.le.s32.totalorder 1, %s22
      %p345 = scmp.lt.s32.totalorder %s22, 3
      %p346 = pnand %p344, %p345
      %p347 = pneg %p346
      // Predicated region
      $region9: #{tpu_custom_call.1} parent=5 // pred_check
        _
      $region10: #{tpu_custom_call.1} parent=5 // pred_check_branch
        %349 = sbr.rel (%p346) target = $region12
      $region11: #{tpu_custom_call.1} parent=5 // pred_region
        %s350 = ssub.s32 %s22, 1
        // Predicated region
        $region13: #{tpu_custom_call.1} parent=11 // pred_check
          %p351 = pneg %p121
        $region14: #{tpu_custom_call.1} parent=11 // pred_check_branch
          %353 = sbr.rel (%p351) target = $region16
        $region15: #{tpu_custom_call.1} parent=11 // pred_region
          _
        $region16: #{tpu_custom_call.1} parent=11 // pred_fallthru
          _
        // Predicated region
        $region17: #{tpu_custom_call.1} parent=11 // pred_check
          %p354 = pneg %p142
        $region18: #{tpu_custom_call.1} parent=11 // pred_check_branch
          %356 = sbr.rel (%p354) target = $region20
        $region19: #{tpu_custom_call.1} parent=11 // pred_region
          _
        $region20: #{tpu_custom_call.1} parent=11 // pred_fallthru
          _
        // Predicated region
        $region21: #{tpu_custom_call.1} parent=11 // pred_check
          %p357 = pneg %p163
        $region22: #{tpu_custom_call.1} parent=11 // pred_check_branch
          %359 = sbr.rel (%p357) target = $region24
        $region23: #{tpu_custom_call.1} parent=11 // pred_region
          _
        $region24: #{tpu_custom_call.1} parent=11 // pred_fallthru
          _
        // Predicated region
        $region25: #{tpu_custom_call.1} parent=11 // pred_check
          %p360 = pneg %p184
        $region26: #{tpu_custom_call.1} parent=11 // pred_check_branch
          %362 = sbr.rel (%p360) target = $region28
        $region27: #{tpu_custom_call.1} parent=11 // pred_region
          _
        $region28: #{tpu_custom_call.1} parent=11 // pred_fallthru
          _
        // Predicated region
        $region29: #{tpu_custom_call.1} parent=11 // pred_check
          %p363 = pneg %p205
        $region30: #{tpu_custom_call.1} parent=11 // pred_check_branch
          %365 = sbr.rel (%p363) target = $region32
        $region31: #{tpu_custom_call.1} parent=11 // pred_region
          _
        $region32: #{tpu_custom_call.1} parent=11 // pred_fallthru
          _
        // Predicated region
        $region33: #{tpu_custom_call.1} parent=11 // pred_check
          %p366 = pneg %p226
        $region34: #{tpu_custom_call.1} parent=11 // pred_check_branch
          %368 = sbr.rel (%p366) target = $region36
        $region35: #{tpu_custom_call.1} parent=11 // pred_region
          _
        $region36: #{tpu_custom_call.1} parent=11 // pred_fallthru
          _
        // Predicated region
        $region37: #{tpu_custom_call.1} parent=11 // pred_check
          %p369 = pneg %p247
        $region38: #{tpu_custom_call.1} parent=11 // pred_check_branch
          %371 = sbr.rel (%p369) target = $region40
        $region39: #{tpu_custom_call.1} parent=11 // pred_region
          _
        $region40: #{tpu_custom_call.1} parent=11 // pred_fallthru
          _
        // Predicated region
        $region41: #{tpu_custom_call.1} parent=11 // pred_check
          %p372 = pneg %p268
        $region42: #{tpu_custom_call.1} parent=11 // pred_check_branch
          %374 = sbr.rel (%p372) target = $region44
        $region43: #{tpu_custom_call.1} parent=11 // pred_region
          _
        $region44: #{tpu_custom_call.1} parent=11 // pred_fallthru
          _
        // Predicated region
        $region45: #{tpu_custom_call.1} parent=11 // pred_check
          %p375 = pneg %p289
        $region46: #{tpu_custom_call.1} parent=11 // pred_check_branch
          %377 = sbr.rel (%p375) target = $region48
        $region47: #{tpu_custom_call.1} parent=11 // pred_region
          _
        $region48: #{tpu_custom_call.1} parent=11 // pred_fallthru
          _
        // Predicated region
        $region49: #{tpu_custom_call.1} parent=11 // pred_check
          %p378 = pneg %p310
        $region50: #{tpu_custom_call.1} parent=11 // pred_check_branch
          %380 = sbr.rel (%p378) target = $region52
        $region51: #{tpu_custom_call.1} parent=11 // pred_region
          _
        $region52: #{tpu_custom_call.1} parent=11 // pred_fallthru
          _
      $region12: #{tpu_custom_call.1} parent=5 // pred_fallthru
        _
      %p381 = scmp.lt.s32.totalorder %s22, 2
      // Predicated region
      $region53: #{tpu_custom_call.1} parent=5 // pred_check
        %p382 = pneg %p381
      $region54: #{tpu_custom_call.1} parent=5 // pred_check_branch
        %384 = sbr.rel (%p382) target = $region56
      $region55: #{tpu_custom_call.1} parent=5 // pred_region
        // Predicated region
        $region57: #{tpu_custom_call.1} parent=55 // pred_check
          %p385 = pneg %p42
        $region58: #{tpu_custom_call.1} parent=55 // pred_check_branch
          %387 = sbr.rel (%p385) target = $region60
        $region59: #{tpu_custom_call.1} parent=55 // pred_region
          %s388 = smul.u32 32, %s22
          %p389 = scmp.lt.s32.totalorder %s388, 63
          %s390 = scalar_select %p389, %s388, 63
          %s391 = smul.addr %s390, 8
          %s392 = scalar_lea.vmem %s0, %s391
          %s393 = smul.u32 32, %s22
        $region60: #{tpu_custom_call.1} parent=55 // pred_fallthru
          _
        // Predicated region
        $region61: #{tpu_custom_call.1} parent=55 // pred_check
          %p394 = pneg %p68
        $region62: #{tpu_custom_call.1} parent=55 // pred_check_branch
          %396 = sbr.rel (%p394) target = $region64
        $region63: #{tpu_custom_call.1} parent=55 // pred_region
          %s397 = smul.u32 16, %s22
          %p398 = scmp.lt.s32.totalorder %s397, 31
          %s399 = scalar_select %p398, %s397, 31
          %s400 = smul.addr %s399, 2
          %s401 = smul.addr %s400, 8
          %s402 = scalar_lea.vmem %s1, %s401
          %s403 = smul.u32 16, %s22
        $region64: #{tpu_custom_call.1} parent=55 // pred_fallthru
          _
        // Predicated region
        $region65: #{tpu_custom_call.1} parent=55 // pred_check
          %p404 = pneg %p94
        $region66: #{tpu_custom_call.1} parent=55 // pred_check_branch
          %406 = sbr.rel (%p404) target = $region68
        $region67: #{tpu_custom_call.1} parent=55 // pred_region
          %s407 = smul.u32 32, %s22
          %p408 = scmp.lt.s32.totalorder %s407, 63
          %s409 = scalar_select %p408, %s407, 63
          %s410 = smul.addr %s409, 8
          %s411 = scalar_lea.vmem %s2, %s410
          %s412 = smul.u32 32, %s22
        $region68: #{tpu_custom_call.1} parent=55 // pred_fallthru
          _
      $region56: #{tpu_custom_call.1} parent=5 // pred_fallthru
        _
      %p413 = scmp.le.s32.totalorder 1, %s22
      %p414 = scmp.lt.s32.totalorder %s22, 3
      %p415 = pnand %p413, %p414
      %p416 = pneg %p415
      // Predicated region
      $region69: #{tpu_custom_call.1} parent=5 // pred_check
        _
      $region70: #{tpu_custom_call.1} parent=5 // pred_check_branch
        %418 = sbr.rel (%p415) target = $region72
      $region71: #{tpu_custom_call.1} parent=5 // pred_region
        %s419 = ssub.s32 %s22, 1
        %s420 = smul.u32 32, %s27
        %p421 = scmp.lt.s32.totalorder %s420, 63
        %s422 = scalar_select %p421, %s420, 63
        %s423 = smul.addr %s422, 8
        %s424 = scalar_lea.vmem %s0, %s423
        %p425 = pneg %p48
        %p426 = pneg %p45
        %s427 = smul.u32 16, %s27
        %p428 = scmp.lt.s32.totalorder %s427, 31
        %s429 = scalar_select %p428, %s427, 31
        %s430 = smul.addr %s429, 2
        %s431 = smul.addr %s430, 8
        %s432 = scalar_lea.vmem %s1, %s431
        %p433 = pneg %p74
        %p434 = pneg %p71
        %s435 = smul.u32 32, %s27
        %p436 = scmp.lt.s32.totalorder %s435, 63
        %s437 = scalar_select %p436, %s435, 63
        %s438 = smul.addr %s437, 8
        %s439 = scalar_lea.vmem %s2, %s438
        %p440 = pneg %p100
        %p441 = pneg %p97
        %p442 = pneg %p121
        %p443 = pneg %p118
        %p444 = pneg %p142
        %p445 = pneg %p139
        %p446 = pneg %p163
        %p447 = pneg %p160
        %p448 = pneg %p184
        %p449 = pneg %p181
        %p450 = pneg %p205
        %p451 = pneg %p202
        %p452 = pneg %p226
        %p453 = pneg %p223
        %p454 = pneg %p247
        %p455 = pneg %p244
        %p456 = pneg %p268
        %p457 = pneg %p265
        %p458 = pneg %p289
        %p459 = pneg %p286
        %p460 = pneg %p310
        %p461 = pneg %p307
        %p462 = pneg %p336
        %p463 = pneg %p333
        %s464 = sand.u32 %s323, 1
        %s465 = scalar_lea.sflag [#allocation3], %s464
        %s466 = sand.u32 %s323, 1
        %s467 = smul.addr %s466, 16
        %s468 = scalar_lea.vmem [#allocation2], %s467
        %s469 = smul.u32 32, %s27
        %p470 = scmp.lt.s32.totalorder %s469, 63
        %s471 = scalar_select %p470, %s469, 63
        %s472 = smul.addr %s471, 8
        %s473 = scalar_lea.vmem %s0, %s472
        %s474 = smul.u32 32, %s27
        %s475 = smul.u32 16, %s27
        %p476 = scmp.lt.s32.totalorder %s475, 31
        %s477 = scalar_select %p476, %s475, 31
        %s478 = smul.addr %s477, 2
        %s479 = smul.addr %s478, 8
        %s480 = scalar_lea.vmem %s1, %s479
        %s481 = smul.u32 16, %s27
        %s482 = smul.u32 32, %s27
        %p483 = scmp.lt.s32.totalorder %s482, 63
        %s484 = scalar_select %p483, %s482, 63
        %s485 = smul.addr %s484, 8
        %s486 = scalar_lea.vmem %s2, %s485
        %s487 = smul.u32 32, %s27
        %s488 = smul.u32 2, %s27
        %v489 = vld [vmem:[%s486] sm:$0xff]
        %v490 = vld [vmem:[%s486 + $0x8] sm:$0xff]
        %v491 = vld [vmem:[%s486 + $0x10] sm:$0xff]
        %v492 = vld [vmem:[%s486 + $0x18] sm:$0xff]
        %v493 = vld [vmem:[%s486 + $0x20] sm:$0xff]
        %v494 = vld [vmem:[%s486 + $0x28] sm:$0xff]
        %v495 = vld [vmem:[%s486 + $0x30] sm:$0xff]
        %v496 = vld [vmem:[%s486 + $0x38] sm:$0xff]
        %v497 = vld [vmem:[%s486 + $0x40] sm:$0xff]
        %v498 = vld [vmem:[%s486 + $0x48] sm:$0xff]
        %v499 = vld [vmem:[%s486 + $0x50] sm:$0xff]
        %v500 = vld [vmem:[%s486 + $0x58] sm:$0xff]
        %v501 = vld [vmem:[%s486 + $0x60] sm:$0xff]
        %v502 = vld [vmem:[%s486 + $0x68] sm:$0xff]
        %v503 = vld [vmem:[%s486 + $0x70] sm:$0xff]
        %v504 = vld [vmem:[%s486 + $0x78] sm:$0xff]
        %v505 = vld [vmem:[%s486 + $0x80] sm:$0xff]
        %v506 = vld [vmem:[%s486 + $0x88] sm:$0xff]
        %v507 = vld [vmem:[%s486 + $0x90] sm:$0xff]
        %v508 = vld [vmem:[%s486 + $0x98] sm:$0xff]
        %v509 = vld [vmem:[%s486 + $0xa0] sm:$0xff]
        %v510 = vld [vmem:[%s486 + $0xa8] sm:$0xff]
        %v511 = vld [vmem:[%s486 + $0xb0] sm:$0xff]
        %v512 = vld [vmem:[%s486 + $0xb8] sm:$0xff]
        %v513 = vld [vmem:[%s486 + $0xc0] sm:$0xff]
        %v514 = vld [vmem:[%s486 + $0xc8] sm:$0xff]
        %v515 = vld [vmem:[%s486 + $0xd0] sm:$0xff]
        %v516 = vld [vmem:[%s486 + $0xd8] sm:$0xff]
        %v517 = vld [vmem:[%s486 + $0xe0] sm:$0xff]
        %v518 = vld [vmem:[%s486 + $0xe8] sm:$0xff]
        %v519 = vld [vmem:[%s486 + $0xf0] sm:$0xff]
        %v520 = vld [vmem:[%s486 + $0xf8] sm:$0xff]
        %v521 = vld [vmem:[%s480] sm:$0xff]
        %v522 = vld [vmem:[%s480 + $0x8] sm:$0xff]
        %v523 = vld [vmem:[%s480 + $0x10] sm:$0xff]
        %v524 = vld [vmem:[%s480 + $0x18] sm:$0xff]
        %v525 = vld [vmem:[%s480 + $0x20] sm:$0xff]
        %v526 = vld [vmem:[%s480 + $0x28] sm:$0xff]
        %v527 = vld [vmem:[%s480 + $0x30] sm:$0xff]
        %v528 = vld [vmem:[%s480 + $0x38] sm:$0xff]
        %v529 = vld [vmem:[%s480 + $0x40] sm:$0xff]
        %v530 = vld [vmem:[%s480 + $0x48] sm:$0xff]
        %v531 = vld [vmem:[%s480 + $0x50] sm:$0xff]
        %v532 = vld [vmem:[%s480 + $0x58] sm:$0xff]
        %v533 = vld [vmem:[%s480 + $0x60] sm:$0xff]
        %v534 = vld [vmem:[%s480 + $0x68] sm:$0xff]
        %v535 = vld [vmem:[%s480 + $0x70] sm:$0xff]
        %v536 = vld [vmem:[%s480 + $0x78] sm:$0xff]
        %v537 = vld [vmem:[%s480 + $0x80] sm:$0xff]
        %v538 = vld [vmem:[%s480 + $0x88] sm:$0xff]
        %v539 = vld [vmem:[%s480 + $0x90] sm:$0xff]
        %v540 = vld [vmem:[%s480 + $0x98] sm:$0xff]
        %v541 = vld [vmem:[%s480 + $0xa0] sm:$0xff]
        %v542 = vld [vmem:[%s480 + $0xa8] sm:$0xff]
        %v543 = vld [vmem:[%s480 + $0xb0] sm:$0xff]
        %v544 = vld [vmem:[%s480 + $0xb8] sm:$0xff]
        %v545 = vld [vmem:[%s480 + $0xc0] sm:$0xff]
        %v546 = vld [vmem:[%s480 + $0xc8] sm:$0xff]
        %v547 = vld [vmem:[%s480 + $0xd0] sm:$0xff]
        %v548 = vld [vmem:[%s480 + $0xd8] sm:$0xff]
        %v549 = vld [vmem:[%s480 + $0xe0] sm:$0xff]
        %v550 = vld [vmem:[%s480 + $0xe8] sm:$0xff]
        %v551 = vld [vmem:[%s480 + $0xf0] sm:$0xff]
        %v552 = vld [vmem:[%s480 + $0xf8] sm:$0xff]
        %v553 = vld [vmem:[%s473] sm:$0xff]
        %v554 = vld [vmem:[%s473 + $0x8] sm:$0xff]
        %v555 = vld [vmem:[%s473 + $0x10] sm:$0xff]
        %v556 = vld [vmem:[%s473 + $0x18] sm:$0xff]
        %v557 = vld [vmem:[%s473 + $0x20] sm:$0xff]
        %v558 = vld [vmem:[%s473 + $0x28] sm:$0xff]
        %v559 = vld [vmem:[%s473 + $0x30] sm:$0xff]
        %v560 = vld [vmem:[%s473 + $0x38] sm:$0xff]
        %v561 = vld [vmem:[%s473 + $0x40] sm:$0xff]
        %v562 = vld [vmem:[%s473 + $0x48] sm:$0xff]
        %v563 = vld [vmem:[%s473 + $0x50] sm:$0xff]
        %v564 = vld [vmem:[%s473 + $0x58] sm:$0xff]
        %v565 = vld [vmem:[%s473 + $0x60] sm:$0xff]
        %v566 = vld [vmem:[%s473 + $0x68] sm:$0xff]
        %v567 = vld [vmem:[%s473 + $0x70] sm:$0xff]
        %v568 = vld [vmem:[%s473 + $0x78] sm:$0xff]
        %v569 = vld [vmem:[%s473 + $0x80] sm:$0xff]
        %v570 = vld [vmem:[%s473 + $0x88] sm:$0xff]
        %v571 = vld [vmem:[%s473 + $0x90] sm:$0xff]
        %v572 = vld [vmem:[%s473 + $0x98] sm:$0xff]
        %v573 = vld [vmem:[%s473 + $0xa0] sm:$0xff]
        %v574 = vld [vmem:[%s473 + $0xa8] sm:$0xff]
        %v575 = vld [vmem:[%s473 + $0xb0] sm:$0xff]
        %v576 = vld [vmem:[%s473 + $0xb8] sm:$0xff]
        %v577 = vld [vmem:[%s473 + $0xc0] sm:$0xff]
        %v578 = vld [vmem:[%s473 + $0xc8] sm:$0xff]
        %v579 = vld [vmem:[%s473 + $0xd0] sm:$0xff]
        %v580 = vld [vmem:[%s473 + $0xd8] sm:$0xff]
        %v581 = vld [vmem:[%s473 + $0xe0] sm:$0xff]
        %v582 = vld [vmem:[%s473 + $0xe8] sm:$0xff]
        %v583 = vld [vmem:[%s473 + $0xf0] sm:$0xff]
        %v584 = vld [vmem:[%s473 + $0xf8] sm:$0xff]
        %v585 = vld [vmem:[%s3] sm:$0xff]
        %v586 = vld [vmem:[%s4] sm:$0x1]
        %v588 = vperm.slane %v586, 0
        %vm590 = vcmask 64512
        %v592 = vsel %vm590, %v553, 0
        %v595 = vsel %vm590, %v554, 0
        %v598 = vsel %vm590, %v555, 0
        %v601 = vsel %vm590, %v556, 0
        %v604 = vsel %vm590, %v557, 0
        %v607 = vsel %vm590, %v558, 0
        %v610 = vsel %vm590, %v559, 0
        %v613 = vsel %vm590, %v560, 0
        %v616 = vsel %vm590, %v561, 0
        %v619 = vsel %vm590, %v562, 0
        %v622 = vsel %vm590, %v563, 0
        %v625 = vsel %vm590, %v564, 0
        %v628 = vsel %vm590, %v565, 0
        %v631 = vsel %vm590, %v566, 0
        %v634 = vsel %vm590, %v567, 0
        %v637 = vsel %vm590, %v568, 0
        %v640 = vsel %vm590, %v569, 0
        %v643 = vsel %vm590, %v570, 0
        %v646 = vsel %vm590, %v571, 0
        %v649 = vsel %vm590, %v572, 0
        %v652 = vsel %vm590, %v573, 0
        %v655 = vsel %vm590, %v574, 0
        %v658 = vsel %vm590, %v575, 0
        %v661 = vsel %vm590, %v576, 0
        %v664 = vsel %vm590, %v577, 0
        %v667 = vsel %vm590, %v578, 0
        %v670 = vsel %vm590, %v579, 0
        %v673 = vsel %vm590, %v580, 0
        %v676 = vsel %vm590, %v581, 0
        %v679 = vsel %vm590, %v582, 0
        %v682 = vsel %vm590, %v583, 0
        %v685 = vsel %vm590, %v584, 0
        %687 = vmatpush.msra.mxu0 0.0
        %688 = vmatpush.msra.mxu0 0.0
        %689 = vmatpush.msra.mxu0 0.0
        %690 = vmatpush.msra.mxu0 0.0
        %691 = vmatpush.msra.mxu0 0.0
        %692 = vmatpush.msra.mxu0 0.0
        %693 = vmatpush.msra.mxu0 0.0
        %694 = vmatpush.msra.mxu0 0.0
        %695 = vmatpush.msra.mxu0 0.0
        %696 = vmatpush.msra.mxu0 0.0
        %697 = vmatpush.msra.mxu0 0.0
        %698 = vmatpush.msra.mxu0 0.0
        %699 = vmatpush.msra.mxu0 0.0
        %700 = vmatpush.msra.mxu0 0.0
        %701 = vmatpush.msra.mxu0 0.0
        %702 = vmatpush.msra.mxu0 %v585
        %703 = vmatmul.f32.gmra.mxu0 %v592
        %v704 = vpop.f32.mrf.mxu0
        %v705 = vadd.f32 %v588, %v704
        %706 = vmatmul.f32.gmra.mxu0 %v595
        %v707 = vpop.f32.mrf.mxu0
        %v708 = vadd.f32 %v588, %v707
        %709 = vmatmul.f32.gmra.mxu0 %v598
        %v710 = vpop.f32.mrf.mxu0
        %v711 = vadd.f32 %v588, %v710
        %712 = vmatmul.f32.gmra.mxu0 %v601
        %v713 = vpop.f32.mrf.mxu0
        %v714 = vadd.f32 %v588, %v713
        %715 = vmatmul.f32.gmra.mxu0 %v604
        %v716 = vpop.f32.mrf.mxu0
        %v717 = vadd.f32 %v588, %v716
        %718 = vmatmul.f32.gmra.mxu0 %v607
        %v719 = vpop.f32.mrf.mxu0
        %v720 = vadd.f32 %v588, %v719
        %721 = vmatmul.f32.gmra.mxu0 %v610
        %v722 = vpop.f32.mrf.mxu0
        %v723 = vadd.f32 %v588, %v722
        %724 = vmatmul.f32.gmra.mxu0 %v613
        %v725 = vpop.f32.mrf.mxu0
        %v726 = vadd.f32 %v588, %v725
        %727 = vmatmul.f32.gmra.mxu0 %v616
        %v728 = vpop.f32.mrf.mxu0
        %v729 = vadd.f32 %v588, %v728
        %730 = vmatmul.f32.gmra.mxu0 %v619
        %v731 = vpop.f32.mrf.mxu0
        %v732 = vadd.f32 %v588, %v731
        %733 = vmatmul.f32.gmra.mxu0 %v622
        %v734 = vpop.f32.mrf.mxu0
        %v735 = vadd.f32 %v588, %v734
        %736 = vmatmul.f32.gmra.mxu0 %v625
        %v737 = vpop.f32.mrf.mxu0
        %v738 = vadd.f32 %v588, %v737
        %739 = vmatmul.f32.gmra.mxu0 %v628
        %v740 = vpop.f32.mrf.mxu0
        %v741 = vadd.f32 %v588, %v740
        %742 = vmatmul.f32.gmra.mxu0 %v631
        %v743 = vpop.f32.mrf.mxu0
        %v744 = vadd.f32 %v588, %v743
        %745 = vmatmul.f32.gmra.mxu0 %v634
        %v746 = vpop.f32.mrf.mxu0
        %v747 = vadd.f32 %v588, %v746
        %748 = vmatmul.f32.gmra.mxu0 %v637
        %v749 = vpop.f32.mrf.mxu0
        %v750 = vadd.f32 %v588, %v749
        %751 = vmatmul.f32.gmra.mxu0 %v640
        %v752 = vpop.f32.mrf.mxu0
        %v753 = vadd.f32 %v588, %v752
        %754 = vmatmul.f32.gmra.mxu0 %v643
        %v755 = vpop.f32.mrf.mxu0
        %v756 = vadd.f32 %v588, %v755
        %757 = vmatmul.f32.gmra.mxu0 %v646
        %v758 = vpop.f32.mrf.mxu0
        %v759 = vadd.f32 %v588, %v758
        %760 = vmatmul.f32.gmra.mxu0 %v649
        %v761 = vpop.f32.mrf.mxu0
        %v762 = vadd.f32 %v588, %v761
        %763 = vmatmul.f32.gmra.mxu0 %v652
        %v764 = vpop.f32.mrf.mxu0
        %v765 = vadd.f32 %v588, %v764
        %766 = vmatmul.f32.gmra.mxu0 %v655
        %v767 = vpop.f32.mrf.mxu0
        %v768 = vadd.f32 %v588, %v767
        %769 = vmatmul.f32.gmra.mxu0 %v658
        %v770 = vpop.f32.mrf.mxu0
        %v771 = vadd.f32 %v588, %v770
        %772 = vmatmul.f32.gmra.mxu0 %v661
        %v773 = vpop.f32.mrf.mxu0
        %v774 = vadd.f32 %v588, %v773
        %775 = vmatmul.f32.gmra.mxu0 %v664
        %v776 = vpop.f32.mrf.mxu0
        %v777 = vadd.f32 %v588, %v776
        %778 = vmatmul.f32.gmra.mxu0 %v667
        %v779 = vpop.f32.mrf.mxu0
        %v780 = vadd.f32 %v588, %v779
        %781 = vmatmul.f32.gmra.mxu0 %v670
        %v782 = vpop.f32.mrf.mxu0
        %v783 = vadd.f32 %v588, %v782
        %784 = vmatmul.f32.gmra.mxu0 %v673
        %v785 = vpop.f32.mrf.mxu0
        %v786 = vadd.f32 %v588, %v785
        %787 = vmatmul.f32.gmra.mxu0 %v676
        %v788 = vpop.f32.mrf.mxu0
        %v789 = vadd.f32 %v588, %v788
        %790 = vmatmul.f32.gmra.mxu0 %v679
        %v791 = vpop.f32.mrf.mxu0
        %v792 = vadd.f32 %v588, %v791
        %793 = vmatmul.f32.gmra.mxu0 %v682
        %v794 = vpop.f32.mrf.mxu0
        %v795 = vadd.f32 %v588, %v794
        %796 = vmatmul.f32.gmra.mxu0 %v685
        %v797 = vpop.f32.mrf.mxu0
        %v798 = vadd.f32 %v588, %v797
        %799 = vdwg.mxu0
        %801 = vset.pattern.permute.xlu0 0
        %802 = vperm.xlu0 %801, %v489
        %v803 = vpop.permute.xlu0 %802
        %806 = vset.pattern.permute.xlu0 0
        %807 = vperm.xlu0 %806, %v490
        %v808 = vpop.permute.xlu0 %807
        %811 = vset.pattern.permute.xlu0 0
        %812 = vperm.xlu0 %811, %v491
        %v813 = vpop.permute.xlu0 %812
        %816 = vset.pattern.permute.xlu0 0
        %817 = vperm.xlu0 %816, %v492
        %v818 = vpop.permute.xlu0 %817
        %821 = vset.pattern.permute.xlu0 0
        %822 = vperm.xlu0 %821, %v493
        %v823 = vpop.permute.xlu0 %822
        %826 = vset.pattern.permute.xlu0 0
        %827 = vperm.xlu0 %826, %v494
        %v828 = vpop.permute.xlu0 %827
        %831 = vset.pattern.permute.xlu0 0
        %832 = vperm.xlu0 %831, %v495
        %v833 = vpop.permute.xlu0 %832
        %836 = vset.pattern.permute.xlu0 0
        %837 = vperm.xlu0 %836, %v496
        %v838 = vpop.permute.xlu0 %837
        %841 = vset.pattern.permute.xlu0 0
        %842 = vperm.xlu0 %841, %v497
        %v843 = vpop.permute.xlu0 %842
        %846 = vset.pattern.permute.xlu0 0
        %847 = vperm.xlu0 %846, %v498
        %v848 = vpop.permute.xlu0 %847
        %851 = vset.pattern.permute.xlu0 0
        %852 = vperm.xlu0 %851, %v499
        %v853 = vpop.permute.xlu0 %852
        %856 = vset.pattern.permute.xlu0 0
        %857 = vperm.xlu0 %856, %v500
        %v858 = vpop.permute.xlu0 %857
        %861 = vset.pattern.permute.xlu0 0
        %862 = vperm.xlu0 %861, %v501
        %v863 = vpop.permute.xlu0 %862
        %866 = vset.pattern.permute.xlu0 0
        %867 = vperm.xlu0 %866, %v502
        %v868 = vpop.permute.xlu0 %867
        %871 = vset.pattern.permute.xlu0 0
        %872 = vperm.xlu0 %871, %v503
        %v873 = vpop.permute.xlu0 %872
        %876 = vset.pattern.permute.xlu0 0
        %877 = vperm.xlu0 %876, %v504
        %v878 = vpop.permute.xlu0 %877
        %881 = vset.pattern.permute.xlu0 0
        %882 = vperm.xlu0 %881, %v505
        %v883 = vpop.permute.xlu0 %882
        %886 = vset.pattern.permute.xlu0 0
        %887 = vperm.xlu0 %886, %v506
        %v888 = vpop.permute.xlu0 %887
        %891 = vset.pattern.permute.xlu0 0
        %892 = vperm.xlu0 %891, %v507
        %v893 = vpop.permute.xlu0 %892
        %896 = vset.pattern.permute.xlu0 0
        %897 = vperm.xlu0 %896, %v508
        %v898 = vpop.permute.xlu0 %897
        %901 = vset.pattern.permute.xlu0 0
        %902 = vperm.xlu0 %901, %v509
        %v903 = vpop.permute.xlu0 %902
        %906 = vset.pattern.permute.xlu0 0
        %907 = vperm.xlu0 %906, %v510
        %v908 = vpop.permute.xlu0 %907
        %911 = vset.pattern.permute.xlu0 0
        %912 = vperm.xlu0 %911, %v511
        %v913 = vpop.permute.xlu0 %912
        %916 = vset.pattern.permute.xlu0 0
        %917 = vperm.xlu0 %916, %v512
        %v918 = vpop.permute.xlu0 %917
        %921 = vset.pattern.permute.xlu0 0
        %922 = vperm.xlu0 %921, %v513
        %v923 = vpop.permute.xlu0 %922
        %926 = vset.pattern.permute.xlu0 0
        %927 = vperm.xlu0 %926, %v514
        %v928 = vpop.permute.xlu0 %927
        %931 = vset.pattern.permute.xlu0 0
        %932 = vperm.xlu0 %931, %v515
        %v933 = vpop.permute.xlu0 %932
        %936 = vset.pattern.permute.xlu0 0
        %937 = vperm.xlu0 %936, %v516
        %v938 = vpop.permute.xlu0 %937
        %941 = vset.pattern.permute.xlu0 0
        %942 = vperm.xlu0 %941, %v517
        %v943 = vpop.permute.xlu0 %942
        %946 = vset.pattern.permute.xlu0 0
        %947 = vperm.xlu0 %946, %v518
        %v948 = vpop.permute.xlu0 %947
        %951 = vset.pattern.permute.xlu0 0
        %952 = vperm.xlu0 %951, %v519
        %v953 = vpop.permute.xlu0 %952
        %956 = vset.pattern.permute.xlu0 0
        %957 = vperm.xlu0 %956, %v520
        %v958 = vpop.permute.xlu0 %957
        %v960 = vmul.f32 %v705, %v803
        %v961 = vmul.f32 %v708, %v808
        %v962 = vmul.f32 %v711, %v813
        %v963 = vmul.f32 %v714, %v818
        %v964 = vmul.f32 %v717, %v823
        %v965 = vmul.f32 %v720, %v828
        %v966 = vmul.f32 %v723, %v833
        %v967 = vmul.f32 %v726, %v838
        %v968 = vmul.f32 %v729, %v843
        %v969 = vmul.f32 %v732, %v848
        %v970 = vmul.f32 %v735, %v853
        %v971 = vmul.f32 %v738, %v858
        %v972 = vmul.f32 %v741, %v863
        %v973 = vmul.f32 %v744, %v868
        %v974 = vmul.f32 %v747, %v873
        %v975 = vmul.f32 %v750, %v878
        %v976 = vmul.f32 %v753, %v883
        %v977 = vmul.f32 %v756, %v888
        %v978 = vmul.f32 %v759, %v893
        %v979 = vmul.f32 %v762, %v898
        %v980 = vmul.f32 %v765, %v903
        %v981 = vmul.f32 %v768, %v908
        %v982 = vmul.f32 %v771, %v913
        %v983 = vmul.f32 %v774, %v918
        %v984 = vmul.f32 %v777, %v923
        %v985 = vmul.f32 %v780, %v928
        %v986 = vmul.f32 %v783, %v933
        %v987 = vmul.f32 %v786, %v938
        %v988 = vmul.f32 %v789, %v943
        %v989 = vmul.f32 %v792, %v948
        %v990 = vmul.f32 %v795, %v953
        %v991 = vmul.f32 %v798, %v958
        %v992 = vld [vmem:[%s5] sm:$0xff]
        %v993 = vld [vmem:[%s5 + $0x8] sm:$0xff]
        %v994 = vld [vmem:[%s5 + $0x10] sm:$0xff]
        %v995 = vld [vmem:[%s5 + $0x18] sm:$0xff]
        %v996 = vld [vmem:[%s6] sm:$0x1]
        %v997 = vld [vmem:[%s7] sm:$0xff]
        %v998 = vld [vmem:[%s7 + $0x8] sm:$0xff]
        %v999 = vld [vmem:[%s7 + $0x10] sm:$0xff]
        %v1000 = vld [vmem:[%s7 + $0x18] sm:$0xff]
        %v1001 = vld [vmem:[%s8] sm:$0x1]
        %v1002 = vld [vmem:[%s9] sm:$0xff]
        %v1003 = vld [vmem:[%s9 + $0x8] sm:$0xff]
        %v1004 = vld [vmem:[%s9 + $0x10] sm:$0xff]
        %v1005 = vld [vmem:[%s9 + $0x18] sm:$0xff]
        %v1006 = vld [vmem:[%s10] sm:$0x1]
        %vm1007 = vcmask 130048
        %v1009 = vsel %vm1007, %v521, 0
        %v1012 = vsel %vm1007, %v522, 0
        %1014 = vmatpush.msra.mxu0 0.0
        %1015 = vmatpush.msra.mxu0 0.0
        %1016 = vmatpush.msra.mxu0 0.0
        %1017 = vmatpush.msra.mxu0 0.0
        %1018 = vmatpush.msra.mxu0 0.0
        %1019 = vmatpush.msra.mxu0 0.0
        %1020 = vmatpush.msra.mxu0 0.0
        %1021 = vmatpush.msra.mxu0 0.0
        %1022 = vmatpush.msra.mxu0 0.0
        %1023 = vmatpush.msra.mxu0 0.0
        %1024 = vmatpush.msra.mxu0 0.0
        %1025 = vmatpush.msra.mxu0 0.0
        %1026 = vmatpush.msra.mxu0 0.0
        %1027 = vmatpush.msra.mxu0 0.0
        %1028 = vmatpush.msra.mxu0 %v961
        %1029 = vmatpush.msra.mxu0 %v960
        %1030 = vmatmul.f32.gmra.mxu0 %v1009
        %v1031 = vpop.f32.mrf.mxu0
        %v1032 = vadd.f32 0.0, %v1031
        %1033 = vmatmul.f32.gmra.mxu0 %v1012
        %v1034 = vpop.f32.mrf.mxu0
        %v1035 = vadd.f32 0.0, %v1034
        %1036 = vdwg.mxu0
        %v1038 = vsel %vm1007, %v523, 0
        %v1041 = vsel %vm1007, %v524, 0
        %1043 = vmatpush.msra.mxu0 0.0
        %1044 = vmatpush.msra.mxu0 0.0
        %1045 = vmatpush.msra.mxu0 0.0
        %1046 = vmatpush.msra.mxu0 0.0
        %1047 = vmatpush.msra.mxu0 0.0
        %1048 = vmatpush.msra.mxu0 0.0
        %1049 = vmatpush.msra.mxu0 0.0
        %1050 = vmatpush.msra.mxu0 0.0
        %1051 = vmatpush.msra.mxu0 0.0
        %1052 = vmatpush.msra.mxu0 0.0
        %1053 = vmatpush.msra.mxu0 0.0
        %1054 = vmatpush.msra.mxu0 0.0
        %1055 = vmatpush.msra.mxu0 0.0
        %1056 = vmatpush.msra.mxu0 0.0
        %1057 = vmatpush.msra.mxu0 %v963
        %1058 = vmatpush.msra.mxu0 %v962
        %1059 = vmatmul.f32.gmra.mxu0 %v1038
        %v1060 = vpop.f32.mrf.mxu0
        %v1061 = vadd.f32 0.0, %v1060
        %1062 = vmatmul.f32.gmra.mxu0 %v1041
        %v1063 = vpop.f32.mrf.mxu0
        %v1064 = vadd.f32 0.0, %v1063
        %1065 = vdwg.mxu0
        %v1067 = vsel %vm1007, %v525, 0
        %v1070 = vsel %vm1007, %v526, 0
        %1072 = vmatpush.msra.mxu0 0.0
        %1073 = vmatpush.msra.mxu0 0.0
        %1074 = vmatpush.msra.mxu0 0.0
        %1075 = vmatpush.msra.mxu0 0.0
        %1076 = vmatpush.msra.mxu0 0.0
        %1077 = vmatpush.msra.mxu0 0.0
        %1078 = vmatpush.msra.mxu0 0.0
        %1079 = vmatpush.msra.mxu0 0.0
        %1080 = vmatpush.msra.mxu0 0.0
        %1081 = vmatpush.msra.mxu0 0.0
        %1082 = vmatpush.msra.mxu0 0.0
        %1083 = vmatpush.msra.mxu0 0.0
        %1084 = vmatpush.msra.mxu0 0.0
        %1085 = vmatpush.msra.mxu0 0.0
        %1086 = vmatpush.msra.mxu0 %v965
        %1087 = vmatpush.msra.mxu0 %v964
        %1088 = vmatmul.f32.gmra.mxu0 %v1067
        %v1089 = vpop.f32.mrf.mxu0
        %v1090 = vadd.f32 0.0, %v1089
        %1091 = vmatmul.f32.gmra.mxu0 %v1070
        %v1092 = vpop.f32.mrf.mxu0
        %v1093 = vadd.f32 0.0, %v1092
        %1094 = vdwg.mxu0
        %v1096 = vsel %vm1007, %v527, 0
        %v1099 = vsel %vm1007, %v528, 0
        %1101 = vmatpush.msra.mxu0 0.0
        %1102 = vmatpush.msra.mxu0 0.0
        %1103 = vmatpush.msra.mxu0 0.0
        %1104 = vmatpush.msra.mxu0 0.0
        %1105 = vmatpush.msra.mxu0 0.0
        %1106 = vmatpush.msra.mxu0 0.0
        %1107 = vmatpush.msra.mxu0 0.0
        %1108 = vmatpush.msra.mxu0 0.0
        %1109 = vmatpush.msra.mxu0 0.0
        %1110 = vmatpush.msra.mxu0 0.0
        %1111 = vmatpush.msra.mxu0 0.0
        %1112 = vmatpush.msra.mxu0 0.0
        %1113 = vmatpush.msra.mxu0 0.0
        %1114 = vmatpush.msra.mxu0 0.0
        %1115 = vmatpush.msra.mxu0 %v967
        %1116 = vmatpush.msra.mxu0 %v966
        %1117 = vmatmul.f32.gmra.mxu0 %v1096
        %v1118 = vpop.f32.mrf.mxu0
        %v1119 = vadd.f32 0.0, %v1118
        %1120 = vmatmul.f32.gmra.mxu0 %v1099
        %v1121 = vpop.f32.mrf.mxu0
        %v1122 = vadd.f32 0.0, %v1121
        %1123 = vdwg.mxu0
        %v1125 = vsel %vm1007, %v529, 0
        %v1128 = vsel %vm1007, %v530, 0
        %1130 = vmatpush.msra.mxu0 0.0
        %1131 = vmatpush.msra.mxu0 0.0
        %1132 = vmatpush.msra.mxu0 0.0
        %1133 = vmatpush.msra.mxu0 0.0
        %1134 = vmatpush.msra.mxu0 0.0
        %1135 = vmatpush.msra.mxu0 0.0
        %1136 = vmatpush.msra.mxu0 0.0
        %1137 = vmatpush.msra.mxu0 0.0
        %1138 = vmatpush.msra.mxu0 0.0
        %1139 = vmatpush.msra.mxu0 0.0
        %1140 = vmatpush.msra.mxu0 0.0
        %1141 = vmatpush.msra.mxu0 0.0
        %1142 = vmatpush.msra.mxu0 0.0
        %1143 = vmatpush.msra.mxu0 0.0
        %1144 = vmatpush.msra.mxu0 %v969
        %1145 = vmatpush.msra.mxu0 %v968
        %1146 = vmatmul.f32.gmra.mxu0 %v1125
        %v1147 = vpop.f32.mrf.mxu0
        %v1148 = vadd.f32 0.0, %v1147
        %1149 = vmatmul.f32.gmra.mxu0 %v1128
        %v1150 = vpop.f32.mrf.mxu0
        %v1151 = vadd.f32 0.0, %v1150
        %1152 = vdwg.mxu0
        %v1154 = vsel %vm1007, %v531, 0
        %v1157 = vsel %vm1007, %v532, 0
        %1159 = vmatpush.msra.mxu0 0.0
        %1160 = vmatpush.msra.mxu0 0.0
        %1161 = vmatpush.msra.mxu0 0.0
        %1162 = vmatpush.msra.mxu0 0.0
        %1163 = vmatpush.msra.mxu0 0.0
        %1164 = vmatpush.msra.mxu0 0.0
        %1165 = vmatpush.msra.mxu0 0.0
        %1166 = vmatpush.msra.mxu0 0.0
        %1167 = vmatpush.msra.mxu0 0.0
        %1168 = vmatpush.msra.mxu0 0.0
        %1169 = vmatpush.msra.mxu0 0.0
        %1170 = vmatpush.msra.mxu0 0.0
        %1171 = vmatpush.msra.mxu0 0.0
        %1172 = vmatpush.msra.mxu0 0.0
        %1173 = vmatpush.msra.mxu0 %v971
        %1174 = vmatpush.msra.mxu0 %v970
        %1175 = vmatmul.f32.gmra.mxu0 %v1154
        %v1176 = vpop.f32.mrf.mxu0
        %v1177 = vadd.f32 0.0, %v1176
        %1178 = vmatmul.f32.gmra.mxu0 %v1157
        %v1179 = vpop.f32.mrf.mxu0
        %v1180 = vadd.f32 0.0, %v1179
        %1181 = vdwg.mxu0
        %v1183 = vsel %vm1007, %v533, 0
        %v1186 = vsel %vm1007, %v534, 0
        %1188 = vmatpush.msra.mxu0 0.0
        %1189 = vmatpush.msra.mxu0 0.0
        %1190 = vmatpush.msra.mxu0 0.0
        %1191 = vmatpush.msra.mxu0 0.0
        %1192 = vmatpush.msra.mxu0 0.0
        %1193 = vmatpush.msra.mxu0 0.0
        %1194 = vmatpush.msra.mxu0 0.0
        %1195 = vmatpush.msra.mxu0 0.0
        %1196 = vmatpush.msra.mxu0 0.0
        %1197 = vmatpush.msra.mxu0 0.0
        %1198 = vmatpush.msra.mxu0 0.0
        %1199 = vmatpush.msra.mxu0 0.0
        %1200 = vmatpush.msra.mxu0 0.0
        %1201 = vmatpush.msra.mxu0 0.0
        %1202 = vmatpush.msra.mxu0 %v973
        %1203 = vmatpush.msra.mxu0 %v972
        %1204 = vmatmul.f32.gmra.mxu0 %v1183
        %v1205 = vpop.f32.mrf.mxu0
        %v1206 = vadd.f32 0.0, %v1205
        %1207 = vmatmul.f32.gmra.mxu0 %v1186
        %v1208 = vpop.f32.mrf.mxu0
        %v1209 = vadd.f32 0.0, %v1208
        %1210 = vdwg.mxu0
        %v1212 = vsel %vm1007, %v535, 0
        %v1215 = vsel %vm1007, %v536, 0
        %1217 = vmatpush.msra.mxu0 0.0
        %1218 = vmatpush.msra.mxu0 0.0
        %1219 = vmatpush.msra.mxu0 0.0
        %1220 = vmatpush.msra.mxu0 0.0
        %1221 = vmatpush.msra.mxu0 0.0
        %1222 = vmatpush.msra.mxu0 0.0
        %1223 = vmatpush.msra.mxu0 0.0
        %1224 = vmatpush.msra.mxu0 0.0
        %1225 = vmatpush.msra.mxu0 0.0
        %1226 = vmatpush.msra.mxu0 0.0
        %1227 = vmatpush.msra.mxu0 0.0
        %1228 = vmatpush.msra.mxu0 0.0
        %1229 = vmatpush.msra.mxu0 0.0
        %1230 = vmatpush.msra.mxu0 0.0
        %1231 = vmatpush.msra.mxu0 %v975
        %1232 = vmatpush.msra.mxu0 %v974
        %1233 = vmatmul.f32.gmra.mxu0 %v1212
        %v1234 = vpop.f32.mrf.mxu0
        %v1235 = vadd.f32 0.0, %v1234
        %1236 = vmatmul.f32.gmra.mxu0 %v1215
        %v1237 = vpop.f32.mrf.mxu0
        %v1238 = vadd.f32 0.0, %v1237
        %1239 = vdwg.mxu0
        %v1241 = vsel %vm1007, %v537, 0
        %v1244 = vsel %vm1007, %v538, 0
        %1246 = vmatpush.msra.mxu0 0.0
        %1247 = vmatpush.msra.mxu0 0.0
        %1248 = vmatpush.msra.mxu0 0.0
        %1249 = vmatpush.msra.mxu0 0.0
        %1250 = vmatpush.msra.mxu0 0.0
        %1251 = vmatpush.msra.mxu0 0.0
        %1252 = vmatpush.msra.mxu0 0.0
        %1253 = vmatpush.msra.mxu0 0.0
        %1254 = vmatpush.msra.mxu0 0.0
        %1255 = vmatpush.msra.mxu0 0.0
        %1256 = vmatpush.msra.mxu0 0.0
        %1257 = vmatpush.msra.mxu0 0.0
        %1258 = vmatpush.msra.mxu0 0.0
        %1259 = vmatpush.msra.mxu0 0.0
        %1260 = vmatpush.msra.mxu0 %v977
        %1261 = vmatpush.msra.mxu0 %v976
        %1262 = vmatmul.f32.gmra.mxu0 %v1241
        %v1263 = vpop.f32.mrf.mxu0
        %v1264 = vadd.f32 0.0, %v1263
        %1265 = vmatmul.f32.gmra.mxu0 %v1244
        %v1266 = vpop.f32.mrf.mxu0
        %v1267 = vadd.f32 0.0, %v1266
        %1268 = vdwg.mxu0
        %v1270 = vsel %vm1007, %v539, 0
        %v1273 = vsel %vm1007, %v540, 0
        %1275 = vmatpush.msra.mxu0 0.0
        %1276 = vmatpush.msra.mxu0 0.0
        %1277 = vmatpush.msra.mxu0 0.0
        %1278 = vmatpush.msra.mxu0 0.0
        %1279 = vmatpush.msra.mxu0 0.0
        %1280 = vmatpush.msra.mxu0 0.0
        %1281 = vmatpush.msra.mxu0 0.0
        %1282 = vmatpush.msra.mxu0 0.0
        %1283 = vmatpush.msra.mxu0 0.0
        %1284 = vmatpush.msra.mxu0 0.0
        %1285 = vmatpush.msra.mxu0 0.0
        %1286 = vmatpush.msra.mxu0 0.0
        %1287 = vmatpush.msra.mxu0 0.0
        %1288 = vmatpush.msra.mxu0 0.0
        %1289 = vmatpush.msra.mxu0 %v979
        %1290 = vmatpush.msra.mxu0 %v978
        %1291 = vmatmul.f32.gmra.mxu0 %v1270
        %v1292 = vpop.f32.mrf.mxu0
        %v1293 = vadd.f32 0.0, %v1292
        %1294 = vmatmul.f32.gmra.mxu0 %v1273
        %v1295 = vpop.f32.mrf.mxu0
        %v1296 = vadd.f32 0.0, %v1295
        %1297 = vdwg.mxu0
        %v1299 = vsel %vm1007, %v541, 0
        %v1302 = vsel %vm1007, %v542, 0
        %1304 = vmatpush.msra.mxu0 0.0
        %1305 = vmatpush.msra.mxu0 0.0
        %1306 = vmatpush.msra.mxu0 0.0
        %1307 = vmatpush.msra.mxu0 0.0
        %1308 = vmatpush.msra.mxu0 0.0
        %1309 = vmatpush.msra.mxu0 0.0
        %1310 = vmatpush.msra.mxu0 0.0
        %1311 = vmatpush.msra.mxu0 0.0
        %1312 = vmatpush.msra.mxu0 0.0
        %1313 = vmatpush.msra.mxu0 0.0
        %1314 = vmatpush.msra.mxu0 0.0
        %1315 = vmatpush.msra.mxu0 0.0
        %1316 = vmatpush.msra.mxu0 0.0
        %1317 = vmatpush.msra.mxu0 0.0
        %1318 = vmatpush.msra.mxu0 %v981
        %1319 = vmatpush.msra.mxu0 %v980
        %1320 = vmatmul.f32.gmra.mxu0 %v1299
        %v1321 = vpop.f32.mrf.mxu0
        %v1322 = vadd.f32 0.0, %v1321
        %1323 = vmatmul.f32.gmra.mxu0 %v1302
        %v1324 = vpop.f32.mrf.mxu0
        %v1325 = vadd.f32 0.0, %v1324
        %1326 = vdwg.mxu0
        %v1328 = vsel %vm1007, %v543, 0
        %v1331 = vsel %vm1007, %v544, 0
        %1333 = vmatpush.msra.mxu0 0.0
        %1334 = vmatpush.msra.mxu0 0.0
        %1335 = vmatpush.msra.mxu0 0.0
        %1336 = vmatpush.msra.mxu0 0.0
        %1337 = vmatpush.msra.mxu0 0.0
        %1338 = vmatpush.msra.mxu0 0.0
        %1339 = vmatpush.msra.mxu0 0.0
        %1340 = vmatpush.msra.mxu0 0.0
        %1341 = vmatpush.msra.mxu0 0.0
        %1342 = vmatpush.msra.mxu0 0.0
        %1343 = vmatpush.msra.mxu0 0.0
        %1344 = vmatpush.msra.mxu0 0.0
        %1345 = vmatpush.msra.mxu0 0.0
        %1346 = vmatpush.msra.mxu0 0.0
        %1347 = vmatpush.msra.mxu0 %v983
        %1348 = vmatpush.msra.mxu0 %v982
        %1349 = vmatmul.f32.gmra.mxu0 %v1328
        %v1350 = vpop.f32.mrf.mxu0
        %v1351 = vadd.f32 0.0, %v1350
        %1352 = vmatmul.f32.gmra.mxu0 %v1331
        %v1353 = vpop.f32.mrf.mxu0
        %v1354 = vadd.f32 0.0, %v1353
        %1355 = vdwg.mxu0
        %v1357 = vsel %vm1007, %v545, 0
        %v1360 = vsel %vm1007, %v546, 0
        %1362 = vmatpush.msra.mxu0 0.0
        %1363 = vmatpush.msra.mxu0 0.0
        %1364 = vmatpush.msra.mxu0 0.0
        %1365 = vmatpush.msra.mxu0 0.0
        %1366 = vmatpush.msra.mxu0 0.0
        %1367 = vmatpush.msra.mxu0 0.0
        %1368 = vmatpush.msra.mxu0 0.0
        %1369 = vmatpush.msra.mxu0 0.0
        %1370 = vmatpush.msra.mxu0 0.0
        %1371 = vmatpush.msra.mxu0 0.0
        %1372 = vmatpush.msra.mxu0 0.0
        %1373 = vmatpush.msra.mxu0 0.0
        %1374 = vmatpush.msra.mxu0 0.0
        %1375 = vmatpush.msra.mxu0 0.0
        %1376 = vmatpush.msra.mxu0 %v985
        %1377 = vmatpush.msra.mxu0 %v984
        %1378 = vmatmul.f32.gmra.mxu0 %v1357
        %v1379 = vpop.f32.mrf.mxu0
        %v1380 = vadd.f32 0.0, %v1379
        %1381 = vmatmul.f32.gmra.mxu0 %v1360
        %v1382 = vpop.f32.mrf.mxu0
        %v1383 = vadd.f32 0.0, %v1382
        %1384 = vdwg.mxu0
        %v1386 = vsel %vm1007, %v547, 0
        %v1389 = vsel %vm1007, %v548, 0
        %1391 = vmatpush.msra.mxu0 0.0
        %1392 = vmatpush.msra.mxu0 0.0
        %1393 = vmatpush.msra.mxu0 0.0
        %1394 = vmatpush.msra.mxu0 0.0
        %1395 = vmatpush.msra.mxu0 0.0
        %1396 = vmatpush.msra.mxu0 0.0
        %1397 = vmatpush.msra.mxu0 0.0
        %1398 = vmatpush.msra.mxu0 0.0
        %1399 = vmatpush.msra.mxu0 0.0
        %1400 = vmatpush.msra.mxu0 0.0
        %1401 = vmatpush.msra.mxu0 0.0
        %1402 = vmatpush.msra.mxu0 0.0
        %1403 = vmatpush.msra.mxu0 0.0
        %1404 = vmatpush.msra.mxu0 0.0
        %1405 = vmatpush.msra.mxu0 %v987
        %1406 = vmatpush.msra.mxu0 %v986
        %1407 = vmatmul.f32.gmra.mxu0 %v1386
        %v1408 = vpop.f32.mrf.mxu0
        %v1409 = vadd.f32 0.0, %v1408
        %1410 = vmatmul.f32.gmra.mxu0 %v1389
        %v1411 = vpop.f32.mrf.mxu0
        %v1412 = vadd.f32 0.0, %v1411
        %1413 = vdwg.mxu0
        %v1415 = vsel %vm1007, %v549, 0
        %v1418 = vsel %vm1007, %v550, 0
        %1420 = vmatpush.msra.mxu0 0.0
        %1421 = vmatpush.msra.mxu0 0.0
        %1422 = vmatpush.msra.mxu0 0.0
        %1423 = vmatpush.msra.mxu0 0.0
        %1424 = vmatpush.msra.mxu0 0.0
        %1425 = vmatpush.msra.mxu0 0.0
        %1426 = vmatpush.msra.mxu0 0.0
        %1427 = vmatpush.msra.mxu0 0.0
        %1428 = vmatpush.msra.mxu0 0.0
        %1429 = vmatpush.msra.mxu0 0.0
        %1430 = vmatpush.msra.mxu0 0.0
        %1431 = vmatpush.msra.mxu0 0.0
        %1432 = vmatpush.msra.mxu0 0.0
        %1433 = vmatpush.msra.mxu0 0.0
        %1434 = vmatpush.msra.mxu0 %v989
        %1435 = vmatpush.msra.mxu0 %v988
        %1436 = vmatmul.f32.gmra.mxu0 %v1415
        %v1437 = vpop.f32.mrf.mxu0
        %v1438 = vadd.f32 0.0, %v1437
        %1439 = vmatmul.f32.gmra.mxu0 %v1418
        %v1440 = vpop.f32.mrf.mxu0
        %v1441 = vadd.f32 0.0, %v1440
        %1442 = vdwg.mxu0
        %v1444 = vsel %vm1007, %v551, 0
        %v1447 = vsel %vm1007, %v552, 0
        %1449 = vmatpush.msra.mxu0 0.0
        %1450 = vmatpush.msra.mxu0 0.0
        %1451 = vmatpush.msra.mxu0 0.0
        %1452 = vmatpush.msra.mxu0 0.0
        %1453 = vmatpush.msra.mxu0 0.0
        %1454 = vmatpush.msra.mxu0 0.0
        %1455 = vmatpush.msra.mxu0 0.0
        %1456 = vmatpush.msra.mxu0 0.0
        %1457 = vmatpush.msra.mxu0 0.0
        %1458 = vmatpush.msra.mxu0 0.0
        %1459 = vmatpush.msra.mxu0 0.0
        %1460 = vmatpush.msra.mxu0 0.0
        %1461 = vmatpush.msra.mxu0 0.0
        %1462 = vmatpush.msra.mxu0 0.0
        %1463 = vmatpush.msra.mxu0 %v991
        %1464 = vmatpush.msra.mxu0 %v990
        %1465 = vmatmul.f32.gmra.mxu0 %v1444
        %v1466 = vpop.f32.mrf.mxu0
        %v1467 = vadd.f32 0.0, %v1466
        %1468 = vmatmul.f32.gmra.mxu0 %v1447
        %v1469 = vpop.f32.mrf.mxu0
        %v1470 = vadd.f32 0.0, %v1469
        %1471 = vdwg.mxu0
        %v1473 = vperm.slane %v996, 0
        %vm1475 = vcmask 261120
        %v1477 = vsel %vm1475, %v1032, 0
        %v1480 = vsel %vm1475, %v1035, 0
        %v1483 = vsel %vm1475, %v1061, 0
        %v1486 = vsel %vm1475, %v1064, 0
        %v1489 = vsel %vm1475, %v1090, 0
        %v1492 = vsel %vm1475, %v1093, 0
        %v1495 = vsel %vm1475, %v1119, 0
        %v1498 = vsel %vm1475, %v1122, 0
        %v1501 = vsel %vm1475, %v1148, 0
        %v1504 = vsel %vm1475, %v1151, 0
        %v1507 = vsel %vm1475, %v1177, 0
        %v1510 = vsel %vm1475, %v1180, 0
        %v1513 = vsel %vm1475, %v1206, 0
        %v1516 = vsel %vm1475, %v1209, 0
        %v1519 = vsel %vm1475, %v1235, 0
        %v1522 = vsel %vm1475, %v1238, 0
        %v1525 = vsel %vm1475, %v1264, 0
        %v1528 = vsel %vm1475, %v1267, 0
        %v1531 = vsel %vm1475, %v1293, 0
        %v1534 = vsel %vm1475, %v1296, 0
        %v1537 = vsel %vm1475, %v1322, 0
        %v1540 = vsel %vm1475, %v1325, 0
        %v1543 = vsel %vm1475, %v1351, 0
        %v1546 = vsel %vm1475, %v1354, 0
        %v1549 = vsel %vm1475, %v1380, 0
        %v1552 = vsel %vm1475, %v1383, 0
        %v1555 = vsel %vm1475, %v1409, 0
        %v1558 = vsel %vm1475, %v1412, 0
        %v1561 = vsel %vm1475, %v1438, 0
        %v1564 = vsel %vm1475, %v1441, 0
        %v1567 = vsel %vm1475, %v1467, 0
        %v1570 = vsel %vm1475, %v1470, 0
        %1572 = vmatpush.msra.mxu0 0.0
        %1573 = vmatpush.msra.mxu0 0.0
        %1574 = vmatpush.msra.mxu0 0.0
        %1575 = vmatpush.msra.mxu0 0.0
        %1576 = vmatpush.msra.mxu0 0.0
        %1577 = vmatpush.msra.mxu0 0.0
        %1578 = vmatpush.msra.mxu0 0.0
        %1579 = vmatpush.msra.mxu0 0.0
        %1580 = vmatpush.msra.mxu0 0.0
        %1581 = vmatpush.msra.mxu0 0.0
        %1582 = vmatpush.msra.mxu0 0.0
        %1583 = vmatpush.msra.mxu0 0.0
        %1584 = vmatpush.msra.mxu0 %v995
        %1585 = vmatpush.msra.mxu0 %v994
        %1586 = vmatpush.msra.mxu0 %v993
        %1587 = vmatpush.msra.mxu0 %v992
        %1588 = vmatmul.f32.gmra.mxu0 %v1477
        %v1589 = vpop.f32.mrf.mxu0
        %v1590 = vadd.f32 %v1473, %v1589
        %1591 = vmatmul.f32.gmra.mxu0 %v1480
        %v1592 = vpop.f32.mrf.mxu0
        %v1593 = vadd.f32 %v1473, %v1592
        %1594 = vmatmul.f32.gmra.mxu0 %v1483
        %v1595 = vpop.f32.mrf.mxu0
        %v1596 = vadd.f32 %v1473, %v1595
        %1597 = vmatmul.f32.gmra.mxu0 %v1486
        %v1598 = vpop.f32.mrf.mxu0
        %v1599 = vadd.f32 %v1473, %v1598
        %1600 = vmatmul.f32.gmra.mxu0 %v1489
        %v1601 = vpop.f32.mrf.mxu0
        %v1602 = vadd.f32 %v1473, %v1601
        %1603 = vmatmul.f32.gmra.mxu0 %v1492
        %v1604 = vpop.f32.mrf.mxu0
        %v1605 = vadd.f32 %v1473, %v1604
        %1606 = vmatmul.f32.gmra.mxu0 %v1495
        %v1607 = vpop.f32.mrf.mxu0
        %v1608 = vadd.f32 %v1473, %v1607
        %1609 = vmatmul.f32.gmra.mxu0 %v1498
        %v1610 = vpop.f32.mrf.mxu0
        %v1611 = vadd.f32 %v1473, %v1610
        %1612 = vmatmul.f32.gmra.mxu0 %v1501
        %v1613 = vpop.f32.mrf.mxu0
        %v1614 = vadd.f32 %v1473, %v1613
        %1615 = vmatmul.f32.gmra.mxu0 %v1504
        %v1616 = vpop.f32.mrf.mxu0
        %v1617 = vadd.f32 %v1473, %v1616
        %1618 = vmatmul.f32.gmra.mxu0 %v1507
        %v1619 = vpop.f32.mrf.mxu0
        %v1620 = vadd.f32 %v1473, %v1619
        %1621 = vmatmul.f32.gmra.mxu0 %v1510
        %v1622 = vpop.f32.mrf.mxu0
        %v1623 = vadd.f32 %v1473, %v1622
        %1624 = vmatmul.f32.gmra.mxu0 %v1513
        %v1625 = vpop.f32.mrf.mxu0
        %v1626 = vadd.f32 %v1473, %v1625
        %1627 = vmatmul.f32.gmra.mxu0 %v1516
        %v1628 = vpop.f32.mrf.mxu0
        %v1629 = vadd.f32 %v1473, %v1628
        %1630 = vmatmul.f32.gmra.mxu0 %v1519
        %v1631 = vpop.f32.mrf.mxu0
        %v1632 = vadd.f32 %v1473, %v1631
        %1633 = vmatmul.f32.gmra.mxu0 %v1522
        %v1634 = vpop.f32.mrf.mxu0
        %v1635 = vadd.f32 %v1473, %v1634
        %1636 = vmatmul.f32.gmra.mxu0 %v1525
        %v1637 = vpop.f32.mrf.mxu0
        %v1638 = vadd.f32 %v1473, %v1637
        %1639 = vmatmul.f32.gmra.mxu0 %v1528
        %v1640 = vpop.f32.mrf.mxu0
        %v1641 = vadd.f32 %v1473, %v1640
        %1642 = vmatmul.f32.gmra.mxu0 %v1531
        %v1643 = vpop.f32.mrf.mxu0
        %v1644 = vadd.f32 %v1473, %v1643
        %1645 = vmatmul.f32.gmra.mxu0 %v1534
        %v1646 = vpop.f32.mrf.mxu0
        %v1647 = vadd.f32 %v1473, %v1646
        %1648 = vmatmul.f32.gmra.mxu0 %v1537
        %v1649 = vpop.f32.mrf.mxu0
        %v1650 = vadd.f32 %v1473, %v1649
        %1651 = vmatmul.f32.gmra.mxu0 %v1540
        %v1652 = vpop.f32.mrf.mxu0
        %v1653 = vadd.f32 %v1473, %v1652
        %1654 = vmatmul.f32.gmra.mxu0 %v1543
        %v1655 = vpop.f32.mrf.mxu0
        %v1656 = vadd.f32 %v1473, %v1655
        %1657 = vmatmul.f32.gmra.mxu0 %v1546
        %v1658 = vpop.f32.mrf.mxu0
        %v1659 = vadd.f32 %v1473, %v1658
        %1660 = vmatmul.f32.gmra.mxu0 %v1549
        %v1661 = vpop.f32.mrf.mxu0
        %v1662 = vadd.f32 %v1473, %v1661
        %1663 = vmatmul.f32.gmra.mxu0 %v1552
        %v1664 = vpop.f32.mrf.mxu0
        %v1665 = vadd.f32 %v1473, %v1664
        %1666 = vmatmul.f32.gmra.mxu0 %v1555
        %v1667 = vpop.f32.mrf.mxu0
        %v1668 = vadd.f32 %v1473, %v1667
        %1669 = vmatmul.f32.gmra.mxu0 %v1558
        %v1670 = vpop.f32.mrf.mxu0
        %v1671 = vadd.f32 %v1473, %v1670
        %1672 = vmatmul.f32.gmra.mxu0 %v1561
        %v1673 = vpop.f32.mrf.mxu0
        %v1674 = vadd.f32 %v1473, %v1673
        %1675 = vmatmul.f32.gmra.mxu0 %v1564
        %v1676 = vpop.f32.mrf.mxu0
        %v1677 = vadd.f32 %v1473, %v1676
        %1678 = vmatmul.f32.gmra.mxu0 %v1567
        %v1679 = vpop.f32.mrf.mxu0
        %v1680 = vadd.f32 %v1473, %v1679
        %1681 = vmatmul.f32.gmra.mxu0 %v1570
        %v1682 = vpop.f32.mrf.mxu0
        %v1683 = vadd.f32 %v1473, %v1682
        %1684 = vdwg.mxu0
        %v1686 = vperm.slane %v1001, 0
        %v1689 = vsel %vm1475, %v960, 0
        %v1692 = vsel %vm1475, %v961, 0
        %v1695 = vsel %vm1475, %v962, 0
        %v1698 = vsel %vm1475, %v963, 0
        %v1701 = vsel %vm1475, %v964, 0
        %v1704 = vsel %vm1475, %v965, 0
        %v1707 = vsel %vm1475, %v966, 0
        %v1710 = vsel %vm1475, %v967, 0
        %v1713 = vsel %vm1475, %v968, 0
        %v1716 = vsel %vm1475, %v969, 0
        %v1719 = vsel %vm1475, %v970, 0
        %v1722 = vsel %vm1475, %v971, 0
        %v1725 = vsel %vm1475, %v972, 0
        %v1728 = vsel %vm1475, %v973, 0
        %v1731 = vsel %vm1475, %v974, 0
        %v1734 = vsel %vm1475, %v975, 0
        %v1737 = vsel %vm1475, %v976, 0
        %v1740 = vsel %vm1475, %v977, 0
        %v1743 = vsel %vm1475, %v978, 0
        %v1746 = vsel %vm1475, %v979, 0
        %v1749 = vsel %vm1475, %v980, 0
        %v1752 = vsel %vm1475, %v981, 0
        %v1755 = vsel %vm1475, %v982, 0
        %v1758 = vsel %vm1475, %v983, 0
        %v1761 = vsel %vm1475, %v984, 0
        %v1764 = vsel %vm1475, %v985, 0
        %v1767 = vsel %vm1475, %v986, 0
        %v1770 = vsel %vm1475, %v987, 0
        %v1773 = vsel %vm1475, %v988, 0
        %v1776 = vsel %vm1475, %v989, 0
        %v1779 = vsel %vm1475, %v990, 0
        %v1782 = vsel %vm1475, %v991, 0
        %1784 = vmatpush.msra.mxu0 0.0
        %1785 = vmatpush.msra.mxu0 0.0
        %1786 = vmatpush.msra.mxu0 0.0
        %1787 = vmatpush.msra.mxu0 0.0
        %1788 = vmatpush.msra.mxu0 0.0
        %1789 = vmatpush.msra.mxu0 0.0
        %1790 = vmatpush.msra.mxu0 0.0
        %1791 = vmatpush.msra.mxu0 0.0
        %1792 = vmatpush.msra.mxu0 0.0
        %1793 = vmatpush.msra.mxu0 0.0
        %1794 = vmatpush.msra.mxu0 0.0
        %1795 = vmatpush.msra.mxu0 0.0
        %1796 = vmatpush.msra.mxu0 %v1000
        %1797 = vmatpush.msra.mxu0 %v999
        %1798 = vmatpush.msra.mxu0 %v998
        %1799 = vmatpush.msra.mxu0 %v997
        %1800 = vmatmul.f32.gmra.mxu0 %v1689
        %v1801 = vpop.f32.mrf.mxu0
        %v1802 = vadd.f32 %v1686, %v1801
        %1803 = vmatmul.f32.gmra.mxu0 %v1692
        %v1804 = vpop.f32.mrf.mxu0
        %v1805 = vadd.f32 %v1686, %v1804
        %1806 = vmatmul.f32.gmra.mxu0 %v1695
        %v1807 = vpop.f32.mrf.mxu0
        %v1808 = vadd.f32 %v1686, %v1807
        %1809 = vmatmul.f32.gmra.mxu0 %v1698
        %v1810 = vpop.f32.mrf.mxu0
        %v1811 = vadd.f32 %v1686, %v1810
        %1812 = vmatmul.f32.gmra.mxu0 %v1701
        %v1813 = vpop.f32.mrf.mxu0
        %v1814 = vadd.f32 %v1686, %v1813
        %1815 = vmatmul.f32.gmra.mxu0 %v1704
        %v1816 = vpop.f32.mrf.mxu0
        %v1817 = vadd.f32 %v1686, %v1816
        %1818 = vmatmul.f32.gmra.mxu0 %v1707
        %v1819 = vpop.f32.mrf.mxu0
        %v1820 = vadd.f32 %v1686, %v1819
        %1821 = vmatmul.f32.gmra.mxu0 %v1710
        %v1822 = vpop.f32.mrf.mxu0
        %v1823 = vadd.f32 %v1686, %v1822
        %1824 = vmatmul.f32.gmra.mxu0 %v1713
        %v1825 = vpop.f32.mrf.mxu0
        %v1826 = vadd.f32 %v1686, %v1825
        %1827 = vmatmul.f32.gmra.mxu0 %v1716
        %v1828 = vpop.f32.mrf.mxu0
        %v1829 = vadd.f32 %v1686, %v1828
        %1830 = vmatmul.f32.gmra.mxu0 %v1719
        %v1831 = vpop.f32.mrf.mxu0
        %v1832 = vadd.f32 %v1686, %v1831
        %1833 = vmatmul.f32.gmra.mxu0 %v1722
        %v1834 = vpop.f32.mrf.mxu0
        %v1835 = vadd.f32 %v1686, %v1834
        %1836 = vmatmul.f32.gmra.mxu0 %v1725
        %v1837 = vpop.f32.mrf.mxu0
        %v1838 = vadd.f32 %v1686, %v1837
        %1839 = vmatmul.f32.gmra.mxu0 %v1728
        %v1840 = vpop.f32.mrf.mxu0
        %v1841 = vadd.f32 %v1686, %v1840
        %1842 = vmatmul.f32.gmra.mxu0 %v1731
        %v1843 = vpop.f32.mrf.mxu0
        %v1844 = vadd.f32 %v1686, %v1843
        %1845 = vmatmul.f32.gmra.mxu0 %v1734
        %v1846 = vpop.f32.mrf.mxu0
        %v1847 = vadd.f32 %v1686, %v1846
        %1848 = vmatmul.f32.gmra.mxu0 %v1737
        %v1849 = vpop.f32.mrf.mxu0
        %v1850 = vadd.f32 %v1686, %v1849
        %1851 = vmatmul.f32.gmra.mxu0 %v1740
        %v1852 = vpop.f32.mrf.mxu0
        %v1853 = vadd.f32 %v1686, %v1852
        %1854 = vmatmul.f32.gmra.mxu0 %v1743
        %v1855 = vpop.f32.mrf.mxu0
        %v1856 = vadd.f32 %v1686, %v1855
        %1857 = vmatmul.f32.gmra.mxu0 %v1746
        %v1858 = vpop.f32.mrf.mxu0
        %v1859 = vadd.f32 %v1686, %v1858
        %1860 = vmatmul.f32.gmra.mxu0 %v1749
        %v1861 = vpop.f32.mrf.mxu0
        %v1862 = vadd.f32 %v1686, %v1861
        %1863 = vmatmul.f32.gmra.mxu0 %v1752
        %v1864 = vpop.f32.mrf.mxu0
        %v1865 = vadd.f32 %v1686, %v1864
        %1866 = vmatmul.f32.gmra.mxu0 %v1755
        %v1867 = vpop.f32.mrf.mxu0
        %v1868 = vadd.f32 %v1686, %v1867
        %1869 = vmatmul.f32.gmra.mxu0 %v1758
        %v1870 = vpop.f32.mrf.mxu0
        %v1871 = vadd.f32 %v1686, %v1870
        %1872 = vmatmul.f32.gmra.mxu0 %v1761
        %v1873 = vpop.f32.mrf.mxu0
        %v1874 = vadd.f32 %v1686, %v1873
        %1875 = vmatmul.f32.gmra.mxu0 %v1764
        %v1876 = vpop.f32.mrf.mxu0
        %v1877 = vadd.f32 %v1686, %v1876
        %1878 = vmatmul.f32.gmra.mxu0 %v1767
        %v1879 = vpop.f32.mrf.mxu0
        %v1880 = vadd.f32 %v1686, %v1879
        %1881 = vmatmul.f32.gmra.mxu0 %v1770
        %v1882 = vpop.f32.mrf.mxu0
        %v1883 = vadd.f32 %v1686, %v1882
        %1884 = vmatmul.f32.gmra.mxu0 %v1773
        %v1885 = vpop.f32.mrf.mxu0
        %v1886 = vadd.f32 %v1686, %v1885
        %1887 = vmatmul.f32.gmra.mxu0 %v1776
        %v1888 = vpop.f32.mrf.mxu0
        %v1889 = vadd.f32 %v1686, %v1888
        %1890 = vmatmul.f32.gmra.mxu0 %v1779
        %v1891 = vpop.f32.mrf.mxu0
        %v1892 = vadd.f32 %v1686, %v1891
        %1893 = vmatmul.f32.gmra.mxu0 %v1782
        %v1894 = vpop.f32.mrf.mxu0
        %v1895 = vadd.f32 %v1686, %v1894
        %1896 = vdwg.mxu0
        %v1897 = vadd.f32 %v1590, %v1802
        %v1898 = vadd.f32 %v1593, %v1805
        %v1899 = vadd.f32 %v1596, %v1808
        %v1900 = vadd.f32 %v1599, %v1811
        %v1901 = vadd.f32 %v1602, %v1814
        %v1902 = vadd.f32 %v1605, %v1817
        %v1903 = vadd.f32 %v1608, %v1820
        %v1904 = vadd.f32 %v1611, %v1823
        %v1905 = vadd.f32 %v1614, %v1826
        %v1906 = vadd.f32 %v1617, %v1829
        %v1907 = vadd.f32 %v1620, %v1832
        %v1908 = vadd.f32 %v1623, %v1835
        %v1909 = vadd.f32 %v1626, %v1838
        %v1910 = vadd.f32 %v1629, %v1841
        %v1911 = vadd.f32 %v1632, %v1844
        %v1912 = vadd.f32 %v1635, %v1847
        %v1913 = vadd.f32 %v1638, %v1850
        %v1914 = vadd.f32 %v1641, %v1853
        %v1915 = vadd.f32 %v1644, %v1856
        %v1916 = vadd.f32 %v1647, %v1859
        %v1917 = vadd.f32 %v1650, %v1862
        %v1918 = vadd.f32 %v1653, %v1865
        %v1919 = vadd.f32 %v1656, %v1868
        %v1920 = vadd.f32 %v1659, %v1871
        %v1921 = vadd.f32 %v1662, %v1874
        %v1922 = vadd.f32 %v1665, %v1877
        %v1923 = vadd.f32 %v1668, %v1880
        %v1924 = vadd.f32 %v1671, %v1883
        %v1925 = vadd.f32 %v1674, %v1886
        %v1926 = vadd.f32 %v1677, %v1889
        %v1927 = vadd.f32 %v1680, %v1892
        %v1928 = vadd.f32 %v1683, %v1895
        %v1929 = vxor.u32 %v1897, 2147483648
        %v1930 = vxor.u32 %v1898, 2147483648
        %v1931 = vxor.u32 %v1899, 2147483648
        %v1932 = vxor.u32 %v1900, 2147483648
        %v1933 = vxor.u32 %v1901, 2147483648
        %v1934 = vxor.u32 %v1902, 2147483648
        %v1935 = vxor.u32 %v1903, 2147483648
        %v1936 = vxor.u32 %v1904, 2147483648
        %v1937 = vxor.u32 %v1905, 2147483648
        %v1938 = vxor.u32 %v1906, 2147483648
        %v1939 = vxor.u32 %v1907, 2147483648
        %v1940 = vxor.u32 %v1908, 2147483648
        %v1941 = vxor.u32 %v1909, 2147483648
        %v1942 = vxor.u32 %v1910, 2147483648
        %v1943 = vxor.u32 %v1911, 2147483648
        %v1944 = vxor.u32 %v1912, 2147483648
        %v1945 = vxor.u32 %v1913, 2147483648
        %v1946 = vxor.u32 %v1914, 2147483648
        %v1947 = vxor.u32 %v1915, 2147483648
        %v1948 = vxor.u32 %v1916, 2147483648
        %v1949 = vxor.u32 %v1917, 2147483648
        %v1950 = vxor.u32 %v1918, 2147483648
        %v1951 = vxor.u32 %v1919, 2147483648
        %v1952 = vxor.u32 %v1920, 2147483648
        %v1953 = vxor.u32 %v1921, 2147483648
        %v1954 = vxor.u32 %v1922, 2147483648
        %v1955 = vxor.u32 %v1923, 2147483648
        %v1956 = vxor.u32 %v1924, 2147483648
        %v1957 = vxor.u32 %v1925, 2147483648
        %v1958 = vxor.u32 %v1926, 2147483648
        %v1959 = vxor.u32 %v1927, 2147483648
        %v1960 = vxor.u32 %v1928, 2147483648
        %v1961 = vmul.f32 %v1929, 1.442695
        %v1962 = vpow.pop %v1961
        %v1963 = vmul.f32 %v1930, 1.442695
        %v1964 = vpow.pop %v1963
        %v1965 = vmul.f32 %v1931, 1.442695
        %v1966 = vpow.pop %v1965
        %v1967 = vmul.f32 %v1932, 1.442695
        %v1968 = vpow.pop %v1967
        %v1969 = vmul.f32 %v1933, 1.442695
        %v1970 = vpow.pop %v1969
        %v1971 = vmul.f32 %v1934, 1.442695
        %v1972 = vpow.pop %v1971
        %v1973 = vmul.f32 %v1935, 1.442695
        %v1974 = vpow.pop %v1973
        %v1975 = vmul.f32 %v1936, 1.442695
        %v1976 = vpow.pop %v1975
        %v1977 = vmul.f32 %v1937, 1.442695
        %v1978 = vpow.pop %v1977
        %v1979 = vmul.f32 %v1938, 1.442695
        %v1980 = vpow.pop %v1979
        %v1981 = vmul.f32 %v1939, 1.442695
        %v1982 = vpow.pop %v1981
        %v1983 = vmul.f32 %v1940, 1.442695
        %v1984 = vpow.pop %v1983
        %v1985 = vmul.f32 %v1941, 1.442695
        %v1986 = vpow.pop %v1985
        %v1987 = vmul.f32 %v1942, 1.442695
        %v1988 = vpow.pop %v1987
        %v1989 = vmul.f32 %v1943, 1.442695
        %v1990 = vpow.pop %v1989
        %v1991 = vmul.f32 %v1944, 1.442695
        %v1992 = vpow.pop %v1991
        %v1993 = vmul.f32 %v1945, 1.442695
        %v1994 = vpow.pop %v1993
        %v1995 = vmul.f32 %v1946, 1.442695
        %v1996 = vpow.pop %v1995
        %v1997 = vmul.f32 %v1947, 1.442695
        %v1998 = vpow.pop %v1997
        %v1999 = vmul.f32 %v1948, 1.442695
        %v2000 = vpow.pop %v1999
        %v2001 = vmul.f32 %v1949, 1.442695
        %v2002 = vpow.pop %v2001
        %v2003 = vmul.f32 %v1950, 1.442695
        %v2004 = vpow.pop %v2003
        %v2005 = vmul.f32 %v1951, 1.442695
        %v2006 = vpow.pop %v2005
        %v2007 = vmul.f32 %v1952, 1.442695
        %v2008 = vpow.pop %v2007
        %v2009 = vmul.f32 %v1953, 1.442695
        %v2010 = vpow.pop %v2009
        %v2011 = vmul.f32 %v1954, 1.442695
        %v2012 = vpow.pop %v2011
        %v2013 = vmul.f32 %v1955, 1.442695
        %v2014 = vpow.pop %v2013
        %v2015 = vmul.f32 %v1956, 1.442695
        %v2016 = vpow.pop %v2015
        %v2017 = vmul.f32 %v1957, 1.442695
        %v2018 = vpow.pop %v2017
        %v2019 = vmul.f32 %v1958, 1.442695
        %v2020 = vpow.pop %v2019
        %v2021 = vmul.f32 %v1959, 1.442695
        %v2022 = vpow.pop %v2021
        %v2023 = vmul.f32 %v1960, 1.442695
        %v2024 = vpow.pop %v2023
        %v2025 = vadd.f32 %v1962, 1.0
        %v2026 = vadd.f32 %v1964, 1.0
        %v2027 = vadd.f32 %v1966, 1.0
        %v2028 = vadd.f32 %v1968, 1.0
        %v2029 = vadd.f32 %v1970, 1.0
        %v2030 = vadd.f32 %v1972, 1.0
        %v2031 = vadd.f32 %v1974, 1.0
        %v2032 = vadd.f32 %v1976, 1.0
        %v2033 = vadd.f32 %v1978, 1.0
        %v2034 = vadd.f32 %v1980, 1.0
        %v2035 = vadd.f32 %v1982, 1.0
        %v2036 = vadd.f32 %v1984, 1.0
        %v2037 = vadd.f32 %v1986, 1.0
        %v2038 = vadd.f32 %v1988, 1.0
        %v2039 = vadd.f32 %v1990, 1.0
        %v2040 = vadd.f32 %v1992, 1.0
        %v2041 = vadd.f32 %v1994, 1.0
        %v2042 = vadd.f32 %v1996, 1.0
        %v2043 = vadd.f32 %v1998, 1.0
        %v2044 = vadd.f32 %v2000, 1.0
        %v2045 = vadd.f32 %v2002, 1.0
        %v2046 = vadd.f32 %v2004, 1.0
        %v2047 = vadd.f32 %v2006, 1.0
        %v2048 = vadd.f32 %v2008, 1.0
        %v2049 = vadd.f32 %v2010, 1.0
        %v2050 = vadd.f32 %v2012, 1.0
        %v2051 = vadd.f32 %v2014, 1.0
        %v2052 = vadd.f32 %v2016, 1.0
        %v2053 = vadd.f32 %v2018, 1.0
        %v2054 = vadd.f32 %v2020, 1.0
        %v2055 = vadd.f32 %v2022, 1.0
        %v2056 = vadd.f32 %v2024, 1.0
        %v2057 = vrcp.pop %v2025
        %v2058 = vmul.f32 %v2025, %v2057
        %v2059 = vsub.f32 1.0, %v2058
        %v2060 = vmul.f32 %v2057, %v2059
        %v2061 = vadd.f32 %v2057, %v2060
        %vm2062 = vweird.f32 %v2025
        %vm2063 = vweird.f32 %v2057
        %vm2064 = vmor %vm2062, %vm2063
        %v2065 = vsel %vm2064, %v2057, %v2061
        %v2066 = vand.u32 2147483647, %v2025
        %vm2067 = vcmp.eq.f32.partialorder %v2066, 8.507059e+37
        %v2068 = vand.u32 %v2025, 2147483648
        %v2069 = vor.u32 1.1754944e-38, %v2068
        %v2070 = vsel %vm2067, %v2069, %v2065
        %v2071 = vmul.f32 1.0, %v2070
        %v2072 = vrcp.pop %v2026
        %v2073 = vmul.f32 %v2026, %v2072
        %v2074 = vsub.f32 1.0, %v2073
        %v2075 = vmul.f32 %v2072, %v2074
        %v2076 = vadd.f32 %v2072, %v2075
        %vm2077 = vweird.f32 %v2026
        %vm2078 = vweird.f32 %v2072
        %vm2079 = vmor %vm2077, %vm2078
        %v2080 = vsel %vm2079, %v2072, %v2076
        %v2081 = vand.u32 2147483647, %v2026
        %vm2082 = vcmp.eq.f32.partialorder %v2081, 8.507059e+37
        %v2083 = vand.u32 %v2026, 2147483648
        %v2084 = vor.u32 1.1754944e-38, %v2083
        %v2085 = vsel %vm2082, %v2084, %v2080
        %v2086 = vmul.f32 1.0, %v2085
        %v2087 = vrcp.pop %v2027
        %v2088 = vmul.f32 %v2027, %v2087
        %v2089 = vsub.f32 1.0, %v2088
        %v2090 = vmul.f32 %v2087, %v2089
        %v2091 = vadd.f32 %v2087, %v2090
        %vm2092 = vweird.f32 %v2027
        %vm2093 = vweird.f32 %v2087
        %vm2094 = vmor %vm2092, %vm2093
        %v2095 = vsel %vm2094, %v2087, %v2091
        %v2096 = vand.u32 2147483647, %v2027
        %vm2097 = vcmp.eq.f32.partialorder %v2096, 8.507059e+37
        %v2098 = vand.u32 %v2027, 2147483648
        %v2099 = vor.u32 1.1754944e-38, %v2098
        %v2100 = vsel %vm2097, %v2099, %v2095
        %v2101 = vmul.f32 1.0, %v2100
        %v2102 = vrcp.pop %v2028
        %v2103 = vmul.f32 %v2028, %v2102
        %v2104 = vsub.f32 1.0, %v2103
        %v2105 = vmul.f32 %v2102, %v2104
        %v2106 = vadd.f32 %v2102, %v2105
        %vm2107 = vweird.f32 %v2028
        %vm2108 = vweird.f32 %v2102
        %vm2109 = vmor %vm2107, %vm2108
        %v2110 = vsel %vm2109, %v2102, %v2106
        %v2111 = vand.u32 2147483647, %v2028
        %vm2112 = vcmp.eq.f32.partialorder %v2111, 8.507059e+37
        %v2113 = vand.u32 %v2028, 2147483648
        %v2114 = vor.u32 1.1754944e-38, %v2113
        %v2115 = vsel %vm2112, %v2114, %v2110
        %v2116 = vmul.f32 1.0, %v2115
        %v2117 = vrcp.pop %v2029
        %v2118 = vmul.f32 %v2029, %v2117
        %v2119 = vsub.f32 1.0, %v2118
        %v2120 = vmul.f32 %v2117, %v2119
        %v2121 = vadd.f32 %v2117, %v2120
        %vm2122 = vweird.f32 %v2029
        %vm2123 = vweird.f32 %v2117
        %vm2124 = vmor %vm2122, %vm2123
        %v2125 = vsel %vm2124, %v2117, %v2121
        %v2126 = vand.u32 2147483647, %v2029
        %vm2127 = vcmp.eq.f32.partialorder %v2126, 8.507059e+37
        %v2128 = vand.u32 %v2029, 2147483648
        %v2129 = vor.u32 1.1754944e-38, %v2128
        %v2130 = vsel %vm2127, %v2129, %v2125
        %v2131 = vmul.f32 1.0, %v2130
        %v2132 = vrcp.pop %v2030
        %v2133 = vmul.f32 %v2030, %v2132
        %v2134 = vsub.f32 1.0, %v2133
        %v2135 = vmul.f32 %v2132, %v2134
        %v2136 = vadd.f32 %v2132, %v2135
        %vm2137 = vweird.f32 %v2030
        %vm2138 = vweird.f32 %v2132
        %vm2139 = vmor %vm2137, %vm2138
        %v2140 = vsel %vm2139, %v2132, %v2136
        %v2141 = vand.u32 2147483647, %v2030
        %vm2142 = vcmp.eq.f32.partialorder %v2141, 8.507059e+37
        %v2143 = vand.u32 %v2030, 2147483648
        %v2144 = vor.u32 1.1754944e-38, %v2143
        %v2145 = vsel %vm2142, %v2144, %v2140
        %v2146 = vmul.f32 1.0, %v2145
        %v2147 = vrcp.pop %v2031
        %v2148 = vmul.f32 %v2031, %v2147
        %v2149 = vsub.f32 1.0, %v2148
        %v2150 = vmul.f32 %v2147, %v2149
        %v2151 = vadd.f32 %v2147, %v2150
        %vm2152 = vweird.f32 %v2031
        %vm2153 = vweird.f32 %v2147
        %vm2154 = vmor %vm2152, %vm2153
        %v2155 = vsel %vm2154, %v2147, %v2151
        %v2156 = vand.u32 2147483647, %v2031
        %vm2157 = vcmp.eq.f32.partialorder %v2156, 8.507059e+37
        %v2158 = vand.u32 %v2031, 2147483648
        %v2159 = vor.u32 1.1754944e-38, %v2158
        %v2160 = vsel %vm2157, %v2159, %v2155
        %v2161 = vmul.f32 1.0, %v2160
        %v2162 = vrcp.pop %v2032
        %v2163 = vmul.f32 %v2032, %v2162
        %v2164 = vsub.f32 1.0, %v2163
        %v2165 = vmul.f32 %v2162, %v2164
        %v2166 = vadd.f32 %v2162, %v2165
        %vm2167 = vweird.f32 %v2032
        %vm2168 = vweird.f32 %v2162
        %vm2169 = vmor %vm2167, %vm2168
        %v2170 = vsel %vm2169, %v2162, %v2166
        %v2171 = vand.u32 2147483647, %v2032
        %vm2172 = vcmp.eq.f32.partialorder %v2171, 8.507059e+37
        %v2173 = vand.u32 %v2032, 2147483648
        %v2174 = vor.u32 1.1754944e-38, %v2173
        %v2175 = vsel %vm2172, %v2174, %v2170
        %v2176 = vmul.f32 1.0, %v2175
        %v2177 = vrcp.pop %v2033
        %v2178 = vmul.f32 %v2033, %v2177
        %v2179 = vsub.f32 1.0, %v2178
        %v2180 = vmul.f32 %v2177, %v2179
        %v2181 = vadd.f32 %v2177, %v2180
        %vm2182 = vweird.f32 %v2033
        %vm2183 = vweird.f32 %v2177
        %vm2184 = vmor %vm2182, %vm2183
        %v2185 = vsel %vm2184, %v2177, %v2181
        %v2186 = vand.u32 2147483647, %v2033
        %vm2187 = vcmp.eq.f32.partialorder %v2186, 8.507059e+37
        %v2188 = vand.u32 %v2033, 2147483648
        %v2189 = vor.u32 1.1754944e-38, %v2188
        %v2190 = vsel %vm2187, %v2189, %v2185
        %v2191 = vmul.f32 1.0, %v2190
        %v2192 = vrcp.pop %v2034
        %v2193 = vmul.f32 %v2034, %v2192
        %v2194 = vsub.f32 1.0, %v2193
        %v2195 = vmul.f32 %v2192, %v2194
        %v2196 = vadd.f32 %v2192, %v2195
        %vm2197 = vweird.f32 %v2034
        %vm2198 = vweird.f32 %v2192
        %vm2199 = vmor %vm2197, %vm2198
        %v2200 = vsel %vm2199, %v2192, %v2196
        %v2201 = vand.u32 2147483647, %v2034
        %vm2202 = vcmp.eq.f32.partialorder %v2201, 8.507059e+37
        %v2203 = vand.u32 %v2034, 2147483648
        %v2204 = vor.u32 1.1754944e-38, %v2203
        %v2205 = vsel %vm2202, %v2204, %v2200
        %v2206 = vmul.f32 1.0, %v2205
        %v2207 = vrcp.pop %v2035
        %v2208 = vmul.f32 %v2035, %v2207
        %v2209 = vsub.f32 1.0, %v2208
        %v2210 = vmul.f32 %v2207, %v2209
        %v2211 = vadd.f32 %v2207, %v2210
        %vm2212 = vweird.f32 %v2035
        %vm2213 = vweird.f32 %v2207
        %vm2214 = vmor %vm2212, %vm2213
        %v2215 = vsel %vm2214, %v2207, %v2211
        %v2216 = vand.u32 2147483647, %v2035
        %vm2217 = vcmp.eq.f32.partialorder %v2216, 8.507059e+37
        %v2218 = vand.u32 %v2035, 2147483648
        %v2219 = vor.u32 1.1754944e-38, %v2218
        %v2220 = vsel %vm2217, %v2219, %v2215
        %v2221 = vmul.f32 1.0, %v2220
        %v2222 = vrcp.pop %v2036
        %v2223 = vmul.f32 %v2036, %v2222
        %v2224 = vsub.f32 1.0, %v2223
        %v2225 = vmul.f32 %v2222, %v2224
        %v2226 = vadd.f32 %v2222, %v2225
        %vm2227 = vweird.f32 %v2036
        %vm2228 = vweird.f32 %v2222
        %vm2229 = vmor %vm2227, %vm2228
        %v2230 = vsel %vm2229, %v2222, %v2226
        %v2231 = vand.u32 2147483647, %v2036
        %vm2232 = vcmp.eq.f32.partialorder %v2231, 8.507059e+37
        %v2233 = vand.u32 %v2036, 2147483648
        %v2234 = vor.u32 1.1754944e-38, %v2233
        %v2235 = vsel %vm2232, %v2234, %v2230
        %v2236 = vmul.f32 1.0, %v2235
        %v2237 = vrcp.pop %v2037
        %v2238 = vmul.f32 %v2037, %v2237
        %v2239 = vsub.f32 1.0, %v2238
        %v2240 = vmul.f32 %v2237, %v2239
        %v2241 = vadd.f32 %v2237, %v2240
        %vm2242 = vweird.f32 %v2037
        %vm2243 = vweird.f32 %v2237
        %vm2244 = vmor %vm2242, %vm2243
        %v2245 = vsel %vm2244, %v2237, %v2241
        %v2246 = vand.u32 2147483647, %v2037
        %vm2247 = vcmp.eq.f32.partialorder %v2246, 8.507059e+37
        %v2248 = vand.u32 %v2037, 2147483648
        %v2249 = vor.u32 1.1754944e-38, %v2248
        %v2250 = vsel %vm2247, %v2249, %v2245
        %v2251 = vmul.f32 1.0, %v2250
        %v2252 = vrcp.pop %v2038
        %v2253 = vmul.f32 %v2038, %v2252
        %v2254 = vsub.f32 1.0, %v2253
        %v2255 = vmul.f32 %v2252, %v2254
        %v2256 = vadd.f32 %v2252, %v2255
        %vm2257 = vweird.f32 %v2038
        %vm2258 = vweird.f32 %v2252
        %vm2259 = vmor %vm2257, %vm2258
        %v2260 = vsel %vm2259, %v2252, %v2256
        %v2261 = vand.u32 2147483647, %v2038
        %vm2262 = vcmp.eq.f32.partialorder %v2261, 8.507059e+37
        %v2263 = vand.u32 %v2038, 2147483648
        %v2264 = vor.u32 1.1754944e-38, %v2263
        %v2265 = vsel %vm2262, %v2264, %v2260
        %v2266 = vmul.f32 1.0, %v2265
        %v2267 = vrcp.pop %v2039
        %v2268 = vmul.f32 %v2039, %v2267
        %v2269 = vsub.f32 1.0, %v2268
        %v2270 = vmul.f32 %v2267, %v2269
        %v2271 = vadd.f32 %v2267, %v2270
        %vm2272 = vweird.f32 %v2039
        %vm2273 = vweird.f32 %v2267
        %vm2274 = vmor %vm2272, %vm2273
        %v2275 = vsel %vm2274, %v2267, %v2271
        %v2276 = vand.u32 2147483647, %v2039
        %vm2277 = vcmp.eq.f32.partialorder %v2276, 8.507059e+37
        %v2278 = vand.u32 %v2039, 2147483648
        %v2279 = vor.u32 1.1754944e-38, %v2278
        %v2280 = vsel %vm2277, %v2279, %v2275
        %v2281 = vmul.f32 1.0, %v2280
        %v2282 = vrcp.pop %v2040
        %v2283 = vmul.f32 %v2040, %v2282
        %v2284 = vsub.f32 1.0, %v2283
        %v2285 = vmul.f32 %v2282, %v2284
        %v2286 = vadd.f32 %v2282, %v2285
        %vm2287 = vweird.f32 %v2040
        %vm2288 = vweird.f32 %v2282
        %vm2289 = vmor %vm2287, %vm2288
        %v2290 = vsel %vm2289, %v2282, %v2286
        %v2291 = vand.u32 2147483647, %v2040
        %vm2292 = vcmp.eq.f32.partialorder %v2291, 8.507059e+37
        %v2293 = vand.u32 %v2040, 2147483648
        %v2294 = vor.u32 1.1754944e-38, %v2293
        %v2295 = vsel %vm2292, %v2294, %v2290
        %v2296 = vmul.f32 1.0, %v2295
        %v2297 = vrcp.pop %v2041
        %v2298 = vmul.f32 %v2041, %v2297
        %v2299 = vsub.f32 1.0, %v2298
        %v2300 = vmul.f32 %v2297, %v2299
        %v2301 = vadd.f32 %v2297, %v2300
        %vm2302 = vweird.f32 %v2041
        %vm2303 = vweird.f32 %v2297
        %vm2304 = vmor %vm2302, %vm2303
        %v2305 = vsel %vm2304, %v2297, %v2301
        %v2306 = vand.u32 2147483647, %v2041
        %vm2307 = vcmp.eq.f32.partialorder %v2306, 8.507059e+37
        %v2308 = vand.u32 %v2041, 2147483648
        %v2309 = vor.u32 1.1754944e-38, %v2308
        %v2310 = vsel %vm2307, %v2309, %v2305
        %v2311 = vmul.f32 1.0, %v2310
        %v2312 = vrcp.pop %v2042
        %v2313 = vmul.f32 %v2042, %v2312
        %v2314 = vsub.f32 1.0, %v2313
        %v2315 = vmul.f32 %v2312, %v2314
        %v2316 = vadd.f32 %v2312, %v2315
        %vm2317 = vweird.f32 %v2042
        %vm2318 = vweird.f32 %v2312
        %vm2319 = vmor %vm2317, %vm2318
        %v2320 = vsel %vm2319, %v2312, %v2316
        %v2321 = vand.u32 2147483647, %v2042
        %vm2322 = vcmp.eq.f32.partialorder %v2321, 8.507059e+37
        %v2323 = vand.u32 %v2042, 2147483648
        %v2324 = vor.u32 1.1754944e-38, %v2323
        %v2325 = vsel %vm2322, %v2324, %v2320
        %v2326 = vmul.f32 1.0, %v2325
        %v2327 = vrcp.pop %v2043
        %v2328 = vmul.f32 %v2043, %v2327
        %v2329 = vsub.f32 1.0, %v2328
        %v2330 = vmul.f32 %v2327, %v2329
        %v2331 = vadd.f32 %v2327, %v2330
        %vm2332 = vweird.f32 %v2043
        %vm2333 = vweird.f32 %v2327
        %vm2334 = vmor %vm2332, %vm2333
        %v2335 = vsel %vm2334, %v2327, %v2331
        %v2336 = vand.u32 2147483647, %v2043
        %vm2337 = vcmp.eq.f32.partialorder %v2336, 8.507059e+37
        %v2338 = vand.u32 %v2043, 2147483648
        %v2339 = vor.u32 1.1754944e-38, %v2338
        %v2340 = vsel %vm2337, %v2339, %v2335
        %v2341 = vmul.f32 1.0, %v2340
        %v2342 = vrcp.pop %v2044
        %v2343 = vmul.f32 %v2044, %v2342
        %v2344 = vsub.f32 1.0, %v2343
        %v2345 = vmul.f32 %v2342, %v2344
        %v2346 = vadd.f32 %v2342, %v2345
        %vm2347 = vweird.f32 %v2044
        %vm2348 = vweird.f32 %v2342
        %vm2349 = vmor %vm2347, %vm2348
        %v2350 = vsel %vm2349, %v2342, %v2346
        %v2351 = vand.u32 2147483647, %v2044
        %vm2352 = vcmp.eq.f32.partialorder %v2351, 8.507059e+37
        %v2353 = vand.u32 %v2044, 2147483648
        %v2354 = vor.u32 1.1754944e-38, %v2353
        %v2355 = vsel %vm2352, %v2354, %v2350
        %v2356 = vmul.f32 1.0, %v2355
        %v2357 = vrcp.pop %v2045
        %v2358 = vmul.f32 %v2045, %v2357
        %v2359 = vsub.f32 1.0, %v2358
        %v2360 = vmul.f32 %v2357, %v2359
        %v2361 = vadd.f32 %v2357, %v2360
        %vm2362 = vweird.f32 %v2045
        %vm2363 = vweird.f32 %v2357
        %vm2364 = vmor %vm2362, %vm2363
        %v2365 = vsel %vm2364, %v2357, %v2361
        %v2366 = vand.u32 2147483647, %v2045
        %vm2367 = vcmp.eq.f32.partialorder %v2366, 8.507059e+37
        %v2368 = vand.u32 %v2045, 2147483648
        %v2369 = vor.u32 1.1754944e-38, %v2368
        %v2370 = vsel %vm2367, %v2369, %v2365
        %v2371 = vmul.f32 1.0, %v2370
        %v2372 = vrcp.pop %v2046
        %v2373 = vmul.f32 %v2046, %v2372
        %v2374 = vsub.f32 1.0, %v2373
        %v2375 = vmul.f32 %v2372, %v2374
        %v2376 = vadd.f32 %v2372, %v2375
        %vm2377 = vweird.f32 %v2046
        %vm2378 = vweird.f32 %v2372
        %vm2379 = vmor %vm2377, %vm2378
        %v2380 = vsel %vm2379, %v2372, %v2376
        %v2381 = vand.u32 2147483647, %v2046
        %vm2382 = vcmp.eq.f32.partialorder %v2381, 8.507059e+37
        %v2383 = vand.u32 %v2046, 2147483648
        %v2384 = vor.u32 1.1754944e-38, %v2383
        %v2385 = vsel %vm2382, %v2384, %v2380
        %v2386 = vmul.f32 1.0, %v2385
        %v2387 = vrcp.pop %v2047
        %v2388 = vmul.f32 %v2047, %v2387
        %v2389 = vsub.f32 1.0, %v2388
        %v2390 = vmul.f32 %v2387, %v2389
        %v2391 = vadd.f32 %v2387, %v2390
        %vm2392 = vweird.f32 %v2047
        %vm2393 = vweird.f32 %v2387
        %vm2394 = vmor %vm2392, %vm2393
        %v2395 = vsel %vm2394, %v2387, %v2391
        %v2396 = vand.u32 2147483647, %v2047
        %vm2397 = vcmp.eq.f32.partialorder %v2396, 8.507059e+37
        %v2398 = vand.u32 %v2047, 2147483648
        %v2399 = vor.u32 1.1754944e-38, %v2398
        %v2400 = vsel %vm2397, %v2399, %v2395
        %v2401 = vmul.f32 1.0, %v2400
        %v2402 = vrcp.pop %v2048
        %v2403 = vmul.f32 %v2048, %v2402
        %v2404 = vsub.f32 1.0, %v2403
        %v2405 = vmul.f32 %v2402, %v2404
        %v2406 = vadd.f32 %v2402, %v2405
        %vm2407 = vweird.f32 %v2048
        %vm2408 = vweird.f32 %v2402
        %vm2409 = vmor %vm2407, %vm2408
        %v2410 = vsel %vm2409, %v2402, %v2406
        %v2411 = vand.u32 2147483647, %v2048
        %vm2412 = vcmp.eq.f32.partialorder %v2411, 8.507059e+37
        %v2413 = vand.u32 %v2048, 2147483648
        %v2414 = vor.u32 1.1754944e-38, %v2413
        %v2415 = vsel %vm2412, %v2414, %v2410
        %v2416 = vmul.f32 1.0, %v2415
        %v2417 = vrcp.pop %v2049
        %v2418 = vmul.f32 %v2049, %v2417
        %v2419 = vsub.f32 1.0, %v2418
        %v2420 = vmul.f32 %v2417, %v2419
        %v2421 = vadd.f32 %v2417, %v2420
        %vm2422 = vweird.f32 %v2049
        %vm2423 = vweird.f32 %v2417
        %vm2424 = vmor %vm2422, %vm2423
        %v2425 = vsel %vm2424, %v2417, %v2421
        %v2426 = vand.u32 2147483647, %v2049
        %vm2427 = vcmp.eq.f32.partialorder %v2426, 8.507059e+37
        %v2428 = vand.u32 %v2049, 2147483648
        %v2429 = vor.u32 1.1754944e-38, %v2428
        %v2430 = vsel %vm2427, %v2429, %v2425
        %v2431 = vmul.f32 1.0, %v2430
        %v2432 = vrcp.pop %v2050
        %v2433 = vmul.f32 %v2050, %v2432
        %v2434 = vsub.f32 1.0, %v2433
        %v2435 = vmul.f32 %v2432, %v2434
        %v2436 = vadd.f32 %v2432, %v2435
        %vm2437 = vweird.f32 %v2050
        %vm2438 = vweird.f32 %v2432
        %vm2439 = vmor %vm2437, %vm2438
        %v2440 = vsel %vm2439, %v2432, %v2436
        %v2441 = vand.u32 2147483647, %v2050
        %vm2442 = vcmp.eq.f32.partialorder %v2441, 8.507059e+37
        %v2443 = vand.u32 %v2050, 2147483648
        %v2444 = vor.u32 1.1754944e-38, %v2443
        %v2445 = vsel %vm2442, %v2444, %v2440
        %v2446 = vmul.f32 1.0, %v2445
        %v2447 = vrcp.pop %v2051
        %v2448 = vmul.f32 %v2051, %v2447
        %v2449 = vsub.f32 1.0, %v2448
        %v2450 = vmul.f32 %v2447, %v2449
        %v2451 = vadd.f32 %v2447, %v2450
        %vm2452 = vweird.f32 %v2051
        %vm2453 = vweird.f32 %v2447
        %vm2454 = vmor %vm2452, %vm2453
        %v2455 = vsel %vm2454, %v2447, %v2451
        %v2456 = vand.u32 2147483647, %v2051
        %vm2457 = vcmp.eq.f32.partialorder %v2456, 8.507059e+37
        %v2458 = vand.u32 %v2051, 2147483648
        %v2459 = vor.u32 1.1754944e-38, %v2458
        %v2460 = vsel %vm2457, %v2459, %v2455
        %v2461 = vmul.f32 1.0, %v2460
        %v2462 = vrcp.pop %v2052
        %v2463 = vmul.f32 %v2052, %v2462
        %v2464 = vsub.f32 1.0, %v2463
        %v2465 = vmul.f32 %v2462, %v2464
        %v2466 = vadd.f32 %v2462, %v2465
        %vm2467 = vweird.f32 %v2052
        %vm2468 = vweird.f32 %v2462
        %vm2469 = vmor %vm2467, %vm2468
        %v2470 = vsel %vm2469, %v2462, %v2466
        %v2471 = vand.u32 2147483647, %v2052
        %vm2472 = vcmp.eq.f32.partialorder %v2471, 8.507059e+37
        %v2473 = vand.u32 %v2052, 2147483648
        %v2474 = vor.u32 1.1754944e-38, %v2473
        %v2475 = vsel %vm2472, %v2474, %v2470
        %v2476 = vmul.f32 1.0, %v2475
        %v2477 = vrcp.pop %v2053
        %v2478 = vmul.f32 %v2053, %v2477
        %v2479 = vsub.f32 1.0, %v2478
        %v2480 = vmul.f32 %v2477, %v2479
        %v2481 = vadd.f32 %v2477, %v2480
        %vm2482 = vweird.f32 %v2053
        %vm2483 = vweird.f32 %v2477
        %vm2484 = vmor %vm2482, %vm2483
        %v2485 = vsel %vm2484, %v2477, %v2481
        %v2486 = vand.u32 2147483647, %v2053
        %vm2487 = vcmp.eq.f32.partialorder %v2486, 8.507059e+37
        %v2488 = vand.u32 %v2053, 2147483648
        %v2489 = vor.u32 1.1754944e-38, %v2488
        %v2490 = vsel %vm2487, %v2489, %v2485
        %v2491 = vmul.f32 1.0, %v2490
        %v2492 = vrcp.pop %v2054
        %v2493 = vmul.f32 %v2054, %v2492
        %v2494 = vsub.f32 1.0, %v2493
        %v2495 = vmul.f32 %v2492, %v2494
        %v2496 = vadd.f32 %v2492, %v2495
        %vm2497 = vweird.f32 %v2054
        %vm2498 = vweird.f32 %v2492
        %vm2499 = vmor %vm2497, %vm2498
        %v2500 = vsel %vm2499, %v2492, %v2496
        %v2501 = vand.u32 2147483647, %v2054
        %vm2502 = vcmp.eq.f32.partialorder %v2501, 8.507059e+37
        %v2503 = vand.u32 %v2054, 2147483648
        %v2504 = vor.u32 1.1754944e-38, %v2503
        %v2505 = vsel %vm2502, %v2504, %v2500
        %v2506 = vmul.f32 1.0, %v2505
        %v2507 = vrcp.pop %v2055
        %v2508 = vmul.f32 %v2055, %v2507
        %v2509 = vsub.f32 1.0, %v2508
        %v2510 = vmul.f32 %v2507, %v2509
        %v2511 = vadd.f32 %v2507, %v2510
        %vm2512 = vweird.f32 %v2055
        %vm2513 = vweird.f32 %v2507
        %vm2514 = vmor %vm2512, %vm2513
        %v2515 = vsel %vm2514, %v2507, %v2511
        %v2516 = vand.u32 2147483647, %v2055
        %vm2517 = vcmp.eq.f32.partialorder %v2516, 8.507059e+37
        %v2518 = vand.u32 %v2055, 2147483648
        %v2519 = vor.u32 1.1754944e-38, %v2518
        %v2520 = vsel %vm2517, %v2519, %v2515
        %v2521 = vmul.f32 1.0, %v2520
        %v2522 = vrcp.pop %v2056
        %v2523 = vmul.f32 %v2056, %v2522
        %v2524 = vsub.f32 1.0, %v2523
        %v2525 = vmul.f32 %v2522, %v2524
        %v2526 = vadd.f32 %v2522, %v2525
        %vm2527 = vweird.f32 %v2056
        %vm2528 = vweird.f32 %v2522
        %vm2529 = vmor %vm2527, %vm2528
        %v2530 = vsel %vm2529, %v2522, %v2526
        %v2531 = vand.u32 2147483647, %v2056
        %vm2532 = vcmp.eq.f32.partialorder %v2531, 8.507059e+37
        %v2533 = vand.u32 %v2056, 2147483648
        %v2534 = vor.u32 1.1754944e-38, %v2533
        %v2535 = vsel %vm2532, %v2534, %v2530
        %v2536 = vmul.f32 1.0, %v2535
        %2537 = vrot.lane.b32.xlu0 %v960, 32
        %v2538 = vpop.permute.xlu0 %2537
        %2539 = vrot.lane.b32.xlu0 %v961, 32
        %v2540 = vpop.permute.xlu0 %2539
        %2541 = vrot.lane.b32.xlu0 %v962, 32
        %v2542 = vpop.permute.xlu0 %2541
        %2543 = vrot.lane.b32.xlu0 %v963, 32
        %v2544 = vpop.permute.xlu0 %2543
        %2545 = vrot.lane.b32.xlu0 %v964, 32
        %v2546 = vpop.permute.xlu0 %2545
        %2547 = vrot.lane.b32.xlu0 %v965, 32
        %v2548 = vpop.permute.xlu0 %2547
        %2549 = vrot.lane.b32.xlu0 %v966, 32
        %v2550 = vpop.permute.xlu0 %2549
        %2551 = vrot.lane.b32.xlu0 %v967, 32
        %v2552 = vpop.permute.xlu0 %2551
        %2553 = vrot.lane.b32.xlu0 %v968, 32
        %v2554 = vpop.permute.xlu0 %2553
        %2555 = vrot.lane.b32.xlu0 %v969, 32
        %v2556 = vpop.permute.xlu0 %2555
        %2557 = vrot.lane.b32.xlu0 %v970, 32
        %v2558 = vpop.permute.xlu0 %2557
        %2559 = vrot.lane.b32.xlu0 %v971, 32
        %v2560 = vpop.permute.xlu0 %2559
        %2561 = vrot.lane.b32.xlu0 %v972, 32
        %v2562 = vpop.permute.xlu0 %2561
        %2563 = vrot.lane.b32.xlu0 %v973, 32
        %v2564 = vpop.permute.xlu0 %2563
        %2565 = vrot.lane.b32.xlu0 %v974, 32
        %v2566 = vpop.permute.xlu0 %2565
        %2567 = vrot.lane.b32.xlu0 %v975, 32
        %v2568 = vpop.permute.xlu0 %2567
        %2569 = vrot.lane.b32.xlu0 %v976, 32
        %v2570 = vpop.permute.xlu0 %2569
        %2571 = vrot.lane.b32.xlu0 %v977, 32
        %v2572 = vpop.permute.xlu0 %2571
        %2573 = vrot.lane.b32.xlu0 %v978, 32
        %v2574 = vpop.permute.xlu0 %2573
        %2575 = vrot.lane.b32.xlu0 %v979, 32
        %v2576 = vpop.permute.xlu0 %2575
        %2577 = vrot.lane.b32.xlu0 %v980, 32
        %v2578 = vpop.permute.xlu0 %2577
        %2579 = vrot.lane.b32.xlu0 %v981, 32
        %v2580 = vpop.permute.xlu0 %2579
        %2581 = vrot.lane.b32.xlu0 %v982, 32
        %v2582 = vpop.permute.xlu0 %2581
        %2583 = vrot.lane.b32.xlu0 %v983, 32
        %v2584 = vpop.permute.xlu0 %2583
        %2585 = vrot.lane.b32.xlu0 %v984, 32
        %v2586 = vpop.permute.xlu0 %2585
        %2587 = vrot.lane.b32.xlu0 %v985, 32
        %v2588 = vpop.permute.xlu0 %2587
        %2589 = vrot.lane.b32.xlu0 %v986, 32
        %v2590 = vpop.permute.xlu0 %2589
        %2591 = vrot.lane.b32.xlu0 %v987, 32
        %v2592 = vpop.permute.xlu0 %2591
        %2593 = vrot.lane.b32.xlu0 %v988, 32
        %v2594 = vpop.permute.xlu0 %2593
        %2595 = vrot.lane.b32.xlu0 %v989, 32
        %v2596 = vpop.permute.xlu0 %2595
        %2597 = vrot.lane.b32.xlu0 %v990, 32
        %v2598 = vpop.permute.xlu0 %2597
        %2599 = vrot.lane.b32.xlu0 %v991, 32
        %v2600 = vpop.permute.xlu0 %2599
        %v2633 = vmul.f32 %v2071, %v2538
        %v2634 = vmul.f32 %v2086, %v2540
        %v2635 = vmul.f32 %v2101, %v2542
        %v2636 = vmul.f32 %v2116, %v2544
        %v2637 = vmul.f32 %v2131, %v2546
        %v2638 = vmul.f32 %v2146, %v2548
        %v2639 = vmul.f32 %v2161, %v2550
        %v2640 = vmul.f32 %v2176, %v2552
        %v2641 = vmul.f32 %v2191, %v2554
        %v2642 = vmul.f32 %v2206, %v2556
        %v2643 = vmul.f32 %v2221, %v2558
        %v2644 = vmul.f32 %v2236, %v2560
        %v2645 = vmul.f32 %v2251, %v2562
        %v2646 = vmul.f32 %v2266, %v2564
        %v2647 = vmul.f32 %v2281, %v2566
        %v2648 = vmul.f32 %v2296, %v2568
        %v2649 = vmul.f32 %v2311, %v2570
        %v2650 = vmul.f32 %v2326, %v2572
        %v2651 = vmul.f32 %v2341, %v2574
        %v2652 = vmul.f32 %v2356, %v2576
        %v2653 = vmul.f32 %v2371, %v2578
        %v2654 = vmul.f32 %v2386, %v2580
        %v2655 = vmul.f32 %v2401, %v2582
        %v2656 = vmul.f32 %v2416, %v2584
        %v2657 = vmul.f32 %v2431, %v2586
        %v2658 = vmul.f32 %v2446, %v2588
        %v2659 = vmul.f32 %v2461, %v2590
        %v2660 = vmul.f32 %v2476, %v2592
        %v2661 = vmul.f32 %v2491, %v2594
        %v2662 = vmul.f32 %v2506, %v2596
        %v2663 = vmul.f32 %v2521, %v2598
        %v2664 = vmul.f32 %v2536, %v2600
        %2697 = vrot.lane.b32.xlu0 %v2633, 96
        %v2698 = vpop.permute.xlu0 %2697
        %2699 = vrot.lane.b32.xlu0 %v2634, 96
        %v2700 = vpop.permute.xlu0 %2699
        %2701 = vrot.lane.b32.xlu0 %v2635, 96
        %v2702 = vpop.permute.xlu0 %2701
        %2703 = vrot.lane.b32.xlu0 %v2636, 96
        %v2704 = vpop.permute.xlu0 %2703
        %2705 = vrot.lane.b32.xlu0 %v2637, 96
        %v2706 = vpop.permute.xlu0 %2705
        %2707 = vrot.lane.b32.xlu0 %v2638, 96
        %v2708 = vpop.permute.xlu0 %2707
        %2709 = vrot.lane.b32.xlu0 %v2639, 96
        %v2710 = vpop.permute.xlu0 %2709
        %2711 = vrot.lane.b32.xlu0 %v2640, 96
        %v2712 = vpop.permute.xlu0 %2711
        %2713 = vrot.lane.b32.xlu0 %v2641, 96
        %v2714 = vpop.permute.xlu0 %2713
        %2715 = vrot.lane.b32.xlu0 %v2642, 96
        %v2716 = vpop.permute.xlu0 %2715
        %2717 = vrot.lane.b32.xlu0 %v2643, 96
        %v2718 = vpop.permute.xlu0 %2717
        %2719 = vrot.lane.b32.xlu0 %v2644, 96
        %v2720 = vpop.permute.xlu0 %2719
        %2721 = vrot.lane.b32.xlu0 %v2645, 96
        %v2722 = vpop.permute.xlu0 %2721
        %2723 = vrot.lane.b32.xlu0 %v2646, 96
        %v2724 = vpop.permute.xlu0 %2723
        %2725 = vrot.lane.b32.xlu0 %v2647, 96
        %v2726 = vpop.permute.xlu0 %2725
        %2727 = vrot.lane.b32.xlu0 %v2648, 96
        %v2728 = vpop.permute.xlu0 %2727
        %2729 = vrot.lane.b32.xlu0 %v2649, 96
        %v2730 = vpop.permute.xlu0 %2729
        %2731 = vrot.lane.b32.xlu0 %v2650, 96
        %v2732 = vpop.permute.xlu0 %2731
        %2733 = vrot.lane.b32.xlu0 %v2651, 96
        %v2734 = vpop.permute.xlu0 %2733
        %2735 = vrot.lane.b32.xlu0 %v2652, 96
        %v2736 = vpop.permute.xlu0 %2735
        %2737 = vrot.lane.b32.xlu0 %v2653, 96
        %v2738 = vpop.permute.xlu0 %2737
        %2739 = vrot.lane.b32.xlu0 %v2654, 96
        %v2740 = vpop.permute.xlu0 %2739
        %2741 = vrot.lane.b32.xlu0 %v2655, 96
        %v2742 = vpop.permute.xlu0 %2741
        %2743 = vrot.lane.b32.xlu0 %v2656, 96
        %v2744 = vpop.permute.xlu0 %2743
        %2745 = vrot.lane.b32.xlu0 %v2657, 96
        %v2746 = vpop.permute.xlu0 %2745
        %2747 = vrot.lane.b32.xlu0 %v2658, 96
        %v2748 = vpop.permute.xlu0 %2747
        %2749 = vrot.lane.b32.xlu0 %v2659, 96
        %v2750 = vpop.permute.xlu0 %2749
        %2751 = vrot.lane.b32.xlu0 %v2660, 96
        %v2752 = vpop.permute.xlu0 %2751
        %2753 = vrot.lane.b32.xlu0 %v2661, 96
        %v2754 = vpop.permute.xlu0 %2753
        %2755 = vrot.lane.b32.xlu0 %v2662, 96
        %v2756 = vpop.permute.xlu0 %2755
        %2757 = vrot.lane.b32.xlu0 %v2663, 96
        %v2758 = vpop.permute.xlu0 %2757
        %2759 = vrot.lane.b32.xlu0 %v2664, 96
        %v2760 = vpop.permute.xlu0 %2759
        %v2761 = vsel %vm1475, %v2698, 0
        %v2763 = vsel %vm1475, %v2700, 0
        %v2765 = vsel %vm1475, %v2702, 0
        %v2767 = vsel %vm1475, %v2704, 0
        %v2769 = vsel %vm1475, %v2706, 0
        %v2771 = vsel %vm1475, %v2708, 0
        %v2773 = vsel %vm1475, %v2710, 0
        %v2775 = vsel %vm1475, %v2712, 0
        %v2777 = vsel %vm1475, %v2714, 0
        %v2779 = vsel %vm1475, %v2716, 0
        %v2781 = vsel %vm1475, %v2718, 0
        %v2783 = vsel %vm1475, %v2720, 0
        %v2785 = vsel %vm1475, %v2722, 0
        %v2787 = vsel %vm1475, %v2724, 0
        %v2789 = vsel %vm1475, %v2726, 0
        %v2791 = vsel %vm1475, %v2728, 0
        %v2793 = vsel %vm1475, %v2730, 0
        %v2795 = vsel %vm1475, %v2732, 0
        %v2797 = vsel %vm1475, %v2734, 0
        %v2799 = vsel %vm1475, %v2736, 0
        %v2801 = vsel %vm1475, %v2738, 0
        %v2803 = vsel %vm1475, %v2740, 0
        %v2805 = vsel %vm1475, %v2742, 0
        %v2807 = vsel %vm1475, %v2744, 0
        %v2809 = vsel %vm1475, %v2746, 0
        %v2811 = vsel %vm1475, %v2748, 0
        %v2813 = vsel %vm1475, %v2750, 0
        %v2815 = vsel %vm1475, %v2752, 0
        %v2817 = vsel %vm1475, %v2754, 0
        %v2819 = vsel %vm1475, %v2756, 0
        %v2821 = vsel %vm1475, %v2758, 0
        %v2823 = vsel %vm1475, %v2760, 0
        %2825 = vmatpush.msra.mxu0 0.0
        %2826 = vmatpush.msra.mxu0 0.0
        %2827 = vmatpush.msra.mxu0 0.0
        %2828 = vmatpush.msra.mxu0 0.0
        %2829 = vmatpush.msra.mxu0 0.0
        %2830 = vmatpush.msra.mxu0 0.0
        %2831 = vmatpush.msra.mxu0 0.0
        %2832 = vmatpush.msra.mxu0 0.0
        %2833 = vmatpush.msra.mxu0 0.0
        %2834 = vmatpush.msra.mxu0 0.0
        %2835 = vmatpush.msra.mxu0 0.0
        %2836 = vmatpush.msra.mxu0 0.0
        %2837 = vmatpush.msra.mxu0 %v1005
        %2838 = vmatpush.msra.mxu0 %v1004
        %2839 = vmatpush.msra.mxu0 %v1003
        %2840 = vmatpush.msra.mxu0 %v1002
        %2841 = vmatmul.f32.gmra.mxu0 %v2761
        %v2842 = vpop.f32.mrf.mxu0
        %v2843 = vadd.f32 0.0, %v2842
        %2844 = vmatmul.f32.gmra.mxu0 %v2763
        %v2845 = vpop.f32.mrf.mxu0
        %v2846 = vadd.f32 0.0, %v2845
        %2847 = vmatmul.f32.gmra.mxu0 %v2765
        %v2848 = vpop.f32.mrf.mxu0
        %v2849 = vadd.f32 0.0, %v2848
        %2850 = vmatmul.f32.gmra.mxu0 %v2767
        %v2851 = vpop.f32.mrf.mxu0
        %v2852 = vadd.f32 0.0, %v2851
        %2853 = vmatmul.f32.gmra.mxu0 %v2769
        %v2854 = vpop.f32.mrf.mxu0
        %v2855 = vadd.f32 0.0, %v2854
        %2856 = vmatmul.f32.gmra.mxu0 %v2771
        %v2857 = vpop.f32.mrf.mxu0
        %v2858 = vadd.f32 0.0, %v2857
        %2859 = vmatmul.f32.gmra.mxu0 %v2773
        %v2860 = vpop.f32.mrf.mxu0
        %v2861 = vadd.f32 0.0, %v2860
        %2862 = vmatmul.f32.gmra.mxu0 %v2775
        %v2863 = vpop.f32.mrf.mxu0
        %v2864 = vadd.f32 0.0, %v2863
        %2865 = vmatmul.f32.gmra.mxu0 %v2777
        %v2866 = vpop.f32.mrf.mxu0
        %v2867 = vadd.f32 0.0, %v2866
        %2868 = vmatmul.f32.gmra.mxu0 %v2779
        %v2869 = vpop.f32.mrf.mxu0
        %v2870 = vadd.f32 0.0, %v2869
        %2871 = vmatmul.f32.gmra.mxu0 %v2781
        %v2872 = vpop.f32.mrf.mxu0
        %v2873 = vadd.f32 0.0, %v2872
        %2874 = vmatmul.f32.gmra.mxu0 %v2783
        %v2875 = vpop.f32.mrf.mxu0
        %v2876 = vadd.f32 0.0, %v2875
        %2877 = vmatmul.f32.gmra.mxu0 %v2785
        %v2878 = vpop.f32.mrf.mxu0
        %v2879 = vadd.f32 0.0, %v2878
        %2880 = vmatmul.f32.gmra.mxu0 %v2787
        %v2881 = vpop.f32.mrf.mxu0
        %v2882 = vadd.f32 0.0, %v2881
        %2883 = vmatmul.f32.gmra.mxu0 %v2789
        %v2884 = vpop.f32.mrf.mxu0
        %v2885 = vadd.f32 0.0, %v2884
        %2886 = vmatmul.f32.gmra.mxu0 %v2791
        %v2887 = vpop.f32.mrf.mxu0
        %v2888 = vadd.f32 0.0, %v2887
        %2889 = vmatmul.f32.gmra.mxu0 %v2793
        %v2890 = vpop.f32.mrf.mxu0
        %v2891 = vadd.f32 0.0, %v2890
        %2892 = vmatmul.f32.gmra.mxu0 %v2795
        %v2893 = vpop.f32.mrf.mxu0
        %v2894 = vadd.f32 0.0, %v2893
        %2895 = vmatmul.f32.gmra.mxu0 %v2797
        %v2896 = vpop.f32.mrf.mxu0
        %v2897 = vadd.f32 0.0, %v2896
        %2898 = vmatmul.f32.gmra.mxu0 %v2799
        %v2899 = vpop.f32.mrf.mxu0
        %v2900 = vadd.f32 0.0, %v2899
        %2901 = vmatmul.f32.gmra.mxu0 %v2801
        %v2902 = vpop.f32.mrf.mxu0
        %v2903 = vadd.f32 0.0, %v2902
        %2904 = vmatmul.f32.gmra.mxu0 %v2803
        %v2905 = vpop.f32.mrf.mxu0
        %v2906 = vadd.f32 0.0, %v2905
        %2907 = vmatmul.f32.gmra.mxu0 %v2805
        %v2908 = vpop.f32.mrf.mxu0
        %v2909 = vadd.f32 0.0, %v2908
        %2910 = vmatmul.f32.gmra.mxu0 %v2807
        %v2911 = vpop.f32.mrf.mxu0
        %v2912 = vadd.f32 0.0, %v2911
        %2913 = vmatmul.f32.gmra.mxu0 %v2809
        %v2914 = vpop.f32.mrf.mxu0
        %v2915 = vadd.f32 0.0, %v2914
        %2916 = vmatmul.f32.gmra.mxu0 %v2811
        %v2917 = vpop.f32.mrf.mxu0
        %v2918 = vadd.f32 0.0, %v2917
        %2919 = vmatmul.f32.gmra.mxu0 %v2813
        %v2920 = vpop.f32.mrf.mxu0
        %v2921 = vadd.f32 0.0, %v2920
        %2922 = vmatmul.f32.gmra.mxu0 %v2815
        %v2923 = vpop.f32.mrf.mxu0
        %v2924 = vadd.f32 0.0, %v2923
        %2925 = vmatmul.f32.gmra.mxu0 %v2817
        %v2926 = vpop.f32.mrf.mxu0
        %v2927 = vadd.f32 0.0, %v2926
        %2928 = vmatmul.f32.gmra.mxu0 %v2819
        %v2929 = vpop.f32.mrf.mxu0
        %v2930 = vadd.f32 0.0, %v2929
        %2931 = vmatmul.f32.gmra.mxu0 %v2821
        %v2932 = vpop.f32.mrf.mxu0
        %v2933 = vadd.f32 0.0, %v2932
        %2934 = vmatmul.f32.gmra.mxu0 %v2823
        %v2935 = vpop.f32.mrf.mxu0
        %v2936 = vadd.f32 0.0, %v2935
        %2937 = vdwg.mxu0
        %2970 = vrot.lane.b32.xlu0 %v2843, 64
        %v2971 = vpop.permute.xlu0 %2970
        %2972 = vrot.lane.b32.xlu0 %v2846, 64
        %v2973 = vpop.permute.xlu0 %2972
        %2974 = vrot.lane.b32.xlu0 %v2849, 64
        %v2975 = vpop.permute.xlu0 %2974
        %2976 = vrot.lane.b32.xlu0 %v2852, 64
        %v2977 = vpop.permute.xlu0 %2976
        %2978 = vrot.lane.b32.xlu0 %v2855, 64
        %v2979 = vpop.permute.xlu0 %2978
        %2980 = vrot.lane.b32.xlu0 %v2858, 64
        %v2981 = vpop.permute.xlu0 %2980
        %2982 = vrot.lane.b32.xlu0 %v2861, 64
        %v2983 = vpop.permute.xlu0 %2982
        %2984 = vrot.lane.b32.xlu0 %v2864, 64
        %v2985 = vpop.permute.xlu0 %2984
        %2986 = vrot.lane.b32.xlu0 %v2867, 64
        %v2987 = vpop.permute.xlu0 %2986
        %2988 = vrot.lane.b32.xlu0 %v2870, 64
        %v2989 = vpop.permute.xlu0 %2988
        %2990 = vrot.lane.b32.xlu0 %v2873, 64
        %v2991 = vpop.permute.xlu0 %2990
        %2992 = vrot.lane.b32.xlu0 %v2876, 64
        %v2993 = vpop.permute.xlu0 %2992
        %2994 = vrot.lane.b32.xlu0 %v2879, 64
        %v2995 = vpop.permute.xlu0 %2994
        %2996 = vrot.lane.b32.xlu0 %v2882, 64
        %v2997 = vpop.permute.xlu0 %2996
        %2998 = vrot.lane.b32.xlu0 %v2885, 64
        %v2999 = vpop.permute.xlu0 %2998
        %3000 = vrot.lane.b32.xlu0 %v2888, 64
        %v3001 = vpop.permute.xlu0 %3000
        %3002 = vrot.lane.b32.xlu0 %v2891, 64
        %v3003 = vpop.permute.xlu0 %3002
        %3004 = vrot.lane.b32.xlu0 %v2894, 64
        %v3005 = vpop.permute.xlu0 %3004
        %3006 = vrot.lane.b32.xlu0 %v2897, 64
        %v3007 = vpop.permute.xlu0 %3006
        %3008 = vrot.lane.b32.xlu0 %v2900, 64
        %v3009 = vpop.permute.xlu0 %3008
        %3010 = vrot.lane.b32.xlu0 %v2903, 64
        %v3011 = vpop.permute.xlu0 %3010
        %3012 = vrot.lane.b32.xlu0 %v2906, 64
        %v3013 = vpop.permute.xlu0 %3012
        %3014 = vrot.lane.b32.xlu0 %v2909, 64
        %v3015 = vpop.permute.xlu0 %3014
        %3016 = vrot.lane.b32.xlu0 %v2912, 64
        %v3017 = vpop.permute.xlu0 %3016
        %3018 = vrot.lane.b32.xlu0 %v2915, 64
        %v3019 = vpop.permute.xlu0 %3018
        %3020 = vrot.lane.b32.xlu0 %v2918, 64
        %v3021 = vpop.permute.xlu0 %3020
        %3022 = vrot.lane.b32.xlu0 %v2921, 64
        %v3023 = vpop.permute.xlu0 %3022
        %3024 = vrot.lane.b32.xlu0 %v2924, 64
        %v3025 = vpop.permute.xlu0 %3024
        %3026 = vrot.lane.b32.xlu0 %v2927, 64
        %v3027 = vpop.permute.xlu0 %3026
        %3028 = vrot.lane.b32.xlu0 %v2930, 64
        %v3029 = vpop.permute.xlu0 %3028
        %3030 = vrot.lane.b32.xlu0 %v2933, 64
        %v3031 = vpop.permute.xlu0 %3030
        %3032 = vrot.lane.b32.xlu0 %v2936, 64
        %v3033 = vpop.permute.xlu0 %3032
        %v3066 = vadd.f32 %v1590, %v2971
        %v3067 = vadd.f32 %v1593, %v2973
        %v3068 = vadd.f32 %v1596, %v2975
        %v3069 = vadd.f32 %v1599, %v2977
        %v3070 = vadd.f32 %v1602, %v2979
        %v3071 = vadd.f32 %v1605, %v2981
        %v3072 = vadd.f32 %v1608, %v2983
        %v3073 = vadd.f32 %v1611, %v2985
        %v3074 = vadd.f32 %v1614, %v2987
        %v3075 = vadd.f32 %v1617, %v2989
        %v3076 = vadd.f32 %v1620, %v2991
        %v3077 = vadd.f32 %v1623, %v2993
        %v3078 = vadd.f32 %v1626, %v2995
        %v3079 = vadd.f32 %v1629, %v2997
        %v3080 = vadd.f32 %v1632, %v2999
        %v3081 = vadd.f32 %v1635, %v3001
        %v3082 = vadd.f32 %v1638, %v3003
        %v3083 = vadd.f32 %v1641, %v3005
        %v3084 = vadd.f32 %v1644, %v3007
        %v3085 = vadd.f32 %v1647, %v3009
        %v3086 = vadd.f32 %v1650, %v3011
        %v3087 = vadd.f32 %v1653, %v3013
        %v3088 = vadd.f32 %v1656, %v3015
        %v3089 = vadd.f32 %v1659, %v3017
        %v3090 = vadd.f32 %v1662, %v3019
        %v3091 = vadd.f32 %v1665, %v3021
        %v3092 = vadd.f32 %v1668, %v3023
        %v3093 = vadd.f32 %v1671, %v3025
        %v3094 = vadd.f32 %v1674, %v3027
        %v3095 = vadd.f32 %v1677, %v3029
        %v3096 = vadd.f32 %v1680, %v3031
        %v3097 = vadd.f32 %v1683, %v3033
        %v3099 = vperm.slane %v1006, 0
        %3100 = vrot.lane.b32.xlu0 %v3099, 64
        %v3101 = vpop.permute.xlu0 %3100
        %v3103 = vadd.f32 %v3066, %v3101
        %v3104 = vadd.f32 %v3067, %v3101
        %v3105 = vadd.f32 %v3068, %v3101
        %v3106 = vadd.f32 %v3069, %v3101
        %v3107 = vadd.f32 %v3070, %v3101
        %v3108 = vadd.f32 %v3071, %v3101
        %v3109 = vadd.f32 %v3072, %v3101
        %v3110 = vadd.f32 %v3073, %v3101
        %v3111 = vadd.f32 %v3074, %v3101
        %v3112 = vadd.f32 %v3075, %v3101
        %v3113 = vadd.f32 %v3076, %v3101
        %v3114 = vadd.f32 %v3077, %v3101
        %v3115 = vadd.f32 %v3078, %v3101
        %v3116 = vadd.f32 %v3079, %v3101
        %v3117 = vadd.f32 %v3080, %v3101
        %v3118 = vadd.f32 %v3081, %v3101
        %v3119 = vadd.f32 %v3082, %v3101
        %v3120 = vadd.f32 %v3083, %v3101
        %v3121 = vadd.f32 %v3084, %v3101
        %v3122 = vadd.f32 %v3085, %v3101
        %v3123 = vadd.f32 %v3086, %v3101
        %v3124 = vadd.f32 %v3087, %v3101
        %v3125 = vadd.f32 %v3088, %v3101
        %v3126 = vadd.f32 %v3089, %v3101
        %v3127 = vadd.f32 %v3090, %v3101
        %v3128 = vadd.f32 %v3091, %v3101
        %v3129 = vadd.f32 %v3092, %v3101
        %v3130 = vadd.f32 %v3093, %v3101
        %v3131 = vadd.f32 %v3094, %v3101
        %v3132 = vadd.f32 %v3095, %v3101
        %v3133 = vadd.f32 %v3096, %v3101
        %v3134 = vadd.f32 %v3097, %v3101
        %v3135 = vmax.f32 %v3103, 0.0
        %v3136 = vmax.f32 %v3104, 0.0
        %v3137 = vmax.f32 %v3105, 0.0
        %v3138 = vmax.f32 %v3106, 0.0
        %v3139 = vmax.f32 %v3107, 0.0
        %v3140 = vmax.f32 %v3108, 0.0
        %v3141 = vmax.f32 %v3109, 0.0
        %v3142 = vmax.f32 %v3110, 0.0
        %v3143 = vmax.f32 %v3111, 0.0
        %v3144 = vmax.f32 %v3112, 0.0
        %v3145 = vmax.f32 %v3113, 0.0
        %v3146 = vmax.f32 %v3114, 0.0
        %v3147 = vmax.f32 %v3115, 0.0
        %v3148 = vmax.f32 %v3116, 0.0
        %v3149 = vmax.f32 %v3117, 0.0
        %v3150 = vmax.f32 %v3118, 0.0
        %v3151 = vmax.f32 %v3119, 0.0
        %v3152 = vmax.f32 %v3120, 0.0
        %v3153 = vmax.f32 %v3121, 0.0
        %v3154 = vmax.f32 %v3122, 0.0
        %v3155 = vmax.f32 %v3123, 0.0
        %v3156 = vmax.f32 %v3124, 0.0
        %v3157 = vmax.f32 %v3125, 0.0
        %v3158 = vmax.f32 %v3126, 0.0
        %v3159 = vmax.f32 %v3127, 0.0
        %v3160 = vmax.f32 %v3128, 0.0
        %v3161 = vmax.f32 %v3129, 0.0
        %v3162 = vmax.f32 %v3130, 0.0
        %v3163 = vmax.f32 %v3131, 0.0
        %v3164 = vmax.f32 %v3132, 0.0
        %v3165 = vmax.f32 %v3133, 0.0
        %v3166 = vmax.f32 %v3134, 0.0
        %3199 = vrot.lane.b32.xlu0 %v2071, 64
        %v3200 = vpop.permute.xlu0 %3199
        %3201 = vrot.lane.b32.xlu0 %v2086, 64
        %v3202 = vpop.permute.xlu0 %3201
        %3203 = vrot.lane.b32.xlu0 %v2101, 64
        %v3204 = vpop.permute.xlu0 %3203
        %3205 = vrot.lane.b32.xlu0 %v2116, 64
        %v3206 = vpop.permute.xlu0 %3205
        %3207 = vrot.lane.b32.xlu0 %v2131, 64
        %v3208 = vpop.permute.xlu0 %3207
        %3209 = vrot.lane.b32.xlu0 %v2146, 64
        %v3210 = vpop.permute.xlu0 %3209
        %3211 = vrot.lane.b32.xlu0 %v2161, 64
        %v3212 = vpop.permute.xlu0 %3211
        %3213 = vrot.lane.b32.xlu0 %v2176, 64
        %v3214 = vpop.permute.xlu0 %3213
        %3215 = vrot.lane.b32.xlu0 %v2191, 64
        %v3216 = vpop.permute.xlu0 %3215
        %3217 = vrot.lane.b32.xlu0 %v2206, 64
        %v3218 = vpop.permute.xlu0 %3217
        %3219 = vrot.lane.b32.xlu0 %v2221, 64
        %v3220 = vpop.permute.xlu0 %3219
        %3221 = vrot.lane.b32.xlu0 %v2236, 64
        %v3222 = vpop.permute.xlu0 %3221
        %3223 = vrot.lane.b32.xlu0 %v2251, 64
        %v3224 = vpop.permute.xlu0 %3223
        %3225 = vrot.lane.b32.xlu0 %v2266, 64
        %v3226 = vpop.permute.xlu0 %3225
        %3227 = vrot.lane.b32.xlu0 %v2281, 64
        %v3228 = vpop.permute.xlu0 %3227
        %3229 = vrot.lane.b32.xlu0 %v2296, 64
        %v3230 = vpop.permute.xlu0 %3229
        %3231 = vrot.lane.b32.xlu0 %v2311, 64
        %v3232 = vpop.permute.xlu0 %3231
        %3233 = vrot.lane.b32.xlu0 %v2326, 64
        %v3234 = vpop.permute.xlu0 %3233
        %3235 = vrot.lane.b32.xlu0 %v2341, 64
        %v3236 = vpop.permute.xlu0 %3235
        %3237 = vrot.lane.b32.xlu0 %v2356, 64
        %v3238 = vpop.permute.xlu0 %3237
        %3239 = vrot.lane.b32.xlu0 %v2371, 64
        %v3240 = vpop.permute.xlu0 %3239
        %3241 = vrot.lane.b32.xlu0 %v2386, 64
        %v3242 = vpop.permute.xlu0 %3241
        %3243 = vrot.lane.b32.xlu0 %v2401, 64
        %v3244 = vpop.permute.xlu0 %3243
        %3245 = vrot.lane.b32.xlu0 %v2416, 64
        %v3246 = vpop.permute.xlu0 %3245
        %3247 = vrot.lane.b32.xlu0 %v2431, 64
        %v3248 = vpop.permute.xlu0 %3247
        %3249 = vrot.lane.b32.xlu0 %v2446, 64
        %v3250 = vpop.permute.xlu0 %3249
        %3251 = vrot.lane.b32.xlu0 %v2461, 64
        %v3252 = vpop.permute.xlu0 %3251
        %3253 = vrot.lane.b32.xlu0 %v2476, 64
        %v3254 = vpop.permute.xlu0 %3253
        %3255 = vrot.lane.b32.xlu0 %v2491, 64
        %v3256 = vpop.permute.xlu0 %3255
        %3257 = vrot.lane.b32.xlu0 %v2506, 64
        %v3258 = vpop.permute.xlu0 %3257
        %3259 = vrot.lane.b32.xlu0 %v2521, 64
        %v3260 = vpop.permute.xlu0 %3259
        %3261 = vrot.lane.b32.xlu0 %v2536, 64
        %v3262 = vpop.permute.xlu0 %3261
        %v3295 = vmul.f32 %v3135, %v3200
        %v3296 = vmul.f32 %v3136, %v3202
        %v3297 = vmul.f32 %v3137, %v3204
        %v3298 = vmul.f32 %v3138, %v3206
        %v3299 = vmul.f32 %v3139, %v3208
        %v3300 = vmul.f32 %v3140, %v3210
        %v3301 = vmul.f32 %v3141, %v3212
        %v3302 = vmul.f32 %v3142, %v3214
        %v3303 = vmul.f32 %v3143, %v3216
        %v3304 = vmul.f32 %v3144, %v3218
        %v3305 = vmul.f32 %v3145, %v3220
        %v3306 = vmul.f32 %v3146, %v3222
        %v3307 = vmul.f32 %v3147, %v3224
        %v3308 = vmul.f32 %v3148, %v3226
        %v3309 = vmul.f32 %v3149, %v3228
        %v3310 = vmul.f32 %v3150, %v3230
        %v3311 = vmul.f32 %v3151, %v3232
        %v3312 = vmul.f32 %v3152, %v3234
        %v3313 = vmul.f32 %v3153, %v3236
        %v3314 = vmul.f32 %v3154, %v3238
        %v3315 = vmul.f32 %v3155, %v3240
        %v3316 = vmul.f32 %v3156, %v3242
        %v3317 = vmul.f32 %v3157, %v3244
        %v3318 = vmul.f32 %v3158, %v3246
        %v3319 = vmul.f32 %v3159, %v3248
        %v3320 = vmul.f32 %v3160, %v3250
        %v3321 = vmul.f32 %v3161, %v3252
        %v3322 = vmul.f32 %v3162, %v3254
        %v3323 = vmul.f32 %v3163, %v3256
        %v3324 = vmul.f32 %v3164, %v3258
        %v3325 = vmul.f32 %v3165, %v3260
        %v3326 = vmul.f32 %v3166, %v3262
        %v3327 = vsub.f32 1.0, %v2071
        %v3328 = vsub.f32 1.0, %v2086
        %v3329 = vsub.f32 1.0, %v2101
        %v3330 = vsub.f32 1.0, %v2116
        %v3331 = vsub.f32 1.0, %v2131
        %v3332 = vsub.f32 1.0, %v2146
        %v3333 = vsub.f32 1.0, %v2161
        %v3334 = vsub.f32 1.0, %v2176
        %v3335 = vsub.f32 1.0, %v2191
        %v3336 = vsub.f32 1.0, %v2206
        %v3337 = vsub.f32 1.0, %v2221
        %v3338 = vsub.f32 1.0, %v2236
        %v3339 = vsub.f32 1.0, %v2251
        %v3340 = vsub.f32 1.0, %v2266
        %v3341 = vsub.f32 1.0, %v2281
        %v3342 = vsub.f32 1.0, %v2296
        %v3343 = vsub.f32 1.0, %v2311
        %v3344 = vsub.f32 1.0, %v2326
        %v3345 = vsub.f32 1.0, %v2341
        %v3346 = vsub.f32 1.0, %v2356
        %v3347 = vsub.f32 1.0, %v2371
        %v3348 = vsub.f32 1.0, %v2386
        %v3349 = vsub.f32 1.0, %v2401
        %v3350 = vsub.f32 1.0, %v2416
        %v3351 = vsub.f32 1.0, %v2431
        %v3352 = vsub.f32 1.0, %v2446
        %v3353 = vsub.f32 1.0, %v2461
        %v3354 = vsub.f32 1.0, %v2476
        %v3355 = vsub.f32 1.0, %v2491
        %v3356 = vsub.f32 1.0, %v2506
        %v3357 = vsub.f32 1.0, %v2521
        %v3358 = vsub.f32 1.0, %v2536
        %v3359 = vmul.f32 %v960, %v3327
        %v3360 = vmul.f32 %v961, %v3328
        %v3361 = vmul.f32 %v962, %v3329
        %v3362 = vmul.f32 %v963, %v3330
        %v3363 = vmul.f32 %v964, %v3331
        %v3364 = vmul.f32 %v965, %v3332
        %v3365 = vmul.f32 %v966, %v3333
        %v3366 = vmul.f32 %v967, %v3334
        %v3367 = vmul.f32 %v968, %v3335
        %v3368 = vmul.f32 %v969, %v3336
        %v3369 = vmul.f32 %v970, %v3337
        %v3370 = vmul.f32 %v971, %v3338
        %v3371 = vmul.f32 %v972, %v3339
        %v3372 = vmul.f32 %v973, %v3340
        %v3373 = vmul.f32 %v974, %v3341
        %v3374 = vmul.f32 %v975, %v3342
        %v3375 = vmul.f32 %v976, %v3343
        %v3376 = vmul.f32 %v977, %v3344
        %v3377 = vmul.f32 %v978, %v3345
        %v3378 = vmul.f32 %v979, %v3346
        %v3379 = vmul.f32 %v980, %v3347
        %v3380 = vmul.f32 %v981, %v3348
        %v3381 = vmul.f32 %v982, %v3349
        %v3382 = vmul.f32 %v983, %v3350
        %v3383 = vmul.f32 %v984, %v3351
        %v3384 = vmul.f32 %v985, %v3352
        %v3385 = vmul.f32 %v986, %v3353
        %v3386 = vmul.f32 %v987, %v3354
        %v3387 = vmul.f32 %v988, %v3355
        %v3388 = vmul.f32 %v989, %v3356
        %v3389 = vmul.f32 %v990, %v3357
        %v3390 = vmul.f32 %v991, %v3358
        %3423 = vrot.lane.b32.xlu0 %v3359, 64
        %v3424 = vpop.permute.xlu0 %3423
        %3425 = vrot.lane.b32.xlu0 %v3360, 64
        %v3426 = vpop.permute.xlu0 %3425
        %3427 = vrot.lane.b32.xlu0 %v3361, 64
        %v3428 = vpop.permute.xlu0 %3427
        %3429 = vrot.lane.b32.xlu0 %v3362, 64
        %v3430 = vpop.permute.xlu0 %3429
        %3431 = vrot.lane.b32.xlu0 %v3363, 64
        %v3432 = vpop.permute.xlu0 %3431
        %3433 = vrot.lane.b32.xlu0 %v3364, 64
        %v3434 = vpop.permute.xlu0 %3433
        %3435 = vrot.lane.b32.xlu0 %v3365, 64
        %v3436 = vpop.permute.xlu0 %3435
        %3437 = vrot.lane.b32.xlu0 %v3366, 64
        %v3438 = vpop.permute.xlu0 %3437
        %3439 = vrot.lane.b32.xlu0 %v3367, 64
        %v3440 = vpop.permute.xlu0 %3439
        %3441 = vrot.lane.b32.xlu0 %v3368, 64
        %v3442 = vpop.permute.xlu0 %3441
        %3443 = vrot.lane.b32.xlu0 %v3369, 64
        %v3444 = vpop.permute.xlu0 %3443
        %3445 = vrot.lane.b32.xlu0 %v3370, 64
        %v3446 = vpop.permute.xlu0 %3445
        %3447 = vrot.lane.b32.xlu0 %v3371, 64
        %v3448 = vpop.permute.xlu0 %3447
        %3449 = vrot.lane.b32.xlu0 %v3372, 64
        %v3450 = vpop.permute.xlu0 %3449
        %3451 = vrot.lane.b32.xlu0 %v3373, 64
        %v3452 = vpop.permute.xlu0 %3451
        %3453 = vrot.lane.b32.xlu0 %v3374, 64
        %v3454 = vpop.permute.xlu0 %3453
        %3455 = vrot.lane.b32.xlu0 %v3375, 64
        %v3456 = vpop.permute.xlu0 %3455
        %3457 = vrot.lane.b32.xlu0 %v3376, 64
        %v3458 = vpop.permute.xlu0 %3457
        %3459 = vrot.lane.b32.xlu0 %v3377, 64
        %v3460 = vpop.permute.xlu0 %3459
        %3461 = vrot.lane.b32.xlu0 %v3378, 64
        %v3462 = vpop.permute.xlu0 %3461
        %3463 = vrot.lane.b32.xlu0 %v3379, 64
        %v3464 = vpop.permute.xlu0 %3463
        %3465 = vrot.lane.b32.xlu0 %v3380, 64
        %v3466 = vpop.permute.xlu0 %3465
        %3467 = vrot.lane.b32.xlu0 %v3381, 64
        %v3468 = vpop.permute.xlu0 %3467
        %3469 = vrot.lane.b32.xlu0 %v3382, 64
        %v3470 = vpop.permute.xlu0 %3469
        %3471 = vrot.lane.b32.xlu0 %v3383, 64
        %v3472 = vpop.permute.xlu0 %3471
        %3473 = vrot.lane.b32.xlu0 %v3384, 64
        %v3474 = vpop.permute.xlu0 %3473
        %3475 = vrot.lane.b32.xlu0 %v3385, 64
        %v3476 = vpop.permute.xlu0 %3475
        %3477 = vrot.lane.b32.xlu0 %v3386, 64
        %v3478 = vpop.permute.xlu0 %3477
        %3479 = vrot.lane.b32.xlu0 %v3387, 64
        %v3480 = vpop.permute.xlu0 %3479
        %3481 = vrot.lane.b32.xlu0 %v3388, 64
        %v3482 = vpop.permute.xlu0 %3481
        %3483 = vrot.lane.b32.xlu0 %v3389, 64
        %v3484 = vpop.permute.xlu0 %3483
        %3485 = vrot.lane.b32.xlu0 %v3390, 64
        %v3486 = vpop.permute.xlu0 %3485
        %v3519 = vadd.f32 %v3295, %v3424
        %v3520 = vadd.f32 %v3296, %v3426
        %v3521 = vadd.f32 %v3297, %v3428
        %v3522 = vadd.f32 %v3298, %v3430
        %v3523 = vadd.f32 %v3299, %v3432
        %v3524 = vadd.f32 %v3300, %v3434
        %v3525 = vadd.f32 %v3301, %v3436
        %v3526 = vadd.f32 %v3302, %v3438
        %v3527 = vadd.f32 %v3303, %v3440
        %v3528 = vadd.f32 %v3304, %v3442
        %v3529 = vadd.f32 %v3305, %v3444
        %v3530 = vadd.f32 %v3306, %v3446
        %v3531 = vadd.f32 %v3307, %v3448
        %v3532 = vadd.f32 %v3308, %v3450
        %v3533 = vadd.f32 %v3309, %v3452
        %v3534 = vadd.f32 %v3310, %v3454
        %v3535 = vadd.f32 %v3311, %v3456
        %v3536 = vadd.f32 %v3312, %v3458
        %v3537 = vadd.f32 %v3313, %v3460
        %v3538 = vadd.f32 %v3314, %v3462
        %v3539 = vadd.f32 %v3315, %v3464
        %v3540 = vadd.f32 %v3316, %v3466
        %v3541 = vadd.f32 %v3317, %v3468
        %v3542 = vadd.f32 %v3318, %v3470
        %v3543 = vadd.f32 %v3319, %v3472
        %v3544 = vadd.f32 %v3320, %v3474
        %v3545 = vadd.f32 %v3321, %v3476
        %v3546 = vadd.f32 %v3322, %v3478
        %v3547 = vadd.f32 %v3323, %v3480
        %v3548 = vadd.f32 %v3324, %v3482
        %v3549 = vadd.f32 %v3325, %v3484
        %v3550 = vadd.f32 %v3326, %v3486
        %v3551 = vmul.f32 %v3519, %v803
        %v3552 = vmul.f32 %v3520, %v808
        %v3553 = vmul.f32 %v3521, %v813
        %v3554 = vmul.f32 %v3522, %v818
        %v3555 = vmul.f32 %v3523, %v823
        %v3556 = vmul.f32 %v3524, %v828
        %v3557 = vmul.f32 %v3525, %v833
        %v3558 = vmul.f32 %v3526, %v838
        %v3559 = vmul.f32 %v3527, %v843
        %v3560 = vmul.f32 %v3528, %v848
        %v3561 = vmul.f32 %v3529, %v853
        %v3562 = vmul.f32 %v3530, %v858
        %v3563 = vmul.f32 %v3531, %v863
        %v3564 = vmul.f32 %v3532, %v868
        %v3565 = vmul.f32 %v3533, %v873
        %v3566 = vmul.f32 %v3534, %v878
        %v3567 = vmul.f32 %v3535, %v883
        %v3568 = vmul.f32 %v3536, %v888
        %v3569 = vmul.f32 %v3537, %v893
        %v3570 = vmul.f32 %v3538, %v898
        %v3571 = vmul.f32 %v3539, %v903
        %v3572 = vmul.f32 %v3540, %v908
        %v3573 = vmul.f32 %v3541, %v913
        %v3574 = vmul.f32 %v3542, %v918
        %v3575 = vmul.f32 %v3543, %v923
        %v3576 = vmul.f32 %v3544, %v928
        %v3577 = vmul.f32 %v3545, %v933
        %v3578 = vmul.f32 %v3546, %v938
        %v3579 = vmul.f32 %v3547, %v943
        %v3580 = vmul.f32 %v3548, %v948
        %v3581 = vmul.f32 %v3549, %v953
        %v3582 = vmul.f32 %v3550, %v958
        %3615 = vrot.lane.b32.xlu0 %v3551, 64
        %v3616 = vpop.permute.xlu0 %3615
        %3617 = vrot.lane.b32.xlu0 %v3552, 64
        %v3618 = vpop.permute.xlu0 %3617
        %3619 = vrot.lane.b32.xlu0 %v3553, 64
        %v3620 = vpop.permute.xlu0 %3619
        %3621 = vrot.lane.b32.xlu0 %v3554, 64
        %v3622 = vpop.permute.xlu0 %3621
        %3623 = vrot.lane.b32.xlu0 %v3555, 64
        %v3624 = vpop.permute.xlu0 %3623
        %3625 = vrot.lane.b32.xlu0 %v3556, 64
        %v3626 = vpop.permute.xlu0 %3625
        %3627 = vrot.lane.b32.xlu0 %v3557, 64
        %v3628 = vpop.permute.xlu0 %3627
        %3629 = vrot.lane.b32.xlu0 %v3558, 64
        %v3630 = vpop.permute.xlu0 %3629
        %3631 = vrot.lane.b32.xlu0 %v3559, 64
        %v3632 = vpop.permute.xlu0 %3631
        %3633 = vrot.lane.b32.xlu0 %v3560, 64
        %v3634 = vpop.permute.xlu0 %3633
        %3635 = vrot.lane.b32.xlu0 %v3561, 64
        %v3636 = vpop.permute.xlu0 %3635
        %3637 = vrot.lane.b32.xlu0 %v3562, 64
        %v3638 = vpop.permute.xlu0 %3637
        %3639 = vrot.lane.b32.xlu0 %v3563, 64
        %v3640 = vpop.permute.xlu0 %3639
        %3641 = vrot.lane.b32.xlu0 %v3564, 64
        %v3642 = vpop.permute.xlu0 %3641
        %3643 = vrot.lane.b32.xlu0 %v3565, 64
        %v3644 = vpop.permute.xlu0 %3643
        %3645 = vrot.lane.b32.xlu0 %v3566, 64
        %v3646 = vpop.permute.xlu0 %3645
        %3647 = vrot.lane.b32.xlu0 %v3567, 64
        %v3648 = vpop.permute.xlu0 %3647
        %3649 = vrot.lane.b32.xlu0 %v3568, 64
        %v3650 = vpop.permute.xlu0 %3649
        %3651 = vrot.lane.b32.xlu0 %v3569, 64
        %v3652 = vpop.permute.xlu0 %3651
        %3653 = vrot.lane.b32.xlu0 %v3570, 64
        %v3654 = vpop.permute.xlu0 %3653
        %3655 = vrot.lane.b32.xlu0 %v3571, 64
        %v3656 = vpop.permute.xlu0 %3655
        %3657 = vrot.lane.b32.xlu0 %v3572, 64
        %v3658 = vpop.permute.xlu0 %3657
        %3659 = vrot.lane.b32.xlu0 %v3573, 64
        %v3660 = vpop.permute.xlu0 %3659
        %3661 = vrot.lane.b32.xlu0 %v3574, 64
        %v3662 = vpop.permute.xlu0 %3661
        %3663 = vrot.lane.b32.xlu0 %v3575, 64
        %v3664 = vpop.permute.xlu0 %3663
        %3665 = vrot.lane.b32.xlu0 %v3576, 64
        %v3666 = vpop.permute.xlu0 %3665
        %3667 = vrot.lane.b32.xlu0 %v3577, 64
        %v3668 = vpop.permute.xlu0 %3667
        %3669 = vrot.lane.b32.xlu0 %v3578, 64
        %v3670 = vpop.permute.xlu0 %3669
        %3671 = vrot.lane.b32.xlu0 %v3579, 64
        %v3672 = vpop.permute.xlu0 %3671
        %3673 = vrot.lane.b32.xlu0 %v3580, 64
        %v3674 = vpop.permute.xlu0 %3673
        %3675 = vrot.lane.b32.xlu0 %v3581, 64
        %v3676 = vpop.permute.xlu0 %3675
        %3677 = vrot.lane.b32.xlu0 %v3582, 64
        %v3678 = vpop.permute.xlu0 %3677
        %v3711 = vadd.f32 %v960, %v3616
        %v3712 = vadd.f32 %v961, %v3618
        %v3713 = vadd.f32 %v962, %v3620
        %v3714 = vadd.f32 %v963, %v3622
        %v3715 = vadd.f32 %v964, %v3624
        %v3716 = vadd.f32 %v965, %v3626
        %v3717 = vadd.f32 %v966, %v3628
        %v3718 = vadd.f32 %v967, %v3630
        %v3719 = vadd.f32 %v968, %v3632
        %v3720 = vadd.f32 %v969, %v3634
        %v3721 = vadd.f32 %v970, %v3636
        %v3722 = vadd.f32 %v971, %v3638
        %v3723 = vadd.f32 %v972, %v3640
        %v3724 = vadd.f32 %v973, %v3642
        %v3725 = vadd.f32 %v974, %v3644
        %v3726 = vadd.f32 %v975, %v3646
        %v3727 = vadd.f32 %v976, %v3648
        %v3728 = vadd.f32 %v977, %v3650
        %v3729 = vadd.f32 %v978, %v3652
        %v3730 = vadd.f32 %v979, %v3654
        %v3731 = vadd.f32 %v980, %v3656
        %v3732 = vadd.f32 %v981, %v3658
        %v3733 = vadd.f32 %v982, %v3660
        %v3734 = vadd.f32 %v983, %v3662
        %v3735 = vadd.f32 %v984, %v3664
        %v3736 = vadd.f32 %v985, %v3666
        %v3737 = vadd.f32 %v986, %v3668
        %v3738 = vadd.f32 %v987, %v3670
        %v3739 = vadd.f32 %v988, %v3672
        %v3740 = vadd.f32 %v989, %v3674
        %v3741 = vadd.f32 %v990, %v3676
        %v3742 = vadd.f32 %v991, %v3678
        %3743 = vmatpush.msra.mxu0 0.0
        %3744 = vmatpush.msra.mxu0 0.0
        %3745 = vmatpush.msra.mxu0 0.0
        %3746 = vmatpush.msra.mxu0 0.0
        %3747 = vmatpush.msra.mxu0 0.0
        %3748 = vmatpush.msra.mxu0 0.0
        %3749 = vmatpush.msra.mxu0 0.0
        %3750 = vmatpush.msra.mxu0 0.0
        %3751 = vmatpush.msra.mxu0 0.0
        %3752 = vmatpush.msra.mxu0 0.0
        %3753 = vmatpush.msra.mxu0 0.0
        %3754 = vmatpush.msra.mxu0 0.0
        %3755 = vmatpush.msra.mxu0 0.0
        %3756 = vmatpush.msra.mxu0 0.0
        %3757 = vmatpush.msra.mxu0 %v3712
        %3758 = vmatpush.msra.mxu0 %v3711
        %3759 = vmatmul.f32.gmra.mxu0 %v1009
        %v3760 = vpop.f32.mrf.mxu0
        %v3761 = vadd.f32 0.0, %v3760
        %3762 = vmatmul.f32.gmra.mxu0 %v1012
        %v3763 = vpop.f32.mrf.mxu0
        %v3764 = vadd.f32 0.0, %v3763
        %3765 = vdwg.mxu0
        %3766 = vmatpush.msra.mxu0 0.0
        %3767 = vmatpush.msra.mxu0 0.0
        %3768 = vmatpush.msra.mxu0 0.0
        %3769 = vmatpush.msra.mxu0 0.0
        %3770 = vmatpush.msra.mxu0 0.0
        %3771 = vmatpush.msra.mxu0 0.0
        %3772 = vmatpush.msra.mxu0 0.0
        %3773 = vmatpush.msra.mxu0 0.0
        %3774 = vmatpush.msra.mxu0 0.0
        %3775 = vmatpush.msra.mxu0 0.0
        %3776 = vmatpush.msra.mxu0 0.0
        %3777 = vmatpush.msra.mxu0 0.0
        %3778 = vmatpush.msra.mxu0 0.0
        %3779 = vmatpush.msra.mxu0 0.0
        %3780 = vmatpush.msra.mxu0 %v3714
        %3781 = vmatpush.msra.mxu0 %v3713
        %3782 = vmatmul.f32.gmra.mxu0 %v1038
        %v3783 = vpop.f32.mrf.mxu0
        %v3784 = vadd.f32 0.0, %v3783
        %3785 = vmatmul.f32.gmra.mxu0 %v1041
        %v3786 = vpop.f32.mrf.mxu0
        %v3787 = vadd.f32 0.0, %v3786
        %3788 = vdwg.mxu0
        %3789 = vmatpush.msra.mxu0 0.0
        %3790 = vmatpush.msra.mxu0 0.0
        %3791 = vmatpush.msra.mxu0 0.0
        %3792 = vmatpush.msra.mxu0 0.0
        %3793 = vmatpush.msra.mxu0 0.0
        %3794 = vmatpush.msra.mxu0 0.0
        %3795 = vmatpush.msra.mxu0 0.0
        %3796 = vmatpush.msra.mxu0 0.0
        %3797 = vmatpush.msra.mxu0 0.0
        %3798 = vmatpush.msra.mxu0 0.0
        %3799 = vmatpush.msra.mxu0 0.0
        %3800 = vmatpush.msra.mxu0 0.0
        %3801 = vmatpush.msra.mxu0 0.0
        %3802 = vmatpush.msra.mxu0 0.0
        %3803 = vmatpush.msra.mxu0 %v3716
        %3804 = vmatpush.msra.mxu0 %v3715
        %3805 = vmatmul.f32.gmra.mxu0 %v1067
        %v3806 = vpop.f32.mrf.mxu0
        %v3807 = vadd.f32 0.0, %v3806
        %3808 = vmatmul.f32.gmra.mxu0 %v1070
        %v3809 = vpop.f32.mrf.mxu0
        %v3810 = vadd.f32 0.0, %v3809
        %3811 = vdwg.mxu0
        %3812 = vmatpush.msra.mxu0 0.0
        %3813 = vmatpush.msra.mxu0 0.0
        %3814 = vmatpush.msra.mxu0 0.0
        %3815 = vmatpush.msra.mxu0 0.0
        %3816 = vmatpush.msra.mxu0 0.0
        %3817 = vmatpush.msra.mxu0 0.0
        %3818 = vmatpush.msra.mxu0 0.0
        %3819 = vmatpush.msra.mxu0 0.0
        %3820 = vmatpush.msra.mxu0 0.0
        %3821 = vmatpush.msra.mxu0 0.0
        %3822 = vmatpush.msra.mxu0 0.0
        %3823 = vmatpush.msra.mxu0 0.0
        %3824 = vmatpush.msra.mxu0 0.0
        %3825 = vmatpush.msra.mxu0 0.0
        %3826 = vmatpush.msra.mxu0 %v3718
        %3827 = vmatpush.msra.mxu0 %v3717
        %3828 = vmatmul.f32.gmra.mxu0 %v1096
        %v3829 = vpop.f32.mrf.mxu0
        %v3830 = vadd.f32 0.0, %v3829
        %3831 = vmatmul.f32.gmra.mxu0 %v1099
        %v3832 = vpop.f32.mrf.mxu0
        %v3833 = vadd.f32 0.0, %v3832
        %3834 = vdwg.mxu0
        %3835 = vmatpush.msra.mxu0 0.0
        %3836 = vmatpush.msra.mxu0 0.0
        %3837 = vmatpush.msra.mxu0 0.0
        %3838 = vmatpush.msra.mxu0 0.0
        %3839 = vmatpush.msra.mxu0 0.0
        %3840 = vmatpush.msra.mxu0 0.0
        %3841 = vmatpush.msra.mxu0 0.0
        %3842 = vmatpush.msra.mxu0 0.0
        %3843 = vmatpush.msra.mxu0 0.0
        %3844 = vmatpush.msra.mxu0 0.0
        %3845 = vmatpush.msra.mxu0 0.0
        %3846 = vmatpush.msra.mxu0 0.0
        %3847 = vmatpush.msra.mxu0 0.0
        %3848 = vmatpush.msra.mxu0 0.0
        %3849 = vmatpush.msra.mxu0 %v3720
        %3850 = vmatpush.msra.mxu0 %v3719
        %3851 = vmatmul.f32.gmra.mxu0 %v1125
        %v3852 = vpop.f32.mrf.mxu0
        %v3853 = vadd.f32 0.0, %v3852
        %3854 = vmatmul.f32.gmra.mxu0 %v1128
        %v3855 = vpop.f32.mrf.mxu0
        %v3856 = vadd.f32 0.0, %v3855
        %3857 = vdwg.mxu0
        %3858 = vmatpush.msra.mxu0 0.0
        %3859 = vmatpush.msra.mxu0 0.0
        %3860 = vmatpush.msra.mxu0 0.0
        %3861 = vmatpush.msra.mxu0 0.0
        %3862 = vmatpush.msra.mxu0 0.0
        %3863 = vmatpush.msra.mxu0 0.0
        %3864 = vmatpush.msra.mxu0 0.0
        %3865 = vmatpush.msra.mxu0 0.0
        %3866 = vmatpush.msra.mxu0 0.0
        %3867 = vmatpush.msra.mxu0 0.0
        %3868 = vmatpush.msra.mxu0 0.0
        %3869 = vmatpush.msra.mxu0 0.0
        %3870 = vmatpush.msra.mxu0 0.0
        %3871 = vmatpush.msra.mxu0 0.0
        %3872 = vmatpush.msra.mxu0 %v3722
        %3873 = vmatpush.msra.mxu0 %v3721
        %3874 = vmatmul.f32.gmra.mxu0 %v1154
        %v3875 = vpop.f32.mrf.mxu0
        %v3876 = vadd.f32 0.0, %v3875
        %3877 = vmatmul.f32.gmra.mxu0 %v1157
        %v3878 = vpop.f32.mrf.mxu0
        %v3879 = vadd.f32 0.0, %v3878
        %3880 = vdwg.mxu0
        %3881 = vmatpush.msra.mxu0 0.0
        %3882 = vmatpush.msra.mxu0 0.0
        %3883 = vmatpush.msra.mxu0 0.0
        %3884 = vmatpush.msra.mxu0 0.0
        %3885 = vmatpush.msra.mxu0 0.0
        %3886 = vmatpush.msra.mxu0 0.0
        %3887 = vmatpush.msra.mxu0 0.0
        %3888 = vmatpush.msra.mxu0 0.0
        %3889 = vmatpush.msra.mxu0 0.0
        %3890 = vmatpush.msra.mxu0 0.0
        %3891 = vmatpush.msra.mxu0 0.0
        %3892 = vmatpush.msra.mxu0 0.0
        %3893 = vmatpush.msra.mxu0 0.0
        %3894 = vmatpush.msra.mxu0 0.0
        %3895 = vmatpush.msra.mxu0 %v3724
        %3896 = vmatpush.msra.mxu0 %v3723
        %3897 = vmatmul.f32.gmra.mxu0 %v1183
        %v3898 = vpop.f32.mrf.mxu0
        %v3899 = vadd.f32 0.0, %v3898
        %3900 = vmatmul.f32.gmra.mxu0 %v1186
        %v3901 = vpop.f32.mrf.mxu0
        %v3902 = vadd.f32 0.0, %v3901
        %3903 = vdwg.mxu0
        %3904 = vmatpush.msra.mxu0 0.0
        %3905 = vmatpush.msra.mxu0 0.0
        %3906 = vmatpush.msra.mxu0 0.0
        %3907 = vmatpush.msra.mxu0 0.0
        %3908 = vmatpush.msra.mxu0 0.0
        %3909 = vmatpush.msra.mxu0 0.0
        %3910 = vmatpush.msra.mxu0 0.0
        %3911 = vmatpush.msra.mxu0 0.0
        %3912 = vmatpush.msra.mxu0 0.0
        %3913 = vmatpush.msra.mxu0 0.0
        %3914 = vmatpush.msra.mxu0 0.0
        %3915 = vmatpush.msra.mxu0 0.0
        %3916 = vmatpush.msra.mxu0 0.0
        %3917 = vmatpush.msra.mxu0 0.0
        %3918 = vmatpush.msra.mxu0 %v3726
        %3919 = vmatpush.msra.mxu0 %v3725
        %3920 = vmatmul.f32.gmra.mxu0 %v1212
        %v3921 = vpop.f32.mrf.mxu0
        %v3922 = vadd.f32 0.0, %v3921
        %3923 = vmatmul.f32.gmra.mxu0 %v1215
        %v3924 = vpop.f32.mrf.mxu0
        %v3925 = vadd.f32 0.0, %v3924
        %3926 = vdwg.mxu0
        %3927 = vmatpush.msra.mxu0 0.0
        %3928 = vmatpush.msra.mxu0 0.0
        %3929 = vmatpush.msra.mxu0 0.0
        %3930 = vmatpush.msra.mxu0 0.0
        %3931 = vmatpush.msra.mxu0 0.0
        %3932 = vmatpush.msra.mxu0 0.0
        %3933 = vmatpush.msra.mxu0 0.0
        %3934 = vmatpush.msra.mxu0 0.0
        %3935 = vmatpush.msra.mxu0 0.0
        %3936 = vmatpush.msra.mxu0 0.0
        %3937 = vmatpush.msra.mxu0 0.0
        %3938 = vmatpush.msra.mxu0 0.0
        %3939 = vmatpush.msra.mxu0 0.0
        %3940 = vmatpush.msra.mxu0 0.0
        %3941 = vmatpush.msra.mxu0 %v3728
        %3942 = vmatpush.msra.mxu0 %v3727
        %3943 = vmatmul.f32.gmra.mxu0 %v1241
        %v3944 = vpop.f32.mrf.mxu0
        %v3945 = vadd.f32 0.0, %v3944
        %3946 = vmatmul.f32.gmra.mxu0 %v1244
        %v3947 = vpop.f32.mrf.mxu0
        %v3948 = vadd.f32 0.0, %v3947
        %3949 = vdwg.mxu0
        %3950 = vmatpush.msra.mxu0 0.0
        %3951 = vmatpush.msra.mxu0 0.0
        %3952 = vmatpush.msra.mxu0 0.0
        %3953 = vmatpush.msra.mxu0 0.0
        %3954 = vmatpush.msra.mxu0 0.0
        %3955 = vmatpush.msra.mxu0 0.0
        %3956 = vmatpush.msra.mxu0 0.0
        %3957 = vmatpush.msra.mxu0 0.0
        %3958 = vmatpush.msra.mxu0 0.0
        %3959 = vmatpush.msra.mxu0 0.0
        %3960 = vmatpush.msra.mxu0 0.0
        %3961 = vmatpush.msra.mxu0 0.0
        %3962 = vmatpush.msra.mxu0 0.0
        %3963 = vmatpush.msra.mxu0 0.0
        %3964 = vmatpush.msra.mxu0 %v3730
        %3965 = vmatpush.msra.mxu0 %v3729
        %3966 = vmatmul.f32.gmra.mxu0 %v1270
        %v3967 = vpop.f32.mrf.mxu0
        %v3968 = vadd.f32 0.0, %v3967
        %3969 = vmatmul.f32.gmra.mxu0 %v1273
        %v3970 = vpop.f32.mrf.mxu0
        %v3971 = vadd.f32 0.0, %v3970
        %3972 = vdwg.mxu0
        %3973 = vmatpush.msra.mxu0 0.0
        %3974 = vmatpush.msra.mxu0 0.0
        %3975 = vmatpush.msra.mxu0 0.0
        %3976 = vmatpush.msra.mxu0 0.0
        %3977 = vmatpush.msra.mxu0 0.0
        %3978 = vmatpush.msra.mxu0 0.0
        %3979 = vmatpush.msra.mxu0 0.0
        %3980 = vmatpush.msra.mxu0 0.0
        %3981 = vmatpush.msra.mxu0 0.0
        %3982 = vmatpush.msra.mxu0 0.0
        %3983 = vmatpush.msra.mxu0 0.0
        %3984 = vmatpush.msra.mxu0 0.0
        %3985 = vmatpush.msra.mxu0 0.0
        %3986 = vmatpush.msra.mxu0 0.0
        %3987 = vmatpush.msra.mxu0 %v3732
        %3988 = vmatpush.msra.mxu0 %v3731
        %3989 = vmatmul.f32.gmra.mxu0 %v1299
        %v3990 = vpop.f32.mrf.mxu0
        %v3991 = vadd.f32 0.0, %v3990
        %3992 = vmatmul.f32.gmra.mxu0 %v1302
        %v3993 = vpop.f32.mrf.mxu0
        %v3994 = vadd.f32 0.0, %v3993
        %3995 = vdwg.mxu0
        %3996 = vmatpush.msra.mxu0 0.0
        %3997 = vmatpush.msra.mxu0 0.0
        %3998 = vmatpush.msra.mxu0 0.0
        %3999 = vmatpush.msra.mxu0 0.0
        %4000 = vmatpush.msra.mxu0 0.0
        %4001 = vmatpush.msra.mxu0 0.0
        %4002 = vmatpush.msra.mxu0 0.0
        %4003 = vmatpush.msra.mxu0 0.0
        %4004 = vmatpush.msra.mxu0 0.0
        %4005 = vmatpush.msra.mxu0 0.0
        %4006 = vmatpush.msra.mxu0 0.0
        %4007 = vmatpush.msra.mxu0 0.0
        %4008 = vmatpush.msra.mxu0 0.0
        %4009 = vmatpush.msra.mxu0 0.0
        %4010 = vmatpush.msra.mxu0 %v3734
        %4011 = vmatpush.msra.mxu0 %v3733
        %4012 = vmatmul.f32.gmra.mxu0 %v1328
        %v4013 = vpop.f32.mrf.mxu0
        %v4014 = vadd.f32 0.0, %v4013
        %4015 = vmatmul.f32.gmra.mxu0 %v1331
        %v4016 = vpop.f32.mrf.mxu0
        %v4017 = vadd.f32 0.0, %v4016
        %4018 = vdwg.mxu0
        %4019 = vmatpush.msra.mxu0 0.0
        %4020 = vmatpush.msra.mxu0 0.0
        %4021 = vmatpush.msra.mxu0 0.0
        %4022 = vmatpush.msra.mxu0 0.0
        %4023 = vmatpush.msra.mxu0 0.0
        %4024 = vmatpush.msra.mxu0 0.0
        %4025 = vmatpush.msra.mxu0 0.0
        %4026 = vmatpush.msra.mxu0 0.0
        %4027 = vmatpush.msra.mxu0 0.0
        %4028 = vmatpush.msra.mxu0 0.0
        %4029 = vmatpush.msra.mxu0 0.0
        %4030 = vmatpush.msra.mxu0 0.0
        %4031 = vmatpush.msra.mxu0 0.0
        %4032 = vmatpush.msra.mxu0 0.0
        %4033 = vmatpush.msra.mxu0 %v3736
        %4034 = vmatpush.msra.mxu0 %v3735
        %4035 = vmatmul.f32.gmra.mxu0 %v1357
        %v4036 = vpop.f32.mrf.mxu0
        %v4037 = vadd.f32 0.0, %v4036
        %4038 = vmatmul.f32.gmra.mxu0 %v1360
        %v4039 = vpop.f32.mrf.mxu0
        %v4040 = vadd.f32 0.0, %v4039
        %4041 = vdwg.mxu0
        %4042 = vmatpush.msra.mxu0 0.0
        %4043 = vmatpush.msra.mxu0 0.0
        %4044 = vmatpush.msra.mxu0 0.0
        %4045 = vmatpush.msra.mxu0 0.0
        %4046 = vmatpush.msra.mxu0 0.0
        %4047 = vmatpush.msra.mxu0 0.0
        %4048 = vmatpush.msra.mxu0 0.0
        %4049 = vmatpush.msra.mxu0 0.0
        %4050 = vmatpush.msra.mxu0 0.0
        %4051 = vmatpush.msra.mxu0 0.0
        %4052 = vmatpush.msra.mxu0 0.0
        %4053 = vmatpush.msra.mxu0 0.0
        %4054 = vmatpush.msra.mxu0 0.0
        %4055 = vmatpush.msra.mxu0 0.0
        %4056 = vmatpush.msra.mxu0 %v3738
        %4057 = vmatpush.msra.mxu0 %v3737
        %4058 = vmatmul.f32.gmra.mxu0 %v1386
        %v4059 = vpop.f32.mrf.mxu0
        %v4060 = vadd.f32 0.0, %v4059
        %4061 = vmatmul.f32.gmra.mxu0 %v1389
        %v4062 = vpop.f32.mrf.mxu0
        %v4063 = vadd.f32 0.0, %v4062
        %4064 = vdwg.mxu0
        %4065 = vmatpush.msra.mxu0 0.0
        %4066 = vmatpush.msra.mxu0 0.0
        %4067 = vmatpush.msra.mxu0 0.0
        %4068 = vmatpush.msra.mxu0 0.0
        %4069 = vmatpush.msra.mxu0 0.0
        %4070 = vmatpush.msra.mxu0 0.0
        %4071 = vmatpush.msra.mxu0 0.0
        %4072 = vmatpush.msra.mxu0 0.0
        %4073 = vmatpush.msra.mxu0 0.0
        %4074 = vmatpush.msra.mxu0 0.0
        %4075 = vmatpush.msra.mxu0 0.0
        %4076 = vmatpush.msra.mxu0 0.0
        %4077 = vmatpush.msra.mxu0 0.0
        %4078 = vmatpush.msra.mxu0 0.0
        %4079 = vmatpush.msra.mxu0 %v3740
        %4080 = vmatpush.msra.mxu0 %v3739
        %4081 = vmatmul.f32.gmra.mxu0 %v1415
        %v4082 = vpop.f32.mrf.mxu0
        %v4083 = vadd.f32 0.0, %v4082
        %4084 = vmatmul.f32.gmra.mxu0 %v1418
        %v4085 = vpop.f32.mrf.mxu0
        %v4086 = vadd.f32 0.0, %v4085
        %4087 = vdwg.mxu0
        %4088 = vmatpush.msra.mxu0 0.0
        %4089 = vmatpush.msra.mxu0 0.0
        %4090 = vmatpush.msra.mxu0 0.0
        %4091 = vmatpush.msra.mxu0 0.0
        %4092 = vmatpush.msra.mxu0 0.0
        %4093 = vmatpush.msra.mxu0 0.0
        %4094 = vmatpush.msra.mxu0 0.0
        %4095 = vmatpush.msra.mxu0 0.0
        %4096 = vmatpush.msra.mxu0 0.0
        %4097 = vmatpush.msra.mxu0 0.0
        %4098 = vmatpush.msra.mxu0 0.0
        %4099 = vmatpush.msra.mxu0 0.0
        %4100 = vmatpush.msra.mxu0 0.0
        %4101 = vmatpush.msra.mxu0 0.0
        %4102 = vmatpush.msra.mxu0 %v3742
        %4103 = vmatpush.msra.mxu0 %v3741
        %4104 = vmatmul.f32.gmra.mxu0 %v1444
        %v4105 = vpop.f32.mrf.mxu0
        %v4106 = vadd.f32 0.0, %v4105
        %4107 = vmatmul.f32.gmra.mxu0 %v1447
        %v4108 = vpop.f32.mrf.mxu0
        %v4109 = vadd.f32 0.0, %v4108
        %4110 = vdwg.mxu0
        %v4112 = vsel %vm1475, %v3761, 0
        %v4115 = vsel %vm1475, %v3764, 0
        %v4118 = vsel %vm1475, %v3784, 0
        %v4121 = vsel %vm1475, %v3787, 0
        %v4124 = vsel %vm1475, %v3807, 0
        %v4127 = vsel %vm1475, %v3810, 0
        %v4130 = vsel %vm1475, %v3830, 0
        %v4133 = vsel %vm1475, %v3833, 0
        %v4136 = vsel %vm1475, %v3853, 0
        %v4139 = vsel %vm1475, %v3856, 0
        %v4142 = vsel %vm1475, %v3876, 0
        %v4145 = vsel %vm1475, %v3879, 0
        %v4148 = vsel %vm1475, %v3899, 0
        %v4151 = vsel %vm1475, %v3902, 0
        %v4154 = vsel %vm1475, %v3922, 0
        %v4157 = vsel %vm1475, %v3925, 0
        %v4160 = vsel %vm1475, %v3945, 0
        %v4163 = vsel %vm1475, %v3948, 0
        %v4166 = vsel %vm1475, %v3968, 0
        %v4169 = vsel %vm1475, %v3971, 0
        %v4172 = vsel %vm1475, %v3991, 0
        %v4175 = vsel %vm1475, %v3994, 0
        %v4178 = vsel %vm1475, %v4014, 0
        %v4181 = vsel %vm1475, %v4017, 0
        %v4184 = vsel %vm1475, %v4037, 0
        %v4187 = vsel %vm1475, %v4040, 0
        %v4190 = vsel %vm1475, %v4060, 0
        %v4193 = vsel %vm1475, %v4063, 0
        %v4196 = vsel %vm1475, %v4083, 0
        %v4199 = vsel %vm1475, %v4086, 0
        %v4202 = vsel %vm1475, %v4106, 0
        %v4205 = vsel %vm1475, %v4109, 0
        %4207 = vmatpush.msra.mxu0 0.0
        %4208 = vmatpush.msra.mxu0 0.0
        %4209 = vmatpush.msra.mxu0 0.0
        %4210 = vmatpush.msra.mxu0 0.0
        %4211 = vmatpush.msra.mxu0 0.0
        %4212 = vmatpush.msra.mxu0 0.0
        %4213 = vmatpush.msra.mxu0 0.0
        %4214 = vmatpush.msra.mxu0 0.0
        %4215 = vmatpush.msra.mxu0 0.0
        %4216 = vmatpush.msra.mxu0 0.0
        %4217 = vmatpush.msra.mxu0 0.0
        %4218 = vmatpush.msra.mxu0 0.0
        %4219 = vmatpush.msra.mxu0 %v995
        %4220 = vmatpush.msra.mxu0 %v994
        %4221 = vmatpush.msra.mxu0 %v993
        %4222 = vmatpush.msra.mxu0 %v992
        %4223 = vmatmul.f32.gmra.mxu0 %v4112
        %v4224 = vpop.f32.mrf.mxu0
        %v4225 = vadd.f32 %v1473, %v4224
        %4226 = vmatmul.f32.gmra.mxu0 %v4115
        %v4227 = vpop.f32.mrf.mxu0
        %v4228 = vadd.f32 %v1473, %v4227
        %4229 = vmatmul.f32.gmra.mxu0 %v4118
        %v4230 = vpop.f32.mrf.mxu0
        %v4231 = vadd.f32 %v1473, %v4230
        %4232 = vmatmul.f32.gmra.mxu0 %v4121
        %v4233 = vpop.f32.mrf.mxu0
        %v4234 = vadd.f32 %v1473, %v4233
        %4235 = vmatmul.f32.gmra.mxu0 %v4124
        %v4236 = vpop.f32.mrf.mxu0
        %v4237 = vadd.f32 %v1473, %v4236
        %4238 = vmatmul.f32.gmra.mxu0 %v4127
        %v4239 = vpop.f32.mrf.mxu0
        %v4240 = vadd.f32 %v1473, %v4239
        %4241 = vmatmul.f32.gmra.mxu0 %v4130
        %v4242 = vpop.f32.mrf.mxu0
        %v4243 = vadd.f32 %v1473, %v4242
        %4244 = vmatmul.f32.gmra.mxu0 %v4133
        %v4245 = vpop.f32.mrf.mxu0
        %v4246 = vadd.f32 %v1473, %v4245
        %4247 = vmatmul.f32.gmra.mxu0 %v4136
        %v4248 = vpop.f32.mrf.mxu0
        %v4249 = vadd.f32 %v1473, %v4248
        %4250 = vmatmul.f32.gmra.mxu0 %v4139
        %v4251 = vpop.f32.mrf.mxu0
        %v4252 = vadd.f32 %v1473, %v4251
        %4253 = vmatmul.f32.gmra.mxu0 %v4142
        %v4254 = vpop.f32.mrf.mxu0
        %v4255 = vadd.f32 %v1473, %v4254
        %4256 = vmatmul.f32.gmra.mxu0 %v4145
        %v4257 = vpop.f32.mrf.mxu0
        %v4258 = vadd.f32 %v1473, %v4257
        %4259 = vmatmul.f32.gmra.mxu0 %v4148
        %v4260 = vpop.f32.mrf.mxu0
        %v4261 = vadd.f32 %v1473, %v4260
        %4262 = vmatmul.f32.gmra.mxu0 %v4151
        %v4263 = vpop.f32.mrf.mxu0
        %v4264 = vadd.f32 %v1473, %v4263
        %4265 = vmatmul.f32.gmra.mxu0 %v4154
        %v4266 = vpop.f32.mrf.mxu0
        %v4267 = vadd.f32 %v1473, %v4266
        %4268 = vmatmul.f32.gmra.mxu0 %v4157
        %v4269 = vpop.f32.mrf.mxu0
        %v4270 = vadd.f32 %v1473, %v4269
        %4271 = vmatmul.f32.gmra.mxu0 %v4160
        %v4272 = vpop.f32.mrf.mxu0
        %v4273 = vadd.f32 %v1473, %v4272
        %4274 = vmatmul.f32.gmra.mxu0 %v4163
        %v4275 = vpop.f32.mrf.mxu0
        %v4276 = vadd.f32 %v1473, %v4275
        %4277 = vmatmul.f32.gmra.mxu0 %v4166
        %v4278 = vpop.f32.mrf.mxu0
        %v4279 = vadd.f32 %v1473, %v4278
        %4280 = vmatmul.f32.gmra.mxu0 %v4169
        %v4281 = vpop.f32.mrf.mxu0
        %v4282 = vadd.f32 %v1473, %v4281
        %4283 = vmatmul.f32.gmra.mxu0 %v4172
        %v4284 = vpop.f32.mrf.mxu0
        %v4285 = vadd.f32 %v1473, %v4284
        %4286 = vmatmul.f32.gmra.mxu0 %v4175
        %v4287 = vpop.f32.mrf.mxu0
        %v4288 = vadd.f32 %v1473, %v4287
        %4289 = vmatmul.f32.gmra.mxu0 %v4178
        %v4290 = vpop.f32.mrf.mxu0
        %v4291 = vadd.f32 %v1473, %v4290
        %4292 = vmatmul.f32.gmra.mxu0 %v4181
        %v4293 = vpop.f32.mrf.mxu0
        %v4294 = vadd.f32 %v1473, %v4293
        %4295 = vmatmul.f32.gmra.mxu0 %v4184
        %v4296 = vpop.f32.mrf.mxu0
        %v4297 = vadd.f32 %v1473, %v4296
        %4298 = vmatmul.f32.gmra.mxu0 %v4187
        %v4299 = vpop.f32.mrf.mxu0
        %v4300 = vadd.f32 %v1473, %v4299
        %4301 = vmatmul.f32.gmra.mxu0 %v4190
        %v4302 = vpop.f32.mrf.mxu0
        %v4303 = vadd.f32 %v1473, %v4302
        %4304 = vmatmul.f32.gmra.mxu0 %v4193
        %v4305 = vpop.f32.mrf.mxu0
        %v4306 = vadd.f32 %v1473, %v4305
        %4307 = vmatmul.f32.gmra.mxu0 %v4196
        %v4308 = vpop.f32.mrf.mxu0
        %v4309 = vadd.f32 %v1473, %v4308
        %4310 = vmatmul.f32.gmra.mxu0 %v4199
        %v4311 = vpop.f32.mrf.mxu0
        %v4312 = vadd.f32 %v1473, %v4311
        %4313 = vmatmul.f32.gmra.mxu0 %v4202
        %v4314 = vpop.f32.mrf.mxu0
        %v4315 = vadd.f32 %v1473, %v4314
        %4316 = vmatmul.f32.gmra.mxu0 %v4205
        %v4317 = vpop.f32.mrf.mxu0
        %v4318 = vadd.f32 %v1473, %v4317
        %4319 = vdwg.mxu0
        %v4321 = vsel %vm1475, %v3711, 0
        %v4324 = vsel %vm1475, %v3712, 0
        %v4327 = vsel %vm1475, %v3713, 0
        %v4330 = vsel %vm1475, %v3714, 0
        %v4333 = vsel %vm1475, %v3715, 0
        %v4336 = vsel %vm1475, %v3716, 0
        %v4339 = vsel %vm1475, %v3717, 0
        %v4342 = vsel %vm1475, %v3718, 0
        %v4345 = vsel %vm1475, %v3719, 0
        %v4348 = vsel %vm1475, %v3720, 0
        %v4351 = vsel %vm1475, %v3721, 0
        %v4354 = vsel %vm1475, %v3722, 0
        %v4357 = vsel %vm1475, %v3723, 0
        %v4360 = vsel %vm1475, %v3724, 0
        %v4363 = vsel %vm1475, %v3725, 0
        %v4366 = vsel %vm1475, %v3726, 0
        %v4369 = vsel %vm1475, %v3727, 0
        %v4372 = vsel %vm1475, %v3728, 0
        %v4375 = vsel %vm1475, %v3729, 0
        %v4378 = vsel %vm1475, %v3730, 0
        %v4381 = vsel %vm1475, %v3731, 0
        %v4384 = vsel %vm1475, %v3732, 0
        %v4387 = vsel %vm1475, %v3733, 0
        %v4390 = vsel %vm1475, %v3734, 0
        %v4393 = vsel %vm1475, %v3735, 0
        %v4396 = vsel %vm1475, %v3736, 0
        %v4399 = vsel %vm1475, %v3737, 0
        %v4402 = vsel %vm1475, %v3738, 0
        %v4405 = vsel %vm1475, %v3739, 0
        %v4408 = vsel %vm1475, %v3740, 0
        %v4411 = vsel %vm1475, %v3741, 0
        %v4414 = vsel %vm1475, %v3742, 0
        %4416 = vmatpush.msra.mxu0 0.0
        %4417 = vmatpush.msra.mxu0 0.0
        %4418 = vmatpush.msra.mxu0 0.0
        %4419 = vmatpush.msra.mxu0 0.0
        %4420 = vmatpush.msra.mxu0 0.0
        %4421 = vmatpush.msra.mxu0 0.0
        %4422 = vmatpush.msra.mxu0 0.0
        %4423 = vmatpush.msra.mxu0 0.0
        %4424 = vmatpush.msra.mxu0 0.0
        %4425 = vmatpush.msra.mxu0 0.0
        %4426 = vmatpush.msra.mxu0 0.0
        %4427 = vmatpush.msra.mxu0 0.0
        %4428 = vmatpush.msra.mxu0 %v1000
        %4429 = vmatpush.msra.mxu0 %v999
        %4430 = vmatpush.msra.mxu0 %v998
        %4431 = vmatpush.msra.mxu0 %v997
        %4432 = vmatmul.f32.gmra.mxu0 %v4321
        %v4433 = vpop.f32.mrf.mxu0
        %v4434 = vadd.f32 %v1686, %v4433
        %4435 = vmatmul.f32.gmra.mxu0 %v4324
        %v4436 = vpop.f32.mrf.mxu0
        %v4437 = vadd.f32 %v1686, %v4436
        %4438 = vmatmul.f32.gmra.mxu0 %v4327
        %v4439 = vpop.f32.mrf.mxu0
        %v4440 = vadd.f32 %v1686, %v4439
        %4441 = vmatmul.f32.gmra.mxu0 %v4330
        %v4442 = vpop.f32.mrf.mxu0
        %v4443 = vadd.f32 %v1686, %v4442
        %4444 = vmatmul.f32.gmra.mxu0 %v4333
        %v4445 = vpop.f32.mrf.mxu0
        %v4446 = vadd.f32 %v1686, %v4445
        %4447 = vmatmul.f32.gmra.mxu0 %v4336
        %v4448 = vpop.f32.mrf.mxu0
        %v4449 = vadd.f32 %v1686, %v4448
        %4450 = vmatmul.f32.gmra.mxu0 %v4339
        %v4451 = vpop.f32.mrf.mxu0
        %v4452 = vadd.f32 %v1686, %v4451
        %4453 = vmatmul.f32.gmra.mxu0 %v4342
        %v4454 = vpop.f32.mrf.mxu0
        %v4455 = vadd.f32 %v1686, %v4454
        %4456 = vmatmul.f32.gmra.mxu0 %v4345
        %v4457 = vpop.f32.mrf.mxu0
        %v4458 = vadd.f32 %v1686, %v4457
        %4459 = vmatmul.f32.gmra.mxu0 %v4348
        %v4460 = vpop.f32.mrf.mxu0
        %v4461 = vadd.f32 %v1686, %v4460
        %4462 = vmatmul.f32.gmra.mxu0 %v4351
        %v4463 = vpop.f32.mrf.mxu0
        %v4464 = vadd.f32 %v1686, %v4463
        %4465 = vmatmul.f32.gmra.mxu0 %v4354
        %v4466 = vpop.f32.mrf.mxu0
        %v4467 = vadd.f32 %v1686, %v4466
        %4468 = vmatmul.f32.gmra.mxu0 %v4357
        %v4469 = vpop.f32.mrf.mxu0
        %v4470 = vadd.f32 %v1686, %v4469
        %4471 = vmatmul.f32.gmra.mxu0 %v4360
        %v4472 = vpop.f32.mrf.mxu0
        %v4473 = vadd.f32 %v1686, %v4472
        %4474 = vmatmul.f32.gmra.mxu0 %v4363
        %v4475 = vpop.f32.mrf.mxu0
        %v4476 = vadd.f32 %v1686, %v4475
        %4477 = vmatmul.f32.gmra.mxu0 %v4366
        %v4478 = vpop.f32.mrf.mxu0
        %v4479 = vadd.f32 %v1686, %v4478
        %4480 = vmatmul.f32.gmra.mxu0 %v4369
        %v4481 = vpop.f32.mrf.mxu0
        %v4482 = vadd.f32 %v1686, %v4481
        %4483 = vmatmul.f32.gmra.mxu0 %v4372
        %v4484 = vpop.f32.mrf.mxu0
        %v4485 = vadd.f32 %v1686, %v4484
        %4486 = vmatmul.f32.gmra.mxu0 %v4375
        %v4487 = vpop.f32.mrf.mxu0
        %v4488 = vadd.f32 %v1686, %v4487
        %4489 = vmatmul.f32.gmra.mxu0 %v4378
        %v4490 = vpop.f32.mrf.mxu0
        %v4491 = vadd.f32 %v1686, %v4490
        %4492 = vmatmul.f32.gmra.mxu0 %v4381
        %v4493 = vpop.f32.mrf.mxu0
        %v4494 = vadd.f32 %v1686, %v4493
        %4495 = vmatmul.f32.gmra.mxu0 %v4384
        %v4496 = vpop.f32.mrf.mxu0
        %v4497 = vadd.f32 %v1686, %v4496
        %4498 = vmatmul.f32.gmra.mxu0 %v4387
        %v4499 = vpop.f32.mrf.mxu0
        %v4500 = vadd.f32 %v1686, %v4499
        %4501 = vmatmul.f32.gmra.mxu0 %v4390
        %v4502 = vpop.f32.mrf.mxu0
        %v4503 = vadd.f32 %v1686, %v4502
        %4504 = vmatmul.f32.gmra.mxu0 %v4393
        %v4505 = vpop.f32.mrf.mxu0
        %v4506 = vadd.f32 %v1686, %v4505
        %4507 = vmatmul.f32.gmra.mxu0 %v4396
        %v4508 = vpop.f32.mrf.mxu0
        %v4509 = vadd.f32 %v1686, %v4508
        %4510 = vmatmul.f32.gmra.mxu0 %v4399
        %v4511 = vpop.f32.mrf.mxu0
        %v4512 = vadd.f32 %v1686, %v4511
        %4513 = vmatmul.f32.gmra.mxu0 %v4402
        %v4514 = vpop.f32.mrf.mxu0
        %v4515 = vadd.f32 %v1686, %v4514
        %4516 = vmatmul.f32.gmra.mxu0 %v4405
        %v4517 = vpop.f32.mrf.mxu0
        %v4518 = vadd.f32 %v1686, %v4517
        %4519 = vmatmul.f32.gmra.mxu0 %v4408
        %v4520 = vpop.f32.mrf.mxu0
        %v4521 = vadd.f32 %v1686, %v4520
        %4522 = vmatmul.f32.gmra.mxu0 %v4411
        %v4523 = vpop.f32.mrf.mxu0
        %v4524 = vadd.f32 %v1686, %v4523
        %4525 = vmatmul.f32.gmra.mxu0 %v4414
        %v4526 = vpop.f32.mrf.mxu0
        %v4527 = vadd.f32 %v1686, %v4526
        %4528 = vdwg.mxu0
        %v4529 = vadd.f32 %v4225, %v4434
        %v4530 = vadd.f32 %v4228, %v4437
        %v4531 = vadd.f32 %v4231, %v4440
        %v4532 = vadd.f32 %v4234, %v4443
        %v4533 = vadd.f32 %v4237, %v4446
        %v4534 = vadd.f32 %v4240, %v4449
        %v4535 = vadd.f32 %v4243, %v4452
        %v4536 = vadd.f32 %v4246, %v4455
        %v4537 = vadd.f32 %v4249, %v4458
        %v4538 = vadd.f32 %v4252, %v4461
        %v4539 = vadd.f32 %v4255, %v4464
        %v4540 = vadd.f32 %v4258, %v4467
        %v4541 = vadd.f32 %v4261, %v4470
        %v4542 = vadd.f32 %v4264, %v4473
        %v4543 = vadd.f32 %v4267, %v4476
        %v4544 = vadd.f32 %v4270, %v4479
        %v4545 = vadd.f32 %v4273, %v4482
        %v4546 = vadd.f32 %v4276, %v4485
        %v4547 = vadd.f32 %v4279, %v4488
        %v4548 = vadd.f32 %v4282, %v4491
        %v4549 = vadd.f32 %v4285, %v4494
        %v4550 = vadd.f32 %v4288, %v4497
        %v4551 = vadd.f32 %v4291, %v4500
        %v4552 = vadd.f32 %v4294, %v4503
        %v4553 = vadd.f32 %v4297, %v4506
        %v4554 = vadd.f32 %v4300, %v4509
        %v4555 = vadd.f32 %v4303, %v4512
        %v4556 = vadd.f32 %v4306, %v4515
        %v4557 = vadd.f32 %v4309, %v4518
        %v4558 = vadd.f32 %v4312, %v4521
        %v4559 = vadd.f32 %v4315, %v4524
        %v4560 = vadd.f32 %v4318, %v4527
        %v4561 = vxor.u32 %v4529, 2147483648
        %v4562 = vxor.u32 %v4530, 2147483648
        %v4563 = vxor.u32 %v4531, 2147483648
        %v4564 = vxor.u32 %v4532, 2147483648
        %v4565 = vxor.u32 %v4533, 2147483648
        %v4566 = vxor.u32 %v4534, 2147483648
        %v4567 = vxor.u32 %v4535, 2147483648
        %v4568 = vxor.u32 %v4536, 2147483648
        %v4569 = vxor.u32 %v4537, 2147483648
        %v4570 = vxor.u32 %v4538, 2147483648
        %v4571 = vxor.u32 %v4539, 2147483648
        %v4572 = vxor.u32 %v4540, 2147483648
        %v4573 = vxor.u32 %v4541, 2147483648
        %v4574 = vxor.u32 %v4542, 2147483648
        %v4575 = vxor.u32 %v4543, 2147483648
        %v4576 = vxor.u32 %v4544, 2147483648
        %v4577 = vxor.u32 %v4545, 2147483648
        %v4578 = vxor.u32 %v4546, 2147483648
        %v4579 = vxor.u32 %v4547, 2147483648
        %v4580 = vxor.u32 %v4548, 2147483648
        %v4581 = vxor.u32 %v4549, 2147483648
        %v4582 = vxor.u32 %v4550, 2147483648
        %v4583 = vxor.u32 %v4551, 2147483648
        %v4584 = vxor.u32 %v4552, 2147483648
        %v4585 = vxor.u32 %v4553, 2147483648
        %v4586 = vxor.u32 %v4554, 2147483648
        %v4587 = vxor.u32 %v4555, 2147483648
        %v4588 = vxor.u32 %v4556, 2147483648
        %v4589 = vxor.u32 %v4557, 2147483648
        %v4590 = vxor.u32 %v4558, 2147483648
        %v4591 = vxor.u32 %v4559, 2147483648
        %v4592 = vxor.u32 %v4560, 2147483648
        %v4593 = vmul.f32 %v4561, 1.442695
        %v4594 = vpow.pop %v4593
        %v4595 = vmul.f32 %v4562, 1.442695
        %v4596 = vpow.pop %v4595
        %v4597 = vmul.f32 %v4563, 1.442695
        %v4598 = vpow.pop %v4597
        %v4599 = vmul.f32 %v4564, 1.442695
        %v4600 = vpow.pop %v4599
        %v4601 = vmul.f32 %v4565, 1.442695
        %v4602 = vpow.pop %v4601
        %v4603 = vmul.f32 %v4566, 1.442695
        %v4604 = vpow.pop %v4603
        %v4605 = vmul.f32 %v4567, 1.442695
        %v4606 = vpow.pop %v4605
        %v4607 = vmul.f32 %v4568, 1.442695
        %v4608 = vpow.pop %v4607
        %v4609 = vmul.f32 %v4569, 1.442695
        %v4610 = vpow.pop %v4609
        %v4611 = vmul.f32 %v4570, 1.442695
        %v4612 = vpow.pop %v4611
        %v4613 = vmul.f32 %v4571, 1.442695
        %v4614 = vpow.pop %v4613
        %v4615 = vmul.f32 %v4572, 1.442695
        %v4616 = vpow.pop %v4615
        %v4617 = vmul.f32 %v4573, 1.442695
        %v4618 = vpow.pop %v4617
        %v4619 = vmul.f32 %v4574, 1.442695
        %v4620 = vpow.pop %v4619
        %v4621 = vmul.f32 %v4575, 1.442695
        %v4622 = vpow.pop %v4621
        %v4623 = vmul.f32 %v4576, 1.442695
        %v4624 = vpow.pop %v4623
        %v4625 = vmul.f32 %v4577, 1.442695
        %v4626 = vpow.pop %v4625
        %v4627 = vmul.f32 %v4578, 1.442695
        %v4628 = vpow.pop %v4627
        %v4629 = vmul.f32 %v4579, 1.442695
        %v4630 = vpow.pop %v4629
        %v4631 = vmul.f32 %v4580, 1.442695
        %v4632 = vpow.pop %v4631
        %v4633 = vmul.f32 %v4581, 1.442695
        %v4634 = vpow.pop %v4633
        %v4635 = vmul.f32 %v4582, 1.442695
        %v4636 = vpow.pop %v4635
        %v4637 = vmul.f32 %v4583, 1.442695
        %v4638 = vpow.pop %v4637
        %v4639 = vmul.f32 %v4584, 1.442695
        %v4640 = vpow.pop %v4639
        %v4641 = vmul.f32 %v4585, 1.442695
        %v4642 = vpow.pop %v4641
        %v4643 = vmul.f32 %v4586, 1.442695
        %v4644 = vpow.pop %v4643
        %v4645 = vmul.f32 %v4587, 1.442695
        %v4646 = vpow.pop %v4645
        %v4647 = vmul.f32 %v4588, 1.442695
        %v4648 = vpow.pop %v4647
        %v4649 = vmul.f32 %v4589, 1.442695
        %v4650 = vpow.pop %v4649
        %v4651 = vmul.f32 %v4590, 1.442695
        %v4652 = vpow.pop %v4651
        %v4653 = vmul.f32 %v4591, 1.442695
        %v4654 = vpow.pop %v4653
        %v4655 = vmul.f32 %v4592, 1.442695
        %v4656 = vpow.pop %v4655
        %v4657 = vadd.f32 %v4594, 1.0
        %v4658 = vadd.f32 %v4596, 1.0
        %v4659 = vadd.f32 %v4598, 1.0
        %v4660 = vadd.f32 %v4600, 1.0
        %v4661 = vadd.f32 %v4602, 1.0
        %v4662 = vadd.f32 %v4604, 1.0
        %v4663 = vadd.f32 %v4606, 1.0
        %v4664 = vadd.f32 %v4608, 1.0
        %v4665 = vadd.f32 %v4610, 1.0
        %v4666 = vadd.f32 %v4612, 1.0
        %v4667 = vadd.f32 %v4614, 1.0
        %v4668 = vadd.f32 %v4616, 1.0
        %v4669 = vadd.f32 %v4618, 1.0
        %v4670 = vadd.f32 %v4620, 1.0
        %v4671 = vadd.f32 %v4622, 1.0
        %v4672 = vadd.f32 %v4624, 1.0
        %v4673 = vadd.f32 %v4626, 1.0
        %v4674 = vadd.f32 %v4628, 1.0
        %v4675 = vadd.f32 %v4630, 1.0
        %v4676 = vadd.f32 %v4632, 1.0
        %v4677 = vadd.f32 %v4634, 1.0
        %v4678 = vadd.f32 %v4636, 1.0
        %v4679 = vadd.f32 %v4638, 1.0
        %v4680 = vadd.f32 %v4640, 1.0
        %v4681 = vadd.f32 %v4642, 1.0
        %v4682 = vadd.f32 %v4644, 1.0
        %v4683 = vadd.f32 %v4646, 1.0
        %v4684 = vadd.f32 %v4648, 1.0
        %v4685 = vadd.f32 %v4650, 1.0
        %v4686 = vadd.f32 %v4652, 1.0
        %v4687 = vadd.f32 %v4654, 1.0
        %v4688 = vadd.f32 %v4656, 1.0
        %v4689 = vrcp.pop %v4657
        %v4690 = vmul.f32 %v4657, %v4689
        %v4691 = vsub.f32 1.0, %v4690
        %v4692 = vmul.f32 %v4689, %v4691
        %v4693 = vadd.f32 %v4689, %v4692
        %vm4694 = vweird.f32 %v4657
        %vm4695 = vweird.f32 %v4689
        %vm4696 = vmor %vm4694, %vm4695
        %v4697 = vsel %vm4696, %v4689, %v4693
        %v4698 = vand.u32 2147483647, %v4657
        %vm4699 = vcmp.eq.f32.partialorder %v4698, 8.507059e+37
        %v4700 = vand.u32 %v4657, 2147483648
        %v4701 = vor.u32 1.1754944e-38, %v4700
        %v4702 = vsel %vm4699, %v4701, %v4697
        %v4703 = vmul.f32 1.0, %v4702
        %v4704 = vrcp.pop %v4658
        %v4705 = vmul.f32 %v4658, %v4704
        %v4706 = vsub.f32 1.0, %v4705
        %v4707 = vmul.f32 %v4704, %v4706
        %v4708 = vadd.f32 %v4704, %v4707
        %vm4709 = vweird.f32 %v4658
        %vm4710 = vweird.f32 %v4704
        %vm4711 = vmor %vm4709, %vm4710
        %v4712 = vsel %vm4711, %v4704, %v4708
        %v4713 = vand.u32 2147483647, %v4658
        %vm4714 = vcmp.eq.f32.partialorder %v4713, 8.507059e+37
        %v4715 = vand.u32 %v4658, 2147483648
        %v4716 = vor.u32 1.1754944e-38, %v4715
        %v4717 = vsel %vm4714, %v4716, %v4712
        %v4718 = vmul.f32 1.0, %v4717
        %v4719 = vrcp.pop %v4659
        %v4720 = vmul.f32 %v4659, %v4719
        %v4721 = vsub.f32 1.0, %v4720
        %v4722 = vmul.f32 %v4719, %v4721
        %v4723 = vadd.f32 %v4719, %v4722
        %vm4724 = vweird.f32 %v4659
        %vm4725 = vweird.f32 %v4719
        %vm4726 = vmor %vm4724, %vm4725
        %v4727 = vsel %vm4726, %v4719, %v4723
        %v4728 = vand.u32 2147483647, %v4659
        %vm4729 = vcmp.eq.f32.partialorder %v4728, 8.507059e+37
        %v4730 = vand.u32 %v4659, 2147483648
        %v4731 = vor.u32 1.1754944e-38, %v4730
        %v4732 = vsel %vm4729, %v4731, %v4727
        %v4733 = vmul.f32 1.0, %v4732
        %v4734 = vrcp.pop %v4660
        %v4735 = vmul.f32 %v4660, %v4734
        %v4736 = vsub.f32 1.0, %v4735
        %v4737 = vmul.f32 %v4734, %v4736
        %v4738 = vadd.f32 %v4734, %v4737
        %vm4739 = vweird.f32 %v4660
        %vm4740 = vweird.f32 %v4734
        %vm4741 = vmor %vm4739, %vm4740
        %v4742 = vsel %vm4741, %v4734, %v4738
        %v4743 = vand.u32 2147483647, %v4660
        %vm4744 = vcmp.eq.f32.partialorder %v4743, 8.507059e+37
        %v4745 = vand.u32 %v4660, 2147483648
        %v4746 = vor.u32 1.1754944e-38, %v4745
        %v4747 = vsel %vm4744, %v4746, %v4742
        %v4748 = vmul.f32 1.0, %v4747
        %v4749 = vrcp.pop %v4661
        %v4750 = vmul.f32 %v4661, %v4749
        %v4751 = vsub.f32 1.0, %v4750
        %v4752 = vmul.f32 %v4749, %v4751
        %v4753 = vadd.f32 %v4749, %v4752
        %vm4754 = vweird.f32 %v4661
        %vm4755 = vweird.f32 %v4749
        %vm4756 = vmor %vm4754, %vm4755
        %v4757 = vsel %vm4756, %v4749, %v4753
        %v4758 = vand.u32 2147483647, %v4661
        %vm4759 = vcmp.eq.f32.partialorder %v4758, 8.507059e+37
        %v4760 = vand.u32 %v4661, 2147483648
        %v4761 = vor.u32 1.1754944e-38, %v4760
        %v4762 = vsel %vm4759, %v4761, %v4757
        %v4763 = vmul.f32 1.0, %v4762
        %v4764 = vrcp.pop %v4662
        %v4765 = vmul.f32 %v4662, %v4764
        %v4766 = vsub.f32 1.0, %v4765
        %v4767 = vmul.f32 %v4764, %v4766
        %v4768 = vadd.f32 %v4764, %v4767
        %vm4769 = vweird.f32 %v4662
        %vm4770 = vweird.f32 %v4764
        %vm4771 = vmor %vm4769, %vm4770
        %v4772 = vsel %vm4771, %v4764, %v4768
        %v4773 = vand.u32 2147483647, %v4662
        %vm4774 = vcmp.eq.f32.partialorder %v4773, 8.507059e+37
        %v4775 = vand.u32 %v4662, 2147483648
        %v4776 = vor.u32 1.1754944e-38, %v4775
        %v4777 = vsel %vm4774, %v4776, %v4772
        %v4778 = vmul.f32 1.0, %v4777
        %v4779 = vrcp.pop %v4663
        %v4780 = vmul.f32 %v4663, %v4779
        %v4781 = vsub.f32 1.0, %v4780
        %v4782 = vmul.f32 %v4779, %v4781
        %v4783 = vadd.f32 %v4779, %v4782
        %vm4784 = vweird.f32 %v4663
        %vm4785 = vweird.f32 %v4779
        %vm4786 = vmor %vm4784, %vm4785
        %v4787 = vsel %vm4786, %v4779, %v4783
        %v4788 = vand.u32 2147483647, %v4663
        %vm4789 = vcmp.eq.f32.partialorder %v4788, 8.507059e+37
        %v4790 = vand.u32 %v4663, 2147483648
        %v4791 = vor.u32 1.1754944e-38, %v4790
        %v4792 = vsel %vm4789, %v4791, %v4787
        %v4793 = vmul.f32 1.0, %v4792
        %v4794 = vrcp.pop %v4664
        %v4795 = vmul.f32 %v4664, %v4794
        %v4796 = vsub.f32 1.0, %v4795
        %v4797 = vmul.f32 %v4794, %v4796
        %v4798 = vadd.f32 %v4794, %v4797
        %vm4799 = vweird.f32 %v4664
        %vm4800 = vweird.f32 %v4794
        %vm4801 = vmor %vm4799, %vm4800
        %v4802 = vsel %vm4801, %v4794, %v4798
        %v4803 = vand.u32 2147483647, %v4664
        %vm4804 = vcmp.eq.f32.partialorder %v4803, 8.507059e+37
        %v4805 = vand.u32 %v4664, 2147483648
        %v4806 = vor.u32 1.1754944e-38, %v4805
        %v4807 = vsel %vm4804, %v4806, %v4802
        %v4808 = vmul.f32 1.0, %v4807
        %v4809 = vrcp.pop %v4665
        %v4810 = vmul.f32 %v4665, %v4809
        %v4811 = vsub.f32 1.0, %v4810
        %v4812 = vmul.f32 %v4809, %v4811
        %v4813 = vadd.f32 %v4809, %v4812
        %vm4814 = vweird.f32 %v4665
        %vm4815 = vweird.f32 %v4809
        %vm4816 = vmor %vm4814, %vm4815
        %v4817 = vsel %vm4816, %v4809, %v4813
        %v4818 = vand.u32 2147483647, %v4665
        %vm4819 = vcmp.eq.f32.partialorder %v4818, 8.507059e+37
        %v4820 = vand.u32 %v4665, 2147483648
        %v4821 = vor.u32 1.1754944e-38, %v4820
        %v4822 = vsel %vm4819, %v4821, %v4817
        %v4823 = vmul.f32 1.0, %v4822
        %v4824 = vrcp.pop %v4666
        %v4825 = vmul.f32 %v4666, %v4824
        %v4826 = vsub.f32 1.0, %v4825
        %v4827 = vmul.f32 %v4824, %v4826
        %v4828 = vadd.f32 %v4824, %v4827
        %vm4829 = vweird.f32 %v4666
        %vm4830 = vweird.f32 %v4824
        %vm4831 = vmor %vm4829, %vm4830
        %v4832 = vsel %vm4831, %v4824, %v4828
        %v4833 = vand.u32 2147483647, %v4666
        %vm4834 = vcmp.eq.f32.partialorder %v4833, 8.507059e+37
        %v4835 = vand.u32 %v4666, 2147483648
        %v4836 = vor.u32 1.1754944e-38, %v4835
        %v4837 = vsel %vm4834, %v4836, %v4832
        %v4838 = vmul.f32 1.0, %v4837
        %v4839 = vrcp.pop %v4667
        %v4840 = vmul.f32 %v4667, %v4839
        %v4841 = vsub.f32 1.0, %v4840
        %v4842 = vmul.f32 %v4839, %v4841
        %v4843 = vadd.f32 %v4839, %v4842
        %vm4844 = vweird.f32 %v4667
        %vm4845 = vweird.f32 %v4839
        %vm4846 = vmor %vm4844, %vm4845
        %v4847 = vsel %vm4846, %v4839, %v4843
        %v4848 = vand.u32 2147483647, %v4667
        %vm4849 = vcmp.eq.f32.partialorder %v4848, 8.507059e+37
        %v4850 = vand.u32 %v4667, 2147483648
        %v4851 = vor.u32 1.1754944e-38, %v4850
        %v4852 = vsel %vm4849, %v4851, %v4847
        %v4853 = vmul.f32 1.0, %v4852
        %v4854 = vrcp.pop %v4668
        %v4855 = vmul.f32 %v4668, %v4854
        %v4856 = vsub.f32 1.0, %v4855
        %v4857 = vmul.f32 %v4854, %v4856
        %v4858 = vadd.f32 %v4854, %v4857
        %vm4859 = vweird.f32 %v4668
        %vm4860 = vweird.f32 %v4854
        %vm4861 = vmor %vm4859, %vm4860
        %v4862 = vsel %vm4861, %v4854, %v4858
        %v4863 = vand.u32 2147483647, %v4668
        %vm4864 = vcmp.eq.f32.partialorder %v4863, 8.507059e+37
        %v4865 = vand.u32 %v4668, 2147483648
        %v4866 = vor.u32 1.1754944e-38, %v4865
        %v4867 = vsel %vm4864, %v4866, %v4862
        %v4868 = vmul.f32 1.0, %v4867
        %v4869 = vrcp.pop %v4669
        %v4870 = vmul.f32 %v4669, %v4869
        %v4871 = vsub.f32 1.0, %v4870
        %v4872 = vmul.f32 %v4869, %v4871
        %v4873 = vadd.f32 %v4869, %v4872
        %vm4874 = vweird.f32 %v4669
        %vm4875 = vweird.f32 %v4869
        %vm4876 = vmor %vm4874, %vm4875
        %v4877 = vsel %vm4876, %v4869, %v4873
        %v4878 = vand.u32 2147483647, %v4669
        %vm4879 = vcmp.eq.f32.partialorder %v4878, 8.507059e+37
        %v4880 = vand.u32 %v4669, 2147483648
        %v4881 = vor.u32 1.1754944e-38, %v4880
        %v4882 = vsel %vm4879, %v4881, %v4877
        %v4883 = vmul.f32 1.0, %v4882
        %v4884 = vrcp.pop %v4670
        %v4885 = vmul.f32 %v4670, %v4884
        %v4886 = vsub.f32 1.0, %v4885
        %v4887 = vmul.f32 %v4884, %v4886
        %v4888 = vadd.f32 %v4884, %v4887
        %vm4889 = vweird.f32 %v4670
        %vm4890 = vweird.f32 %v4884
        %vm4891 = vmor %vm4889, %vm4890
        %v4892 = vsel %vm4891, %v4884, %v4888
        %v4893 = vand.u32 2147483647, %v4670
        %vm4894 = vcmp.eq.f32.partialorder %v4893, 8.507059e+37
        %v4895 = vand.u32 %v4670, 2147483648
        %v4896 = vor.u32 1.1754944e-38, %v4895
        %v4897 = vsel %vm4894, %v4896, %v4892
        %v4898 = vmul.f32 1.0, %v4897
        %v4899 = vrcp.pop %v4671
        %v4900 = vmul.f32 %v4671, %v4899
        %v4901 = vsub.f32 1.0, %v4900
        %v4902 = vmul.f32 %v4899, %v4901
        %v4903 = vadd.f32 %v4899, %v4902
        %vm4904 = vweird.f32 %v4671
        %vm4905 = vweird.f32 %v4899
        %vm4906 = vmor %vm4904, %vm4905
        %v4907 = vsel %vm4906, %v4899, %v4903
        %v4908 = vand.u32 2147483647, %v4671
        %vm4909 = vcmp.eq.f32.partialorder %v4908, 8.507059e+37
        %v4910 = vand.u32 %v4671, 2147483648
        %v4911 = vor.u32 1.1754944e-38, %v4910
        %v4912 = vsel %vm4909, %v4911, %v4907
        %v4913 = vmul.f32 1.0, %v4912
        %v4914 = vrcp.pop %v4672
        %v4915 = vmul.f32 %v4672, %v4914
        %v4916 = vsub.f32 1.0, %v4915
        %v4917 = vmul.f32 %v4914, %v4916
        %v4918 = vadd.f32 %v4914, %v4917
        %vm4919 = vweird.f32 %v4672
        %vm4920 = vweird.f32 %v4914
        %vm4921 = vmor %vm4919, %vm4920
        %v4922 = vsel %vm4921, %v4914, %v4918
        %v4923 = vand.u32 2147483647, %v4672
        %vm4924 = vcmp.eq.f32.partialorder %v4923, 8.507059e+37
        %v4925 = vand.u32 %v4672, 2147483648
        %v4926 = vor.u32 1.1754944e-38, %v4925
        %v4927 = vsel %vm4924, %v4926, %v4922
        %v4928 = vmul.f32 1.0, %v4927
        %v4929 = vrcp.pop %v4673
        %v4930 = vmul.f32 %v4673, %v4929
        %v4931 = vsub.f32 1.0, %v4930
        %v4932 = vmul.f32 %v4929, %v4931
        %v4933 = vadd.f32 %v4929, %v4932
        %vm4934 = vweird.f32 %v4673
        %vm4935 = vweird.f32 %v4929
        %vm4936 = vmor %vm4934, %vm4935
        %v4937 = vsel %vm4936, %v4929, %v4933
        %v4938 = vand.u32 2147483647, %v4673
        %vm4939 = vcmp.eq.f32.partialorder %v4938, 8.507059e+37
        %v4940 = vand.u32 %v4673, 2147483648
        %v4941 = vor.u32 1.1754944e-38, %v4940
        %v4942 = vsel %vm4939, %v4941, %v4937
        %v4943 = vmul.f32 1.0, %v4942
        %v4944 = vrcp.pop %v4674
        %v4945 = vmul.f32 %v4674, %v4944
        %v4946 = vsub.f32 1.0, %v4945
        %v4947 = vmul.f32 %v4944, %v4946
        %v4948 = vadd.f32 %v4944, %v4947
        %vm4949 = vweird.f32 %v4674
        %vm4950 = vweird.f32 %v4944
        %vm4951 = vmor %vm4949, %vm4950
        %v4952 = vsel %vm4951, %v4944, %v4948
        %v4953 = vand.u32 2147483647, %v4674
        %vm4954 = vcmp.eq.f32.partialorder %v4953, 8.507059e+37
        %v4955 = vand.u32 %v4674, 2147483648
        %v4956 = vor.u32 1.1754944e-38, %v4955
        %v4957 = vsel %vm4954, %v4956, %v4952
        %v4958 = vmul.f32 1.0, %v4957
        %v4959 = vrcp.pop %v4675
        %v4960 = vmul.f32 %v4675, %v4959
        %v4961 = vsub.f32 1.0, %v4960
        %v4962 = vmul.f32 %v4959, %v4961
        %v4963 = vadd.f32 %v4959, %v4962
        %vm4964 = vweird.f32 %v4675
        %vm4965 = vweird.f32 %v4959
        %vm4966 = vmor %vm4964, %vm4965
        %v4967 = vsel %vm4966, %v4959, %v4963
        %v4968 = vand.u32 2147483647, %v4675
        %vm4969 = vcmp.eq.f32.partialorder %v4968, 8.507059e+37
        %v4970 = vand.u32 %v4675, 2147483648
        %v4971 = vor.u32 1.1754944e-38, %v4970
        %v4972 = vsel %vm4969, %v4971, %v4967
        %v4973 = vmul.f32 1.0, %v4972
        %v4974 = vrcp.pop %v4676
        %v4975 = vmul.f32 %v4676, %v4974
        %v4976 = vsub.f32 1.0, %v4975
        %v4977 = vmul.f32 %v4974, %v4976
        %v4978 = vadd.f32 %v4974, %v4977
        %vm4979 = vweird.f32 %v4676
        %vm4980 = vweird.f32 %v4974
        %vm4981 = vmor %vm4979, %vm4980
        %v4982 = vsel %vm4981, %v4974, %v4978
        %v4983 = vand.u32 2147483647, %v4676
        %vm4984 = vcmp.eq.f32.partialorder %v4983, 8.507059e+37
        %v4985 = vand.u32 %v4676, 2147483648
        %v4986 = vor.u32 1.1754944e-38, %v4985
        %v4987 = vsel %vm4984, %v4986, %v4982
        %v4988 = vmul.f32 1.0, %v4987
        %v4989 = vrcp.pop %v4677
        %v4990 = vmul.f32 %v4677, %v4989
        %v4991 = vsub.f32 1.0, %v4990
        %v4992 = vmul.f32 %v4989, %v4991
        %v4993 = vadd.f32 %v4989, %v4992
        %vm4994 = vweird.f32 %v4677
        %vm4995 = vweird.f32 %v4989
        %vm4996 = vmor %vm4994, %vm4995
        %v4997 = vsel %vm4996, %v4989, %v4993
        %v4998 = vand.u32 2147483647, %v4677
        %vm4999 = vcmp.eq.f32.partialorder %v4998, 8.507059e+37
        %v5000 = vand.u32 %v4677, 2147483648
        %v5001 = vor.u32 1.1754944e-38, %v5000
        %v5002 = vsel %vm4999, %v5001, %v4997
        %v5003 = vmul.f32 1.0, %v5002
        %v5004 = vrcp.pop %v4678
        %v5005 = vmul.f32 %v4678, %v5004
        %v5006 = vsub.f32 1.0, %v5005
        %v5007 = vmul.f32 %v5004, %v5006
        %v5008 = vadd.f32 %v5004, %v5007
        %vm5009 = vweird.f32 %v4678
        %vm5010 = vweird.f32 %v5004
        %vm5011 = vmor %vm5009, %vm5010
        %v5012 = vsel %vm5011, %v5004, %v5008
        %v5013 = vand.u32 2147483647, %v4678
        %vm5014 = vcmp.eq.f32.partialorder %v5013, 8.507059e+37
        %v5015 = vand.u32 %v4678, 2147483648
        %v5016 = vor.u32 1.1754944e-38, %v5015
        %v5017 = vsel %vm5014, %v5016, %v5012
        %v5018 = vmul.f32 1.0, %v5017
        %v5019 = vrcp.pop %v4679
        %v5020 = vmul.f32 %v4679, %v5019
        %v5021 = vsub.f32 1.0, %v5020
        %v5022 = vmul.f32 %v5019, %v5021
        %v5023 = vadd.f32 %v5019, %v5022
        %vm5024 = vweird.f32 %v4679
        %vm5025 = vweird.f32 %v5019
        %vm5026 = vmor %vm5024, %vm5025
        %v5027 = vsel %vm5026, %v5019, %v5023
        %v5028 = vand.u32 2147483647, %v4679
        %vm5029 = vcmp.eq.f32.partialorder %v5028, 8.507059e+37
        %v5030 = vand.u32 %v4679, 2147483648
        %v5031 = vor.u32 1.1754944e-38, %v5030
        %v5032 = vsel %vm5029, %v5031, %v5027
        %v5033 = vmul.f32 1.0, %v5032
        %v5034 = vrcp.pop %v4680
        %v5035 = vmul.f32 %v4680, %v5034
        %v5036 = vsub.f32 1.0, %v5035
        %v5037 = vmul.f32 %v5034, %v5036
        %v5038 = vadd.f32 %v5034, %v5037
        %vm5039 = vweird.f32 %v4680
        %vm5040 = vweird.f32 %v5034
        %vm5041 = vmor %vm5039, %vm5040
        %v5042 = vsel %vm5041, %v5034, %v5038
        %v5043 = vand.u32 2147483647, %v4680
        %vm5044 = vcmp.eq.f32.partialorder %v5043, 8.507059e+37
        %v5045 = vand.u32 %v4680, 2147483648
        %v5046 = vor.u32 1.1754944e-38, %v5045
        %v5047 = vsel %vm5044, %v5046, %v5042
        %v5048 = vmul.f32 1.0, %v5047
        %v5049 = vrcp.pop %v4681
        %v5050 = vmul.f32 %v4681, %v5049
        %v5051 = vsub.f32 1.0, %v5050
        %v5052 = vmul.f32 %v5049, %v5051
        %v5053 = vadd.f32 %v5049, %v5052
        %vm5054 = vweird.f32 %v4681
        %vm5055 = vweird.f32 %v5049
        %vm5056 = vmor %vm5054, %vm5055
        %v5057 = vsel %vm5056, %v5049, %v5053
        %v5058 = vand.u32 2147483647, %v4681
        %vm5059 = vcmp.eq.f32.partialorder %v5058, 8.507059e+37
        %v5060 = vand.u32 %v4681, 2147483648
        %v5061 = vor.u32 1.1754944e-38, %v5060
        %v5062 = vsel %vm5059, %v5061, %v5057
        %v5063 = vmul.f32 1.0, %v5062
        %v5064 = vrcp.pop %v4682
        %v5065 = vmul.f32 %v4682, %v5064
        %v5066 = vsub.f32 1.0, %v5065
        %v5067 = vmul.f32 %v5064, %v5066
        %v5068 = vadd.f32 %v5064, %v5067
        %vm5069 = vweird.f32 %v4682
        %vm5070 = vweird.f32 %v5064
        %vm5071 = vmor %vm5069, %vm5070
        %v5072 = vsel %vm5071, %v5064, %v5068
        %v5073 = vand.u32 2147483647, %v4682
        %vm5074 = vcmp.eq.f32.partialorder %v5073, 8.507059e+37
        %v5075 = vand.u32 %v4682, 2147483648
        %v5076 = vor.u32 1.1754944e-38, %v5075
        %v5077 = vsel %vm5074, %v5076, %v5072
        %v5078 = vmul.f32 1.0, %v5077
        %v5079 = vrcp.pop %v4683
        %v5080 = vmul.f32 %v4683, %v5079
        %v5081 = vsub.f32 1.0, %v5080
        %v5082 = vmul.f32 %v5079, %v5081
        %v5083 = vadd.f32 %v5079, %v5082
        %vm5084 = vweird.f32 %v4683
        %vm5085 = vweird.f32 %v5079
        %vm5086 = vmor %vm5084, %vm5085
        %v5087 = vsel %vm5086, %v5079, %v5083
        %v5088 = vand.u32 2147483647, %v4683
        %vm5089 = vcmp.eq.f32.partialorder %v5088, 8.507059e+37
        %v5090 = vand.u32 %v4683, 2147483648
        %v5091 = vor.u32 1.1754944e-38, %v5090
        %v5092 = vsel %vm5089, %v5091, %v5087
        %v5093 = vmul.f32 1.0, %v5092
        %v5094 = vrcp.pop %v4684
        %v5095 = vmul.f32 %v4684, %v5094
        %v5096 = vsub.f32 1.0, %v5095
        %v5097 = vmul.f32 %v5094, %v5096
        %v5098 = vadd.f32 %v5094, %v5097
        %vm5099 = vweird.f32 %v4684
        %vm5100 = vweird.f32 %v5094
        %vm5101 = vmor %vm5099, %vm5100
        %v5102 = vsel %vm5101, %v5094, %v5098
        %v5103 = vand.u32 2147483647, %v4684
        %vm5104 = vcmp.eq.f32.partialorder %v5103, 8.507059e+37
        %v5105 = vand.u32 %v4684, 2147483648
        %v5106 = vor.u32 1.1754944e-38, %v5105
        %v5107 = vsel %vm5104, %v5106, %v5102
        %v5108 = vmul.f32 1.0, %v5107
        %v5109 = vrcp.pop %v4685
        %v5110 = vmul.f32 %v4685, %v5109
        %v5111 = vsub.f32 1.0, %v5110
        %v5112 = vmul.f32 %v5109, %v5111
        %v5113 = vadd.f32 %v5109, %v5112
        %vm5114 = vweird.f32 %v4685
        %vm5115 = vweird.f32 %v5109
        %vm5116 = vmor %vm5114, %vm5115
        %v5117 = vsel %vm5116, %v5109, %v5113
        %v5118 = vand.u32 2147483647, %v4685
        %vm5119 = vcmp.eq.f32.partialorder %v5118, 8.507059e+37
        %v5120 = vand.u32 %v4685, 2147483648
        %v5121 = vor.u32 1.1754944e-38, %v5120
        %v5122 = vsel %vm5119, %v5121, %v5117
        %v5123 = vmul.f32 1.0, %v5122
        %v5124 = vrcp.pop %v4686
        %v5125 = vmul.f32 %v4686, %v5124
        %v5126 = vsub.f32 1.0, %v5125
        %v5127 = vmul.f32 %v5124, %v5126
        %v5128 = vadd.f32 %v5124, %v5127
        %vm5129 = vweird.f32 %v4686
        %vm5130 = vweird.f32 %v5124
        %vm5131 = vmor %vm5129, %vm5130
        %v5132 = vsel %vm5131, %v5124, %v5128
        %v5133 = vand.u32 2147483647, %v4686
        %vm5134 = vcmp.eq.f32.partialorder %v5133, 8.507059e+37
        %v5135 = vand.u32 %v4686, 2147483648
        %v5136 = vor.u32 1.1754944e-38, %v5135
        %v5137 = vsel %vm5134, %v5136, %v5132
        %v5138 = vmul.f32 1.0, %v5137
        %v5139 = vrcp.pop %v4687
        %v5140 = vmul.f32 %v4687, %v5139
        %v5141 = vsub.f32 1.0, %v5140
        %v5142 = vmul.f32 %v5139, %v5141
        %v5143 = vadd.f32 %v5139, %v5142
        %vm5144 = vweird.f32 %v4687
        %vm5145 = vweird.f32 %v5139
        %vm5146 = vmor %vm5144, %vm5145
        %v5147 = vsel %vm5146, %v5139, %v5143
        %v5148 = vand.u32 2147483647, %v4687
        %vm5149 = vcmp.eq.f32.partialorder %v5148, 8.507059e+37
        %v5150 = vand.u32 %v4687, 2147483648
        %v5151 = vor.u32 1.1754944e-38, %v5150
        %v5152 = vsel %vm5149, %v5151, %v5147
        %v5153 = vmul.f32 1.0, %v5152
        %v5154 = vrcp.pop %v4688
        %v5155 = vmul.f32 %v4688, %v5154
        %v5156 = vsub.f32 1.0, %v5155
        %v5157 = vmul.f32 %v5154, %v5156
        %v5158 = vadd.f32 %v5154, %v5157
        %vm5159 = vweird.f32 %v4688
        %vm5160 = vweird.f32 %v5154
        %vm5161 = vmor %vm5159, %vm5160
        %v5162 = vsel %vm5161, %v5154, %v5158
        %v5163 = vand.u32 2147483647, %v4688
        %vm5164 = vcmp.eq.f32.partialorder %v5163, 8.507059e+37
        %v5165 = vand.u32 %v4688, 2147483648
        %v5166 = vor.u32 1.1754944e-38, %v5165
        %v5167 = vsel %vm5164, %v5166, %v5162
        %v5168 = vmul.f32 1.0, %v5167
        %5169 = vrot.lane.b32.xlu0 %v3711, 32
        %v5170 = vpop.permute.xlu0 %5169
        %5171 = vrot.lane.b32.xlu0 %v3712, 32
        %v5172 = vpop.permute.xlu0 %5171
        %5173 = vrot.lane.b32.xlu0 %v3713, 32
        %v5174 = vpop.permute.xlu0 %5173
        %5175 = vrot.lane.b32.xlu0 %v3714, 32
        %v5176 = vpop.permute.xlu0 %5175
        %5177 = vrot.lane.b32.xlu0 %v3715, 32
        %v5178 = vpop.permute.xlu0 %5177
        %5179 = vrot.lane.b32.xlu0 %v3716, 32
        %v5180 = vpop.permute.xlu0 %5179
        %5181 = vrot.lane.b32.xlu0 %v3717, 32
        %v5182 = vpop.permute.xlu0 %5181
        %5183 = vrot.lane.b32.xlu0 %v3718, 32
        %v5184 = vpop.permute.xlu0 %5183
        %5185 = vrot.lane.b32.xlu0 %v3719, 32
        %v5186 = vpop.permute.xlu0 %5185
        %5187 = vrot.lane.b32.xlu0 %v3720, 32
        %v5188 = vpop.permute.xlu0 %5187
        %5189 = vrot.lane.b32.xlu0 %v3721, 32
        %v5190 = vpop.permute.xlu0 %5189
        %5191 = vrot.lane.b32.xlu0 %v3722, 32
        %v5192 = vpop.permute.xlu0 %5191
        %5193 = vrot.lane.b32.xlu0 %v3723, 32
        %v5194 = vpop.permute.xlu0 %5193
        %5195 = vrot.lane.b32.xlu0 %v3724, 32
        %v5196 = vpop.permute.xlu0 %5195
        %5197 = vrot.lane.b32.xlu0 %v3725, 32
        %v5198 = vpop.permute.xlu0 %5197
        %5199 = vrot.lane.b32.xlu0 %v3726, 32
        %v5200 = vpop.permute.xlu0 %5199
        %5201 = vrot.lane.b32.xlu0 %v3727, 32
        %v5202 = vpop.permute.xlu0 %5201
        %5203 = vrot.lane.b32.xlu0 %v3728, 32
        %v5204 = vpop.permute.xlu0 %5203
        %5205 = vrot.lane.b32.xlu0 %v3729, 32
        %v5206 = vpop.permute.xlu0 %5205
        %5207 = vrot.lane.b32.xlu0 %v3730, 32
        %v5208 = vpop.permute.xlu0 %5207
        %5209 = vrot.lane.b32.xlu0 %v3731, 32
        %v5210 = vpop.permute.xlu0 %5209
        %5211 = vrot.lane.b32.xlu0 %v3732, 32
        %v5212 = vpop.permute.xlu0 %5211
        %5213 = vrot.lane.b32.xlu0 %v3733, 32
        %v5214 = vpop.permute.xlu0 %5213
        %5215 = vrot.lane.b32.xlu0 %v3734, 32
        %v5216 = vpop.permute.xlu0 %5215
        %5217 = vrot.lane.b32.xlu0 %v3735, 32
        %v5218 = vpop.permute.xlu0 %5217
        %5219 = vrot.lane.b32.xlu0 %v3736, 32
        %v5220 = vpop.permute.xlu0 %5219
        %5221 = vrot.lane.b32.xlu0 %v3737, 32
        %v5222 = vpop.permute.xlu0 %5221
        %5223 = vrot.lane.b32.xlu0 %v3738, 32
        %v5224 = vpop.permute.xlu0 %5223
        %5225 = vrot.lane.b32.xlu0 %v3739, 32
        %v5226 = vpop.permute.xlu0 %5225
        %5227 = vrot.lane.b32.xlu0 %v3740, 32
        %v5228 = vpop.permute.xlu0 %5227
        %5229 = vrot.lane.b32.xlu0 %v3741, 32
        %v5230 = vpop.permute.xlu0 %5229
        %5231 = vrot.lane.b32.xlu0 %v3742, 32
        %v5232 = vpop.permute.xlu0 %5231
        %v5265 = vmul.f32 %v4703, %v5170
        %v5266 = vmul.f32 %v4718, %v5172
        %v5267 = vmul.f32 %v4733, %v5174
        %v5268 = vmul.f32 %v4748, %v5176
        %v5269 = vmul.f32 %v4763, %v5178
        %v5270 = vmul.f32 %v4778, %v5180
        %v5271 = vmul.f32 %v4793, %v5182
        %v5272 = vmul.f32 %v4808, %v5184
        %v5273 = vmul.f32 %v4823, %v5186
        %v5274 = vmul.f32 %v4838, %v5188
        %v5275 = vmul.f32 %v4853, %v5190
        %v5276 = vmul.f32 %v4868, %v5192
        %v5277 = vmul.f32 %v4883, %v5194
        %v5278 = vmul.f32 %v4898, %v5196
        %v5279 = vmul.f32 %v4913, %v5198
        %v5280 = vmul.f32 %v4928, %v5200
        %v5281 = vmul.f32 %v4943, %v5202
        %v5282 = vmul.f32 %v4958, %v5204
        %v5283 = vmul.f32 %v4973, %v5206
        %v5284 = vmul.f32 %v4988, %v5208
        %v5285 = vmul.f32 %v5003, %v5210
        %v5286 = vmul.f32 %v5018, %v5212
        %v5287 = vmul.f32 %v5033, %v5214
        %v5288 = vmul.f32 %v5048, %v5216
        %v5289 = vmul.f32 %v5063, %v5218
        %v5290 = vmul.f32 %v5078, %v5220
        %v5291 = vmul.f32 %v5093, %v5222
        %v5292 = vmul.f32 %v5108, %v5224
        %v5293 = vmul.f32 %v5123, %v5226
        %v5294 = vmul.f32 %v5138, %v5228
        %v5295 = vmul.f32 %v5153, %v5230
        %v5296 = vmul.f32 %v5168, %v5232
        %5329 = vrot.lane.b32.xlu0 %v5265, 96
        %v5330 = vpop.permute.xlu0 %5329
        %5331 = vrot.lane.b32.xlu0 %v5266, 96
        %v5332 = vpop.permute.xlu0 %5331
        %5333 = vrot.lane.b32.xlu0 %v5267, 96
        %v5334 = vpop.permute.xlu0 %5333
        %5335 = vrot.lane.b32.xlu0 %v5268, 96
        %v5336 = vpop.permute.xlu0 %5335
        %5337 = vrot.lane.b32.xlu0 %v5269, 96
        %v5338 = vpop.permute.xlu0 %5337
        %5339 = vrot.lane.b32.xlu0 %v5270, 96
        %v5340 = vpop.permute.xlu0 %5339
        %5341 = vrot.lane.b32.xlu0 %v5271, 96
        %v5342 = vpop.permute.xlu0 %5341
        %5343 = vrot.lane.b32.xlu0 %v5272, 96
        %v5344 = vpop.permute.xlu0 %5343
        %5345 = vrot.lane.b32.xlu0 %v5273, 96
        %v5346 = vpop.permute.xlu0 %5345
        %5347 = vrot.lane.b32.xlu0 %v5274, 96
        %v5348 = vpop.permute.xlu0 %5347
        %5349 = vrot.lane.b32.xlu0 %v5275, 96
        %v5350 = vpop.permute.xlu0 %5349
        %5351 = vrot.lane.b32.xlu0 %v5276, 96
        %v5352 = vpop.permute.xlu0 %5351
        %5353 = vrot.lane.b32.xlu0 %v5277, 96
        %v5354 = vpop.permute.xlu0 %5353
        %5355 = vrot.lane.b32.xlu0 %v5278, 96
        %v5356 = vpop.permute.xlu0 %5355
        %5357 = vrot.lane.b32.xlu0 %v5279, 96
        %v5358 = vpop.permute.xlu0 %5357
        %5359 = vrot.lane.b32.xlu0 %v5280, 96
        %v5360 = vpop.permute.xlu0 %5359
        %5361 = vrot.lane.b32.xlu0 %v5281, 96
        %v5362 = vpop.permute.xlu0 %5361
        %5363 = vrot.lane.b32.xlu0 %v5282, 96
        %v5364 = vpop.permute.xlu0 %5363
        %5365 = vrot.lane.b32.xlu0 %v5283, 96
        %v5366 = vpop.permute.xlu0 %5365
        %5367 = vrot.lane.b32.xlu0 %v5284, 96
        %v5368 = vpop.permute.xlu0 %5367
        %5369 = vrot.lane.b32.xlu0 %v5285, 96
        %v5370 = vpop.permute.xlu0 %5369
        %5371 = vrot.lane.b32.xlu0 %v5286, 96
        %v5372 = vpop.permute.xlu0 %5371
        %5373 = vrot.lane.b32.xlu0 %v5287, 96
        %v5374 = vpop.permute.xlu0 %5373
        %5375 = vrot.lane.b32.xlu0 %v5288, 96
        %v5376 = vpop.permute.xlu0 %5375
        %5377 = vrot.lane.b32.xlu0 %v5289, 96
        %v5378 = vpop.permute.xlu0 %5377
        %5379 = vrot.lane.b32.xlu0 %v5290, 96
        %v5380 = vpop.permute.xlu0 %5379
        %5381 = vrot.lane.b32.xlu0 %v5291, 96
        %v5382 = vpop.permute.xlu0 %5381
        %5383 = vrot.lane.b32.xlu0 %v5292, 96
        %v5384 = vpop.permute.xlu0 %5383
        %5385 = vrot.lane.b32.xlu0 %v5293, 96
        %v5386 = vpop.permute.xlu0 %5385
        %5387 = vrot.lane.b32.xlu0 %v5294, 96
        %v5388 = vpop.permute.xlu0 %5387
        %5389 = vrot.lane.b32.xlu0 %v5295, 96
        %v5390 = vpop.permute.xlu0 %5389
        %5391 = vrot.lane.b32.xlu0 %v5296, 96
        %v5392 = vpop.permute.xlu0 %5391
        %v5393 = vsel %vm1475, %v5330, 0
        %v5395 = vsel %vm1475, %v5332, 0
        %v5397 = vsel %vm1475, %v5334, 0
        %v5399 = vsel %vm1475, %v5336, 0
        %v5401 = vsel %vm1475, %v5338, 0
        %v5403 = vsel %vm1475, %v5340, 0
        %v5405 = vsel %vm1475, %v5342, 0
        %v5407 = vsel %vm1475, %v5344, 0
        %v5409 = vsel %vm1475, %v5346, 0
        %v5411 = vsel %vm1475, %v5348, 0
        %v5413 = vsel %vm1475, %v5350, 0
        %v5415 = vsel %vm1475, %v5352, 0
        %v5417 = vsel %vm1475, %v5354, 0
        %v5419 = vsel %vm1475, %v5356, 0
        %v5421 = vsel %vm1475, %v5358, 0
        %v5423 = vsel %vm1475, %v5360, 0
        %v5425 = vsel %vm1475, %v5362, 0
        %v5427 = vsel %vm1475, %v5364, 0
        %v5429 = vsel %vm1475, %v5366, 0
        %v5431 = vsel %vm1475, %v5368, 0
        %v5433 = vsel %vm1475, %v5370, 0
        %v5435 = vsel %vm1475, %v5372, 0
        %v5437 = vsel %vm1475, %v5374, 0
        %v5439 = vsel %vm1475, %v5376, 0
        %v5441 = vsel %vm1475, %v5378, 0
        %v5443 = vsel %vm1475, %v5380, 0
        %v5445 = vsel %vm1475, %v5382, 0
        %v5447 = vsel %vm1475, %v5384, 0
        %v5449 = vsel %vm1475, %v5386, 0
        %v5451 = vsel %vm1475, %v5388, 0
        %v5453 = vsel %vm1475, %v5390, 0
        %v5455 = vsel %vm1475, %v5392, 0
        %5457 = vmatpush.msra.mxu0 0.0
        %5458 = vmatpush.msra.mxu0 0.0
        %5459 = vmatpush.msra.mxu0 0.0
        %5460 = vmatpush.msra.mxu0 0.0
        %5461 = vmatpush.msra.mxu0 0.0
        %5462 = vmatpush.msra.mxu0 0.0
        %5463 = vmatpush.msra.mxu0 0.0
        %5464 = vmatpush.msra.mxu0 0.0
        %5465 = vmatpush.msra.mxu0 0.0
        %5466 = vmatpush.msra.mxu0 0.0
        %5467 = vmatpush.msra.mxu0 0.0
        %5468 = vmatpush.msra.mxu0 0.0
        %5469 = vmatpush.msra.mxu0 %v1005
        %5470 = vmatpush.msra.mxu0 %v1004
        %5471 = vmatpush.msra.mxu0 %v1003
        %5472 = vmatpush.msra.mxu0 %v1002
        %5473 = vmatmul.f32.gmra.mxu0 %v5393
        %v5474 = vpop.f32.mrf.mxu0
        %v5475 = vadd.f32 0.0, %v5474
        %5476 = vmatmul.f32.gmra.mxu0 %v5395
        %v5477 = vpop.f32.mrf.mxu0
        %v5478 = vadd.f32 0.0, %v5477
        %5479 = vmatmul.f32.gmra.mxu0 %v5397
        %v5480 = vpop.f32.mrf.mxu0
        %v5481 = vadd.f32 0.0, %v5480
        %5482 = vmatmul.f32.gmra.mxu0 %v5399
        %v5483 = vpop.f32.mrf.mxu0
        %v5484 = vadd.f32 0.0, %v5483
        %5485 = vmatmul.f32.gmra.mxu0 %v5401
        %v5486 = vpop.f32.mrf.mxu0
        %v5487 = vadd.f32 0.0, %v5486
        %5488 = vmatmul.f32.gmra.mxu0 %v5403
        %v5489 = vpop.f32.mrf.mxu0
        %v5490 = vadd.f32 0.0, %v5489
        %5491 = vmatmul.f32.gmra.mxu0 %v5405
        %v5492 = vpop.f32.mrf.mxu0
        %v5493 = vadd.f32 0.0, %v5492
        %5494 = vmatmul.f32.gmra.mxu0 %v5407
        %v5495 = vpop.f32.mrf.mxu0
        %v5496 = vadd.f32 0.0, %v5495
        %5497 = vmatmul.f32.gmra.mxu0 %v5409
        %v5498 = vpop.f32.mrf.mxu0
        %v5499 = vadd.f32 0.0, %v5498
        %5500 = vmatmul.f32.gmra.mxu0 %v5411
        %v5501 = vpop.f32.mrf.mxu0
        %v5502 = vadd.f32 0.0, %v5501
        %5503 = vmatmul.f32.gmra.mxu0 %v5413
        %v5504 = vpop.f32.mrf.mxu0
        %v5505 = vadd.f32 0.0, %v5504
        %5506 = vmatmul.f32.gmra.mxu0 %v5415
        %v5507 = vpop.f32.mrf.mxu0
        %v5508 = vadd.f32 0.0, %v5507
        %5509 = vmatmul.f32.gmra.mxu0 %v5417
        %v5510 = vpop.f32.mrf.mxu0
        %v5511 = vadd.f32 0.0, %v5510
        %5512 = vmatmul.f32.gmra.mxu0 %v5419
        %v5513 = vpop.f32.mrf.mxu0
        %v5514 = vadd.f32 0.0, %v5513
        %5515 = vmatmul.f32.gmra.mxu0 %v5421
        %v5516 = vpop.f32.mrf.mxu0
        %v5517 = vadd.f32 0.0, %v5516
        %5518 = vmatmul.f32.gmra.mxu0 %v5423
        %v5519 = vpop.f32.mrf.mxu0
        %v5520 = vadd.f32 0.0, %v5519
        %5521 = vmatmul.f32.gmra.mxu0 %v5425
        %v5522 = vpop.f32.mrf.mxu0
        %v5523 = vadd.f32 0.0, %v5522
        %5524 = vmatmul.f32.gmra.mxu0 %v5427
        %v5525 = vpop.f32.mrf.mxu0
        %v5526 = vadd.f32 0.0, %v5525
        %5527 = vmatmul.f32.gmra.mxu0 %v5429
        %v5528 = vpop.f32.mrf.mxu0
        %v5529 = vadd.f32 0.0, %v5528
        %5530 = vmatmul.f32.gmra.mxu0 %v5431
        %v5531 = vpop.f32.mrf.mxu0
        %v5532 = vadd.f32 0.0, %v5531
        %5533 = vmatmul.f32.gmra.mxu0 %v5433
        %v5534 = vpop.f32.mrf.mxu0
        %v5535 = vadd.f32 0.0, %v5534
        %5536 = vmatmul.f32.gmra.mxu0 %v5435
        %v5537 = vpop.f32.mrf.mxu0
        %v5538 = vadd.f32 0.0, %v5537
        %5539 = vmatmul.f32.gmra.mxu0 %v5437
        %v5540 = vpop.f32.mrf.mxu0
        %v5541 = vadd.f32 0.0, %v5540
        %5542 = vmatmul.f32.gmra.mxu0 %v5439
        %v5543 = vpop.f32.mrf.mxu0
        %v5544 = vadd.f32 0.0, %v5543
        %5545 = vmatmul.f32.gmra.mxu0 %v5441
        %v5546 = vpop.f32.mrf.mxu0
        %v5547 = vadd.f32 0.0, %v5546
        %5548 = vmatmul.f32.gmra.mxu0 %v5443
        %v5549 = vpop.f32.mrf.mxu0
        %v5550 = vadd.f32 0.0, %v5549
        %5551 = vmatmul.f32.gmra.mxu0 %v5445
        %v5552 = vpop.f32.mrf.mxu0
        %v5553 = vadd.f32 0.0, %v5552
        %5554 = vmatmul.f32.gmra.mxu0 %v5447
        %v5555 = vpop.f32.mrf.mxu0
        %v5556 = vadd.f32 0.0, %v5555
        %5557 = vmatmul.f32.gmra.mxu0 %v5449
        %v5558 = vpop.f32.mrf.mxu0
        %v5559 = vadd.f32 0.0, %v5558
        %5560 = vmatmul.f32.gmra.mxu0 %v5451
        %v5561 = vpop.f32.mrf.mxu0
        %v5562 = vadd.f32 0.0, %v5561
        %5563 = vmatmul.f32.gmra.mxu0 %v5453
        %v5564 = vpop.f32.mrf.mxu0
        %v5565 = vadd.f32 0.0, %v5564
        %5566 = vmatmul.f32.gmra.mxu0 %v5455
        %v5567 = vpop.f32.mrf.mxu0
        %v5568 = vadd.f32 0.0, %v5567
        %5569 = vdwg.mxu0
        %5602 = vrot.lane.b32.xlu0 %v5475, 64
        %v5603 = vpop.permute.xlu0 %5602
        %5604 = vrot.lane.b32.xlu0 %v5478, 64
        %v5605 = vpop.permute.xlu0 %5604
        %5606 = vrot.lane.b32.xlu0 %v5481, 64
        %v5607 = vpop.permute.xlu0 %5606
        %5608 = vrot.lane.b32.xlu0 %v5484, 64
        %v5609 = vpop.permute.xlu0 %5608
        %5610 = vrot.lane.b32.xlu0 %v5487, 64
        %v5611 = vpop.permute.xlu0 %5610
        %5612 = vrot.lane.b32.xlu0 %v5490, 64
        %v5613 = vpop.permute.xlu0 %5612
        %5614 = vrot.lane.b32.xlu0 %v5493, 64
        %v5615 = vpop.permute.xlu0 %5614
        %5616 = vrot.lane.b32.xlu0 %v5496, 64
        %v5617 = vpop.permute.xlu0 %5616
        %5618 = vrot.lane.b32.xlu0 %v5499, 64
        %v5619 = vpop.permute.xlu0 %5618
        %5620 = vrot.lane.b32.xlu0 %v5502, 64
        %v5621 = vpop.permute.xlu0 %5620
        %5622 = vrot.lane.b32.xlu0 %v5505, 64
        %v5623 = vpop.permute.xlu0 %5622
        %5624 = vrot.lane.b32.xlu0 %v5508, 64
        %v5625 = vpop.permute.xlu0 %5624
        %5626 = vrot.lane.b32.xlu0 %v5511, 64
        %v5627 = vpop.permute.xlu0 %5626
        %5628 = vrot.lane.b32.xlu0 %v5514, 64
        %v5629 = vpop.permute.xlu0 %5628
        %5630 = vrot.lane.b32.xlu0 %v5517, 64
        %v5631 = vpop.permute.xlu0 %5630
        %5632 = vrot.lane.b32.xlu0 %v5520, 64
        %v5633 = vpop.permute.xlu0 %5632
        %5634 = vrot.lane.b32.xlu0 %v5523, 64
        %v5635 = vpop.permute.xlu0 %5634
        %5636 = vrot.lane.b32.xlu0 %v5526, 64
        %v5637 = vpop.permute.xlu0 %5636
        %5638 = vrot.lane.b32.xlu0 %v5529, 64
        %v5639 = vpop.permute.xlu0 %5638
        %5640 = vrot.lane.b32.xlu0 %v5532, 64
        %v5641 = vpop.permute.xlu0 %5640
        %5642 = vrot.lane.b32.xlu0 %v5535, 64
        %v5643 = vpop.permute.xlu0 %5642
        %5644 = vrot.lane.b32.xlu0 %v5538, 64
        %v5645 = vpop.permute.xlu0 %5644
        %5646 = vrot.lane.b32.xlu0 %v5541, 64
        %v5647 = vpop.permute.xlu0 %5646
        %5648 = vrot.lane.b32.xlu0 %v5544, 64
        %v5649 = vpop.permute.xlu0 %5648
        %5650 = vrot.lane.b32.xlu0 %v5547, 64
        %v5651 = vpop.permute.xlu0 %5650
        %5652 = vrot.lane.b32.xlu0 %v5550, 64
        %v5653 = vpop.permute.xlu0 %5652
        %5654 = vrot.lane.b32.xlu0 %v5553, 64
        %v5655 = vpop.permute.xlu0 %5654
        %5656 = vrot.lane.b32.xlu0 %v5556, 64
        %v5657 = vpop.permute.xlu0 %5656
        %5658 = vrot.lane.b32.xlu0 %v5559, 64
        %v5659 = vpop.permute.xlu0 %5658
        %5660 = vrot.lane.b32.xlu0 %v5562, 64
        %v5661 = vpop.permute.xlu0 %5660
        %5662 = vrot.lane.b32.xlu0 %v5565, 64
        %v5663 = vpop.permute.xlu0 %5662
        %5664 = vrot.lane.b32.xlu0 %v5568, 64
        %v5665 = vpop.permute.xlu0 %5664
        %v5698 = vadd.f32 %v4225, %v5603
        %v5699 = vadd.f32 %v4228, %v5605
        %v5700 = vadd.f32 %v4231, %v5607
        %v5701 = vadd.f32 %v4234, %v5609
        %v5702 = vadd.f32 %v4237, %v5611
        %v5703 = vadd.f32 %v4240, %v5613
        %v5704 = vadd.f32 %v4243, %v5615
        %v5705 = vadd.f32 %v4246, %v5617
        %v5706 = vadd.f32 %v4249, %v5619
        %v5707 = vadd.f32 %v4252, %v5621
        %v5708 = vadd.f32 %v4255, %v5623
        %v5709 = vadd.f32 %v4258, %v5625
        %v5710 = vadd.f32 %v4261, %v5627
        %v5711 = vadd.f32 %v4264, %v5629
        %v5712 = vadd.f32 %v4267, %v5631
        %v5713 = vadd.f32 %v4270, %v5633
        %v5714 = vadd.f32 %v4273, %v5635
        %v5715 = vadd.f32 %v4276, %v5637
        %v5716 = vadd.f32 %v4279, %v5639
        %v5717 = vadd.f32 %v4282, %v5641
        %v5718 = vadd.f32 %v4285, %v5643
        %v5719 = vadd.f32 %v4288, %v5645
        %v5720 = vadd.f32 %v4291, %v5647
        %v5721 = vadd.f32 %v4294, %v5649
        %v5722 = vadd.f32 %v4297, %v5651
        %v5723 = vadd.f32 %v4300, %v5653
        %v5724 = vadd.f32 %v4303, %v5655
        %v5725 = vadd.f32 %v4306, %v5657
        %v5726 = vadd.f32 %v4309, %v5659
        %v5727 = vadd.f32 %v4312, %v5661
        %v5728 = vadd.f32 %v4315, %v5663
        %v5729 = vadd.f32 %v4318, %v5665
        %v5730 = vadd.f32 %v5698, %v3101
        %v5731 = vadd.f32 %v5699, %v3101
        %v5732 = vadd.f32 %v5700, %v3101
        %v5733 = vadd.f32 %v5701, %v3101
        %v5734 = vadd.f32 %v5702, %v3101
        %v5735 = vadd.f32 %v5703, %v3101
        %v5736 = vadd.f32 %v5704, %v3101
        %v5737 = vadd.f32 %v5705, %v3101
        %v5738 = vadd.f32 %v5706, %v3101
        %v5739 = vadd.f32 %v5707, %v3101
        %v5740 = vadd.f32 %v5708, %v3101
        %v5741 = vadd.f32 %v5709, %v3101
        %v5742 = vadd.f32 %v5710, %v3101
        %v5743 = vadd.f32 %v5711, %v3101
        %v5744 = vadd.f32 %v5712, %v3101
        %v5745 = vadd.f32 %v5713, %v3101
        %v5746 = vadd.f32 %v5714, %v3101
        %v5747 = vadd.f32 %v5715, %v3101
        %v5748 = vadd.f32 %v5716, %v3101
        %v5749 = vadd.f32 %v5717, %v3101
        %v5750 = vadd.f32 %v5718, %v3101
        %v5751 = vadd.f32 %v5719, %v3101
        %v5752 = vadd.f32 %v5720, %v3101
        %v5753 = vadd.f32 %v5721, %v3101
        %v5754 = vadd.f32 %v5722, %v3101
        %v5755 = vadd.f32 %v5723, %v3101
        %v5756 = vadd.f32 %v5724, %v3101
        %v5757 = vadd.f32 %v5725, %v3101
        %v5758 = vadd.f32 %v5726, %v3101
        %v5759 = vadd.f32 %v5727, %v3101
        %v5760 = vadd.f32 %v5728, %v3101
        %v5761 = vadd.f32 %v5729, %v3101
        %v5762 = vmax.f32 %v5730, 0.0
        %v5763 = vmax.f32 %v5731, 0.0
        %v5764 = vmax.f32 %v5732, 0.0
        %v5765 = vmax.f32 %v5733, 0.0
        %v5766 = vmax.f32 %v5734, 0.0
        %v5767 = vmax.f32 %v5735, 0.0
        %v5768 = vmax.f32 %v5736, 0.0
        %v5769 = vmax.f32 %v5737, 0.0
        %v5770 = vmax.f32 %v5738, 0.0
        %v5771 = vmax.f32 %v5739, 0.0
        %v5772 = vmax.f32 %v5740, 0.0
        %v5773 = vmax.f32 %v5741, 0.0
        %v5774 = vmax.f32 %v5742, 0.0
        %v5775 = vmax.f32 %v5743, 0.0
        %v5776 = vmax.f32 %v5744, 0.0
        %v5777 = vmax.f32 %v5745, 0.0
        %v5778 = vmax.f32 %v5746, 0.0
        %v5779 = vmax.f32 %v5747, 0.0
        %v5780 = vmax.f32 %v5748, 0.0
        %v5781 = vmax.f32 %v5749, 0.0
        %v5782 = vmax.f32 %v5750, 0.0
        %v5783 = vmax.f32 %v5751, 0.0
        %v5784 = vmax.f32 %v5752, 0.0
        %v5785 = vmax.f32 %v5753, 0.0
        %v5786 = vmax.f32 %v5754, 0.0
        %v5787 = vmax.f32 %v5755, 0.0
        %v5788 = vmax.f32 %v5756, 0.0
        %v5789 = vmax.f32 %v5757, 0.0
        %v5790 = vmax.f32 %v5758, 0.0
        %v5791 = vmax.f32 %v5759, 0.0
        %v5792 = vmax.f32 %v5760, 0.0
        %v5793 = vmax.f32 %v5761, 0.0
        %5826 = vrot.lane.b32.xlu0 %v4703, 64
        %v5827 = vpop.permute.xlu0 %5826
        %5828 = vrot.lane.b32.xlu0 %v4718, 64
        %v5829 = vpop.permute.xlu0 %5828
        %5830 = vrot.lane.b32.xlu0 %v4733, 64
        %v5831 = vpop.permute.xlu0 %5830
        %5832 = vrot.lane.b32.xlu0 %v4748, 64
        %v5833 = vpop.permute.xlu0 %5832
        %5834 = vrot.lane.b32.xlu0 %v4763, 64
        %v5835 = vpop.permute.xlu0 %5834
        %5836 = vrot.lane.b32.xlu0 %v4778, 64
        %v5837 = vpop.permute.xlu0 %5836
        %5838 = vrot.lane.b32.xlu0 %v4793, 64
        %v5839 = vpop.permute.xlu0 %5838
        %5840 = vrot.lane.b32.xlu0 %v4808, 64
        %v5841 = vpop.permute.xlu0 %5840
        %5842 = vrot.lane.b32.xlu0 %v4823, 64
        %v5843 = vpop.permute.xlu0 %5842
        %5844 = vrot.lane.b32.xlu0 %v4838, 64
        %v5845 = vpop.permute.xlu0 %5844
        %5846 = vrot.lane.b32.xlu0 %v4853, 64
        %v5847 = vpop.permute.xlu0 %5846
        %5848 = vrot.lane.b32.xlu0 %v4868, 64
        %v5849 = vpop.permute.xlu0 %5848
        %5850 = vrot.lane.b32.xlu0 %v4883, 64
        %v5851 = vpop.permute.xlu0 %5850
        %5852 = vrot.lane.b32.xlu0 %v4898, 64
        %v5853 = vpop.permute.xlu0 %5852
        %5854 = vrot.lane.b32.xlu0 %v4913, 64
        %v5855 = vpop.permute.xlu0 %5854
        %5856 = vrot.lane.b32.xlu0 %v4928, 64
        %v5857 = vpop.permute.xlu0 %5856
        %5858 = vrot.lane.b32.xlu0 %v4943, 64
        %v5859 = vpop.permute.xlu0 %5858
        %5860 = vrot.lane.b32.xlu0 %v4958, 64
        %v5861 = vpop.permute.xlu0 %5860
        %5862 = vrot.lane.b32.xlu0 %v4973, 64
        %v5863 = vpop.permute.xlu0 %5862
        %5864 = vrot.lane.b32.xlu0 %v4988, 64
        %v5865 = vpop.permute.xlu0 %5864
        %5866 = vrot.lane.b32.xlu0 %v5003, 64
        %v5867 = vpop.permute.xlu0 %5866
        %5868 = vrot.lane.b32.xlu0 %v5018, 64
        %v5869 = vpop.permute.xlu0 %5868
        %5870 = vrot.lane.b32.xlu0 %v5033, 64
        %v5871 = vpop.permute.xlu0 %5870
        %5872 = vrot.lane.b32.xlu0 %v5048, 64
        %v5873 = vpop.permute.xlu0 %5872
        %5874 = vrot.lane.b32.xlu0 %v5063, 64
        %v5875 = vpop.permute.xlu0 %5874
        %5876 = vrot.lane.b32.xlu0 %v5078, 64
        %v5877 = vpop.permute.xlu0 %5876
        %5878 = vrot.lane.b32.xlu0 %v5093, 64
        %v5879 = vpop.permute.xlu0 %5878
        %5880 = vrot.lane.b32.xlu0 %v5108, 64
        %v5881 = vpop.permute.xlu0 %5880
        %5882 = vrot.lane.b32.xlu0 %v5123, 64
        %v5883 = vpop.permute.xlu0 %5882
        %5884 = vrot.lane.b32.xlu0 %v5138, 64
        %v5885 = vpop.permute.xlu0 %5884
        %5886 = vrot.lane.b32.xlu0 %v5153, 64
        %v5887 = vpop.permute.xlu0 %5886
        %5888 = vrot.lane.b32.xlu0 %v5168, 64
        %v5889 = vpop.permute.xlu0 %5888
        %v5922 = vmul.f32 %v5762, %v5827
        %v5923 = vmul.f32 %v5763, %v5829
        %v5924 = vmul.f32 %v5764, %v5831
        %v5925 = vmul.f32 %v5765, %v5833
        %v5926 = vmul.f32 %v5766, %v5835
        %v5927 = vmul.f32 %v5767, %v5837
        %v5928 = vmul.f32 %v5768, %v5839
        %v5929 = vmul.f32 %v5769, %v5841
        %v5930 = vmul.f32 %v5770, %v5843
        %v5931 = vmul.f32 %v5771, %v5845
        %v5932 = vmul.f32 %v5772, %v5847
        %v5933 = vmul.f32 %v5773, %v5849
        %v5934 = vmul.f32 %v5774, %v5851
        %v5935 = vmul.f32 %v5775, %v5853
        %v5936 = vmul.f32 %v5776, %v5855
        %v5937 = vmul.f32 %v5777, %v5857
        %v5938 = vmul.f32 %v5778, %v5859
        %v5939 = vmul.f32 %v5779, %v5861
        %v5940 = vmul.f32 %v5780, %v5863
        %v5941 = vmul.f32 %v5781, %v5865
        %v5942 = vmul.f32 %v5782, %v5867
        %v5943 = vmul.f32 %v5783, %v5869
        %v5944 = vmul.f32 %v5784, %v5871
        %v5945 = vmul.f32 %v5785, %v5873
        %v5946 = vmul.f32 %v5786, %v5875
        %v5947 = vmul.f32 %v5787, %v5877
        %v5948 = vmul.f32 %v5788, %v5879
        %v5949 = vmul.f32 %v5789, %v5881
        %v5950 = vmul.f32 %v5790, %v5883
        %v5951 = vmul.f32 %v5791, %v5885
        %v5952 = vmul.f32 %v5792, %v5887
        %v5953 = vmul.f32 %v5793, %v5889
        %v5954 = vsub.f32 1.0, %v4703
        %v5955 = vsub.f32 1.0, %v4718
        %v5956 = vsub.f32 1.0, %v4733
        %v5957 = vsub.f32 1.0, %v4748
        %v5958 = vsub.f32 1.0, %v4763
        %v5959 = vsub.f32 1.0, %v4778
        %v5960 = vsub.f32 1.0, %v4793
        %v5961 = vsub.f32 1.0, %v4808
        %v5962 = vsub.f32 1.0, %v4823
        %v5963 = vsub.f32 1.0, %v4838
        %v5964 = vsub.f32 1.0, %v4853
        %v5965 = vsub.f32 1.0, %v4868
        %v5966 = vsub.f32 1.0, %v4883
        %v5967 = vsub.f32 1.0, %v4898
        %v5968 = vsub.f32 1.0, %v4913
        %v5969 = vsub.f32 1.0, %v4928
        %v5970 = vsub.f32 1.0, %v4943
        %v5971 = vsub.f32 1.0, %v4958
        %v5972 = vsub.f32 1.0, %v4973
        %v5973 = vsub.f32 1.0, %v4988
        %v5974 = vsub.f32 1.0, %v5003
        %v5975 = vsub.f32 1.0, %v5018
        %v5976 = vsub.f32 1.0, %v5033
        %v5977 = vsub.f32 1.0, %v5048
        %v5978 = vsub.f32 1.0, %v5063
        %v5979 = vsub.f32 1.0, %v5078
        %v5980 = vsub.f32 1.0, %v5093
        %v5981 = vsub.f32 1.0, %v5108
        %v5982 = vsub.f32 1.0, %v5123
        %v5983 = vsub.f32 1.0, %v5138
        %v5984 = vsub.f32 1.0, %v5153
        %v5985 = vsub.f32 1.0, %v5168
        %v5986 = vmul.f32 %v3711, %v5954
        %v5987 = vmul.f32 %v3712, %v5955
        %v5988 = vmul.f32 %v3713, %v5956
        %v5989 = vmul.f32 %v3714, %v5957
        %v5990 = vmul.f32 %v3715, %v5958
        %v5991 = vmul.f32 %v3716, %v5959
        %v5992 = vmul.f32 %v3717, %v5960
        %v5993 = vmul.f32 %v3718, %v5961
        %v5994 = vmul.f32 %v3719, %v5962
        %v5995 = vmul.f32 %v3720, %v5963
        %v5996 = vmul.f32 %v3721, %v5964
        %v5997 = vmul.f32 %v3722, %v5965
        %v5998 = vmul.f32 %v3723, %v5966
        %v5999 = vmul.f32 %v3724, %v5967
        %v6000 = vmul.f32 %v3725, %v5968
        %v6001 = vmul.f32 %v3726, %v5969
        %v6002 = vmul.f32 %v3727, %v5970
        %v6003 = vmul.f32 %v3728, %v5971
        %v6004 = vmul.f32 %v3729, %v5972
        %v6005 = vmul.f32 %v3730, %v5973
        %v6006 = vmul.f32 %v3731, %v5974
        %v6007 = vmul.f32 %v3732, %v5975
        %v6008 = vmul.f32 %v3733, %v5976
        %v6009 = vmul.f32 %v3734, %v5977
        %v6010 = vmul.f32 %v3735, %v5978
        %v6011 = vmul.f32 %v3736, %v5979
        %v6012 = vmul.f32 %v3737, %v5980
        %v6013 = vmul.f32 %v3738, %v5981
        %v6014 = vmul.f32 %v3739, %v5982
        %v6015 = vmul.f32 %v3740, %v5983
        %v6016 = vmul.f32 %v3741, %v5984
        %v6017 = vmul.f32 %v3742, %v5985
        %6050 = vrot.lane.b32.xlu0 %v5986, 64
        %v6051 = vpop.permute.xlu0 %6050
        %6052 = vrot.lane.b32.xlu0 %v5987, 64
        %v6053 = vpop.permute.xlu0 %6052
        %6054 = vrot.lane.b32.xlu0 %v5988, 64
        %v6055 = vpop.permute.xlu0 %6054
        %6056 = vrot.lane.b32.xlu0 %v5989, 64
        %v6057 = vpop.permute.xlu0 %6056
        %6058 = vrot.lane.b32.xlu0 %v5990, 64
        %v6059 = vpop.permute.xlu0 %6058
        %6060 = vrot.lane.b32.xlu0 %v5991, 64
        %v6061 = vpop.permute.xlu0 %6060
        %6062 = vrot.lane.b32.xlu0 %v5992, 64
        %v6063 = vpop.permute.xlu0 %6062
        %6064 = vrot.lane.b32.xlu0 %v5993, 64
        %v6065 = vpop.permute.xlu0 %6064
        %6066 = vrot.lane.b32.xlu0 %v5994, 64
        %v6067 = vpop.permute.xlu0 %6066
        %6068 = vrot.lane.b32.xlu0 %v5995, 64
        %v6069 = vpop.permute.xlu0 %6068
        %6070 = vrot.lane.b32.xlu0 %v5996, 64
        %v6071 = vpop.permute.xlu0 %6070
        %6072 = vrot.lane.b32.xlu0 %v5997, 64
        %v6073 = vpop.permute.xlu0 %6072
        %6074 = vrot.lane.b32.xlu0 %v5998, 64
        %v6075 = vpop.permute.xlu0 %6074
        %6076 = vrot.lane.b32.xlu0 %v5999, 64
        %v6077 = vpop.permute.xlu0 %6076
        %6078 = vrot.lane.b32.xlu0 %v6000, 64
        %v6079 = vpop.permute.xlu0 %6078
        %6080 = vrot.lane.b32.xlu0 %v6001, 64
        %v6081 = vpop.permute.xlu0 %6080
        %6082 = vrot.lane.b32.xlu0 %v6002, 64
        %v6083 = vpop.permute.xlu0 %6082
        %6084 = vrot.lane.b32.xlu0 %v6003, 64
        %v6085 = vpop.permute.xlu0 %6084
        %6086 = vrot.lane.b32.xlu0 %v6004, 64
        %v6087 = vpop.permute.xlu0 %6086
        %6088 = vrot.lane.b32.xlu0 %v6005, 64
        %v6089 = vpop.permute.xlu0 %6088
        %6090 = vrot.lane.b32.xlu0 %v6006, 64
        %v6091 = vpop.permute.xlu0 %6090
        %6092 = vrot.lane.b32.xlu0 %v6007, 64
        %v6093 = vpop.permute.xlu0 %6092
        %6094 = vrot.lane.b32.xlu0 %v6008, 64
        %v6095 = vpop.permute.xlu0 %6094
        %6096 = vrot.lane.b32.xlu0 %v6009, 64
        %v6097 = vpop.permute.xlu0 %6096
        %6098 = vrot.lane.b32.xlu0 %v6010, 64
        %v6099 = vpop.permute.xlu0 %6098
        %6100 = vrot.lane.b32.xlu0 %v6011, 64
        %v6101 = vpop.permute.xlu0 %6100
        %6102 = vrot.lane.b32.xlu0 %v6012, 64
        %v6103 = vpop.permute.xlu0 %6102
        %6104 = vrot.lane.b32.xlu0 %v6013, 64
        %v6105 = vpop.permute.xlu0 %6104
        %6106 = vrot.lane.b32.xlu0 %v6014, 64
        %v6107 = vpop.permute.xlu0 %6106
        %6108 = vrot.lane.b32.xlu0 %v6015, 64
        %v6109 = vpop.permute.xlu0 %6108
        %6110 = vrot.lane.b32.xlu0 %v6016, 64
        %v6111 = vpop.permute.xlu0 %6110
        %6112 = vrot.lane.b32.xlu0 %v6017, 64
        %v6113 = vpop.permute.xlu0 %6112
        %v6146 = vadd.f32 %v5922, %v6051
        %v6147 = vadd.f32 %v5923, %v6053
        %v6148 = vadd.f32 %v5924, %v6055
        %v6149 = vadd.f32 %v5925, %v6057
        %v6150 = vadd.f32 %v5926, %v6059
        %v6151 = vadd.f32 %v5927, %v6061
        %v6152 = vadd.f32 %v5928, %v6063
        %v6153 = vadd.f32 %v5929, %v6065
        %v6154 = vadd.f32 %v5930, %v6067
        %v6155 = vadd.f32 %v5931, %v6069
        %v6156 = vadd.f32 %v5932, %v6071
        %v6157 = vadd.f32 %v5933, %v6073
        %v6158 = vadd.f32 %v5934, %v6075
        %v6159 = vadd.f32 %v5935, %v6077
        %v6160 = vadd.f32 %v5936, %v6079
        %v6161 = vadd.f32 %v5937, %v6081
        %v6162 = vadd.f32 %v5938, %v6083
        %v6163 = vadd.f32 %v5939, %v6085
        %v6164 = vadd.f32 %v5940, %v6087
        %v6165 = vadd.f32 %v5941, %v6089
        %v6166 = vadd.f32 %v5942, %v6091
        %v6167 = vadd.f32 %v5943, %v6093
        %v6168 = vadd.f32 %v5944, %v6095
        %v6169 = vadd.f32 %v5945, %v6097
        %v6170 = vadd.f32 %v5946, %v6099
        %v6171 = vadd.f32 %v5947, %v6101
        %v6172 = vadd.f32 %v5948, %v6103
        %v6173 = vadd.f32 %v5949, %v6105
        %v6174 = vadd.f32 %v5950, %v6107
        %v6175 = vadd.f32 %v5951, %v6109
        %v6176 = vadd.f32 %v5952, %v6111
        %v6177 = vadd.f32 %v5953, %v6113
        %v6178 = vmul.f32 %v6146, %v803
        %v6179 = vmul.f32 %v6147, %v808
        %v6180 = vmul.f32 %v6148, %v813
        %v6181 = vmul.f32 %v6149, %v818
        %v6182 = vmul.f32 %v6150, %v823
        %v6183 = vmul.f32 %v6151, %v828
        %v6184 = vmul.f32 %v6152, %v833
        %v6185 = vmul.f32 %v6153, %v838
        %v6186 = vmul.f32 %v6154, %v843
        %v6187 = vmul.f32 %v6155, %v848
        %v6188 = vmul.f32 %v6156, %v853
        %v6189 = vmul.f32 %v6157, %v858
        %v6190 = vmul.f32 %v6158, %v863
        %v6191 = vmul.f32 %v6159, %v868
        %v6192 = vmul.f32 %v6160, %v873
        %v6193 = vmul.f32 %v6161, %v878
        %v6194 = vmul.f32 %v6162, %v883
        %v6195 = vmul.f32 %v6163, %v888
        %v6196 = vmul.f32 %v6164, %v893
        %v6197 = vmul.f32 %v6165, %v898
        %v6198 = vmul.f32 %v6166, %v903
        %v6199 = vmul.f32 %v6167, %v908
        %v6200 = vmul.f32 %v6168, %v913
        %v6201 = vmul.f32 %v6169, %v918
        %v6202 = vmul.f32 %v6170, %v923
        %v6203 = vmul.f32 %v6171, %v928
        %v6204 = vmul.f32 %v6172, %v933
        %v6205 = vmul.f32 %v6173, %v938
        %v6206 = vmul.f32 %v6174, %v943
        %v6207 = vmul.f32 %v6175, %v948
        %v6208 = vmul.f32 %v6176, %v953
        %v6209 = vmul.f32 %v6177, %v958
        %6242 = vrot.lane.b32.xlu0 %v6178, 64
        %v6243 = vpop.permute.xlu0 %6242
        %6244 = vrot.lane.b32.xlu0 %v6179, 64
        %v6245 = vpop.permute.xlu0 %6244
        %6246 = vrot.lane.b32.xlu0 %v6180, 64
        %v6247 = vpop.permute.xlu0 %6246
        %6248 = vrot.lane.b32.xlu0 %v6181, 64
        %v6249 = vpop.permute.xlu0 %6248
        %6250 = vrot.lane.b32.xlu0 %v6182, 64
        %v6251 = vpop.permute.xlu0 %6250
        %6252 = vrot.lane.b32.xlu0 %v6183, 64
        %v6253 = vpop.permute.xlu0 %6252
        %6254 = vrot.lane.b32.xlu0 %v6184, 64
        %v6255 = vpop.permute.xlu0 %6254
        %6256 = vrot.lane.b32.xlu0 %v6185, 64
        %v6257 = vpop.permute.xlu0 %6256
        %6258 = vrot.lane.b32.xlu0 %v6186, 64
        %v6259 = vpop.permute.xlu0 %6258
        %6260 = vrot.lane.b32.xlu0 %v6187, 64
        %v6261 = vpop.permute.xlu0 %6260
        %6262 = vrot.lane.b32.xlu0 %v6188, 64
        %v6263 = vpop.permute.xlu0 %6262
        %6264 = vrot.lane.b32.xlu0 %v6189, 64
        %v6265 = vpop.permute.xlu0 %6264
        %6266 = vrot.lane.b32.xlu0 %v6190, 64
        %v6267 = vpop.permute.xlu0 %6266
        %6268 = vrot.lane.b32.xlu0 %v6191, 64
        %v6269 = vpop.permute.xlu0 %6268
        %6270 = vrot.lane.b32.xlu0 %v6192, 64
        %v6271 = vpop.permute.xlu0 %6270
        %6272 = vrot.lane.b32.xlu0 %v6193, 64
        %v6273 = vpop.permute.xlu0 %6272
        %6274 = vrot.lane.b32.xlu0 %v6194, 64
        %v6275 = vpop.permute.xlu0 %6274
        %6276 = vrot.lane.b32.xlu0 %v6195, 64
        %v6277 = vpop.permute.xlu0 %6276
        %6278 = vrot.lane.b32.xlu0 %v6196, 64
        %v6279 = vpop.permute.xlu0 %6278
        %6280 = vrot.lane.b32.xlu0 %v6197, 64
        %v6281 = vpop.permute.xlu0 %6280
        %6282 = vrot.lane.b32.xlu0 %v6198, 64
        %v6283 = vpop.permute.xlu0 %6282
        %6284 = vrot.lane.b32.xlu0 %v6199, 64
        %v6285 = vpop.permute.xlu0 %6284
        %6286 = vrot.lane.b32.xlu0 %v6200, 64
        %v6287 = vpop.permute.xlu0 %6286
        %6288 = vrot.lane.b32.xlu0 %v6201, 64
        %v6289 = vpop.permute.xlu0 %6288
        %6290 = vrot.lane.b32.xlu0 %v6202, 64
        %v6291 = vpop.permute.xlu0 %6290
        %6292 = vrot.lane.b32.xlu0 %v6203, 64
        %v6293 = vpop.permute.xlu0 %6292
        %6294 = vrot.lane.b32.xlu0 %v6204, 64
        %v6295 = vpop.permute.xlu0 %6294
        %6296 = vrot.lane.b32.xlu0 %v6205, 64
        %v6297 = vpop.permute.xlu0 %6296
        %6298 = vrot.lane.b32.xlu0 %v6206, 64
        %v6299 = vpop.permute.xlu0 %6298
        %6300 = vrot.lane.b32.xlu0 %v6207, 64
        %v6301 = vpop.permute.xlu0 %6300
        %6302 = vrot.lane.b32.xlu0 %v6208, 64
        %v6303 = vpop.permute.xlu0 %6302
        %6304 = vrot.lane.b32.xlu0 %v6209, 64
        %v6305 = vpop.permute.xlu0 %6304
        %v6338 = vadd.f32 %v3711, %v6243
        %v6339 = vadd.f32 %v3712, %v6245
        %v6340 = vadd.f32 %v3713, %v6247
        %v6341 = vadd.f32 %v3714, %v6249
        %v6342 = vadd.f32 %v3715, %v6251
        %v6343 = vadd.f32 %v3716, %v6253
        %v6344 = vadd.f32 %v3717, %v6255
        %v6345 = vadd.f32 %v3718, %v6257
        %v6346 = vadd.f32 %v3719, %v6259
        %v6347 = vadd.f32 %v3720, %v6261
        %v6348 = vadd.f32 %v3721, %v6263
        %v6349 = vadd.f32 %v3722, %v6265
        %v6350 = vadd.f32 %v3723, %v6267
        %v6351 = vadd.f32 %v3724, %v6269
        %v6352 = vadd.f32 %v3725, %v6271
        %v6353 = vadd.f32 %v3726, %v6273
        %v6354 = vadd.f32 %v3727, %v6275
        %v6355 = vadd.f32 %v3728, %v6277
        %v6356 = vadd.f32 %v3729, %v6279
        %v6357 = vadd.f32 %v3730, %v6281
        %v6358 = vadd.f32 %v3731, %v6283
        %v6359 = vadd.f32 %v3732, %v6285
        %v6360 = vadd.f32 %v3733, %v6287
        %v6361 = vadd.f32 %v3734, %v6289
        %v6362 = vadd.f32 %v3735, %v6291
        %v6363 = vadd.f32 %v3736, %v6293
        %v6364 = vadd.f32 %v3737, %v6295
        %v6365 = vadd.f32 %v3738, %v6297
        %v6366 = vadd.f32 %v3739, %v6299
        %v6367 = vadd.f32 %v3740, %v6301
        %v6368 = vadd.f32 %v3741, %v6303
        %v6369 = vadd.f32 %v3742, %v6305
        %v6370 = vld [vmem:[%s11] sm:$0xff]
        %v6371 = vld [vmem:[%s11 + $0x8] sm:$0xff]
        %v6372 = vld [vmem:[%s11 + $0x10] sm:$0xff]
        %v6373 = vld [vmem:[%s11 + $0x18] sm:$0xff]
        %v6374 = vld [vmem:[%s12] sm:$0x1]
        %v6376 = vperm.slane %v6374, 0
        %v6379 = vsel %vm1475, %v6338, 0
        %v6382 = vsel %vm1475, %v6339, 0
        %v6385 = vsel %vm1475, %v6340, 0
        %v6388 = vsel %vm1475, %v6341, 0
        %v6391 = vsel %vm1475, %v6342, 0
        %v6394 = vsel %vm1475, %v6343, 0
        %v6397 = vsel %vm1475, %v6344, 0
        %v6400 = vsel %vm1475, %v6345, 0
        %v6403 = vsel %vm1475, %v6346, 0
        %v6406 = vsel %vm1475, %v6347, 0
        %v6409 = vsel %vm1475, %v6348, 0
        %v6412 = vsel %vm1475, %v6349, 0
        %v6415 = vsel %vm1475, %v6350, 0
        %v6418 = vsel %vm1475, %v6351, 0
        %v6421 = vsel %vm1475, %v6352, 0
        %v6424 = vsel %vm1475, %v6353, 0
        %v6427 = vsel %vm1475, %v6354, 0
        %v6430 = vsel %vm1475, %v6355, 0
        %v6433 = vsel %vm1475, %v6356, 0
        %v6436 = vsel %vm1475, %v6357, 0
        %v6439 = vsel %vm1475, %v6358, 0
        %v6442 = vsel %vm1475, %v6359, 0
        %v6445 = vsel %vm1475, %v6360, 0
        %v6448 = vsel %vm1475, %v6361, 0
        %v6451 = vsel %vm1475, %v6362, 0
        %v6454 = vsel %vm1475, %v6363, 0
        %v6457 = vsel %vm1475, %v6364, 0
        %v6460 = vsel %vm1475, %v6365, 0
        %v6463 = vsel %vm1475, %v6366, 0
        %v6466 = vsel %vm1475, %v6367, 0
        %v6469 = vsel %vm1475, %v6368, 0
        %v6472 = vsel %vm1475, %v6369, 0
        %6474 = vmatpush.msra.mxu0 0.0
        %6475 = vmatpush.msra.mxu0 0.0
        %6476 = vmatpush.msra.mxu0 0.0
        %6477 = vmatpush.msra.mxu0 0.0
        %6478 = vmatpush.msra.mxu0 0.0
        %6479 = vmatpush.msra.mxu0 0.0
        %6480 = vmatpush.msra.mxu0 0.0
        %6481 = vmatpush.msra.mxu0 0.0
        %6482 = vmatpush.msra.mxu0 0.0
        %6483 = vmatpush.msra.mxu0 0.0
        %6484 = vmatpush.msra.mxu0 0.0
        %6485 = vmatpush.msra.mxu0 0.0
        %6486 = vmatpush.msra.mxu0 %v6373
        %6487 = vmatpush.msra.mxu0 %v6372
        %6488 = vmatpush.msra.mxu0 %v6371
        %6489 = vmatpush.msra.mxu0 %v6370
        %6490 = vmatmul.f32.gmra.mxu0 %v6379
        %v6491 = vpop.f32.mrf.mxu0
        %v6492 = vadd.f32 %v6376, %v6491
        %6493 = vmatmul.f32.gmra.mxu0 %v6382
        %v6494 = vpop.f32.mrf.mxu0
        %v6495 = vadd.f32 %v6376, %v6494
        %6496 = vmatmul.f32.gmra.mxu0 %v6385
        %v6497 = vpop.f32.mrf.mxu0
        %v6498 = vadd.f32 %v6376, %v6497
        %6499 = vmatmul.f32.gmra.mxu0 %v6388
        %v6500 = vpop.f32.mrf.mxu0
        %v6501 = vadd.f32 %v6376, %v6500
        %6502 = vmatmul.f32.gmra.mxu0 %v6391
        %v6503 = vpop.f32.mrf.mxu0
        %v6504 = vadd.f32 %v6376, %v6503
        %6505 = vmatmul.f32.gmra.mxu0 %v6394
        %v6506 = vpop.f32.mrf.mxu0
        %v6507 = vadd.f32 %v6376, %v6506
        %6508 = vmatmul.f32.gmra.mxu0 %v6397
        %v6509 = vpop.f32.mrf.mxu0
        %v6510 = vadd.f32 %v6376, %v6509
        %6511 = vmatmul.f32.gmra.mxu0 %v6400
        %v6512 = vpop.f32.mrf.mxu0
        %v6513 = vadd.f32 %v6376, %v6512
        %6514 = vmatmul.f32.gmra.mxu0 %v6403
        %v6515 = vpop.f32.mrf.mxu0
        %v6516 = vadd.f32 %v6376, %v6515
        %6517 = vmatmul.f32.gmra.mxu0 %v6406
        %v6518 = vpop.f32.mrf.mxu0
        %v6519 = vadd.f32 %v6376, %v6518
        %6520 = vmatmul.f32.gmra.mxu0 %v6409
        %v6521 = vpop.f32.mrf.mxu0
        %v6522 = vadd.f32 %v6376, %v6521
        %6523 = vmatmul.f32.gmra.mxu0 %v6412
        %v6524 = vpop.f32.mrf.mxu0
        %v6525 = vadd.f32 %v6376, %v6524
        %6526 = vmatmul.f32.gmra.mxu0 %v6415
        %v6527 = vpop.f32.mrf.mxu0
        %v6528 = vadd.f32 %v6376, %v6527
        %6529 = vmatmul.f32.gmra.mxu0 %v6418
        %v6530 = vpop.f32.mrf.mxu0
        %v6531 = vadd.f32 %v6376, %v6530
        %6532 = vmatmul.f32.gmra.mxu0 %v6421
        %v6533 = vpop.f32.mrf.mxu0
        %v6534 = vadd.f32 %v6376, %v6533
        %6535 = vmatmul.f32.gmra.mxu0 %v6424
        %v6536 = vpop.f32.mrf.mxu0
        %v6537 = vadd.f32 %v6376, %v6536
        %6538 = vmatmul.f32.gmra.mxu0 %v6427
        %v6539 = vpop.f32.mrf.mxu0
        %v6540 = vadd.f32 %v6376, %v6539
        %6541 = vmatmul.f32.gmra.mxu0 %v6430
        %v6542 = vpop.f32.mrf.mxu0
        %v6543 = vadd.f32 %v6376, %v6542
        %6544 = vmatmul.f32.gmra.mxu0 %v6433
        %v6545 = vpop.f32.mrf.mxu0
        %v6546 = vadd.f32 %v6376, %v6545
        %6547 = vmatmul.f32.gmra.mxu0 %v6436
        %v6548 = vpop.f32.mrf.mxu0
        %v6549 = vadd.f32 %v6376, %v6548
        %6550 = vmatmul.f32.gmra.mxu0 %v6439
        %v6551 = vpop.f32.mrf.mxu0
        %v6552 = vadd.f32 %v6376, %v6551
        %6553 = vmatmul.f32.gmra.mxu0 %v6442
        %v6554 = vpop.f32.mrf.mxu0
        %v6555 = vadd.f32 %v6376, %v6554
        %6556 = vmatmul.f32.gmra.mxu0 %v6445
        %v6557 = vpop.f32.mrf.mxu0
        %v6558 = vadd.f32 %v6376, %v6557
        %6559 = vmatmul.f32.gmra.mxu0 %v6448
        %v6560 = vpop.f32.mrf.mxu0
        %v6561 = vadd.f32 %v6376, %v6560
        %6562 = vmatmul.f32.gmra.mxu0 %v6451
        %v6563 = vpop.f32.mrf.mxu0
        %v6564 = vadd.f32 %v6376, %v6563
        %6565 = vmatmul.f32.gmra.mxu0 %v6454
        %v6566 = vpop.f32.mrf.mxu0
        %v6567 = vadd.f32 %v6376, %v6566
        %6568 = vmatmul.f32.gmra.mxu0 %v6457
        %v6569 = vpop.f32.mrf.mxu0
        %v6570 = vadd.f32 %v6376, %v6569
        %6571 = vmatmul.f32.gmra.mxu0 %v6460
        %v6572 = vpop.f32.mrf.mxu0
        %v6573 = vadd.f32 %v6376, %v6572
        %6574 = vmatmul.f32.gmra.mxu0 %v6463
        %v6575 = vpop.f32.mrf.mxu0
        %v6576 = vadd.f32 %v6376, %v6575
        %6577 = vmatmul.f32.gmra.mxu0 %v6466
        %v6578 = vpop.f32.mrf.mxu0
        %v6579 = vadd.f32 %v6376, %v6578
        %6580 = vmatmul.f32.gmra.mxu0 %v6469
        %v6581 = vpop.f32.mrf.mxu0
        %v6582 = vadd.f32 %v6376, %v6581
        %6583 = vmatmul.f32.gmra.mxu0 %v6472
        %v6584 = vpop.f32.mrf.mxu0
        %v6585 = vadd.f32 %v6376, %v6584
        %6586 = vdwg.mxu0
        %v6587 = vmax.f32 %v6492, 0.0
        %v6588 = vmax.f32 %v6495, 0.0
        %v6589 = vmax.f32 %v6498, 0.0
        %v6590 = vmax.f32 %v6501, 0.0
        %v6591 = vmax.f32 %v6504, 0.0
        %v6592 = vmax.f32 %v6507, 0.0
        %v6593 = vmax.f32 %v6510, 0.0
        %v6594 = vmax.f32 %v6513, 0.0
        %v6595 = vmax.f32 %v6516, 0.0
        %v6596 = vmax.f32 %v6519, 0.0
        %v6597 = vmax.f32 %v6522, 0.0
        %v6598 = vmax.f32 %v6525, 0.0
        %v6599 = vmax.f32 %v6528, 0.0
        %v6600 = vmax.f32 %v6531, 0.0
        %v6601 = vmax.f32 %v6534, 0.0
        %v6602 = vmax.f32 %v6537, 0.0
        %v6603 = vmax.f32 %v6540, 0.0
        %v6604 = vmax.f32 %v6543, 0.0
        %v6605 = vmax.f32 %v6546, 0.0
        %v6606 = vmax.f32 %v6549, 0.0
        %v6607 = vmax.f32 %v6552, 0.0
        %v6608 = vmax.f32 %v6555, 0.0
        %v6609 = vmax.f32 %v6558, 0.0
        %v6610 = vmax.f32 %v6561, 0.0
        %v6611 = vmax.f32 %v6564, 0.0
        %v6612 = vmax.f32 %v6567, 0.0
        %v6613 = vmax.f32 %v6570, 0.0
        %v6614 = vmax.f32 %v6573, 0.0
        %v6615 = vmax.f32 %v6576, 0.0
        %v6616 = vmax.f32 %v6579, 0.0
        %v6617 = vmax.f32 %v6582, 0.0
        %v6618 = vmax.f32 %v6585, 0.0
        %v6619 = vxor.u32 %v6492, 2147483648
        %v6620 = vxor.u32 %v6495, 2147483648
        %v6621 = vxor.u32 %v6498, 2147483648
        %v6622 = vxor.u32 %v6501, 2147483648
        %v6623 = vxor.u32 %v6504, 2147483648
        %v6624 = vxor.u32 %v6507, 2147483648
        %v6625 = vxor.u32 %v6510, 2147483648
        %v6626 = vxor.u32 %v6513, 2147483648
        %v6627 = vxor.u32 %v6516, 2147483648
        %v6628 = vxor.u32 %v6519, 2147483648
        %v6629 = vxor.u32 %v6522, 2147483648
        %v6630 = vxor.u32 %v6525, 2147483648
        %v6631 = vxor.u32 %v6528, 2147483648
        %v6632 = vxor.u32 %v6531, 2147483648
        %v6633 = vxor.u32 %v6534, 2147483648
        %v6634 = vxor.u32 %v6537, 2147483648
        %v6635 = vxor.u32 %v6540, 2147483648
        %v6636 = vxor.u32 %v6543, 2147483648
        %v6637 = vxor.u32 %v6546, 2147483648
        %v6638 = vxor.u32 %v6549, 2147483648
        %v6639 = vxor.u32 %v6552, 2147483648
        %v6640 = vxor.u32 %v6555, 2147483648
        %v6641 = vxor.u32 %v6558, 2147483648
        %v6642 = vxor.u32 %v6561, 2147483648
        %v6643 = vxor.u32 %v6564, 2147483648
        %v6644 = vxor.u32 %v6567, 2147483648
        %v6645 = vxor.u32 %v6570, 2147483648
        %v6646 = vxor.u32 %v6573, 2147483648
        %v6647 = vxor.u32 %v6576, 2147483648
        %v6648 = vxor.u32 %v6579, 2147483648
        %v6649 = vxor.u32 %v6582, 2147483648
        %v6650 = vxor.u32 %v6585, 2147483648
        %v6651 = vmul.f32 %v6619, 1.442695
        %v6652 = vpow.pop %v6651
        %v6653 = vmul.f32 %v6620, 1.442695
        %v6654 = vpow.pop %v6653
        %v6655 = vmul.f32 %v6621, 1.442695
        %v6656 = vpow.pop %v6655
        %v6657 = vmul.f32 %v6622, 1.442695
        %v6658 = vpow.pop %v6657
        %v6659 = vmul.f32 %v6623, 1.442695
        %v6660 = vpow.pop %v6659
        %v6661 = vmul.f32 %v6624, 1.442695
        %v6662 = vpow.pop %v6661
        %v6663 = vmul.f32 %v6625, 1.442695
        %v6664 = vpow.pop %v6663
        %v6665 = vmul.f32 %v6626, 1.442695
        %v6666 = vpow.pop %v6665
        %v6667 = vmul.f32 %v6627, 1.442695
        %v6668 = vpow.pop %v6667
        %v6669 = vmul.f32 %v6628, 1.442695
        %v6670 = vpow.pop %v6669
        %v6671 = vmul.f32 %v6629, 1.442695
        %v6672 = vpow.pop %v6671
        %v6673 = vmul.f32 %v6630, 1.442695
        %v6674 = vpow.pop %v6673
        %v6675 = vmul.f32 %v6631, 1.442695
        %v6676 = vpow.pop %v6675
        %v6677 = vmul.f32 %v6632, 1.442695
        %v6678 = vpow.pop %v6677
        %v6679 = vmul.f32 %v6633, 1.442695
        %v6680 = vpow.pop %v6679
        %v6681 = vmul.f32 %v6634, 1.442695
        %v6682 = vpow.pop %v6681
        %v6683 = vmul.f32 %v6635, 1.442695
        %v6684 = vpow.pop %v6683
        %v6685 = vmul.f32 %v6636, 1.442695
        %v6686 = vpow.pop %v6685
        %v6687 = vmul.f32 %v6637, 1.442695
        %v6688 = vpow.pop %v6687
        %v6689 = vmul.f32 %v6638, 1.442695
        %v6690 = vpow.pop %v6689
        %v6691 = vmul.f32 %v6639, 1.442695
        %v6692 = vpow.pop %v6691
        %v6693 = vmul.f32 %v6640, 1.442695
        %v6694 = vpow.pop %v6693
        %v6695 = vmul.f32 %v6641, 1.442695
        %v6696 = vpow.pop %v6695
        %v6697 = vmul.f32 %v6642, 1.442695
        %v6698 = vpow.pop %v6697
        %v6699 = vmul.f32 %v6643, 1.442695
        %v6700 = vpow.pop %v6699
        %v6701 = vmul.f32 %v6644, 1.442695
        %v6702 = vpow.pop %v6701
        %v6703 = vmul.f32 %v6645, 1.442695
        %v6704 = vpow.pop %v6703
        %v6705 = vmul.f32 %v6646, 1.442695
        %v6706 = vpow.pop %v6705
        %v6707 = vmul.f32 %v6647, 1.442695
        %v6708 = vpow.pop %v6707
        %v6709 = vmul.f32 %v6648, 1.442695
        %v6710 = vpow.pop %v6709
        %v6711 = vmul.f32 %v6649, 1.442695
        %v6712 = vpow.pop %v6711
        %v6713 = vmul.f32 %v6650, 1.442695
        %v6714 = vpow.pop %v6713
        %v6715 = vadd.f32 %v6652, 1.0
        %v6716 = vadd.f32 %v6654, 1.0
        %v6717 = vadd.f32 %v6656, 1.0
        %v6718 = vadd.f32 %v6658, 1.0
        %v6719 = vadd.f32 %v6660, 1.0
        %v6720 = vadd.f32 %v6662, 1.0
        %v6721 = vadd.f32 %v6664, 1.0
        %v6722 = vadd.f32 %v6666, 1.0
        %v6723 = vadd.f32 %v6668, 1.0
        %v6724 = vadd.f32 %v6670, 1.0
        %v6725 = vadd.f32 %v6672, 1.0
        %v6726 = vadd.f32 %v6674, 1.0
        %v6727 = vadd.f32 %v6676, 1.0
        %v6728 = vadd.f32 %v6678, 1.0
        %v6729 = vadd.f32 %v6680, 1.0
        %v6730 = vadd.f32 %v6682, 1.0
        %v6731 = vadd.f32 %v6684, 1.0
        %v6732 = vadd.f32 %v6686, 1.0
        %v6733 = vadd.f32 %v6688, 1.0
        %v6734 = vadd.f32 %v6690, 1.0
        %v6735 = vadd.f32 %v6692, 1.0
        %v6736 = vadd.f32 %v6694, 1.0
        %v6737 = vadd.f32 %v6696, 1.0
        %v6738 = vadd.f32 %v6698, 1.0
        %v6739 = vadd.f32 %v6700, 1.0
        %v6740 = vadd.f32 %v6702, 1.0
        %v6741 = vadd.f32 %v6704, 1.0
        %v6742 = vadd.f32 %v6706, 1.0
        %v6743 = vadd.f32 %v6708, 1.0
        %v6744 = vadd.f32 %v6710, 1.0
        %v6745 = vadd.f32 %v6712, 1.0
        %v6746 = vadd.f32 %v6714, 1.0
        %v6747 = vrcp.pop %v6715
        %v6748 = vmul.f32 %v6715, %v6747
        %v6749 = vsub.f32 1.0, %v6748
        %v6750 = vmul.f32 %v6747, %v6749
        %v6751 = vadd.f32 %v6747, %v6750
        %vm6752 = vweird.f32 %v6715
        %vm6753 = vweird.f32 %v6747
        %vm6754 = vmor %vm6752, %vm6753
        %v6755 = vsel %vm6754, %v6747, %v6751
        %v6756 = vand.u32 2147483647, %v6715
        %vm6757 = vcmp.eq.f32.partialorder %v6756, 8.507059e+37
        %v6758 = vand.u32 %v6715, 2147483648
        %v6759 = vor.u32 1.1754944e-38, %v6758
        %v6760 = vsel %vm6757, %v6759, %v6755
        %v6761 = vmul.f32 1.0, %v6760
        %v6762 = vrcp.pop %v6716
        %v6763 = vmul.f32 %v6716, %v6762
        %v6764 = vsub.f32 1.0, %v6763
        %v6765 = vmul.f32 %v6762, %v6764
        %v6766 = vadd.f32 %v6762, %v6765
        %vm6767 = vweird.f32 %v6716
        %vm6768 = vweird.f32 %v6762
        %vm6769 = vmor %vm6767, %vm6768
        %v6770 = vsel %vm6769, %v6762, %v6766
        %v6771 = vand.u32 2147483647, %v6716
        %vm6772 = vcmp.eq.f32.partialorder %v6771, 8.507059e+37
        %v6773 = vand.u32 %v6716, 2147483648
        %v6774 = vor.u32 1.1754944e-38, %v6773
        %v6775 = vsel %vm6772, %v6774, %v6770
        %v6776 = vmul.f32 1.0, %v6775
        %v6777 = vrcp.pop %v6717
        %v6778 = vmul.f32 %v6717, %v6777
        %v6779 = vsub.f32 1.0, %v6778
        %v6780 = vmul.f32 %v6777, %v6779
        %v6781 = vadd.f32 %v6777, %v6780
        %vm6782 = vweird.f32 %v6717
        %vm6783 = vweird.f32 %v6777
        %vm6784 = vmor %vm6782, %vm6783
        %v6785 = vsel %vm6784, %v6777, %v6781
        %v6786 = vand.u32 2147483647, %v6717
        %vm6787 = vcmp.eq.f32.partialorder %v6786, 8.507059e+37
        %v6788 = vand.u32 %v6717, 2147483648
        %v6789 = vor.u32 1.1754944e-38, %v6788
        %v6790 = vsel %vm6787, %v6789, %v6785
        %v6791 = vmul.f32 1.0, %v6790
        %v6792 = vrcp.pop %v6718
        %v6793 = vmul.f32 %v6718, %v6792
        %v6794 = vsub.f32 1.0, %v6793
        %v6795 = vmul.f32 %v6792, %v6794
        %v6796 = vadd.f32 %v6792, %v6795
        %vm6797 = vweird.f32 %v6718
        %vm6798 = vweird.f32 %v6792
        %vm6799 = vmor %vm6797, %vm6798
        %v6800 = vsel %vm6799, %v6792, %v6796
        %v6801 = vand.u32 2147483647, %v6718
        %vm6802 = vcmp.eq.f32.partialorder %v6801, 8.507059e+37
        %v6803 = vand.u32 %v6718, 2147483648
        %v6804 = vor.u32 1.1754944e-38, %v6803
        %v6805 = vsel %vm6802, %v6804, %v6800
        %v6806 = vmul.f32 1.0, %v6805
        %v6807 = vrcp.pop %v6719
        %v6808 = vmul.f32 %v6719, %v6807
        %v6809 = vsub.f32 1.0, %v6808
        %v6810 = vmul.f32 %v6807, %v6809
        %v6811 = vadd.f32 %v6807, %v6810
        %vm6812 = vweird.f32 %v6719
        %vm6813 = vweird.f32 %v6807
        %vm6814 = vmor %vm6812, %vm6813
        %v6815 = vsel %vm6814, %v6807, %v6811
        %v6816 = vand.u32 2147483647, %v6719
        %vm6817 = vcmp.eq.f32.partialorder %v6816, 8.507059e+37
        %v6818 = vand.u32 %v6719, 2147483648
        %v6819 = vor.u32 1.1754944e-38, %v6818
        %v6820 = vsel %vm6817, %v6819, %v6815
        %v6821 = vmul.f32 1.0, %v6820
        %v6822 = vrcp.pop %v6720
        %v6823 = vmul.f32 %v6720, %v6822
        %v6824 = vsub.f32 1.0, %v6823
        %v6825 = vmul.f32 %v6822, %v6824
        %v6826 = vadd.f32 %v6822, %v6825
        %vm6827 = vweird.f32 %v6720
        %vm6828 = vweird.f32 %v6822
        %vm6829 = vmor %vm6827, %vm6828
        %v6830 = vsel %vm6829, %v6822, %v6826
        %v6831 = vand.u32 2147483647, %v6720
        %vm6832 = vcmp.eq.f32.partialorder %v6831, 8.507059e+37
        %v6833 = vand.u32 %v6720, 2147483648
        %v6834 = vor.u32 1.1754944e-38, %v6833
        %v6835 = vsel %vm6832, %v6834, %v6830
        %v6836 = vmul.f32 1.0, %v6835
        %v6837 = vrcp.pop %v6721
        %v6838 = vmul.f32 %v6721, %v6837
        %v6839 = vsub.f32 1.0, %v6838
        %v6840 = vmul.f32 %v6837, %v6839
        %v6841 = vadd.f32 %v6837, %v6840
        %vm6842 = vweird.f32 %v6721
        %vm6843 = vweird.f32 %v6837
        %vm6844 = vmor %vm6842, %vm6843
        %v6845 = vsel %vm6844, %v6837, %v6841
        %v6846 = vand.u32 2147483647, %v6721
        %vm6847 = vcmp.eq.f32.partialorder %v6846, 8.507059e+37
        %v6848 = vand.u32 %v6721, 2147483648
        %v6849 = vor.u32 1.1754944e-38, %v6848
        %v6850 = vsel %vm6847, %v6849, %v6845
        %v6851 = vmul.f32 1.0, %v6850
        %v6852 = vrcp.pop %v6722
        %v6853 = vmul.f32 %v6722, %v6852
        %v6854 = vsub.f32 1.0, %v6853
        %v6855 = vmul.f32 %v6852, %v6854
        %v6856 = vadd.f32 %v6852, %v6855
        %vm6857 = vweird.f32 %v6722
        %vm6858 = vweird.f32 %v6852
        %vm6859 = vmor %vm6857, %vm6858
        %v6860 = vsel %vm6859, %v6852, %v6856
        %v6861 = vand.u32 2147483647, %v6722
        %vm6862 = vcmp.eq.f32.partialorder %v6861, 8.507059e+37
        %v6863 = vand.u32 %v6722, 2147483648
        %v6864 = vor.u32 1.1754944e-38, %v6863
        %v6865 = vsel %vm6862, %v6864, %v6860
        %v6866 = vmul.f32 1.0, %v6865
        %v6867 = vrcp.pop %v6723
        %v6868 = vmul.f32 %v6723, %v6867
        %v6869 = vsub.f32 1.0, %v6868
        %v6870 = vmul.f32 %v6867, %v6869
        %v6871 = vadd.f32 %v6867, %v6870
        %vm6872 = vweird.f32 %v6723
        %vm6873 = vweird.f32 %v6867
        %vm6874 = vmor %vm6872, %vm6873
        %v6875 = vsel %vm6874, %v6867, %v6871
        %v6876 = vand.u32 2147483647, %v6723
        %vm6877 = vcmp.eq.f32.partialorder %v6876, 8.507059e+37
        %v6878 = vand.u32 %v6723, 2147483648
        %v6879 = vor.u32 1.1754944e-38, %v6878
        %v6880 = vsel %vm6877, %v6879, %v6875
        %v6881 = vmul.f32 1.0, %v6880
        %v6882 = vrcp.pop %v6724
        %v6883 = vmul.f32 %v6724, %v6882
        %v6884 = vsub.f32 1.0, %v6883
        %v6885 = vmul.f32 %v6882, %v6884
        %v6886 = vadd.f32 %v6882, %v6885
        %vm6887 = vweird.f32 %v6724
        %vm6888 = vweird.f32 %v6882
        %vm6889 = vmor %vm6887, %vm6888
        %v6890 = vsel %vm6889, %v6882, %v6886
        %v6891 = vand.u32 2147483647, %v6724
        %vm6892 = vcmp.eq.f32.partialorder %v6891, 8.507059e+37
        %v6893 = vand.u32 %v6724, 2147483648
        %v6894 = vor.u32 1.1754944e-38, %v6893
        %v6895 = vsel %vm6892, %v6894, %v6890
        %v6896 = vmul.f32 1.0, %v6895
        %v6897 = vrcp.pop %v6725
        %v6898 = vmul.f32 %v6725, %v6897
        %v6899 = vsub.f32 1.0, %v6898
        %v6900 = vmul.f32 %v6897, %v6899
        %v6901 = vadd.f32 %v6897, %v6900
        %vm6902 = vweird.f32 %v6725
        %vm6903 = vweird.f32 %v6897
        %vm6904 = vmor %vm6902, %vm6903
        %v6905 = vsel %vm6904, %v6897, %v6901
        %v6906 = vand.u32 2147483647, %v6725
        %vm6907 = vcmp.eq.f32.partialorder %v6906, 8.507059e+37
        %v6908 = vand.u32 %v6725, 2147483648
        %v6909 = vor.u32 1.1754944e-38, %v6908
        %v6910 = vsel %vm6907, %v6909, %v6905
        %v6911 = vmul.f32 1.0, %v6910
        %v6912 = vrcp.pop %v6726
        %v6913 = vmul.f32 %v6726, %v6912
        %v6914 = vsub.f32 1.0, %v6913
        %v6915 = vmul.f32 %v6912, %v6914
        %v6916 = vadd.f32 %v6912, %v6915
        %vm6917 = vweird.f32 %v6726
        %vm6918 = vweird.f32 %v6912
        %vm6919 = vmor %vm6917, %vm6918
        %v6920 = vsel %vm6919, %v6912, %v6916
        %v6921 = vand.u32 2147483647, %v6726
        %vm6922 = vcmp.eq.f32.partialorder %v6921, 8.507059e+37
        %v6923 = vand.u32 %v6726, 2147483648
        %v6924 = vor.u32 1.1754944e-38, %v6923
        %v6925 = vsel %vm6922, %v6924, %v6920
        %v6926 = vmul.f32 1.0, %v6925
        %v6927 = vrcp.pop %v6727
        %v6928 = vmul.f32 %v6727, %v6927
        %v6929 = vsub.f32 1.0, %v6928
        %v6930 = vmul.f32 %v6927, %v6929
        %v6931 = vadd.f32 %v6927, %v6930
        %vm6932 = vweird.f32 %v6727
        %vm6933 = vweird.f32 %v6927
        %vm6934 = vmor %vm6932, %vm6933
        %v6935 = vsel %vm6934, %v6927, %v6931
        %v6936 = vand.u32 2147483647, %v6727
        %vm6937 = vcmp.eq.f32.partialorder %v6936, 8.507059e+37
        %v6938 = vand.u32 %v6727, 2147483648
        %v6939 = vor.u32 1.1754944e-38, %v6938
        %v6940 = vsel %vm6937, %v6939, %v6935
        %v6941 = vmul.f32 1.0, %v6940
        %v6942 = vrcp.pop %v6728
        %v6943 = vmul.f32 %v6728, %v6942
        %v6944 = vsub.f32 1.0, %v6943
        %v6945 = vmul.f32 %v6942, %v6944
        %v6946 = vadd.f32 %v6942, %v6945
        %vm6947 = vweird.f32 %v6728
        %vm6948 = vweird.f32 %v6942
        %vm6949 = vmor %vm6947, %vm6948
        %v6950 = vsel %vm6949, %v6942, %v6946
        %v6951 = vand.u32 2147483647, %v6728
        %vm6952 = vcmp.eq.f32.partialorder %v6951, 8.507059e+37
        %v6953 = vand.u32 %v6728, 2147483648
        %v6954 = vor.u32 1.1754944e-38, %v6953
        %v6955 = vsel %vm6952, %v6954, %v6950
        %v6956 = vmul.f32 1.0, %v6955
        %v6957 = vrcp.pop %v6729
        %v6958 = vmul.f32 %v6729, %v6957
        %v6959 = vsub.f32 1.0, %v6958
        %v6960 = vmul.f32 %v6957, %v6959
        %v6961 = vadd.f32 %v6957, %v6960
        %vm6962 = vweird.f32 %v6729
        %vm6963 = vweird.f32 %v6957
        %vm6964 = vmor %vm6962, %vm6963
        %v6965 = vsel %vm6964, %v6957, %v6961
        %v6966 = vand.u32 2147483647, %v6729
        %vm6967 = vcmp.eq.f32.partialorder %v6966, 8.507059e+37
        %v6968 = vand.u32 %v6729, 2147483648
        %v6969 = vor.u32 1.1754944e-38, %v6968
        %v6970 = vsel %vm6967, %v6969, %v6965
        %v6971 = vmul.f32 1.0, %v6970
        %v6972 = vrcp.pop %v6730
        %v6973 = vmul.f32 %v6730, %v6972
        %v6974 = vsub.f32 1.0, %v6973
        %v6975 = vmul.f32 %v6972, %v6974
        %v6976 = vadd.f32 %v6972, %v6975
        %vm6977 = vweird.f32 %v6730
        %vm6978 = vweird.f32 %v6972
        %vm6979 = vmor %vm6977, %vm6978
        %v6980 = vsel %vm6979, %v6972, %v6976
        %v6981 = vand.u32 2147483647, %v6730
        %vm6982 = vcmp.eq.f32.partialorder %v6981, 8.507059e+37
        %v6983 = vand.u32 %v6730, 2147483648
        %v6984 = vor.u32 1.1754944e-38, %v6983
        %v6985 = vsel %vm6982, %v6984, %v6980
        %v6986 = vmul.f32 1.0, %v6985
        %v6987 = vrcp.pop %v6731
        %v6988 = vmul.f32 %v6731, %v6987
        %v6989 = vsub.f32 1.0, %v6988
        %v6990 = vmul.f32 %v6987, %v6989
        %v6991 = vadd.f32 %v6987, %v6990
        %vm6992 = vweird.f32 %v6731
        %vm6993 = vweird.f32 %v6987
        %vm6994 = vmor %vm6992, %vm6993
        %v6995 = vsel %vm6994, %v6987, %v6991
        %v6996 = vand.u32 2147483647, %v6731
        %vm6997 = vcmp.eq.f32.partialorder %v6996, 8.507059e+37
        %v6998 = vand.u32 %v6731, 2147483648
        %v6999 = vor.u32 1.1754944e-38, %v6998
        %v7000 = vsel %vm6997, %v6999, %v6995
        %v7001 = vmul.f32 1.0, %v7000
        %v7002 = vrcp.pop %v6732
        %v7003 = vmul.f32 %v6732, %v7002
        %v7004 = vsub.f32 1.0, %v7003
        %v7005 = vmul.f32 %v7002, %v7004
        %v7006 = vadd.f32 %v7002, %v7005
        %vm7007 = vweird.f32 %v6732
        %vm7008 = vweird.f32 %v7002
        %vm7009 = vmor %vm7007, %vm7008
        %v7010 = vsel %vm7009, %v7002, %v7006
        %v7011 = vand.u32 2147483647, %v6732
        %vm7012 = vcmp.eq.f32.partialorder %v7011, 8.507059e+37
        %v7013 = vand.u32 %v6732, 2147483648
        %v7014 = vor.u32 1.1754944e-38, %v7013
        %v7015 = vsel %vm7012, %v7014, %v7010
        %v7016 = vmul.f32 1.0, %v7015
        %v7017 = vrcp.pop %v6733
        %v7018 = vmul.f32 %v6733, %v7017
        %v7019 = vsub.f32 1.0, %v7018
        %v7020 = vmul.f32 %v7017, %v7019
        %v7021 = vadd.f32 %v7017, %v7020
        %vm7022 = vweird.f32 %v6733
        %vm7023 = vweird.f32 %v7017
        %vm7024 = vmor %vm7022, %vm7023
        %v7025 = vsel %vm7024, %v7017, %v7021
        %v7026 = vand.u32 2147483647, %v6733
        %vm7027 = vcmp.eq.f32.partialorder %v7026, 8.507059e+37
        %v7028 = vand.u32 %v6733, 2147483648
        %v7029 = vor.u32 1.1754944e-38, %v7028
        %v7030 = vsel %vm7027, %v7029, %v7025
        %v7031 = vmul.f32 1.0, %v7030
        %v7032 = vrcp.pop %v6734
        %v7033 = vmul.f32 %v6734, %v7032
        %v7034 = vsub.f32 1.0, %v7033
        %v7035 = vmul.f32 %v7032, %v7034
        %v7036 = vadd.f32 %v7032, %v7035
        %vm7037 = vweird.f32 %v6734
        %vm7038 = vweird.f32 %v7032
        %vm7039 = vmor %vm7037, %vm7038
        %v7040 = vsel %vm7039, %v7032, %v7036
        %v7041 = vand.u32 2147483647, %v6734
        %vm7042 = vcmp.eq.f32.partialorder %v7041, 8.507059e+37
        %v7043 = vand.u32 %v6734, 2147483648
        %v7044 = vor.u32 1.1754944e-38, %v7043
        %v7045 = vsel %vm7042, %v7044, %v7040
        %v7046 = vmul.f32 1.0, %v7045
        %v7047 = vrcp.pop %v6735
        %v7048 = vmul.f32 %v6735, %v7047
        %v7049 = vsub.f32 1.0, %v7048
        %v7050 = vmul.f32 %v7047, %v7049
        %v7051 = vadd.f32 %v7047, %v7050
        %vm7052 = vweird.f32 %v6735
        %vm7053 = vweird.f32 %v7047
        %vm7054 = vmor %vm7052, %vm7053
        %v7055 = vsel %vm7054, %v7047, %v7051
        %v7056 = vand.u32 2147483647, %v6735
        %vm7057 = vcmp.eq.f32.partialorder %v7056, 8.507059e+37
        %v7058 = vand.u32 %v6735, 2147483648
        %v7059 = vor.u32 1.1754944e-38, %v7058
        %v7060 = vsel %vm7057, %v7059, %v7055
        %v7061 = vmul.f32 1.0, %v7060
        %v7062 = vrcp.pop %v6736
        %v7063 = vmul.f32 %v6736, %v7062
        %v7064 = vsub.f32 1.0, %v7063
        %v7065 = vmul.f32 %v7062, %v7064
        %v7066 = vadd.f32 %v7062, %v7065
        %vm7067 = vweird.f32 %v6736
        %vm7068 = vweird.f32 %v7062
        %vm7069 = vmor %vm7067, %vm7068
        %v7070 = vsel %vm7069, %v7062, %v7066
        %v7071 = vand.u32 2147483647, %v6736
        %vm7072 = vcmp.eq.f32.partialorder %v7071, 8.507059e+37
        %v7073 = vand.u32 %v6736, 2147483648
        %v7074 = vor.u32 1.1754944e-38, %v7073
        %v7075 = vsel %vm7072, %v7074, %v7070
        %v7076 = vmul.f32 1.0, %v7075
        %v7077 = vrcp.pop %v6737
        %v7078 = vmul.f32 %v6737, %v7077
        %v7079 = vsub.f32 1.0, %v7078
        %v7080 = vmul.f32 %v7077, %v7079
        %v7081 = vadd.f32 %v7077, %v7080
        %vm7082 = vweird.f32 %v6737
        %vm7083 = vweird.f32 %v7077
        %vm7084 = vmor %vm7082, %vm7083
        %v7085 = vsel %vm7084, %v7077, %v7081
        %v7086 = vand.u32 2147483647, %v6737
        %vm7087 = vcmp.eq.f32.partialorder %v7086, 8.507059e+37
        %v7088 = vand.u32 %v6737, 2147483648
        %v7089 = vor.u32 1.1754944e-38, %v7088
        %v7090 = vsel %vm7087, %v7089, %v7085
        %v7091 = vmul.f32 1.0, %v7090
        %v7092 = vrcp.pop %v6738
        %v7093 = vmul.f32 %v6738, %v7092
        %v7094 = vsub.f32 1.0, %v7093
        %v7095 = vmul.f32 %v7092, %v7094
        %v7096 = vadd.f32 %v7092, %v7095
        %vm7097 = vweird.f32 %v6738
        %vm7098 = vweird.f32 %v7092
        %vm7099 = vmor %vm7097, %vm7098
        %v7100 = vsel %vm7099, %v7092, %v7096
        %v7101 = vand.u32 2147483647, %v6738
        %vm7102 = vcmp.eq.f32.partialorder %v7101, 8.507059e+37
        %v7103 = vand.u32 %v6738, 2147483648
        %v7104 = vor.u32 1.1754944e-38, %v7103
        %v7105 = vsel %vm7102, %v7104, %v7100
        %v7106 = vmul.f32 1.0, %v7105
        %v7107 = vrcp.pop %v6739
        %v7108 = vmul.f32 %v6739, %v7107
        %v7109 = vsub.f32 1.0, %v7108
        %v7110 = vmul.f32 %v7107, %v7109
        %v7111 = vadd.f32 %v7107, %v7110
        %vm7112 = vweird.f32 %v6739
        %vm7113 = vweird.f32 %v7107
        %vm7114 = vmor %vm7112, %vm7113
        %v7115 = vsel %vm7114, %v7107, %v7111
        %v7116 = vand.u32 2147483647, %v6739
        %vm7117 = vcmp.eq.f32.partialorder %v7116, 8.507059e+37
        %v7118 = vand.u32 %v6739, 2147483648
        %v7119 = vor.u32 1.1754944e-38, %v7118
        %v7120 = vsel %vm7117, %v7119, %v7115
        %v7121 = vmul.f32 1.0, %v7120
        %v7122 = vrcp.pop %v6740
        %v7123 = vmul.f32 %v6740, %v7122
        %v7124 = vsub.f32 1.0, %v7123
        %v7125 = vmul.f32 %v7122, %v7124
        %v7126 = vadd.f32 %v7122, %v7125
        %vm7127 = vweird.f32 %v6740
        %vm7128 = vweird.f32 %v7122
        %vm7129 = vmor %vm7127, %vm7128
        %v7130 = vsel %vm7129, %v7122, %v7126
        %v7131 = vand.u32 2147483647, %v6740
        %vm7132 = vcmp.eq.f32.partialorder %v7131, 8.507059e+37
        %v7133 = vand.u32 %v6740, 2147483648
        %v7134 = vor.u32 1.1754944e-38, %v7133
        %v7135 = vsel %vm7132, %v7134, %v7130
        %v7136 = vmul.f32 1.0, %v7135
        %v7137 = vrcp.pop %v6741
        %v7138 = vmul.f32 %v6741, %v7137
        %v7139 = vsub.f32 1.0, %v7138
        %v7140 = vmul.f32 %v7137, %v7139
        %v7141 = vadd.f32 %v7137, %v7140
        %vm7142 = vweird.f32 %v6741
        %vm7143 = vweird.f32 %v7137
        %vm7144 = vmor %vm7142, %vm7143
        %v7145 = vsel %vm7144, %v7137, %v7141
        %v7146 = vand.u32 2147483647, %v6741
        %vm7147 = vcmp.eq.f32.partialorder %v7146, 8.507059e+37
        %v7148 = vand.u32 %v6741, 2147483648
        %v7149 = vor.u32 1.1754944e-38, %v7148
        %v7150 = vsel %vm7147, %v7149, %v7145
        %v7151 = vmul.f32 1.0, %v7150
        %v7152 = vrcp.pop %v6742
        %v7153 = vmul.f32 %v6742, %v7152
        %v7154 = vsub.f32 1.0, %v7153
        %v7155 = vmul.f32 %v7152, %v7154
        %v7156 = vadd.f32 %v7152, %v7155
        %vm7157 = vweird.f32 %v6742
        %vm7158 = vweird.f32 %v7152
        %vm7159 = vmor %vm7157, %vm7158
        %v7160 = vsel %vm7159, %v7152, %v7156
        %v7161 = vand.u32 2147483647, %v6742
        %vm7162 = vcmp.eq.f32.partialorder %v7161, 8.507059e+37
        %v7163 = vand.u32 %v6742, 2147483648
        %v7164 = vor.u32 1.1754944e-38, %v7163
        %v7165 = vsel %vm7162, %v7164, %v7160
        %v7166 = vmul.f32 1.0, %v7165
        %v7167 = vrcp.pop %v6743
        %v7168 = vmul.f32 %v6743, %v7167
        %v7169 = vsub.f32 1.0, %v7168
        %v7170 = vmul.f32 %v7167, %v7169
        %v7171 = vadd.f32 %v7167, %v7170
        %vm7172 = vweird.f32 %v6743
        %vm7173 = vweird.f32 %v7167
        %vm7174 = vmor %vm7172, %vm7173
        %v7175 = vsel %vm7174, %v7167, %v7171
        %v7176 = vand.u32 2147483647, %v6743
        %vm7177 = vcmp.eq.f32.partialorder %v7176, 8.507059e+37
        %v7178 = vand.u32 %v6743, 2147483648
        %v7179 = vor.u32 1.1754944e-38, %v7178
        %v7180 = vsel %vm7177, %v7179, %v7175
        %v7181 = vmul.f32 1.0, %v7180
        %v7182 = vrcp.pop %v6744
        %v7183 = vmul.f32 %v6744, %v7182
        %v7184 = vsub.f32 1.0, %v7183
        %v7185 = vmul.f32 %v7182, %v7184
        %v7186 = vadd.f32 %v7182, %v7185
        %vm7187 = vweird.f32 %v6744
        %vm7188 = vweird.f32 %v7182
        %vm7189 = vmor %vm7187, %vm7188
        %v7190 = vsel %vm7189, %v7182, %v7186
        %v7191 = vand.u32 2147483647, %v6744
        %vm7192 = vcmp.eq.f32.partialorder %v7191, 8.507059e+37
        %v7193 = vand.u32 %v6744, 2147483648
        %v7194 = vor.u32 1.1754944e-38, %v7193
        %v7195 = vsel %vm7192, %v7194, %v7190
        %v7196 = vmul.f32 1.0, %v7195
        %v7197 = vrcp.pop %v6745
        %v7198 = vmul.f32 %v6745, %v7197
        %v7199 = vsub.f32 1.0, %v7198
        %v7200 = vmul.f32 %v7197, %v7199
        %v7201 = vadd.f32 %v7197, %v7200
        %vm7202 = vweird.f32 %v6745
        %vm7203 = vweird.f32 %v7197
        %vm7204 = vmor %vm7202, %vm7203
        %v7205 = vsel %vm7204, %v7197, %v7201
        %v7206 = vand.u32 2147483647, %v6745
        %vm7207 = vcmp.eq.f32.partialorder %v7206, 8.507059e+37
        %v7208 = vand.u32 %v6745, 2147483648
        %v7209 = vor.u32 1.1754944e-38, %v7208
        %v7210 = vsel %vm7207, %v7209, %v7205
        %v7211 = vmul.f32 1.0, %v7210
        %v7212 = vrcp.pop %v6746
        %v7213 = vmul.f32 %v6746, %v7212
        %v7214 = vsub.f32 1.0, %v7213
        %v7215 = vmul.f32 %v7212, %v7214
        %v7216 = vadd.f32 %v7212, %v7215
        %vm7217 = vweird.f32 %v6746
        %vm7218 = vweird.f32 %v7212
        %vm7219 = vmor %vm7217, %vm7218
        %v7220 = vsel %vm7219, %v7212, %v7216
        %v7221 = vand.u32 2147483647, %v6746
        %vm7222 = vcmp.eq.f32.partialorder %v7221, 8.507059e+37
        %v7223 = vand.u32 %v6746, 2147483648
        %v7224 = vor.u32 1.1754944e-38, %v7223
        %v7225 = vsel %vm7222, %v7224, %v7220
        %v7226 = vmul.f32 1.0, %v7225
        %7228 = vset.pattern.permute.xlu0 32
        %7229 = vperm.xlu0 %7228, %v6761
        %v7230 = vpop.permute.xlu0 %7229
        %7233 = vset.pattern.permute.xlu0 32
        %7234 = vperm.xlu0 %7233, %v6776
        %v7235 = vpop.permute.xlu0 %7234
        %7238 = vset.pattern.permute.xlu0 32
        %7239 = vperm.xlu0 %7238, %v6791
        %v7240 = vpop.permute.xlu0 %7239
        %7243 = vset.pattern.permute.xlu0 32
        %7244 = vperm.xlu0 %7243, %v6806
        %v7245 = vpop.permute.xlu0 %7244
        %7248 = vset.pattern.permute.xlu0 32
        %7249 = vperm.xlu0 %7248, %v6821
        %v7250 = vpop.permute.xlu0 %7249
        %7253 = vset.pattern.permute.xlu0 32
        %7254 = vperm.xlu0 %7253, %v6836
        %v7255 = vpop.permute.xlu0 %7254
        %7258 = vset.pattern.permute.xlu0 32
        %7259 = vperm.xlu0 %7258, %v6851
        %v7260 = vpop.permute.xlu0 %7259
        %7263 = vset.pattern.permute.xlu0 32
        %7264 = vperm.xlu0 %7263, %v6866
        %v7265 = vpop.permute.xlu0 %7264
        %7268 = vset.pattern.permute.xlu0 32
        %7269 = vperm.xlu0 %7268, %v6881
        %v7270 = vpop.permute.xlu0 %7269
        %7273 = vset.pattern.permute.xlu0 32
        %7274 = vperm.xlu0 %7273, %v6896
        %v7275 = vpop.permute.xlu0 %7274
        %7278 = vset.pattern.permute.xlu0 32
        %7279 = vperm.xlu0 %7278, %v6911
        %v7280 = vpop.permute.xlu0 %7279
        %7283 = vset.pattern.permute.xlu0 32
        %7284 = vperm.xlu0 %7283, %v6926
        %v7285 = vpop.permute.xlu0 %7284
        %7288 = vset.pattern.permute.xlu0 32
        %7289 = vperm.xlu0 %7288, %v6941
        %v7290 = vpop.permute.xlu0 %7289
        %7293 = vset.pattern.permute.xlu0 32
        %7294 = vperm.xlu0 %7293, %v6956
        %v7295 = vpop.permute.xlu0 %7294
        %7298 = vset.pattern.permute.xlu0 32
        %7299 = vperm.xlu0 %7298, %v6971
        %v7300 = vpop.permute.xlu0 %7299
        %7303 = vset.pattern.permute.xlu0 32
        %7304 = vperm.xlu0 %7303, %v6986
        %v7305 = vpop.permute.xlu0 %7304
        %7308 = vset.pattern.permute.xlu0 32
        %7309 = vperm.xlu0 %7308, %v7001
        %v7310 = vpop.permute.xlu0 %7309
        %7313 = vset.pattern.permute.xlu0 32
        %7314 = vperm.xlu0 %7313, %v7016
        %v7315 = vpop.permute.xlu0 %7314
        %7318 = vset.pattern.permute.xlu0 32
        %7319 = vperm.xlu0 %7318, %v7031
        %v7320 = vpop.permute.xlu0 %7319
        %7323 = vset.pattern.permute.xlu0 32
        %7324 = vperm.xlu0 %7323, %v7046
        %v7325 = vpop.permute.xlu0 %7324
        %7328 = vset.pattern.permute.xlu0 32
        %7329 = vperm.xlu0 %7328, %v7061
        %v7330 = vpop.permute.xlu0 %7329
        %7333 = vset.pattern.permute.xlu0 32
        %7334 = vperm.xlu0 %7333, %v7076
        %v7335 = vpop.permute.xlu0 %7334
        %7338 = vset.pattern.permute.xlu0 32
        %7339 = vperm.xlu0 %7338, %v7091
        %v7340 = vpop.permute.xlu0 %7339
        %7343 = vset.pattern.permute.xlu0 32
        %7344 = vperm.xlu0 %7343, %v7106
        %v7345 = vpop.permute.xlu0 %7344
        %7348 = vset.pattern.permute.xlu0 32
        %7349 = vperm.xlu0 %7348, %v7121
        %v7350 = vpop.permute.xlu0 %7349
        %7353 = vset.pattern.permute.xlu0 32
        %7354 = vperm.xlu0 %7353, %v7136
        %v7355 = vpop.permute.xlu0 %7354
        %7358 = vset.pattern.permute.xlu0 32
        %7359 = vperm.xlu0 %7358, %v7151
        %v7360 = vpop.permute.xlu0 %7359
        %7363 = vset.pattern.permute.xlu0 32
        %7364 = vperm.xlu0 %7363, %v7166
        %v7365 = vpop.permute.xlu0 %7364
        %7368 = vset.pattern.permute.xlu0 32
        %7369 = vperm.xlu0 %7368, %v7181
        %v7370 = vpop.permute.xlu0 %7369
        %7373 = vset.pattern.permute.xlu0 32
        %7374 = vperm.xlu0 %7373, %v7196
        %v7375 = vpop.permute.xlu0 %7374
        %7378 = vset.pattern.permute.xlu0 32
        %7379 = vperm.xlu0 %7378, %v7211
        %v7380 = vpop.permute.xlu0 %7379
        %7383 = vset.pattern.permute.xlu0 32
        %7384 = vperm.xlu0 %7383, %v7226
        %v7385 = vpop.permute.xlu0 %7384
        %v7387 = vmul.f32 %v7230, %v6587
        %v7388 = vmul.f32 %v7235, %v6588
        %v7389 = vmul.f32 %v7240, %v6589
        %v7390 = vmul.f32 %v7245, %v6590
        %v7391 = vmul.f32 %v7250, %v6591
        %v7392 = vmul.f32 %v7255, %v6592
        %v7393 = vmul.f32 %v7260, %v6593
        %v7394 = vmul.f32 %v7265, %v6594
        %v7395 = vmul.f32 %v7270, %v6595
        %v7396 = vmul.f32 %v7275, %v6596
        %v7397 = vmul.f32 %v7280, %v6597
        %v7398 = vmul.f32 %v7285, %v6598
        %v7399 = vmul.f32 %v7290, %v6599
        %v7400 = vmul.f32 %v7295, %v6600
        %v7401 = vmul.f32 %v7300, %v6601
        %v7402 = vmul.f32 %v7305, %v6602
        %v7403 = vmul.f32 %v7310, %v6603
        %v7404 = vmul.f32 %v7315, %v6604
        %v7405 = vmul.f32 %v7320, %v6605
        %v7406 = vmul.f32 %v7325, %v6606
        %v7407 = vmul.f32 %v7330, %v6607
        %v7408 = vmul.f32 %v7335, %v6608
        %v7409 = vmul.f32 %v7340, %v6609
        %v7410 = vmul.f32 %v7345, %v6610
        %v7411 = vmul.f32 %v7350, %v6611
        %v7412 = vmul.f32 %v7355, %v6612
        %v7413 = vmul.f32 %v7360, %v6613
        %v7414 = vmul.f32 %v7365, %v6614
        %v7415 = vmul.f32 %v7370, %v6615
        %v7416 = vmul.f32 %v7375, %v6616
        %v7417 = vmul.f32 %v7380, %v6617
        %v7418 = vmul.f32 %v7385, %v6618
        %v7419 = vmul.f32 %v7387, %v803
        %v7420 = vmul.f32 %v7388, %v808
        %v7421 = vmul.f32 %v7389, %v813
        %v7422 = vmul.f32 %v7390, %v818
        %v7423 = vmul.f32 %v7391, %v823
        %v7424 = vmul.f32 %v7392, %v828
        %v7425 = vmul.f32 %v7393, %v833
        %v7426 = vmul.f32 %v7394, %v838
        %v7427 = vmul.f32 %v7395, %v843
        %v7428 = vmul.f32 %v7396, %v848
        %v7429 = vmul.f32 %v7397, %v853
        %v7430 = vmul.f32 %v7398, %v858
        %v7431 = vmul.f32 %v7399, %v863
        %v7432 = vmul.f32 %v7400, %v868
        %v7433 = vmul.f32 %v7401, %v873
        %v7434 = vmul.f32 %v7402, %v878
        %v7435 = vmul.f32 %v7403, %v883
        %v7436 = vmul.f32 %v7404, %v888
        %v7437 = vmul.f32 %v7405, %v893
        %v7438 = vmul.f32 %v7406, %v898
        %v7439 = vmul.f32 %v7407, %v903
        %v7440 = vmul.f32 %v7408, %v908
        %v7441 = vmul.f32 %v7409, %v913
        %v7442 = vmul.f32 %v7410, %v918
        %v7443 = vmul.f32 %v7411, %v923
        %v7444 = vmul.f32 %v7412, %v928
        %v7445 = vmul.f32 %v7413, %v933
        %v7446 = vmul.f32 %v7414, %v938
        %v7447 = vmul.f32 %v7415, %v943
        %v7448 = vmul.f32 %v7416, %v948
        %v7449 = vmul.f32 %v7417, %v953
        %v7450 = vmul.f32 %v7418, %v958
        %v7451 = vsel %vm1475, %v7419, 0.0
        %v7452 = vsel %vm1475, %v7420, 0.0
        %v7453 = vadd.f32 %v7451, %v7452
        %v7454 = vrot.slane %v7453, 4
        %v7455 = vadd.f32 %v7453, %v7454
        %v7456 = vrot.slane %v7455, 2
        %v7457 = vadd.f32 %v7455, %v7456
        %v7458 = vrot.slane %v7457, 1
        %v7459 = vadd.f32 %v7457, %v7458
        %v7460 = vsel %vm1475, %v7421, 0.0
        %v7461 = vsel %vm1475, %v7422, 0.0
        %v7462 = vadd.f32 %v7460, %v7461
        %v7463 = vrot.slane %v7462, 4
        %v7464 = vadd.f32 %v7462, %v7463
        %v7465 = vrot.slane %v7464, 2
        %v7466 = vadd.f32 %v7464, %v7465
        %v7467 = vrot.slane %v7466, 1
        %v7468 = vadd.f32 %v7466, %v7467
        %v7469 = vsel %vm1475, %v7423, 0.0
        %v7470 = vsel %vm1475, %v7424, 0.0
        %v7471 = vadd.f32 %v7469, %v7470
        %v7472 = vrot.slane %v7471, 4
        %v7473 = vadd.f32 %v7471, %v7472
        %v7474 = vrot.slane %v7473, 2
        %v7475 = vadd.f32 %v7473, %v7474
        %v7476 = vrot.slane %v7475, 1
        %v7477 = vadd.f32 %v7475, %v7476
        %v7478 = vsel %vm1475, %v7425, 0.0
        %v7479 = vsel %vm1475, %v7426, 0.0
        %v7480 = vadd.f32 %v7478, %v7479
        %v7481 = vrot.slane %v7480, 4
        %v7482 = vadd.f32 %v7480, %v7481
        %v7483 = vrot.slane %v7482, 2
        %v7484 = vadd.f32 %v7482, %v7483
        %v7485 = vrot.slane %v7484, 1
        %v7486 = vadd.f32 %v7484, %v7485
        %v7487 = vsel %vm1475, %v7427, 0.0
        %v7488 = vsel %vm1475, %v7428, 0.0
        %v7489 = vadd.f32 %v7487, %v7488
        %v7490 = vrot.slane %v7489, 4
        %v7491 = vadd.f32 %v7489, %v7490
        %v7492 = vrot.slane %v7491, 2
        %v7493 = vadd.f32 %v7491, %v7492
        %v7494 = vrot.slane %v7493, 1
        %v7495 = vadd.f32 %v7493, %v7494
        %v7496 = vsel %vm1475, %v7429, 0.0
        %v7497 = vsel %vm1475, %v7430, 0.0
        %v7498 = vadd.f32 %v7496, %v7497
        %v7499 = vrot.slane %v7498, 4
        %v7500 = vadd.f32 %v7498, %v7499
        %v7501 = vrot.slane %v7500, 2
        %v7502 = vadd.f32 %v7500, %v7501
        %v7503 = vrot.slane %v7502, 1
        %v7504 = vadd.f32 %v7502, %v7503
        %v7505 = vsel %vm1475, %v7431, 0.0
        %v7506 = vsel %vm1475, %v7432, 0.0
        %v7507 = vadd.f32 %v7505, %v7506
        %v7508 = vrot.slane %v7507, 4
        %v7509 = vadd.f32 %v7507, %v7508
        %v7510 = vrot.slane %v7509, 2
        %v7511 = vadd.f32 %v7509, %v7510
        %v7512 = vrot.slane %v7511, 1
        %v7513 = vadd.f32 %v7511, %v7512
        %v7514 = vsel %vm1475, %v7433, 0.0
        %v7515 = vsel %vm1475, %v7434, 0.0
        %v7516 = vadd.f32 %v7514, %v7515
        %v7517 = vrot.slane %v7516, 4
        %v7518 = vadd.f32 %v7516, %v7517
        %v7519 = vrot.slane %v7518, 2
        %v7520 = vadd.f32 %v7518, %v7519
        %v7521 = vrot.slane %v7520, 1
        %v7522 = vadd.f32 %v7520, %v7521
        %v7523 = vsel %vm1475, %v7435, 0.0
        %v7524 = vsel %vm1475, %v7436, 0.0
        %v7525 = vadd.f32 %v7523, %v7524
        %v7526 = vrot.slane %v7525, 4
        %v7527 = vadd.f32 %v7525, %v7526
        %v7528 = vrot.slane %v7527, 2
        %v7529 = vadd.f32 %v7527, %v7528
        %v7530 = vrot.slane %v7529, 1
        %v7531 = vadd.f32 %v7529, %v7530
        %v7532 = vsel %vm1475, %v7437, 0.0
        %v7533 = vsel %vm1475, %v7438, 0.0
        %v7534 = vadd.f32 %v7532, %v7533
        %v7535 = vrot.slane %v7534, 4
        %v7536 = vadd.f32 %v7534, %v7535
        %v7537 = vrot.slane %v7536, 2
        %v7538 = vadd.f32 %v7536, %v7537
        %v7539 = vrot.slane %v7538, 1
        %v7540 = vadd.f32 %v7538, %v7539
        %v7541 = vsel %vm1475, %v7439, 0.0
        %v7542 = vsel %vm1475, %v7440, 0.0
        %v7543 = vadd.f32 %v7541, %v7542
        %v7544 = vrot.slane %v7543, 4
        %v7545 = vadd.f32 %v7543, %v7544
        %v7546 = vrot.slane %v7545, 2
        %v7547 = vadd.f32 %v7545, %v7546
        %v7548 = vrot.slane %v7547, 1
        %v7549 = vadd.f32 %v7547, %v7548
        %v7550 = vsel %vm1475, %v7441, 0.0
        %v7551 = vsel %vm1475, %v7442, 0.0
        %v7552 = vadd.f32 %v7550, %v7551
        %v7553 = vrot.slane %v7552, 4
        %v7554 = vadd.f32 %v7552, %v7553
        %v7555 = vrot.slane %v7554, 2
        %v7556 = vadd.f32 %v7554, %v7555
        %v7557 = vrot.slane %v7556, 1
        %v7558 = vadd.f32 %v7556, %v7557
        %v7559 = vsel %vm1475, %v7443, 0.0
        %v7560 = vsel %vm1475, %v7444, 0.0
        %v7561 = vadd.f32 %v7559, %v7560
        %v7562 = vrot.slane %v7561, 4
        %v7563 = vadd.f32 %v7561, %v7562
        %v7564 = vrot.slane %v7563, 2
        %v7565 = vadd.f32 %v7563, %v7564
        %v7566 = vrot.slane %v7565, 1
        %v7567 = vadd.f32 %v7565, %v7566
        %v7568 = vsel %vm1475, %v7445, 0.0
        %v7569 = vsel %vm1475, %v7446, 0.0
        %v7570 = vadd.f32 %v7568, %v7569
        %v7571 = vrot.slane %v7570, 4
        %v7572 = vadd.f32 %v7570, %v7571
        %v7573 = vrot.slane %v7572, 2
        %v7574 = vadd.f32 %v7572, %v7573
        %v7575 = vrot.slane %v7574, 1
        %v7576 = vadd.f32 %v7574, %v7575
        %v7577 = vsel %vm1475, %v7447, 0.0
        %v7578 = vsel %vm1475, %v7448, 0.0
        %v7579 = vadd.f32 %v7577, %v7578
        %v7580 = vrot.slane %v7579, 4
        %v7581 = vadd.f32 %v7579, %v7580
        %v7582 = vrot.slane %v7581, 2
        %v7583 = vadd.f32 %v7581, %v7582
        %v7584 = vrot.slane %v7583, 1
        %v7585 = vadd.f32 %v7583, %v7584
        %v7586 = vsel %vm1475, %v7449, 0.0
        %v7587 = vsel %vm1475, %v7450, 0.0
        %v7588 = vadd.f32 %v7586, %v7587
        %v7589 = vrot.slane %v7588, 4
        %v7590 = vadd.f32 %v7588, %v7589
        %v7591 = vrot.slane %v7590, 2
        %v7592 = vadd.f32 %v7590, %v7591
        %v7593 = vrot.slane %v7592, 1
        %v7594 = vadd.f32 %v7592, %v7593
        %v7595 = vsel %vm1475, %v7419, -inf
        %v7596 = vsel %vm1475, %v7420, -inf
        %v7597 = vmax.f32 %v7595, %v7596
        %v7598 = vrot.slane %v7597, 4
        %v7599 = vmax.f32 %v7597, %v7598
        %v7600 = vrot.slane %v7599, 2
        %v7601 = vmax.f32 %v7599, %v7600
        %v7602 = vrot.slane %v7601, 1
        %v7603 = vmax.f32 %v7601, %v7602
        %v7604 = vsel %vm1475, %v7421, -inf
        %v7605 = vsel %vm1475, %v7422, -inf
        %v7606 = vmax.f32 %v7604, %v7605
        %v7607 = vrot.slane %v7606, 4
        %v7608 = vmax.f32 %v7606, %v7607
        %v7609 = vrot.slane %v7608, 2
        %v7610 = vmax.f32 %v7608, %v7609
        %v7611 = vrot.slane %v7610, 1
        %v7612 = vmax.f32 %v7610, %v7611
        %v7613 = vsel %vm1475, %v7423, -inf
        %v7614 = vsel %vm1475, %v7424, -inf
        %v7615 = vmax.f32 %v7613, %v7614
        %v7616 = vrot.slane %v7615, 4
        %v7617 = vmax.f32 %v7615, %v7616
        %v7618 = vrot.slane %v7617, 2
        %v7619 = vmax.f32 %v7617, %v7618
        %v7620 = vrot.slane %v7619, 1
        %v7621 = vmax.f32 %v7619, %v7620
        %v7622 = vsel %vm1475, %v7425, -inf
        %v7623 = vsel %vm1475, %v7426, -inf
        %v7624 = vmax.f32 %v7622, %v7623
        %v7625 = vrot.slane %v7624, 4
        %v7626 = vmax.f32 %v7624, %v7625
        %v7627 = vrot.slane %v7626, 2
        %v7628 = vmax.f32 %v7626, %v7627
        %v7629 = vrot.slane %v7628, 1
        %v7630 = vmax.f32 %v7628, %v7629
        %v7631 = vsel %vm1475, %v7427, -inf
        %v7632 = vsel %vm1475, %v7428, -inf
        %v7633 = vmax.f32 %v7631, %v7632
        %v7634 = vrot.slane %v7633, 4
        %v7635 = vmax.f32 %v7633, %v7634
        %v7636 = vrot.slane %v7635, 2
        %v7637 = vmax.f32 %v7635, %v7636
        %v7638 = vrot.slane %v7637, 1
        %v7639 = vmax.f32 %v7637, %v7638
        %v7640 = vsel %vm1475, %v7429, -inf
        %v7641 = vsel %vm1475, %v7430, -inf
        %v7642 = vmax.f32 %v7640, %v7641
        %v7643 = vrot.slane %v7642, 4
        %v7644 = vmax.f32 %v7642, %v7643
        %v7645 = vrot.slane %v7644, 2
        %v7646 = vmax.f32 %v7644, %v7645
        %v7647 = vrot.slane %v7646, 1
        %v7648 = vmax.f32 %v7646, %v7647
        %v7649 = vsel %vm1475, %v7431, -inf
        %v7650 = vsel %vm1475, %v7432, -inf
        %v7651 = vmax.f32 %v7649, %v7650
        %v7652 = vrot.slane %v7651, 4
        %v7653 = vmax.f32 %v7651, %v7652
        %v7654 = vrot.slane %v7653, 2
        %v7655 = vmax.f32 %v7653, %v7654
        %v7656 = vrot.slane %v7655, 1
        %v7657 = vmax.f32 %v7655, %v7656
        %v7658 = vsel %vm1475, %v7433, -inf
        %v7659 = vsel %vm1475, %v7434, -inf
        %v7660 = vmax.f32 %v7658, %v7659
        %v7661 = vrot.slane %v7660, 4
        %v7662 = vmax.f32 %v7660, %v7661
        %v7663 = vrot.slane %v7662, 2
        %v7664 = vmax.f32 %v7662, %v7663
        %v7665 = vrot.slane %v7664, 1
        %v7666 = vmax.f32 %v7664, %v7665
        %v7667 = vsel %vm1475, %v7435, -inf
        %v7668 = vsel %vm1475, %v7436, -inf
        %v7669 = vmax.f32 %v7667, %v7668
        %v7670 = vrot.slane %v7669, 4
        %v7671 = vmax.f32 %v7669, %v7670
        %v7672 = vrot.slane %v7671, 2
        %v7673 = vmax.f32 %v7671, %v7672
        %v7674 = vrot.slane %v7673, 1
        %v7675 = vmax.f32 %v7673, %v7674
        %v7676 = vsel %vm1475, %v7437, -inf
        %v7677 = vsel %vm1475, %v7438, -inf
        %v7678 = vmax.f32 %v7676, %v7677
        %v7679 = vrot.slane %v7678, 4
        %v7680 = vmax.f32 %v7678, %v7679
        %v7681 = vrot.slane %v7680, 2
        %v7682 = vmax.f32 %v7680, %v7681
        %v7683 = vrot.slane %v7682, 1
        %v7684 = vmax.f32 %v7682, %v7683
        %v7685 = vsel %vm1475, %v7439, -inf
        %v7686 = vsel %vm1475, %v7440, -inf
        %v7687 = vmax.f32 %v7685, %v7686
        %v7688 = vrot.slane %v7687, 4
        %v7689 = vmax.f32 %v7687, %v7688
        %v7690 = vrot.slane %v7689, 2
        %v7691 = vmax.f32 %v7689, %v7690
        %v7692 = vrot.slane %v7691, 1
        %v7693 = vmax.f32 %v7691, %v7692
        %v7694 = vsel %vm1475, %v7441, -inf
        %v7695 = vsel %vm1475, %v7442, -inf
        %v7696 = vmax.f32 %v7694, %v7695
        %v7697 = vrot.slane %v7696, 4
        %v7698 = vmax.f32 %v7696, %v7697
        %v7699 = vrot.slane %v7698, 2
        %v7700 = vmax.f32 %v7698, %v7699
        %v7701 = vrot.slane %v7700, 1
        %v7702 = vmax.f32 %v7700, %v7701
        %v7703 = vsel %vm1475, %v7443, -inf
        %v7704 = vsel %vm1475, %v7444, -inf
        %v7705 = vmax.f32 %v7703, %v7704
        %v7706 = vrot.slane %v7705, 4
        %v7707 = vmax.f32 %v7705, %v7706
        %v7708 = vrot.slane %v7707, 2
        %v7709 = vmax.f32 %v7707, %v7708
        %v7710 = vrot.slane %v7709, 1
        %v7711 = vmax.f32 %v7709, %v7710
        %v7712 = vsel %vm1475, %v7445, -inf
        %v7713 = vsel %vm1475, %v7446, -inf
        %v7714 = vmax.f32 %v7712, %v7713
        %v7715 = vrot.slane %v7714, 4
        %v7716 = vmax.f32 %v7714, %v7715
        %v7717 = vrot.slane %v7716, 2
        %v7718 = vmax.f32 %v7716, %v7717
        %v7719 = vrot.slane %v7718, 1
        %v7720 = vmax.f32 %v7718, %v7719
        %v7721 = vsel %vm1475, %v7447, -inf
        %v7722 = vsel %vm1475, %v7448, -inf
        %v7723 = vmax.f32 %v7721, %v7722
        %v7724 = vrot.slane %v7723, 4
        %v7725 = vmax.f32 %v7723, %v7724
        %v7726 = vrot.slane %v7725, 2
        %v7727 = vmax.f32 %v7725, %v7726
        %v7728 = vrot.slane %v7727, 1
        %v7729 = vmax.f32 %v7727, %v7728
        %v7730 = vsel %vm1475, %v7449, -inf
        %v7731 = vsel %vm1475, %v7450, -inf
        %v7732 = vmax.f32 %v7730, %v7731
        %v7733 = vrot.slane %v7732, 4
        %v7734 = vmax.f32 %v7732, %v7733
        %v7735 = vrot.slane %v7734, 2
        %v7736 = vmax.f32 %v7734, %v7735
        %v7737 = vrot.slane %v7736, 1
        %v7738 = vmax.f32 %v7736, %v7737
        %v7739 = vmul.f32 %v7459, %v7603
        %v7740 = vmul.f32 %v7468, %v7612
        %v7741 = vmul.f32 %v7477, %v7621
        %v7742 = vmul.f32 %v7486, %v7630
        %v7743 = vmul.f32 %v7495, %v7639
        %v7744 = vmul.f32 %v7504, %v7648
        %v7745 = vmul.f32 %v7513, %v7657
        %v7746 = vmul.f32 %v7522, %v7666
        %v7747 = vmul.f32 %v7531, %v7675
        %v7748 = vmul.f32 %v7540, %v7684
        %v7749 = vmul.f32 %v7549, %v7693
        %v7750 = vmul.f32 %v7558, %v7702
        %v7751 = vmul.f32 %v7567, %v7711
        %v7752 = vmul.f32 %v7576, %v7720
        %v7753 = vmul.f32 %v7585, %v7729
        %v7754 = vmul.f32 %v7594, %v7738
        %vm7771 = vcmask 1041409
        %v7772 = vsel %vm7771, %v7740, %v7739
        %vm7773 = vcmask 1042434
        %v7774 = vsel %vm7773, %v7741, %v7772
        %vm7775 = vcmask 1043459
        %v7776 = vsel %vm7775, %v7742, %v7774
        %vm7777 = vcmask 1044484
        %v7778 = vsel %vm7777, %v7743, %v7776
        %vm7779 = vcmask 1045509
        %v7780 = vsel %vm7779, %v7744, %v7778
        %vm7781 = vcmask 1046534
        %v7782 = vsel %vm7781, %v7745, %v7780
        %vm7783 = vcmask 1047559
        %v7784 = vsel %vm7783, %v7746, %v7782
        %v7785 = vsel %vm7771, %v7748, %v7747
        %v7786 = vsel %vm7773, %v7749, %v7785
        %v7787 = vsel %vm7775, %v7750, %v7786
        %v7788 = vsel %vm7777, %v7751, %v7787
        %v7789 = vsel %vm7779, %v7752, %v7788
        %v7790 = vsel %vm7781, %v7753, %v7789
        %v7791 = vsel %vm7783, %v7754, %v7790
        %7794 = vst.msk [vmem:[%s468] sm:$0xff] %vm1475, %v7784
        %7795 = vst.msk [vmem:[%s468 + $0x8] sm:$0xff] %vm1475, %v7791
        %s7796 = sand.u32 %s323, 1
        %s7797 = scalar_lea.sflag [#allocation3], %s7796
        %s7798 = sand.u32 %s323, 1
        %s7799 = smul.addr %s7798, 16
        %s7800 = scalar_lea.vmem [#allocation2], %s7799
        // Predicated region
        $region73: #{tpu_custom_call.1} parent=71 // pred_check
          %p7801 = pneg %p333
        $region74: #{tpu_custom_call.1} parent=71 // pred_check_branch
          %7803 = sbr.rel (%p7801) target = $region76
        $region75: #{tpu_custom_call.1} parent=71 // pred_region
          %s7804 = smul.u32 2, %s27
          %7806 = vsyncadd %s7797, 0
          %s7807 = smul.addr %s7804, 8
          %s7808 = scalar_lea.hbm %s13, %s7807
          %s7809 = sshll.u32 %s7800, 4
          %s7810 = int_to_ptr.vmem [resolvable:$true] %s7809
          %s7811 = sshll.u32 %s7808, 4
          %s7812 = int_to_ptr.hbm [resolvable:$true] %s7811
          %7817 = dma.vmem_to_hbm [thread:$0]  %s7810, 256, %s7812, %s7797, 128, 128, 8
        $region76: #{tpu_custom_call.1} parent=71 // pred_fallthru
          _
      $region72: #{tpu_custom_call.1} parent=5 // pred_fallthru
        _
      %p7818 = scmp.le.s32.totalorder 2, %s22
      // Predicated region
      $region77: #{tpu_custom_call.1} parent=5 // pred_check
        %p7819 = pneg %p7818
      $region78: #{tpu_custom_call.1} parent=5 // pred_check_branch
        %7821 = sbr.rel (%p7819) target = $region80
      $region79: #{tpu_custom_call.1} parent=5 // pred_region
        %s7822 = ssub.s32 %s22, 2
        // Predicated region
        $region81: #{tpu_custom_call.1} parent=79 // pred_check
          %p7823 = pneg %p339
        $region82: #{tpu_custom_call.1} parent=79 // pred_check_branch
          %7825 = sbr.rel (%p7823) target = $region84
        $region83: #{tpu_custom_call.1} parent=79 // pred_region
          %s7826 = sand.u32 %s324, 1
          %s7827 = scalar_lea.sflag [#allocation3], %s7826
          %s7828 = sand.u32 %s324, 1
          %s7829 = smul.addr %s7828, 16
          %s7830 = scalar_lea.vmem [#allocation2], %s7829
          %7832 = dma.done %s7827, 256
        $region84: #{tpu_custom_call.1} parent=79 // pred_fallthru
          _
      $region80: #{tpu_custom_call.1} parent=5 // pred_fallthru
        _
    $region6: #{tpu_custom_call.1} parent=1 // loop_footer
      %s26 = sadd.s32 1, %s22
    $region7: #{tpu_custom_call.1} parent=1 // loop_footer_branch
      %21 = sbr.rel target = $region3
    $region8: #{tpu_custom_call.1} parent=1 // loop_exit
      _
    %7833 = vsyncpa [#allocation3], 1
    %s7834 = scalar_lea.sflag [#allocation3], 1
    %7835 = vsyncpa %s7834, 1

</llo_original>
